<compile_context>
chip_gen: v7x
topology: tpu7x:2x2x1
jax: 0.10.0
libtpu: 0.0.40
codegen_flags: <defaults>
</compile_context>

<pallas_src>
import functools

import jax
import jax.numpy as jnp
from jax import lax
from jax.experimental import pallas as pl
from jax.experimental.pallas import tpu as pltpu

F32 = jnp.float32
BF16 = jnp.bfloat16


# ----------------------------- in-kernel helpers -----------------------------

def _gate(y, r):
    return jnp.tanh(y[:, :r]) * jax.nn.sigmoid(y[:, r:])


def _dconv(x, w_taps, b, dil, tpos, T):
    """'same' dilated conv along rows: (M, Cin) f32 -> (M, Cout) f32.

    w_taps: length-fw tuple of (Cin, Cout) bf16 tap matrices in PyTorch tap order
    (tap k reads x[t + k*dil - pad]).  Row shifts use a roll plus a validity mask
    built from `tpos` (within-batch time index), so taps never read across batch
    elements or past the sequence ends -- no halo buffers, no tap concatenation.
    # TODO(synk): on hardware pltpu.roll(x, shift, axis=0) maps the shift to a single
    #             XLU sublane rotate; jnp.roll is used here for interpret-mode
    #             portability (it lowers to two row slices + a concat in Mosaic).
    """
    fw = len(w_taps)
    pad = dil * (fw // 2)
    y = None
    for k, wk in enumerate(w_taps):
        off = k * dil - pad                     # output row t reads input row t + off
        if off == 0:
            xk = x
        else:
            valid = (tpos >= -off) if off < 0 else (tpos < T - off)
            xk = jnp.where(valid, jnp.roll(x, -off, axis=0), 0.0)
        t = jnp.dot(xk.astype(BF16), wk, preferred_element_type=F32)
        y = t if y is None else y + t
    return y + b


# ----------------------------- fused Pallas kernel ---------------------------

def _cnet_fused_kernel(x_ref, tpos_ref,
                       in_w_ref, in_b_ref,
                       fg_w_ref, fg_b_ref,
                       sp_w_ref, pf_b_ref, skb_ref,
                       pp1_w_ref, pp1_b_ref, pp2_w_ref, pp2_b_ref,
                       o_ref,
                       *, fw, dilations, r, s, T):
    """Entire CNET forward on a (B*T, C) channels-last slab, fully VMEM-resident."""
    M = o_ref.shape[0]
    tpos = tpos_ref[...]                                   # (M, 1) int32, t within batch

    taps = lambda ref, *idx: tuple(ref[(*idx, k)] for k in range(fw))

    # ---- input layer: conv -> tanh * sigmoid gate ----------------------------
    y = _dconv(x_ref[...].astype(F32), taps(in_w_ref), in_b_ref[...], 1, tpos, T)
    X = _gate(y, r)                                        # (M, r) f32 residual stream

    # ---- residual / skip stack (static unroll over the 8 layers) -------------
    # TODO(synk): for much deeper stacks convert to lax.fori_loop with dynamic
    #             weight indexing to bound live ranges.
    skip = jnp.zeros((M, s), F32)
    for i, d in enumerate(dilations):
        y = _dconv(X, taps(fg_w_ref, i), fg_b_ref[i], d, tpos, T)     # (M, 2r)
        y = _gate(y, r)                                                # (M, r)
        # fused 1x1 skip + post-filter: one (M, r) @ (r, s+r) matmul, lane-split.
        z = jnp.dot(y.astype(BF16), sp_w_ref[i], preferred_element_type=F32)
        skip = skip + z[:, :s]
        X = z[:, s:] + pf_b_ref[i] + X
    skip = skip + skb_ref[...]                             # pre-summed skip biases

    # ---- postproc: conv -> ReLU -> conv --------------------------------------
    h = jnp.maximum(_dconv(skip, taps(pp1_w_ref), pp1_b_ref[...], 1, tpos, T), 0.0)
    out = _dconv(h, taps(pp2_w_ref), pp2_b_ref[...], 1, tpos, T)
    o_ref[...] = out.astype(o_ref.dtype)


# ----------------------------- wrapper ---------------------------------------

def cnet_forward(x_nct, kp, *, fw, dilations, r, s):
    """x_nct: (B, C_in, T) PyTorch layout. Returns (B, C_out, T)."""
    B, cin, T = x_nct.shape
    cout = kp["pp2_w"].shape[-1]
    x = jnp.transpose(x_nct, (0, 2, 1)).reshape(B * T, cin)      # channels-last slab
    tpos = jnp.tile(jnp.arange(T, dtype=jnp.int32), B).reshape(B * T, 1)

    kern = functools.partial(_cnet_fused_kernel, fw=fw, dilations=tuple(dilations),
                             r=r, s=s, T=T)

    # Single invocation (no grid): activations and all weights (~0.3 MiB) stay in VMEM
    # for the entire forward.  On v7x, B could instead stay a CORE_PARALLEL grid axis
    # to use both TensorCores.
    # TODO(synk): for production T (>=32K) add a time-tile grid axis with max_pad halo
    #             and size tiles for the per-generation VMEM budget.
    out = pl.pallas_call(
        kern,
        out_shape=jax.ShapeDtypeStruct((B * T, cout), x_nct.dtype),
        compiler_params=pltpu.CompilerParams(vmem_limit_bytes=32 * 1024 * 1024),
    )(x, tpos, kp["in_w"], kp["in_b"], kp["fg_w"], kp["fg_b"],
      kp["sp_w"], kp["pf_b"], kp["sk_b_sum"],
      kp["pp1_w"], kp["pp1_b"], kp["pp2_w"], kp["pp2_b"])

    return jnp.transpose(out.reshape(B, T, cout), (0, 2, 1))     # back to (B, C_out, T)


# ------------------------- params & pure-JAX reference -----------------------

def init_conv(key, cout, cin, fw):
    k1, k2 = jax.random.split(key)
    scale = 1.0 / jnp.sqrt(jnp.asarray(cin * fw, F32))
    w = jax.random.normal(k1, (cout, cin, fw), F32) * scale   # PyTorch (Cout, Cin, fw)
    b = jax.random.normal(k2, (cout,), F32) * scale
    return w, b


def _to_k(w):        # (Cout, Cin, fw) -> (fw, Cin, Cout)
    return jnp.transpose(w, (2, 1, 0))


def build_params(key, *, r, fw, s, cin, cout, dilations):
    pt = {}   # PyTorch-layout f32 params (for the reference)
    keys = jax.random.split(key, 3 * len(dilations) + 3)
    ki = iter(keys)
    pt["in_w"], pt["in_b"] = init_conv(next(ki), 2 * r, cin, fw)
    pt["fg_w"], pt["fg_b"] = [], []
    pt["sk_w"], pt["sk_b"] = [], []
    pt["pf_w"], pt["pf_b"] = [], []
    for _ in dilations:
        w, b = init_conv(next(ki), 2 * r, r, fw); pt["fg_w"].append(w); pt["fg_b"].append(b)
        w, b = init_conv(next(ki), s, r, 1);      pt["sk_w"].append(w); pt["sk_b"].append(b)
        w, b = init_conv(next(ki), r, r, 1);      pt["pf_w"].append(w); pt["pf_b"].append(b)
    pt["pp1_w"], pt["pp1_b"] = init_conv(next(ki), s, s, fw)
    pt["pp2_w"], pt["pp2_b"] = init_conv(next(ki), cout, s, fw)

    kp = {
        # conv weights as bf16 per-tap (fw, Cin, Cout) stacks; biases stay f32.
        "in_w": _to_k(pt["in_w"]).astype(BF16),                               # (fw, cin, 2r)
        "in_b": pt["in_b"].reshape(1, 2 * r),
        "fg_w": jnp.stack([_to_k(w) for w in pt["fg_w"]]).astype(BF16),       # (L, fw, r, 2r)
        "fg_b": jnp.stack([b.reshape(1, 2 * r) for b in pt["fg_b"]]),         # (L, 1, 2r)
        # fused 1x1 skip + post-filter weights -> (L, r, s + r)
        "sp_w": jnp.stack([jnp.concatenate([_to_k(ws)[0], _to_k(wp)[0]], axis=1)
                           for ws, wp in zip(pt["sk_w"], pt["pf_w"])]).astype(BF16),
        "pf_b": jnp.stack([b.reshape(1, r) for b in pt["pf_b"]]),             # (L, 1, r)
        "sk_b_sum": sum(pt["sk_b"]).reshape(1, s),                            # (1, s)
        "pp1_w": _to_k(pt["pp1_w"]).astype(BF16),                             # (fw, s, s)
        "pp1_b": pt["pp1_b"].reshape(1, s),
        "pp2_w": _to_k(pt["pp2_w"]).astype(BF16),                             # (fw, s, cout)
        "pp2_b": pt["pp2_b"].reshape(1, cout),
    }
    return pt, kp


def ref_conv(x, w, b, dil):
    fw = w.shape[-1]
    pad = dil * (fw // 2)
    y = lax.conv_general_dilated(x, w, window_strides=(1,), padding=[(pad, pad)],
                                 rhs_dilation=(dil,),
                                 dimension_numbers=("NCH", "OIH", "NCH"))
    return y + b[None, :, None]


def ref_forward(x_nct, pt, *, dilations, r):
    X = ref_conv(x_nct, pt["in_w"], pt["in_b"], 1)
    Xc = jnp.tanh(X[:, :r]) * jax.nn.sigmoid(X[:, r:])
    skips = []
    for i, d in enumerate(dilations):
        Y = ref_conv(Xc, pt["fg_w"][i], pt["fg_b"][i], d)
        Y = jnp.tanh(Y[:, :r]) * jax.nn.sigmoid(Y[:, r:])
        skips.append(ref_conv(Y, pt["sk_w"][i], pt["sk_b"][i], 1))
        Xc = ref_conv(Y, pt["pf_w"][i], pt["pf_b"][i], 1) + Xc
    S = sum(skips)
    H = jax.nn.relu(ref_conv(S, pt["pp1_w"], pt["pp1_b"], 1))
    return ref_conv(H, pt["pp2_w"], pt["pp2_b"], 1)


# ----------------------------- main -------------------------------------------

if __name__ == "__main__":
    # small, forward-consistent config
    B, T = 2, 64
    r = 32            # residual_channels
    fw = 3            # filter_width
    s = 64            # postnet_channels
    cin = 16          # input_channels
    cout = 12         # output_channels (scalar)
    dilations = [1, 2, 4, 8, 1, 2, 4, 8]

    key = jax.random.PRNGKey(0)
    kx, kw = jax.random.split(key)
    pt_params, k_params = build_params(kw, r=r, fw=fw, s=s, cin=cin, cout=cout,
                                       dilations=dilations)
    x = jax.random.normal(kx, (B, cin, T), F32)   # PyTorch NCW input layout

    out = cnet_forward(x, k_params, fw=fw, dilations=dilations, r=r, s=s)
    out = jax.block_until_ready(out)
    assert out.shape == (B, cout, T), out.shape

    ref = jax.block_until_ready(ref_forward(x, pt_params, dilations=dilations, r=r))
    if not bool(jnp.allclose(out, ref, atol=5e-2, rtol=5e-2)):
        raise AssertionError(
            f"mismatch vs reference, max abs err = {float(jnp.max(jnp.abs(out - ref)))}")

    print("KERNEL_OK")
</pallas_src>

<mosaic_0001>
module attributes {stable_mosaic.version = 11 : i64} {
  func.func @_cnet_fused_kernel(%arg0: memref<128x16xf32, #tpu.memory_space<vmem>>, %arg1: memref<128x1xi32, #tpu.memory_space<vmem>>, %arg2: memref<3x16x64xbf16, #tpu.memory_space<vmem>>, %arg3: memref<1x64xf32, #tpu.memory_space<vmem>>, %arg4: memref<8x3x32x64xbf16, #tpu.memory_space<vmem>>, %arg5: memref<8x1x64xf32, #tpu.memory_space<vmem>>, %arg6: memref<8x32x96xbf16, #tpu.memory_space<vmem>>, %arg7: memref<8x1x32xf32, #tpu.memory_space<vmem>>, %arg8: memref<1x64xf32, #tpu.memory_space<vmem>>, %arg9: memref<3x64x64xbf16, #tpu.memory_space<vmem>>, %arg10: memref<1x64xf32, #tpu.memory_space<vmem>>, %arg11: memref<3x64x12xbf16, #tpu.memory_space<vmem>>, %arg12: memref<1x12xf32, #tpu.memory_space<vmem>>, %arg13: memref<128x12xf32, #tpu.memory_space<vmem>>) attributes {dimension_semantics = [], scalar_prefetch = 0 : i64, scratch_operands = 0 : i64, tpu.core_type = #tpu.core_type<tc>} {
    %c0 = arith.constant 0 : index
    %c0_0 = arith.constant 0 : index
    %0 = vector.load %arg1[%c0, %c0_0] : memref<128x1xi32, #tpu.memory_space<vmem>>, vector<128x1xi32>
    %c0_1 = arith.constant 0 : index
    %c0_2 = arith.constant 0 : index
    %1 = vector.load %arg0[%c0_1, %c0_2] : memref<128x16xf32, #tpu.memory_space<vmem>>, vector<128x16xf32>
    %c0_3 = arith.constant 0 : index
    %c0_4 = arith.constant 0 : index
    %c0_5 = arith.constant 0 : index
    %2 = vector.load %arg2[%c0_3, %c0_4, %c0_5] : memref<3x16x64xbf16, #tpu.memory_space<vmem>>, vector<1x16x64xbf16>
    %3 = vector.shape_cast %2 : vector<1x16x64xbf16> to vector<16x64xbf16>
    %c1 = arith.constant 1 : index
    %c0_6 = arith.constant 0 : index
    %c0_7 = arith.constant 0 : index
    %4 = vector.load %arg2[%c1, %c0_6, %c0_7] : memref<3x16x64xbf16, #tpu.memory_space<vmem>>, vector<1x16x64xbf16>
    %5 = vector.shape_cast %4 : vector<1x16x64xbf16> to vector<16x64xbf16>
    %c2 = arith.constant 2 : index
    %c0_8 = arith.constant 0 : index
    %c0_9 = arith.constant 0 : index
    %6 = vector.load %arg2[%c2, %c0_8, %c0_9] : memref<3x16x64xbf16, #tpu.memory_space<vmem>>, vector<1x16x64xbf16>
    %7 = vector.shape_cast %6 : vector<1x16x64xbf16> to vector<16x64xbf16>
    %c0_10 = arith.constant 0 : index
    %c0_11 = arith.constant 0 : index
    %8 = vector.load %arg3[%c0_10, %c0_11] : memref<1x64xf32, #tpu.memory_space<vmem>>, vector<1x64xf32>
    %c1_i32 = arith.constant 1 : i32
    %9 = vector.broadcast %c1_i32 : i32 to vector<128x1xi32>
    %10 = arith.cmpi sge, %0, %9 : vector<128x1xi32>
    %11 = vector.extract_strided_slice %1 {offsets = [127, 0], sizes = [1, 16], strides = [1, 1]} : vector<128x16xf32> to vector<1x16xf32>
    %12 = vector.extract_strided_slice %1 {offsets = [0, 0], sizes = [127, 16], strides = [1, 1]} : vector<128x16xf32> to vector<127x16xf32>
    %13 = tpu.concatenate %11, %12 in 0 : vector<1x16xf32>, vector<127x16xf32> -> vector<128x16xf32>
    %cst = arith.constant 0.000000e+00 : f32
    %14 = vector.shape_cast %10 : vector<128x1xi1> to vector<128x1xi1>
    %15 = vector.broadcast %14 : vector<128x1xi1> to vector<128x16xi1>
    %16 = vector.broadcast %cst : f32 to vector<128x16xf32>
    %17 = arith.select %15, %13, %16 : vector<128x16xi1>, vector<128x16xf32>
    %18 = arith.truncf %17 : vector<128x16xf32> to vector<128x16xbf16>
    %cst_12 = arith.constant dense<0.000000e+00> : vector<128x64xf32>
    %19 = tpu.matmul %18, %3, %cst_12 {dimension_numbers = #tpu.dot_dimension_numbers<[1], [0], [0], [1], [0, 0, 1, 1], [], []>} : vector<128x16xbf16>, vector<16x64xbf16>, vector<128x64xf32> -> vector<128x64xf32>
    %20 = arith.truncf %1 : vector<128x16xf32> to vector<128x16xbf16>
    %cst_13 = arith.constant dense<0.000000e+00> : vector<128x64xf32>
    %21 = tpu.matmul %20, %5, %cst_13 {dimension_numbers = #tpu.dot_dimension_numbers<[1], [0], [0], [1], [0, 0, 1, 1], [], []>} : vector<128x16xbf16>, vector<16x64xbf16>, vector<128x64xf32> -> vector<128x64xf32>
    %22 = arith.addf %19, %21 : vector<128x64xf32>
    %c63_i32 = arith.constant 63 : i32
    %23 = vector.broadcast %c63_i32 : i32 to vector<128x1xi32>
    %24 = arith.cmpi slt, %0, %23 : vector<128x1xi32>
    %25 = vector.extract_strided_slice %1 {offsets = [1, 0], sizes = [127, 16], strides = [1, 1]} : vector<128x16xf32> to vector<127x16xf32>
    %26 = vector.extract_strided_slice %1 {offsets = [0, 0], sizes = [1, 16], strides = [1, 1]} : vector<128x16xf32> to vector<1x16xf32>
    %27 = tpu.concatenate %25, %26 in 0 : vector<127x16xf32>, vector<1x16xf32> -> vector<128x16xf32>
    %cst_14 = arith.constant 0.000000e+00 : f32
    %28 = vector.shape_cast %24 : vector<128x1xi1> to vector<128x1xi1>
    %29 = vector.broadcast %28 : vector<128x1xi1> to vector<128x16xi1>
    %30 = vector.broadcast %cst_14 : f32 to vector<128x16xf32>
    %31 = arith.select %29, %27, %30 : vector<128x16xi1>, vector<128x16xf32>
    %32 = arith.truncf %31 : vector<128x16xf32> to vector<128x16xbf16>
    %cst_15 = arith.constant dense<0.000000e+00> : vector<128x64xf32>
    %33 = tpu.matmul %32, %7, %cst_15 {dimension_numbers = #tpu.dot_dimension_numbers<[1], [0], [0], [1], [0, 0, 1, 1], [], []>} : vector<128x16xbf16>, vector<16x64xbf16>, vector<128x64xf32> -> vector<128x64xf32>
    %34 = arith.addf %22, %33 : vector<128x64xf32>
    %35 = vector.broadcast %8 : vector<1x64xf32> to vector<128x64xf32>
    %36 = arith.addf %34, %35 : vector<128x64xf32>
    %37 = vector.extract_strided_slice %36 {offsets = [0, 0], sizes = [128, 32], strides = [1, 1]} : vector<128x64xf32> to vector<128x32xf32>
    %38 = math.tanh %37 : vector<128x32xf32>
    %39 = vector.extract_strided_slice %36 {offsets = [0, 32], sizes = [128, 32], strides = [1, 1]} : vector<128x64xf32> to vector<128x32xf32>
    %40 = arith.negf %39 : vector<128x32xf32>
    %41 = math.exp %40 : vector<128x32xf32>
    %cst_16 = arith.constant 1.000000e+00 : f32
    %42 = vector.broadcast %cst_16 : f32 to vector<128x32xf32>
    %43 = arith.addf %42, %41 : vector<128x32xf32>
    %44 = arith.divf %42, %43 : vector<128x32xf32>
    %45 = arith.mulf %38, %44 : vector<128x32xf32>
    %cst_17 = arith.constant 0.000000e+00 : f32
    %46 = vector.broadcast %cst_17 : f32 to vector<128x64xf32>
    %c0_18 = arith.constant 0 : index
    %c0_19 = arith.constant 0 : index
    %c0_20 = arith.constant 0 : index
    %c0_21 = arith.constant 0 : index
    %47 = vector.load %arg4[%c0_18, %c0_19, %c0_20, %c0_21] : memref<8x3x32x64xbf16, #tpu.memory_space<vmem>>, vector<1x1x32x64xbf16>
    %48 = vector.shape_cast %47 : vector<1x1x32x64xbf16> to vector<32x64xbf16>
    %c0_22 = arith.constant 0 : index
    %c1_23 = arith.constant 1 : index
    %c0_24 = arith.constant 0 : index
    %c0_25 = arith.constant 0 : index
    %49 = vector.load %arg4[%c0_22, %c1_23, %c0_24, %c0_25] : memref<8x3x32x64xbf16, #tpu.memory_space<vmem>>, vector<1x1x32x64xbf16>
    %50 = vector.shape_cast %49 : vector<1x1x32x64xbf16> to vector<32x64xbf16>
    %c0_26 = arith.constant 0 : index
    %c2_27 = arith.constant 2 : index
    %c0_28 = arith.constant 0 : index
    %c0_29 = arith.constant 0 : index
    %51 = vector.load %arg4[%c0_26, %c2_27, %c0_28, %c0_29] : memref<8x3x32x64xbf16, #tpu.memory_space<vmem>>, vector<1x1x32x64xbf16>
    %52 = vector.shape_cast %51 : vector<1x1x32x64xbf16> to vector<32x64xbf16>
    %c0_30 = arith.constant 0 : index
    %c0_31 = arith.constant 0 : index
    %c0_32 = arith.constant 0 : index
    %53 = vector.load %arg5[%c0_30, %c0_31, %c0_32] : memref<8x1x64xf32, #tpu.memory_space<vmem>>, vector<1x1x64xf32>
    %54 = vector.shape_cast %53 : vector<1x1x64xf32> to vector<1x64xf32>
    %c1_i32_33 = arith.constant 1 : i32
    %55 = vector.broadcast %c1_i32_33 : i32 to vector<128x1xi32>
    %56 = arith.cmpi sge, %0, %55 : vector<128x1xi32>
    %57 = vector.extract_strided_slice %45 {offsets = [127, 0], sizes = [1, 32], strides = [1, 1]} : vector<128x32xf32> to vector<1x32xf32>
    %58 = vector.extract_strided_slice %45 {offsets = [0, 0], sizes = [127, 32], strides = [1, 1]} : vector<128x32xf32> to vector<127x32xf32>
    %59 = tpu.concatenate %57, %58 in 0 : vector<1x32xf32>, vector<127x32xf32> -> vector<128x32xf32>
    %cst_34 = arith.constant 0.000000e+00 : f32
    %60 = vector.shape_cast %56 : vector<128x1xi1> to vector<128x1xi1>
    %61 = vector.broadcast %60 : vector<128x1xi1> to vector<128x32xi1>
    %62 = vector.broadcast %cst_34 : f32 to vector<128x32xf32>
    %63 = arith.select %61, %59, %62 : vector<128x32xi1>, vector<128x32xf32>
    %64 = arith.truncf %63 : vector<128x32xf32> to vector<128x32xbf16>
    %cst_35 = arith.constant dense<0.000000e+00> : vector<128x64xf32>
    %65 = tpu.matmul %64, %48, %cst_35 {dimension_numbers = #tpu.dot_dimension_numbers<[1], [0], [0], [1], [0, 0, 1, 1], [], []>} : vector<128x32xbf16>, vector<32x64xbf16>, vector<128x64xf32> -> vector<128x64xf32>
    %66 = arith.truncf %45 : vector<128x32xf32> to vector<128x32xbf16>
    %cst_36 = arith.constant dense<0.000000e+00> : vector<128x64xf32>
    %67 = tpu.matmul %66, %50, %cst_36 {dimension_numbers = #tpu.dot_dimension_numbers<[1], [0], [0], [1], [0, 0, 1, 1], [], []>} : vector<128x32xbf16>, vector<32x64xbf16>, vector<128x64xf32> -> vector<128x64xf32>
    %68 = arith.addf %65, %67 : vector<128x64xf32>
    %c63_i32_37 = arith.constant 63 : i32
    %69 = vector.broadcast %c63_i32_37 : i32 to vector<128x1xi32>
    %70 = arith.cmpi slt, %0, %69 : vector<128x1xi32>
    %71 = vector.extract_strided_slice %45 {offsets = [1, 0], sizes = [127, 32], strides = [1, 1]} : vector<128x32xf32> to vector<127x32xf32>
    %72 = vector.extract_strided_slice %45 {offsets = [0, 0], sizes = [1, 32], strides = [1, 1]} : vector<128x32xf32> to vector<1x32xf32>
    %73 = tpu.concatenate %71, %72 in 0 : vector<127x32xf32>, vector<1x32xf32> -> vector<128x32xf32>
    %cst_38 = arith.constant 0.000000e+00 : f32
    %74 = vector.shape_cast %70 : vector<128x1xi1> to vector<128x1xi1>
    %75 = vector.broadcast %74 : vector<128x1xi1> to vector<128x32xi1>
    %76 = vector.broadcast %cst_38 : f32 to vector<128x32xf32>
    %77 = arith.select %75, %73, %76 : vector<128x32xi1>, vector<128x32xf32>
    %78 = arith.truncf %77 : vector<128x32xf32> to vector<128x32xbf16>
    %cst_39 = arith.constant dense<0.000000e+00> : vector<128x64xf32>
    %79 = tpu.matmul %78, %52, %cst_39 {dimension_numbers = #tpu.dot_dimension_numbers<[1], [0], [0], [1], [0, 0, 1, 1], [], []>} : vector<128x32xbf16>, vector<32x64xbf16>, vector<128x64xf32> -> vector<128x64xf32>
    %80 = arith.addf %68, %79 : vector<128x64xf32>
    %81 = vector.broadcast %54 : vector<1x64xf32> to vector<128x64xf32>
    %82 = arith.addf %80, %81 : vector<128x64xf32>
    %83 = vector.extract_strided_slice %82 {offsets = [0, 0], sizes = [128, 32], strides = [1, 1]} : vector<128x64xf32> to vector<128x32xf32>
    %84 = math.tanh %83 : vector<128x32xf32>
    %85 = vector.extract_strided_slice %82 {offsets = [0, 32], sizes = [128, 32], strides = [1, 1]} : vector<128x64xf32> to vector<128x32xf32>
    %86 = arith.negf %85 : vector<128x32xf32>
    %87 = math.exp %86 : vector<128x32xf32>
    %cst_40 = arith.constant 1.000000e+00 : f32
    %88 = vector.broadcast %cst_40 : f32 to vector<128x32xf32>
    %89 = arith.addf %88, %87 : vector<128x32xf32>
    %90 = arith.divf %88, %89 : vector<128x32xf32>
    %91 = arith.mulf %84, %90 : vector<128x32xf32>
    %92 = arith.truncf %91 : vector<128x32xf32> to vector<128x32xbf16>
    %c0_41 = arith.constant 0 : index
    %c0_42 = arith.constant 0 : index
    %c0_43 = arith.constant 0 : index
    %93 = vector.load %arg6[%c0_41, %c0_42, %c0_43] : memref<8x32x96xbf16, #tpu.memory_space<vmem>>, vector<1x32x96xbf16>
    %94 = vector.shape_cast %93 : vector<1x32x96xbf16> to vector<32x96xbf16>
    %cst_44 = arith.constant dense<0.000000e+00> : vector<128x96xf32>
    %95 = tpu.matmul %92, %94, %cst_44 {dimension_numbers = #tpu.dot_dimension_numbers<[1], [0], [0], [1], [0, 0, 1, 1], [], []>} : vector<128x32xbf16>, vector<32x96xbf16>, vector<128x96xf32> -> vector<128x96xf32>
    %96 = vector.extract_strided_slice %95 {offsets = [0, 0], sizes = [128, 64], strides = [1, 1]} : vector<128x96xf32> to vector<128x64xf32>
    %97 = arith.addf %46, %96 : vector<128x64xf32>
    %98 = vector.extract_strided_slice %95 {offsets = [0, 64], sizes = [128, 32], strides = [1, 1]} : vector<128x96xf32> to vector<128x32xf32>
    %c0_45 = arith.constant 0 : index
    %c0_46 = arith.constant 0 : index
    %c0_47 = arith.constant 0 : index
    %99 = vector.load %arg7[%c0_45, %c0_46, %c0_47] : memref<8x1x32xf32, #tpu.memory_space<vmem>>, vector<1x1x32xf32>
    %100 = vector.shape_cast %99 : vector<1x1x32xf32> to vector<1x32xf32>
    %101 = vector.broadcast %100 : vector<1x32xf32> to vector<128x32xf32>
    %102 = arith.addf %98, %101 : vector<128x32xf32>
    %103 = arith.addf %102, %45 : vector<128x32xf32>
    %c1_48 = arith.constant 1 : index
    %c0_49 = arith.constant 0 : index
    %c0_50 = arith.constant 0 : index
    %c0_51 = arith.constant 0 : index
    %104 = vector.load %arg4[%c1_48, %c0_49, %c0_50, %c0_51] : memref<8x3x32x64xbf16, #tpu.memory_space<vmem>>, vector<1x1x32x64xbf16>
    %105 = vector.shape_cast %104 : vector<1x1x32x64xbf16> to vector<32x64xbf16>
    %c1_52 = arith.constant 1 : index
    %c1_53 = arith.constant 1 : index
    %c0_54 = arith.constant 0 : index
    %c0_55 = arith.constant 0 : index
    %106 = vector.load %arg4[%c1_52, %c1_53, %c0_54, %c0_55] : memref<8x3x32x64xbf16, #tpu.memory_space<vmem>>, vector<1x1x32x64xbf16>
    %107 = vector.shape_cast %106 : vector<1x1x32x64xbf16> to vector<32x64xbf16>
    %c1_56 = arith.constant 1 : index
    %c2_57 = arith.constant 2 : index
    %c0_58 = arith.constant 0 : index
    %c0_59 = arith.constant 0 : index
    %108 = vector.load %arg4[%c1_56, %c2_57, %c0_58, %c0_59] : memref<8x3x32x64xbf16, #tpu.memory_space<vmem>>, vector<1x1x32x64xbf16>
    %109 = vector.shape_cast %108 : vector<1x1x32x64xbf16> to vector<32x64xbf16>
    %c1_60 = arith.constant 1 : index
    %c0_61 = arith.constant 0 : index
    %c0_62 = arith.constant 0 : index
    %110 = vector.load %arg5[%c1_60, %c0_61, %c0_62] : memref<8x1x64xf32, #tpu.memory_space<vmem>>, vector<1x1x64xf32>
    %111 = vector.shape_cast %110 : vector<1x1x64xf32> to vector<1x64xf32>
    %c2_i32 = arith.constant 2 : i32
    %112 = vector.broadcast %c2_i32 : i32 to vector<128x1xi32>
    %113 = arith.cmpi sge, %0, %112 : vector<128x1xi32>
    %114 = vector.extract_strided_slice %103 {offsets = [126, 0], sizes = [2, 32], strides = [1, 1]} : vector<128x32xf32> to vector<2x32xf32>
    %115 = vector.extract_strided_slice %103 {offsets = [0, 0], sizes = [126, 32], strides = [1, 1]} : vector<128x32xf32> to vector<126x32xf32>
    %116 = tpu.concatenate %114, %115 in 0 : vector<2x32xf32>, vector<126x32xf32> -> vector<128x32xf32>
    %cst_63 = arith.constant 0.000000e+00 : f32
    %117 = vector.shape_cast %113 : vector<128x1xi1> to vector<128x1xi1>
    %118 = vector.broadcast %117 : vector<128x1xi1> to vector<128x32xi1>
    %119 = vector.broadcast %cst_63 : f32 to vector<128x32xf32>
    %120 = arith.select %118, %116, %119 : vector<128x32xi1>, vector<128x32xf32>
    %121 = arith.truncf %120 : vector<128x32xf32> to vector<128x32xbf16>
    %cst_64 = arith.constant dense<0.000000e+00> : vector<128x64xf32>
    %122 = tpu.matmul %121, %105, %cst_64 {dimension_numbers = #tpu.dot_dimension_numbers<[1], [0], [0], [1], [0, 0, 1, 1], [], []>} : vector<128x32xbf16>, vector<32x64xbf16>, vector<128x64xf32> -> vector<128x64xf32>
    %123 = arith.truncf %103 : vector<128x32xf32> to vector<128x32xbf16>
    %cst_65 = arith.constant dense<0.000000e+00> : vector<128x64xf32>
    %124 = tpu.matmul %123, %107, %cst_65 {dimension_numbers = #tpu.dot_dimension_numbers<[1], [0], [0], [1], [0, 0, 1, 1], [], []>} : vector<128x32xbf16>, vector<32x64xbf16>, vector<128x64xf32> -> vector<128x64xf32>
    %125 = arith.addf %122, %124 : vector<128x64xf32>
    %c62_i32 = arith.constant 62 : i32
    %126 = vector.broadcast %c62_i32 : i32 to vector<128x1xi32>
    %127 = arith.cmpi slt, %0, %126 : vector<128x1xi32>
    %128 = vector.extract_strided_slice %103 {offsets = [2, 0], sizes = [126, 32], strides = [1, 1]} : vector<128x32xf32> to vector<126x32xf32>
    %129 = vector.extract_strided_slice %103 {offsets = [0, 0], sizes = [2, 32], strides = [1, 1]} : vector<128x32xf32> to vector<2x32xf32>
    %130 = tpu.concatenate %128, %129 in 0 : vector<126x32xf32>, vector<2x32xf32> -> vector<128x32xf32>
    %cst_66 = arith.constant 0.000000e+00 : f32
    %131 = vector.shape_cast %127 : vector<128x1xi1> to vector<128x1xi1>
    %132 = vector.broadcast %131 : vector<128x1xi1> to vector<128x32xi1>
    %133 = vector.broadcast %cst_66 : f32 to vector<128x32xf32>
    %134 = arith.select %132, %130, %133 : vector<128x32xi1>, vector<128x32xf32>
    %135 = arith.truncf %134 : vector<128x32xf32> to vector<128x32xbf16>
    %cst_67 = arith.constant dense<0.000000e+00> : vector<128x64xf32>
    %136 = tpu.matmul %135, %109, %cst_67 {dimension_numbers = #tpu.dot_dimension_numbers<[1], [0], [0], [1], [0, 0, 1, 1], [], []>} : vector<128x32xbf16>, vector<32x64xbf16>, vector<128x64xf32> -> vector<128x64xf32>
    %137 = arith.addf %125, %136 : vector<128x64xf32>
    %138 = vector.broadcast %111 : vector<1x64xf32> to vector<128x64xf32>
    %139 = arith.addf %137, %138 : vector<128x64xf32>
    %140 = vector.extract_strided_slice %139 {offsets = [0, 0], sizes = [128, 32], strides = [1, 1]} : vector<128x64xf32> to vector<128x32xf32>
    %141 = math.tanh %140 : vector<128x32xf32>
    %142 = vector.extract_strided_slice %139 {offsets = [0, 32], sizes = [128, 32], strides = [1, 1]} : vector<128x64xf32> to vector<128x32xf32>
    %143 = arith.negf %142 : vector<128x32xf32>
    %144 = math.exp %143 : vector<128x32xf32>
    %cst_68 = arith.constant 1.000000e+00 : f32
    %145 = vector.broadcast %cst_68 : f32 to vector<128x32xf32>
    %146 = arith.addf %145, %144 : vector<128x32xf32>
    %147 = arith.divf %145, %146 : vector<128x32xf32>
    %148 = arith.mulf %141, %147 : vector<128x32xf32>
    %149 = arith.truncf %148 : vector<128x32xf32> to vector<128x32xbf16>
    %c1_69 = arith.constant 1 : index
    %c0_70 = arith.constant 0 : index
    %c0_71 = arith.constant 0 : index
    %150 = vector.load %arg6[%c1_69, %c0_70, %c0_71] : memref<8x32x96xbf16, #tpu.memory_space<vmem>>, vector<1x32x96xbf16>
    %151 = vector.shape_cast %150 : vector<1x32x96xbf16> to vector<32x96xbf16>
    %cst_72 = arith.constant dense<0.000000e+00> : vector<128x96xf32>
    %152 = tpu.matmul %149, %151, %cst_72 {dimension_numbers = #tpu.dot_dimension_numbers<[1], [0], [0], [1], [0, 0, 1, 1], [], []>} : vector<128x32xbf16>, vector<32x96xbf16>, vector<128x96xf32> -> vector<128x96xf32>
    %153 = vector.extract_strided_slice %152 {offsets = [0, 0], sizes = [128, 64], strides = [1, 1]} : vector<128x96xf32> to vector<128x64xf32>
    %154 = arith.addf %97, %153 : vector<128x64xf32>
    %155 = vector.extract_strided_slice %152 {offsets = [0, 64], sizes = [128, 32], strides = [1, 1]} : vector<128x96xf32> to vector<128x32xf32>
    %c1_73 = arith.constant 1 : index
    %c0_74 = arith.constant 0 : index
    %c0_75 = arith.constant 0 : index
    %156 = vector.load %arg7[%c1_73, %c0_74, %c0_75] : memref<8x1x32xf32, #tpu.memory_space<vmem>>, vector<1x1x32xf32>
    %157 = vector.shape_cast %156 : vector<1x1x32xf32> to vector<1x32xf32>
    %158 = vector.broadcast %157 : vector<1x32xf32> to vector<128x32xf32>
    %159 = arith.addf %155, %158 : vector<128x32xf32>
    %160 = arith.addf %159, %103 : vector<128x32xf32>
    %c2_76 = arith.constant 2 : index
    %c0_77 = arith.constant 0 : index
    %c0_78 = arith.constant 0 : index
    %c0_79 = arith.constant 0 : index
    %161 = vector.load %arg4[%c2_76, %c0_77, %c0_78, %c0_79] : memref<8x3x32x64xbf16, #tpu.memory_space<vmem>>, vector<1x1x32x64xbf16>
    %162 = vector.shape_cast %161 : vector<1x1x32x64xbf16> to vector<32x64xbf16>
    %c2_80 = arith.constant 2 : index
    %c1_81 = arith.constant 1 : index
    %c0_82 = arith.constant 0 : index
    %c0_83 = arith.constant 0 : index
    %163 = vector.load %arg4[%c2_80, %c1_81, %c0_82, %c0_83] : memref<8x3x32x64xbf16, #tpu.memory_space<vmem>>, vector<1x1x32x64xbf16>
    %164 = vector.shape_cast %163 : vector<1x1x32x64xbf16> to vector<32x64xbf16>
    %c2_84 = arith.constant 2 : index
    %c2_85 = arith.constant 2 : index
    %c0_86 = arith.constant 0 : index
    %c0_87 = arith.constant 0 : index
    %165 = vector.load %arg4[%c2_84, %c2_85, %c0_86, %c0_87] : memref<8x3x32x64xbf16, #tpu.memory_space<vmem>>, vector<1x1x32x64xbf16>
    %166 = vector.shape_cast %165 : vector<1x1x32x64xbf16> to vector<32x64xbf16>
    %c2_88 = arith.constant 2 : index
    %c0_89 = arith.constant 0 : index
    %c0_90 = arith.constant 0 : index
    %167 = vector.load %arg5[%c2_88, %c0_89, %c0_90] : memref<8x1x64xf32, #tpu.memory_space<vmem>>, vector<1x1x64xf32>
    %168 = vector.shape_cast %167 : vector<1x1x64xf32> to vector<1x64xf32>
    %c4_i32 = arith.constant 4 : i32
    %169 = vector.broadcast %c4_i32 : i32 to vector<128x1xi32>
    %170 = arith.cmpi sge, %0, %169 : vector<128x1xi32>
    %171 = vector.extract_strided_slice %160 {offsets = [124, 0], sizes = [4, 32], strides = [1, 1]} : vector<128x32xf32> to vector<4x32xf32>
    %172 = vector.extract_strided_slice %160 {offsets = [0, 0], sizes = [124, 32], strides = [1, 1]} : vector<128x32xf32> to vector<124x32xf32>
    %173 = tpu.concatenate %171, %172 in 0 : vector<4x32xf32>, vector<124x32xf32> -> vector<128x32xf32>
    %cst_91 = arith.constant 0.000000e+00 : f32
    %174 = vector.shape_cast %170 : vector<128x1xi1> to vector<128x1xi1>
    %175 = vector.broadcast %174 : vector<128x1xi1> to vector<128x32xi1>
    %176 = vector.broadcast %cst_91 : f32 to vector<128x32xf32>
    %177 = arith.select %175, %173, %176 : vector<128x32xi1>, vector<128x32xf32>
    %178 = arith.truncf %177 : vector<128x32xf32> to vector<128x32xbf16>
    %cst_92 = arith.constant dense<0.000000e+00> : vector<128x64xf32>
    %179 = tpu.matmul %178, %162, %cst_92 {dimension_numbers = #tpu.dot_dimension_numbers<[1], [0], [0], [1], [0, 0, 1, 1], [], []>} : vector<128x32xbf16>, vector<32x64xbf16>, vector<128x64xf32> -> vector<128x64xf32>
    %180 = arith.truncf %160 : vector<128x32xf32> to vector<128x32xbf16>
    %cst_93 = arith.constant dense<0.000000e+00> : vector<128x64xf32>
    %181 = tpu.matmul %180, %164, %cst_93 {dimension_numbers = #tpu.dot_dimension_numbers<[1], [0], [0], [1], [0, 0, 1, 1], [], []>} : vector<128x32xbf16>, vector<32x64xbf16>, vector<128x64xf32> -> vector<128x64xf32>
    %182 = arith.addf %179, %181 : vector<128x64xf32>
    %c60_i32 = arith.constant 60 : i32
    %183 = vector.broadcast %c60_i32 : i32 to vector<128x1xi32>
    %184 = arith.cmpi slt, %0, %183 : vector<128x1xi32>
    %185 = vector.extract_strided_slice %160 {offsets = [4, 0], sizes = [124, 32], strides = [1, 1]} : vector<128x32xf32> to vector<124x32xf32>
    %186 = vector.extract_strided_slice %160 {offsets = [0, 0], sizes = [4, 32], strides = [1, 1]} : vector<128x32xf32> to vector<4x32xf32>
    %187 = tpu.concatenate %185, %186 in 0 : vector<124x32xf32>, vector<4x32xf32> -> vector<128x32xf32>
    %cst_94 = arith.constant 0.000000e+00 : f32
    %188 = vector.shape_cast %184 : vector<128x1xi1> to vector<128x1xi1>
    %189 = vector.broadcast %188 : vector<128x1xi1> to vector<128x32xi1>
    %190 = vector.broadcast %cst_94 : f32 to vector<128x32xf32>
    %191 = arith.select %189, %187, %190 : vector<128x32xi1>, vector<128x32xf32>
    %192 = arith.truncf %191 : vector<128x32xf32> to vector<128x32xbf16>
    %cst_95 = arith.constant dense<0.000000e+00> : vector<128x64xf32>
    %193 = tpu.matmul %192, %166, %cst_95 {dimension_numbers = #tpu.dot_dimension_numbers<[1], [0], [0], [1], [0, 0, 1, 1], [], []>} : vector<128x32xbf16>, vector<32x64xbf16>, vector<128x64xf32> -> vector<128x64xf32>
    %194 = arith.addf %182, %193 : vector<128x64xf32>
    %195 = vector.broadcast %168 : vector<1x64xf32> to vector<128x64xf32>
    %196 = arith.addf %194, %195 : vector<128x64xf32>
    %197 = vector.extract_strided_slice %196 {offsets = [0, 0], sizes = [128, 32], strides = [1, 1]} : vector<128x64xf32> to vector<128x32xf32>
    %198 = math.tanh %197 : vector<128x32xf32>
    %199 = vector.extract_strided_slice %196 {offsets = [0, 32], sizes = [128, 32], strides = [1, 1]} : vector<128x64xf32> to vector<128x32xf32>
    %200 = arith.negf %199 : vector<128x32xf32>
    %201 = math.exp %200 : vector<128x32xf32>
    %cst_96 = arith.constant 1.000000e+00 : f32
    %202 = vector.broadcast %cst_96 : f32 to vector<128x32xf32>
    %203 = arith.addf %202, %201 : vector<128x32xf32>
    %204 = arith.divf %202, %203 : vector<128x32xf32>
    %205 = arith.mulf %198, %204 : vector<128x32xf32>
    %206 = arith.truncf %205 : vector<128x32xf32> to vector<128x32xbf16>
    %c2_97 = arith.constant 2 : index
    %c0_98 = arith.constant 0 : index
    %c0_99 = arith.constant 0 : index
    %207 = vector.load %arg6[%c2_97, %c0_98, %c0_99] : memref<8x32x96xbf16, #tpu.memory_space<vmem>>, vector<1x32x96xbf16>
    %208 = vector.shape_cast %207 : vector<1x32x96xbf16> to vector<32x96xbf16>
    %cst_100 = arith.constant dense<0.000000e+00> : vector<128x96xf32>
    %209 = tpu.matmul %206, %208, %cst_100 {dimension_numbers = #tpu.dot_dimension_numbers<[1], [0], [0], [1], [0, 0, 1, 1], [], []>} : vector<128x32xbf16>, vector<32x96xbf16>, vector<128x96xf32> -> vector<128x96xf32>
    %210 = vector.extract_strided_slice %209 {offsets = [0, 0], sizes = [128, 64], strides = [1, 1]} : vector<128x96xf32> to vector<128x64xf32>
    %211 = arith.addf %154, %210 : vector<128x64xf32>
    %212 = vector.extract_strided_slice %209 {offsets = [0, 64], sizes = [128, 32], strides = [1, 1]} : vector<128x96xf32> to vector<128x32xf32>
    %c2_101 = arith.constant 2 : index
    %c0_102 = arith.constant 0 : index
    %c0_103 = arith.constant 0 : index
    %213 = vector.load %arg7[%c2_101, %c0_102, %c0_103] : memref<8x1x32xf32, #tpu.memory_space<vmem>>, vector<1x1x32xf32>
    %214 = vector.shape_cast %213 : vector<1x1x32xf32> to vector<1x32xf32>
    %215 = vector.broadcast %214 : vector<1x32xf32> to vector<128x32xf32>
    %216 = arith.addf %212, %215 : vector<128x32xf32>
    %217 = arith.addf %216, %160 : vector<128x32xf32>
    %c3 = arith.constant 3 : index
    %c0_104 = arith.constant 0 : index
    %c0_105 = arith.constant 0 : index
    %c0_106 = arith.constant 0 : index
    %218 = vector.load %arg4[%c3, %c0_104, %c0_105, %c0_106] : memref<8x3x32x64xbf16, #tpu.memory_space<vmem>>, vector<1x1x32x64xbf16>
    %219 = vector.shape_cast %218 : vector<1x1x32x64xbf16> to vector<32x64xbf16>
    %c3_107 = arith.constant 3 : index
    %c1_108 = arith.constant 1 : index
    %c0_109 = arith.constant 0 : index
    %c0_110 = arith.constant 0 : index
    %220 = vector.load %arg4[%c3_107, %c1_108, %c0_109, %c0_110] : memref<8x3x32x64xbf16, #tpu.memory_space<vmem>>, vector<1x1x32x64xbf16>
    %221 = vector.shape_cast %220 : vector<1x1x32x64xbf16> to vector<32x64xbf16>
    %c3_111 = arith.constant 3 : index
    %c2_112 = arith.constant 2 : index
    %c0_113 = arith.constant 0 : index
    %c0_114 = arith.constant 0 : index
    %222 = vector.load %arg4[%c3_111, %c2_112, %c0_113, %c0_114] : memref<8x3x32x64xbf16, #tpu.memory_space<vmem>>, vector<1x1x32x64xbf16>
    %223 = vector.shape_cast %222 : vector<1x1x32x64xbf16> to vector<32x64xbf16>
    %c3_115 = arith.constant 3 : index
    %c0_116 = arith.constant 0 : index
    %c0_117 = arith.constant 0 : index
    %224 = vector.load %arg5[%c3_115, %c0_116, %c0_117] : memref<8x1x64xf32, #tpu.memory_space<vmem>>, vector<1x1x64xf32>
    %225 = vector.shape_cast %224 : vector<1x1x64xf32> to vector<1x64xf32>
    %c8_i32 = arith.constant 8 : i32
    %226 = vector.broadcast %c8_i32 : i32 to vector<128x1xi32>
    %227 = arith.cmpi sge, %0, %226 : vector<128x1xi32>
    %228 = vector.extract_strided_slice %217 {offsets = [120, 0], sizes = [8, 32], strides = [1, 1]} : vector<128x32xf32> to vector<8x32xf32>
    %229 = vector.extract_strided_slice %217 {offsets = [0, 0], sizes = [120, 32], strides = [1, 1]} : vector<128x32xf32> to vector<120x32xf32>
    %230 = tpu.concatenate %228, %229 in 0 : vector<8x32xf32>, vector<120x32xf32> -> vector<128x32xf32>
    %cst_118 = arith.constant 0.000000e+00 : f32
    %231 = vector.shape_cast %227 : vector<128x1xi1> to vector<128x1xi1>
    %232 = vector.broadcast %231 : vector<128x1xi1> to vector<128x32xi1>
    %233 = vector.broadcast %cst_118 : f32 to vector<128x32xf32>
    %234 = arith.select %232, %230, %233 : vector<128x32xi1>, vector<128x32xf32>
    %235 = arith.truncf %234 : vector<128x32xf32> to vector<128x32xbf16>
    %cst_119 = arith.constant dense<0.000000e+00> : vector<128x64xf32>
    %236 = tpu.matmul %235, %219, %cst_119 {dimension_numbers = #tpu.dot_dimension_numbers<[1], [0], [0], [1], [0, 0, 1, 1], [], []>} : vector<128x32xbf16>, vector<32x64xbf16>, vector<128x64xf32> -> vector<128x64xf32>
    %237 = arith.truncf %217 : vector<128x32xf32> to vector<128x32xbf16>
    %cst_120 = arith.constant dense<0.000000e+00> : vector<128x64xf32>
    %238 = tpu.matmul %237, %221, %cst_120 {dimension_numbers = #tpu.dot_dimension_numbers<[1], [0], [0], [1], [0, 0, 1, 1], [], []>} : vector<128x32xbf16>, vector<32x64xbf16>, vector<128x64xf32> -> vector<128x64xf32>
    %239 = arith.addf %236, %238 : vector<128x64xf32>
    %c56_i32 = arith.constant 56 : i32
    %240 = vector.broadcast %c56_i32 : i32 to vector<128x1xi32>
    %241 = arith.cmpi slt, %0, %240 : vector<128x1xi32>
    %242 = vector.extract_strided_slice %217 {offsets = [8, 0], sizes = [120, 32], strides = [1, 1]} : vector<128x32xf32> to vector<120x32xf32>
    %243 = vector.extract_strided_slice %217 {offsets = [0, 0], sizes = [8, 32], strides = [1, 1]} : vector<128x32xf32> to vector<8x32xf32>
    %244 = tpu.concatenate %242, %243 in 0 : vector<120x32xf32>, vector<8x32xf32> -> vector<128x32xf32>
    %cst_121 = arith.constant 0.000000e+00 : f32
    %245 = vector.shape_cast %241 : vector<128x1xi1> to vector<128x1xi1>
    %246 = vector.broadcast %245 : vector<128x1xi1> to vector<128x32xi1>
    %247 = vector.broadcast %cst_121 : f32 to vector<128x32xf32>
    %248 = arith.select %246, %244, %247 : vector<128x32xi1>, vector<128x32xf32>
    %249 = arith.truncf %248 : vector<128x32xf32> to vector<128x32xbf16>
    %cst_122 = arith.constant dense<0.000000e+00> : vector<128x64xf32>
    %250 = tpu.matmul %249, %223, %cst_122 {dimension_numbers = #tpu.dot_dimension_numbers<[1], [0], [0], [1], [0, 0, 1, 1], [], []>} : vector<128x32xbf16>, vector<32x64xbf16>, vector<128x64xf32> -> vector<128x64xf32>
    %251 = arith.addf %239, %250 : vector<128x64xf32>
    %252 = vector.broadcast %225 : vector<1x64xf32> to vector<128x64xf32>
    %253 = arith.addf %251, %252 : vector<128x64xf32>
    %254 = vector.extract_strided_slice %253 {offsets = [0, 0], sizes = [128, 32], strides = [1, 1]} : vector<128x64xf32> to vector<128x32xf32>
    %255 = math.tanh %254 : vector<128x32xf32>
    %256 = vector.extract_strided_slice %253 {offsets = [0, 32], sizes = [128, 32], strides = [1, 1]} : vector<128x64xf32> to vector<128x32xf32>
    %257 = arith.negf %256 : vector<128x32xf32>
    %258 = math.exp %257 : vector<128x32xf32>
    %cst_123 = arith.constant 1.000000e+00 : f32
    %259 = vector.broadcast %cst_123 : f32 to vector<128x32xf32>
    %260 = arith.addf %259, %258 : vector<128x32xf32>
    %261 = arith.divf %259, %260 : vector<128x32xf32>
    %262 = arith.mulf %255, %261 : vector<128x32xf32>
    %263 = arith.truncf %262 : vector<128x32xf32> to vector<128x32xbf16>
    %c3_124 = arith.constant 3 : index
    %c0_125 = arith.constant 0 : index
    %c0_126 = arith.constant 0 : index
    %264 = vector.load %arg6[%c3_124, %c0_125, %c0_126] : memref<8x32x96xbf16, #tpu.memory_space<vmem>>, vector<1x32x96xbf16>
    %265 = vector.shape_cast %264 : vector<1x32x96xbf16> to vector<32x96xbf16>
    %cst_127 = arith.constant dense<0.000000e+00> : vector<128x96xf32>
    %266 = tpu.matmul %263, %265, %cst_127 {dimension_numbers = #tpu.dot_dimension_numbers<[1], [0], [0], [1], [0, 0, 1, 1], [], []>} : vector<128x32xbf16>, vector<32x96xbf16>, vector<128x96xf32> -> vector<128x96xf32>
    %267 = vector.extract_strided_slice %266 {offsets = [0, 0], sizes = [128, 64], strides = [1, 1]} : vector<128x96xf32> to vector<128x64xf32>
    %268 = arith.addf %211, %267 : vector<128x64xf32>
    %269 = vector.extract_strided_slice %266 {offsets = [0, 64], sizes = [128, 32], strides = [1, 1]} : vector<128x96xf32> to vector<128x32xf32>
    %c3_128 = arith.constant 3 : index
    %c0_129 = arith.constant 0 : index
    %c0_130 = arith.constant 0 : index
    %270 = vector.load %arg7[%c3_128, %c0_129, %c0_130] : memref<8x1x32xf32, #tpu.memory_space<vmem>>, vector<1x1x32xf32>
    %271 = vector.shape_cast %270 : vector<1x1x32xf32> to vector<1x32xf32>
    %272 = vector.broadcast %271 : vector<1x32xf32> to vector<128x32xf32>
    %273 = arith.addf %269, %272 : vector<128x32xf32>
    %274 = arith.addf %273, %217 : vector<128x32xf32>
    %c4 = arith.constant 4 : index
    %c0_131 = arith.constant 0 : index
    %c0_132 = arith.constant 0 : index
    %c0_133 = arith.constant 0 : index
    %275 = vector.load %arg4[%c4, %c0_131, %c0_132, %c0_133] : memref<8x3x32x64xbf16, #tpu.memory_space<vmem>>, vector<1x1x32x64xbf16>
    %276 = vector.shape_cast %275 : vector<1x1x32x64xbf16> to vector<32x64xbf16>
    %c4_134 = arith.constant 4 : index
    %c1_135 = arith.constant 1 : index
    %c0_136 = arith.constant 0 : index
    %c0_137 = arith.constant 0 : index
    %277 = vector.load %arg4[%c4_134, %c1_135, %c0_136, %c0_137] : memref<8x3x32x64xbf16, #tpu.memory_space<vmem>>, vector<1x1x32x64xbf16>
    %278 = vector.shape_cast %277 : vector<1x1x32x64xbf16> to vector<32x64xbf16>
    %c4_138 = arith.constant 4 : index
    %c2_139 = arith.constant 2 : index
    %c0_140 = arith.constant 0 : index
    %c0_141 = arith.constant 0 : index
    %279 = vector.load %arg4[%c4_138, %c2_139, %c0_140, %c0_141] : memref<8x3x32x64xbf16, #tpu.memory_space<vmem>>, vector<1x1x32x64xbf16>
    %280 = vector.shape_cast %279 : vector<1x1x32x64xbf16> to vector<32x64xbf16>
    %c4_142 = arith.constant 4 : index
    %c0_143 = arith.constant 0 : index
    %c0_144 = arith.constant 0 : index
    %281 = vector.load %arg5[%c4_142, %c0_143, %c0_144] : memref<8x1x64xf32, #tpu.memory_space<vmem>>, vector<1x1x64xf32>
    %282 = vector.shape_cast %281 : vector<1x1x64xf32> to vector<1x64xf32>
    %c1_i32_145 = arith.constant 1 : i32
    %283 = vector.broadcast %c1_i32_145 : i32 to vector<128x1xi32>
    %284 = arith.cmpi sge, %0, %283 : vector<128x1xi32>
    %285 = vector.extract_strided_slice %274 {offsets = [127, 0], sizes = [1, 32], strides = [1, 1]} : vector<128x32xf32> to vector<1x32xf32>
    %286 = vector.extract_strided_slice %274 {offsets = [0, 0], sizes = [127, 32], strides = [1, 1]} : vector<128x32xf32> to vector<127x32xf32>
    %287 = tpu.concatenate %285, %286 in 0 : vector<1x32xf32>, vector<127x32xf32> -> vector<128x32xf32>
    %cst_146 = arith.constant 0.000000e+00 : f32
    %288 = vector.shape_cast %284 : vector<128x1xi1> to vector<128x1xi1>
    %289 = vector.broadcast %288 : vector<128x1xi1> to vector<128x32xi1>
    %290 = vector.broadcast %cst_146 : f32 to vector<128x32xf32>
    %291 = arith.select %289, %287, %290 : vector<128x32xi1>, vector<128x32xf32>
    %292 = arith.truncf %291 : vector<128x32xf32> to vector<128x32xbf16>
    %cst_147 = arith.constant dense<0.000000e+00> : vector<128x64xf32>
    %293 = tpu.matmul %292, %276, %cst_147 {dimension_numbers = #tpu.dot_dimension_numbers<[1], [0], [0], [1], [0, 0, 1, 1], [], []>} : vector<128x32xbf16>, vector<32x64xbf16>, vector<128x64xf32> -> vector<128x64xf32>
    %294 = arith.truncf %274 : vector<128x32xf32> to vector<128x32xbf16>
    %cst_148 = arith.constant dense<0.000000e+00> : vector<128x64xf32>
    %295 = tpu.matmul %294, %278, %cst_148 {dimension_numbers = #tpu.dot_dimension_numbers<[1], [0], [0], [1], [0, 0, 1, 1], [], []>} : vector<128x32xbf16>, vector<32x64xbf16>, vector<128x64xf32> -> vector<128x64xf32>
    %296 = arith.addf %293, %295 : vector<128x64xf32>
    %c63_i32_149 = arith.constant 63 : i32
    %297 = vector.broadcast %c63_i32_149 : i32 to vector<128x1xi32>
    %298 = arith.cmpi slt, %0, %297 : vector<128x1xi32>
    %299 = vector.extract_strided_slice %274 {offsets = [1, 0], sizes = [127, 32], strides = [1, 1]} : vector<128x32xf32> to vector<127x32xf32>
    %300 = vector.extract_strided_slice %274 {offsets = [0, 0], sizes = [1, 32], strides = [1, 1]} : vector<128x32xf32> to vector<1x32xf32>
    %301 = tpu.concatenate %299, %300 in 0 : vector<127x32xf32>, vector<1x32xf32> -> vector<128x32xf32>
    %cst_150 = arith.constant 0.000000e+00 : f32
    %302 = vector.shape_cast %298 : vector<128x1xi1> to vector<128x1xi1>
    %303 = vector.broadcast %302 : vector<128x1xi1> to vector<128x32xi1>
    %304 = vector.broadcast %cst_150 : f32 to vector<128x32xf32>
    %305 = arith.select %303, %301, %304 : vector<128x32xi1>, vector<128x32xf32>
    %306 = arith.truncf %305 : vector<128x32xf32> to vector<128x32xbf16>
    %cst_151 = arith.constant dense<0.000000e+00> : vector<128x64xf32>
    %307 = tpu.matmul %306, %280, %cst_151 {dimension_numbers = #tpu.dot_dimension_numbers<[1], [0], [0], [1], [0, 0, 1, 1], [], []>} : vector<128x32xbf16>, vector<32x64xbf16>, vector<128x64xf32> -> vector<128x64xf32>
    %308 = arith.addf %296, %307 : vector<128x64xf32>
    %309 = vector.broadcast %282 : vector<1x64xf32> to vector<128x64xf32>
    %310 = arith.addf %308, %309 : vector<128x64xf32>
    %311 = vector.extract_strided_slice %310 {offsets = [0, 0], sizes = [128, 32], strides = [1, 1]} : vector<128x64xf32> to vector<128x32xf32>
    %312 = math.tanh %311 : vector<128x32xf32>
    %313 = vector.extract_strided_slice %310 {offsets = [0, 32], sizes = [128, 32], strides = [1, 1]} : vector<128x64xf32> to vector<128x32xf32>
    %314 = arith.negf %313 : vector<128x32xf32>
    %315 = math.exp %314 : vector<128x32xf32>
    %cst_152 = arith.constant 1.000000e+00 : f32
    %316 = vector.broadcast %cst_152 : f32 to vector<128x32xf32>
    %317 = arith.addf %316, %315 : vector<128x32xf32>
    %318 = arith.divf %316, %317 : vector<128x32xf32>
    %319 = arith.mulf %312, %318 : vector<128x32xf32>
    %320 = arith.truncf %319 : vector<128x32xf32> to vector<128x32xbf16>
    %c4_153 = arith.constant 4 : index
    %c0_154 = arith.constant 0 : index
    %c0_155 = arith.constant 0 : index
    %321 = vector.load %arg6[%c4_153, %c0_154, %c0_155] : memref<8x32x96xbf16, #tpu.memory_space<vmem>>, vector<1x32x96xbf16>
    %322 = vector.shape_cast %321 : vector<1x32x96xbf16> to vector<32x96xbf16>
    %cst_156 = arith.constant dense<0.000000e+00> : vector<128x96xf32>
    %323 = tpu.matmul %320, %322, %cst_156 {dimension_numbers = #tpu.dot_dimension_numbers<[1], [0], [0], [1], [0, 0, 1, 1], [], []>} : vector<128x32xbf16>, vector<32x96xbf16>, vector<128x96xf32> -> vector<128x96xf32>
    %324 = vector.extract_strided_slice %323 {offsets = [0, 0], sizes = [128, 64], strides = [1, 1]} : vector<128x96xf32> to vector<128x64xf32>
    %325 = arith.addf %268, %324 : vector<128x64xf32>
    %326 = vector.extract_strided_slice %323 {offsets = [0, 64], sizes = [128, 32], strides = [1, 1]} : vector<128x96xf32> to vector<128x32xf32>
    %c4_157 = arith.constant 4 : index
    %c0_158 = arith.constant 0 : index
    %c0_159 = arith.constant 0 : index
    %327 = vector.load %arg7[%c4_157, %c0_158, %c0_159] : memref<8x1x32xf32, #tpu.memory_space<vmem>>, vector<1x1x32xf32>
    %328 = vector.shape_cast %327 : vector<1x1x32xf32> to vector<1x32xf32>
    %329 = vector.broadcast %328 : vector<1x32xf32> to vector<128x32xf32>
    %330 = arith.addf %326, %329 : vector<128x32xf32>
    %331 = arith.addf %330, %274 : vector<128x32xf32>
    %c5 = arith.constant 5 : index
    %c0_160 = arith.constant 0 : index
    %c0_161 = arith.constant 0 : index
    %c0_162 = arith.constant 0 : index
    %332 = vector.load %arg4[%c5, %c0_160, %c0_161, %c0_162] : memref<8x3x32x64xbf16, #tpu.memory_space<vmem>>, vector<1x1x32x64xbf16>
    %333 = vector.shape_cast %332 : vector<1x1x32x64xbf16> to vector<32x64xbf16>
    %c5_163 = arith.constant 5 : index
    %c1_164 = arith.constant 1 : index
    %c0_165 = arith.constant 0 : index
    %c0_166 = arith.constant 0 : index
    %334 = vector.load %arg4[%c5_163, %c1_164, %c0_165, %c0_166] : memref<8x3x32x64xbf16, #tpu.memory_space<vmem>>, vector<1x1x32x64xbf16>
    %335 = vector.shape_cast %334 : vector<1x1x32x64xbf16> to vector<32x64xbf16>
    %c5_167 = arith.constant 5 : index
    %c2_168 = arith.constant 2 : index
    %c0_169 = arith.constant 0 : index
    %c0_170 = arith.constant 0 : index
    %336 = vector.load %arg4[%c5_167, %c2_168, %c0_169, %c0_170] : memref<8x3x32x64xbf16, #tpu.memory_space<vmem>>, vector<1x1x32x64xbf16>
    %337 = vector.shape_cast %336 : vector<1x1x32x64xbf16> to vector<32x64xbf16>
    %c5_171 = arith.constant 5 : index
    %c0_172 = arith.constant 0 : index
    %c0_173 = arith.constant 0 : index
    %338 = vector.load %arg5[%c5_171, %c0_172, %c0_173] : memref<8x1x64xf32, #tpu.memory_space<vmem>>, vector<1x1x64xf32>
    %339 = vector.shape_cast %338 : vector<1x1x64xf32> to vector<1x64xf32>
    %c2_i32_174 = arith.constant 2 : i32
    %340 = vector.broadcast %c2_i32_174 : i32 to vector<128x1xi32>
    %341 = arith.cmpi sge, %0, %340 : vector<128x1xi32>
    %342 = vector.extract_strided_slice %331 {offsets = [126, 0], sizes = [2, 32], strides = [1, 1]} : vector<128x32xf32> to vector<2x32xf32>
    %343 = vector.extract_strided_slice %331 {offsets = [0, 0], sizes = [126, 32], strides = [1, 1]} : vector<128x32xf32> to vector<126x32xf32>
    %344 = tpu.concatenate %342, %343 in 0 : vector<2x32xf32>, vector<126x32xf32> -> vector<128x32xf32>
    %cst_175 = arith.constant 0.000000e+00 : f32
    %345 = vector.shape_cast %341 : vector<128x1xi1> to vector<128x1xi1>
    %346 = vector.broadcast %345 : vector<128x1xi1> to vector<128x32xi1>
    %347 = vector.broadcast %cst_175 : f32 to vector<128x32xf32>
    %348 = arith.select %346, %344, %347 : vector<128x32xi1>, vector<128x32xf32>
    %349 = arith.truncf %348 : vector<128x32xf32> to vector<128x32xbf16>
    %cst_176 = arith.constant dense<0.000000e+00> : vector<128x64xf32>
    %350 = tpu.matmul %349, %333, %cst_176 {dimension_numbers = #tpu.dot_dimension_numbers<[1], [0], [0], [1], [0, 0, 1, 1], [], []>} : vector<128x32xbf16>, vector<32x64xbf16>, vector<128x64xf32> -> vector<128x64xf32>
    %351 = arith.truncf %331 : vector<128x32xf32> to vector<128x32xbf16>
    %cst_177 = arith.constant dense<0.000000e+00> : vector<128x64xf32>
    %352 = tpu.matmul %351, %335, %cst_177 {dimension_numbers = #tpu.dot_dimension_numbers<[1], [0], [0], [1], [0, 0, 1, 1], [], []>} : vector<128x32xbf16>, vector<32x64xbf16>, vector<128x64xf32> -> vector<128x64xf32>
    %353 = arith.addf %350, %352 : vector<128x64xf32>
    %c62_i32_178 = arith.constant 62 : i32
    %354 = vector.broadcast %c62_i32_178 : i32 to vector<128x1xi32>
    %355 = arith.cmpi slt, %0, %354 : vector<128x1xi32>
    %356 = vector.extract_strided_slice %331 {offsets = [2, 0], sizes = [126, 32], strides = [1, 1]} : vector<128x32xf32> to vector<126x32xf32>
    %357 = vector.extract_strided_slice %331 {offsets = [0, 0], sizes = [2, 32], strides = [1, 1]} : vector<128x32xf32> to vector<2x32xf32>
    %358 = tpu.concatenate %356, %357 in 0 : vector<126x32xf32>, vector<2x32xf32> -> vector<128x32xf32>
    %cst_179 = arith.constant 0.000000e+00 : f32
    %359 = vector.shape_cast %355 : vector<128x1xi1> to vector<128x1xi1>
    %360 = vector.broadcast %359 : vector<128x1xi1> to vector<128x32xi1>
    %361 = vector.broadcast %cst_179 : f32 to vector<128x32xf32>
    %362 = arith.select %360, %358, %361 : vector<128x32xi1>, vector<128x32xf32>
    %363 = arith.truncf %362 : vector<128x32xf32> to vector<128x32xbf16>
    %cst_180 = arith.constant dense<0.000000e+00> : vector<128x64xf32>
    %364 = tpu.matmul %363, %337, %cst_180 {dimension_numbers = #tpu.dot_dimension_numbers<[1], [0], [0], [1], [0, 0, 1, 1], [], []>} : vector<128x32xbf16>, vector<32x64xbf16>, vector<128x64xf32> -> vector<128x64xf32>
    %365 = arith.addf %353, %364 : vector<128x64xf32>
    %366 = vector.broadcast %339 : vector<1x64xf32> to vector<128x64xf32>
    %367 = arith.addf %365, %366 : vector<128x64xf32>
    %368 = vector.extract_strided_slice %367 {offsets = [0, 0], sizes = [128, 32], strides = [1, 1]} : vector<128x64xf32> to vector<128x32xf32>
    %369 = math.tanh %368 : vector<128x32xf32>
    %370 = vector.extract_strided_slice %367 {offsets = [0, 32], sizes = [128, 32], strides = [1, 1]} : vector<128x64xf32> to vector<128x32xf32>
    %371 = arith.negf %370 : vector<128x32xf32>
    %372 = math.exp %371 : vector<128x32xf32>
    %cst_181 = arith.constant 1.000000e+00 : f32
    %373 = vector.broadcast %cst_181 : f32 to vector<128x32xf32>
    %374 = arith.addf %373, %372 : vector<128x32xf32>
    %375 = arith.divf %373, %374 : vector<128x32xf32>
    %376 = arith.mulf %369, %375 : vector<128x32xf32>
    %377 = arith.truncf %376 : vector<128x32xf32> to vector<128x32xbf16>
    %c5_182 = arith.constant 5 : index
    %c0_183 = arith.constant 0 : index
    %c0_184 = arith.constant 0 : index
    %378 = vector.load %arg6[%c5_182, %c0_183, %c0_184] : memref<8x32x96xbf16, #tpu.memory_space<vmem>>, vector<1x32x96xbf16>
    %379 = vector.shape_cast %378 : vector<1x32x96xbf16> to vector<32x96xbf16>
    %cst_185 = arith.constant dense<0.000000e+00> : vector<128x96xf32>
    %380 = tpu.matmul %377, %379, %cst_185 {dimension_numbers = #tpu.dot_dimension_numbers<[1], [0], [0], [1], [0, 0, 1, 1], [], []>} : vector<128x32xbf16>, vector<32x96xbf16>, vector<128x96xf32> -> vector<128x96xf32>
    %381 = vector.extract_strided_slice %380 {offsets = [0, 0], sizes = [128, 64], strides = [1, 1]} : vector<128x96xf32> to vector<128x64xf32>
    %382 = arith.addf %325, %381 : vector<128x64xf32>
    %383 = vector.extract_strided_slice %380 {offsets = [0, 64], sizes = [128, 32], strides = [1, 1]} : vector<128x96xf32> to vector<128x32xf32>
    %c5_186 = arith.constant 5 : index
    %c0_187 = arith.constant 0 : index
    %c0_188 = arith.constant 0 : index
    %384 = vector.load %arg7[%c5_186, %c0_187, %c0_188] : memref<8x1x32xf32, #tpu.memory_space<vmem>>, vector<1x1x32xf32>
    %385 = vector.shape_cast %384 : vector<1x1x32xf32> to vector<1x32xf32>
    %386 = vector.broadcast %385 : vector<1x32xf32> to vector<128x32xf32>
    %387 = arith.addf %383, %386 : vector<128x32xf32>
    %388 = arith.addf %387, %331 : vector<128x32xf32>
    %c6 = arith.constant 6 : index
    %c0_189 = arith.constant 0 : index
    %c0_190 = arith.constant 0 : index
    %c0_191 = arith.constant 0 : index
    %389 = vector.load %arg4[%c6, %c0_189, %c0_190, %c0_191] : memref<8x3x32x64xbf16, #tpu.memory_space<vmem>>, vector<1x1x32x64xbf16>
    %390 = vector.shape_cast %389 : vector<1x1x32x64xbf16> to vector<32x64xbf16>
    %c6_192 = arith.constant 6 : index
    %c1_193 = arith.constant 1 : index
    %c0_194 = arith.constant 0 : index
    %c0_195 = arith.constant 0 : index
    %391 = vector.load %arg4[%c6_192, %c1_193, %c0_194, %c0_195] : memref<8x3x32x64xbf16, #tpu.memory_space<vmem>>, vector<1x1x32x64xbf16>
    %392 = vector.shape_cast %391 : vector<1x1x32x64xbf16> to vector<32x64xbf16>
    %c6_196 = arith.constant 6 : index
    %c2_197 = arith.constant 2 : index
    %c0_198 = arith.constant 0 : index
    %c0_199 = arith.constant 0 : index
    %393 = vector.load %arg4[%c6_196, %c2_197, %c0_198, %c0_199] : memref<8x3x32x64xbf16, #tpu.memory_space<vmem>>, vector<1x1x32x64xbf16>
    %394 = vector.shape_cast %393 : vector<1x1x32x64xbf16> to vector<32x64xbf16>
    %c6_200 = arith.constant 6 : index
    %c0_201 = arith.constant 0 : index
    %c0_202 = arith.constant 0 : index
    %395 = vector.load %arg5[%c6_200, %c0_201, %c0_202] : memref<8x1x64xf32, #tpu.memory_space<vmem>>, vector<1x1x64xf32>
    %396 = vector.shape_cast %395 : vector<1x1x64xf32> to vector<1x64xf32>
    %c4_i32_203 = arith.constant 4 : i32
    %397 = vector.broadcast %c4_i32_203 : i32 to vector<128x1xi32>
    %398 = arith.cmpi sge, %0, %397 : vector<128x1xi32>
    %399 = vector.extract_strided_slice %388 {offsets = [124, 0], sizes = [4, 32], strides = [1, 1]} : vector<128x32xf32> to vector<4x32xf32>
    %400 = vector.extract_strided_slice %388 {offsets = [0, 0], sizes = [124, 32], strides = [1, 1]} : vector<128x32xf32> to vector<124x32xf32>
    %401 = tpu.concatenate %399, %400 in 0 : vector<4x32xf32>, vector<124x32xf32> -> vector<128x32xf32>
    %cst_204 = arith.constant 0.000000e+00 : f32
    %402 = vector.shape_cast %398 : vector<128x1xi1> to vector<128x1xi1>
    %403 = vector.broadcast %402 : vector<128x1xi1> to vector<128x32xi1>
    %404 = vector.broadcast %cst_204 : f32 to vector<128x32xf32>
    %405 = arith.select %403, %401, %404 : vector<128x32xi1>, vector<128x32xf32>
    %406 = arith.truncf %405 : vector<128x32xf32> to vector<128x32xbf16>
    %cst_205 = arith.constant dense<0.000000e+00> : vector<128x64xf32>
    %407 = tpu.matmul %406, %390, %cst_205 {dimension_numbers = #tpu.dot_dimension_numbers<[1], [0], [0], [1], [0, 0, 1, 1], [], []>} : vector<128x32xbf16>, vector<32x64xbf16>, vector<128x64xf32> -> vector<128x64xf32>
    %408 = arith.truncf %388 : vector<128x32xf32> to vector<128x32xbf16>
    %cst_206 = arith.constant dense<0.000000e+00> : vector<128x64xf32>
    %409 = tpu.matmul %408, %392, %cst_206 {dimension_numbers = #tpu.dot_dimension_numbers<[1], [0], [0], [1], [0, 0, 1, 1], [], []>} : vector<128x32xbf16>, vector<32x64xbf16>, vector<128x64xf32> -> vector<128x64xf32>
    %410 = arith.addf %407, %409 : vector<128x64xf32>
    %c60_i32_207 = arith.constant 60 : i32
    %411 = vector.broadcast %c60_i32_207 : i32 to vector<128x1xi32>
    %412 = arith.cmpi slt, %0, %411 : vector<128x1xi32>
    %413 = vector.extract_strided_slice %388 {offsets = [4, 0], sizes = [124, 32], strides = [1, 1]} : vector<128x32xf32> to vector<124x32xf32>
    %414 = vector.extract_strided_slice %388 {offsets = [0, 0], sizes = [4, 32], strides = [1, 1]} : vector<128x32xf32> to vector<4x32xf32>
    %415 = tpu.concatenate %413, %414 in 0 : vector<124x32xf32>, vector<4x32xf32> -> vector<128x32xf32>
    %cst_208 = arith.constant 0.000000e+00 : f32
    %416 = vector.shape_cast %412 : vector<128x1xi1> to vector<128x1xi1>
    %417 = vector.broadcast %416 : vector<128x1xi1> to vector<128x32xi1>
    %418 = vector.broadcast %cst_208 : f32 to vector<128x32xf32>
    %419 = arith.select %417, %415, %418 : vector<128x32xi1>, vector<128x32xf32>
    %420 = arith.truncf %419 : vector<128x32xf32> to vector<128x32xbf16>
    %cst_209 = arith.constant dense<0.000000e+00> : vector<128x64xf32>
    %421 = tpu.matmul %420, %394, %cst_209 {dimension_numbers = #tpu.dot_dimension_numbers<[1], [0], [0], [1], [0, 0, 1, 1], [], []>} : vector<128x32xbf16>, vector<32x64xbf16>, vector<128x64xf32> -> vector<128x64xf32>
    %422 = arith.addf %410, %421 : vector<128x64xf32>
    %423 = vector.broadcast %396 : vector<1x64xf32> to vector<128x64xf32>
    %424 = arith.addf %422, %423 : vector<128x64xf32>
    %425 = vector.extract_strided_slice %424 {offsets = [0, 0], sizes = [128, 32], strides = [1, 1]} : vector<128x64xf32> to vector<128x32xf32>
    %426 = math.tanh %425 : vector<128x32xf32>
    %427 = vector.extract_strided_slice %424 {offsets = [0, 32], sizes = [128, 32], strides = [1, 1]} : vector<128x64xf32> to vector<128x32xf32>
    %428 = arith.negf %427 : vector<128x32xf32>
    %429 = math.exp %428 : vector<128x32xf32>
    %cst_210 = arith.constant 1.000000e+00 : f32
    %430 = vector.broadcast %cst_210 : f32 to vector<128x32xf32>
    %431 = arith.addf %430, %429 : vector<128x32xf32>
    %432 = arith.divf %430, %431 : vector<128x32xf32>
    %433 = arith.mulf %426, %432 : vector<128x32xf32>
    %434 = arith.truncf %433 : vector<128x32xf32> to vector<128x32xbf16>
    %c6_211 = arith.constant 6 : index
    %c0_212 = arith.constant 0 : index
    %c0_213 = arith.constant 0 : index
    %435 = vector.load %arg6[%c6_211, %c0_212, %c0_213] : memref<8x32x96xbf16, #tpu.memory_space<vmem>>, vector<1x32x96xbf16>
    %436 = vector.shape_cast %435 : vector<1x32x96xbf16> to vector<32x96xbf16>
    %cst_214 = arith.constant dense<0.000000e+00> : vector<128x96xf32>
    %437 = tpu.matmul %434, %436, %cst_214 {dimension_numbers = #tpu.dot_dimension_numbers<[1], [0], [0], [1], [0, 0, 1, 1], [], []>} : vector<128x32xbf16>, vector<32x96xbf16>, vector<128x96xf32> -> vector<128x96xf32>
    %438 = vector.extract_strided_slice %437 {offsets = [0, 0], sizes = [128, 64], strides = [1, 1]} : vector<128x96xf32> to vector<128x64xf32>
    %439 = arith.addf %382, %438 : vector<128x64xf32>
    %440 = vector.extract_strided_slice %437 {offsets = [0, 64], sizes = [128, 32], strides = [1, 1]} : vector<128x96xf32> to vector<128x32xf32>
    %c6_215 = arith.constant 6 : index
    %c0_216 = arith.constant 0 : index
    %c0_217 = arith.constant 0 : index
    %441 = vector.load %arg7[%c6_215, %c0_216, %c0_217] : memref<8x1x32xf32, #tpu.memory_space<vmem>>, vector<1x1x32xf32>
    %442 = vector.shape_cast %441 : vector<1x1x32xf32> to vector<1x32xf32>
    %443 = vector.broadcast %442 : vector<1x32xf32> to vector<128x32xf32>
    %444 = arith.addf %440, %443 : vector<128x32xf32>
    %445 = arith.addf %444, %388 : vector<128x32xf32>
    %c7 = arith.constant 7 : index
    %c0_218 = arith.constant 0 : index
    %c0_219 = arith.constant 0 : index
    %c0_220 = arith.constant 0 : index
    %446 = vector.load %arg4[%c7, %c0_218, %c0_219, %c0_220] : memref<8x3x32x64xbf16, #tpu.memory_space<vmem>>, vector<1x1x32x64xbf16>
    %447 = vector.shape_cast %446 : vector<1x1x32x64xbf16> to vector<32x64xbf16>
    %c7_221 = arith.constant 7 : index
    %c1_222 = arith.constant 1 : index
    %c0_223 = arith.constant 0 : index
    %c0_224 = arith.constant 0 : index
    %448 = vector.load %arg4[%c7_221, %c1_222, %c0_223, %c0_224] : memref<8x3x32x64xbf16, #tpu.memory_space<vmem>>, vector<1x1x32x64xbf16>
    %449 = vector.shape_cast %448 : vector<1x1x32x64xbf16> to vector<32x64xbf16>
    %c7_225 = arith.constant 7 : index
    %c2_226 = arith.constant 2 : index
    %c0_227 = arith.constant 0 : index
    %c0_228 = arith.constant 0 : index
    %450 = vector.load %arg4[%c7_225, %c2_226, %c0_227, %c0_228] : memref<8x3x32x64xbf16, #tpu.memory_space<vmem>>, vector<1x1x32x64xbf16>
    %451 = vector.shape_cast %450 : vector<1x1x32x64xbf16> to vector<32x64xbf16>
    %c7_229 = arith.constant 7 : index
    %c0_230 = arith.constant 0 : index
    %c0_231 = arith.constant 0 : index
    %452 = vector.load %arg5[%c7_229, %c0_230, %c0_231] : memref<8x1x64xf32, #tpu.memory_space<vmem>>, vector<1x1x64xf32>
    %453 = vector.shape_cast %452 : vector<1x1x64xf32> to vector<1x64xf32>
    %c8_i32_232 = arith.constant 8 : i32
    %454 = vector.broadcast %c8_i32_232 : i32 to vector<128x1xi32>
    %455 = arith.cmpi sge, %0, %454 : vector<128x1xi32>
    %456 = vector.extract_strided_slice %445 {offsets = [120, 0], sizes = [8, 32], strides = [1, 1]} : vector<128x32xf32> to vector<8x32xf32>
    %457 = vector.extract_strided_slice %445 {offsets = [0, 0], sizes = [120, 32], strides = [1, 1]} : vector<128x32xf32> to vector<120x32xf32>
    %458 = tpu.concatenate %456, %457 in 0 : vector<8x32xf32>, vector<120x32xf32> -> vector<128x32xf32>
    %cst_233 = arith.constant 0.000000e+00 : f32
    %459 = vector.shape_cast %455 : vector<128x1xi1> to vector<128x1xi1>
    %460 = vector.broadcast %459 : vector<128x1xi1> to vector<128x32xi1>
    %461 = vector.broadcast %cst_233 : f32 to vector<128x32xf32>
    %462 = arith.select %460, %458, %461 : vector<128x32xi1>, vector<128x32xf32>
    %463 = arith.truncf %462 : vector<128x32xf32> to vector<128x32xbf16>
    %cst_234 = arith.constant dense<0.000000e+00> : vector<128x64xf32>
    %464 = tpu.matmul %463, %447, %cst_234 {dimension_numbers = #tpu.dot_dimension_numbers<[1], [0], [0], [1], [0, 0, 1, 1], [], []>} : vector<128x32xbf16>, vector<32x64xbf16>, vector<128x64xf32> -> vector<128x64xf32>
    %465 = arith.truncf %445 : vector<128x32xf32> to vector<128x32xbf16>
    %cst_235 = arith.constant dense<0.000000e+00> : vector<128x64xf32>
    %466 = tpu.matmul %465, %449, %cst_235 {dimension_numbers = #tpu.dot_dimension_numbers<[1], [0], [0], [1], [0, 0, 1, 1], [], []>} : vector<128x32xbf16>, vector<32x64xbf16>, vector<128x64xf32> -> vector<128x64xf32>
    %467 = arith.addf %464, %466 : vector<128x64xf32>
    %c56_i32_236 = arith.constant 56 : i32
    %468 = vector.broadcast %c56_i32_236 : i32 to vector<128x1xi32>
    %469 = arith.cmpi slt, %0, %468 : vector<128x1xi32>
    %470 = vector.extract_strided_slice %445 {offsets = [8, 0], sizes = [120, 32], strides = [1, 1]} : vector<128x32xf32> to vector<120x32xf32>
    %471 = vector.extract_strided_slice %445 {offsets = [0, 0], sizes = [8, 32], strides = [1, 1]} : vector<128x32xf32> to vector<8x32xf32>
    %472 = tpu.concatenate %470, %471 in 0 : vector<120x32xf32>, vector<8x32xf32> -> vector<128x32xf32>
    %cst_237 = arith.constant 0.000000e+00 : f32
    %473 = vector.shape_cast %469 : vector<128x1xi1> to vector<128x1xi1>
    %474 = vector.broadcast %473 : vector<128x1xi1> to vector<128x32xi1>
    %475 = vector.broadcast %cst_237 : f32 to vector<128x32xf32>
    %476 = arith.select %474, %472, %475 : vector<128x32xi1>, vector<128x32xf32>
    %477 = arith.truncf %476 : vector<128x32xf32> to vector<128x32xbf16>
    %cst_238 = arith.constant dense<0.000000e+00> : vector<128x64xf32>
    %478 = tpu.matmul %477, %451, %cst_238 {dimension_numbers = #tpu.dot_dimension_numbers<[1], [0], [0], [1], [0, 0, 1, 1], [], []>} : vector<128x32xbf16>, vector<32x64xbf16>, vector<128x64xf32> -> vector<128x64xf32>
    %479 = arith.addf %467, %478 : vector<128x64xf32>
    %480 = vector.broadcast %453 : vector<1x64xf32> to vector<128x64xf32>
    %481 = arith.addf %479, %480 : vector<128x64xf32>
    %482 = vector.extract_strided_slice %481 {offsets = [0, 0], sizes = [128, 32], strides = [1, 1]} : vector<128x64xf32> to vector<128x32xf32>
    %483 = math.tanh %482 : vector<128x32xf32>
    %484 = vector.extract_strided_slice %481 {offsets = [0, 32], sizes = [128, 32], strides = [1, 1]} : vector<128x64xf32> to vector<128x32xf32>
    %485 = arith.negf %484 : vector<128x32xf32>
    %486 = math.exp %485 : vector<128x32xf32>
    %cst_239 = arith.constant 1.000000e+00 : f32
    %487 = vector.broadcast %cst_239 : f32 to vector<128x32xf32>
    %488 = arith.addf %487, %486 : vector<128x32xf32>
    %489 = arith.divf %487, %488 : vector<128x32xf32>
    %490 = arith.mulf %483, %489 : vector<128x32xf32>
    %491 = arith.truncf %490 : vector<128x32xf32> to vector<128x32xbf16>
    %c7_240 = arith.constant 7 : index
    %c0_241 = arith.constant 0 : index
    %c0_242 = arith.constant 0 : index
    %492 = vector.load %arg6[%c7_240, %c0_241, %c0_242] : memref<8x32x96xbf16, #tpu.memory_space<vmem>>, vector<1x32x96xbf16>
    %493 = vector.shape_cast %492 : vector<1x32x96xbf16> to vector<32x96xbf16>
    %cst_243 = arith.constant dense<0.000000e+00> : vector<128x96xf32>
    %494 = tpu.matmul %491, %493, %cst_243 {dimension_numbers = #tpu.dot_dimension_numbers<[1], [0], [0], [1], [0, 0, 1, 1], [], []>} : vector<128x32xbf16>, vector<32x96xbf16>, vector<128x96xf32> -> vector<128x96xf32>
    %495 = vector.extract_strided_slice %494 {offsets = [0, 0], sizes = [128, 64], strides = [1, 1]} : vector<128x96xf32> to vector<128x64xf32>
    %496 = arith.addf %439, %495 : vector<128x64xf32>
    %c0_244 = arith.constant 0 : index
    %c0_245 = arith.constant 0 : index
    %497 = vector.load %arg8[%c0_244, %c0_245] : memref<1x64xf32, #tpu.memory_space<vmem>>, vector<1x64xf32>
    %498 = vector.broadcast %497 : vector<1x64xf32> to vector<128x64xf32>
    %499 = arith.addf %496, %498 : vector<128x64xf32>
    %c0_246 = arith.constant 0 : index
    %c0_247 = arith.constant 0 : index
    %c0_248 = arith.constant 0 : index
    %500 = vector.load %arg9[%c0_246, %c0_247, %c0_248] : memref<3x64x64xbf16, #tpu.memory_space<vmem>>, vector<1x64x64xbf16>
    %501 = vector.shape_cast %500 : vector<1x64x64xbf16> to vector<64x64xbf16>
    %c1_249 = arith.constant 1 : index
    %c0_250 = arith.constant 0 : index
    %c0_251 = arith.constant 0 : index
    %502 = vector.load %arg9[%c1_249, %c0_250, %c0_251] : memref<3x64x64xbf16, #tpu.memory_space<vmem>>, vector<1x64x64xbf16>
    %503 = vector.shape_cast %502 : vector<1x64x64xbf16> to vector<64x64xbf16>
    %c2_252 = arith.constant 2 : index
    %c0_253 = arith.constant 0 : index
    %c0_254 = arith.constant 0 : index
    %504 = vector.load %arg9[%c2_252, %c0_253, %c0_254] : memref<3x64x64xbf16, #tpu.memory_space<vmem>>, vector<1x64x64xbf16>
    %505 = vector.shape_cast %504 : vector<1x64x64xbf16> to vector<64x64xbf16>
    %c0_255 = arith.constant 0 : index
    %c0_256 = arith.constant 0 : index
    %506 = vector.load %arg10[%c0_255, %c0_256] : memref<1x64xf32, #tpu.memory_space<vmem>>, vector<1x64xf32>
    %c1_i32_257 = arith.constant 1 : i32
    %507 = vector.broadcast %c1_i32_257 : i32 to vector<128x1xi32>
    %508 = arith.cmpi sge, %0, %507 : vector<128x1xi32>
    %509 = vector.extract_strided_slice %499 {offsets = [127, 0], sizes = [1, 64], strides = [1, 1]} : vector<128x64xf32> to vector<1x64xf32>
    %510 = vector.extract_strided_slice %499 {offsets = [0, 0], sizes = [127, 64], strides = [1, 1]} : vector<128x64xf32> to vector<127x64xf32>
    %511 = tpu.concatenate %509, %510 in 0 : vector<1x64xf32>, vector<127x64xf32> -> vector<128x64xf32>
    %cst_258 = arith.constant 0.000000e+00 : f32
    %512 = vector.shape_cast %508 : vector<128x1xi1> to vector<128x1xi1>
    %513 = vector.broadcast %512 : vector<128x1xi1> to vector<128x64xi1>
    %514 = vector.broadcast %cst_258 : f32 to vector<128x64xf32>
    %515 = arith.select %513, %511, %514 : vector<128x64xi1>, vector<128x64xf32>
    %516 = arith.truncf %515 : vector<128x64xf32> to vector<128x64xbf16>
    %cst_259 = arith.constant dense<0.000000e+00> : vector<128x64xf32>
    %517 = tpu.matmul %516, %501, %cst_259 {dimension_numbers = #tpu.dot_dimension_numbers<[1], [0], [0], [1], [0, 0, 1, 1], [], []>} : vector<128x64xbf16>, vector<64x64xbf16>, vector<128x64xf32> -> vector<128x64xf32>
    %518 = arith.truncf %499 : vector<128x64xf32> to vector<128x64xbf16>
    %cst_260 = arith.constant dense<0.000000e+00> : vector<128x64xf32>
    %519 = tpu.matmul %518, %503, %cst_260 {dimension_numbers = #tpu.dot_dimension_numbers<[1], [0], [0], [1], [0, 0, 1, 1], [], []>} : vector<128x64xbf16>, vector<64x64xbf16>, vector<128x64xf32> -> vector<128x64xf32>
    %520 = arith.addf %517, %519 : vector<128x64xf32>
    %c63_i32_261 = arith.constant 63 : i32
    %521 = vector.broadcast %c63_i32_261 : i32 to vector<128x1xi32>
    %522 = arith.cmpi slt, %0, %521 : vector<128x1xi32>
    %523 = vector.extract_strided_slice %499 {offsets = [1, 0], sizes = [127, 64], strides = [1, 1]} : vector<128x64xf32> to vector<127x64xf32>
    %524 = vector.extract_strided_slice %499 {offsets = [0, 0], sizes = [1, 64], strides = [1, 1]} : vector<128x64xf32> to vector<1x64xf32>
    %525 = tpu.concatenate %523, %524 in 0 : vector<127x64xf32>, vector<1x64xf32> -> vector<128x64xf32>
    %cst_262 = arith.constant 0.000000e+00 : f32
    %526 = vector.shape_cast %522 : vector<128x1xi1> to vector<128x1xi1>
    %527 = vector.broadcast %526 : vector<128x1xi1> to vector<128x64xi1>
    %528 = vector.broadcast %cst_262 : f32 to vector<128x64xf32>
    %529 = arith.select %527, %525, %528 : vector<128x64xi1>, vector<128x64xf32>
    %530 = arith.truncf %529 : vector<128x64xf32> to vector<128x64xbf16>
    %cst_263 = arith.constant dense<0.000000e+00> : vector<128x64xf32>
    %531 = tpu.matmul %530, %505, %cst_263 {dimension_numbers = #tpu.dot_dimension_numbers<[1], [0], [0], [1], [0, 0, 1, 1], [], []>} : vector<128x64xbf16>, vector<64x64xbf16>, vector<128x64xf32> -> vector<128x64xf32>
    %532 = arith.addf %520, %531 : vector<128x64xf32>
    %533 = vector.broadcast %506 : vector<1x64xf32> to vector<128x64xf32>
    %534 = arith.addf %532, %533 : vector<128x64xf32>
    %cst_264 = arith.constant 0.000000e+00 : f32
    %535 = vector.broadcast %cst_264 : f32 to vector<128x64xf32>
    %536 = arith.maximumf %534, %535 : vector<128x64xf32>
    %c0_265 = arith.constant 0 : index
    %c0_266 = arith.constant 0 : index
    %c0_267 = arith.constant 0 : index
    %537 = vector.load %arg11[%c0_265, %c0_266, %c0_267] : memref<3x64x12xbf16, #tpu.memory_space<vmem>>, vector<1x64x12xbf16>
    %538 = vector.shape_cast %537 : vector<1x64x12xbf16> to vector<64x12xbf16>
    %c1_268 = arith.constant 1 : index
    %c0_269 = arith.constant 0 : index
    %c0_270 = arith.constant 0 : index
    %539 = vector.load %arg11[%c1_268, %c0_269, %c0_270] : memref<3x64x12xbf16, #tpu.memory_space<vmem>>, vector<1x64x12xbf16>
    %540 = vector.shape_cast %539 : vector<1x64x12xbf16> to vector<64x12xbf16>
    %c2_271 = arith.constant 2 : index
    %c0_272 = arith.constant 0 : index
    %c0_273 = arith.constant 0 : index
    %541 = vector.load %arg11[%c2_271, %c0_272, %c0_273] : memref<3x64x12xbf16, #tpu.memory_space<vmem>>, vector<1x64x12xbf16>
    %542 = vector.shape_cast %541 : vector<1x64x12xbf16> to vector<64x12xbf16>
    %c0_274 = arith.constant 0 : index
    %c0_275 = arith.constant 0 : index
    %543 = vector.load %arg12[%c0_274, %c0_275] : memref<1x12xf32, #tpu.memory_space<vmem>>, vector<1x12xf32>
    %c1_i32_276 = arith.constant 1 : i32
    %544 = vector.broadcast %c1_i32_276 : i32 to vector<128x1xi32>
    %545 = arith.cmpi sge, %0, %544 : vector<128x1xi32>
    %546 = vector.extract_strided_slice %536 {offsets = [127, 0], sizes = [1, 64], strides = [1, 1]} : vector<128x64xf32> to vector<1x64xf32>
    %547 = vector.extract_strided_slice %536 {offsets = [0, 0], sizes = [127, 64], strides = [1, 1]} : vector<128x64xf32> to vector<127x64xf32>
    %548 = tpu.concatenate %546, %547 in 0 : vector<1x64xf32>, vector<127x64xf32> -> vector<128x64xf32>
    %cst_277 = arith.constant 0.000000e+00 : f32
    %549 = vector.shape_cast %545 : vector<128x1xi1> to vector<128x1xi1>
    %550 = vector.broadcast %549 : vector<128x1xi1> to vector<128x64xi1>
    %551 = vector.broadcast %cst_277 : f32 to vector<128x64xf32>
    %552 = arith.select %550, %548, %551 : vector<128x64xi1>, vector<128x64xf32>
    %553 = arith.truncf %552 : vector<128x64xf32> to vector<128x64xbf16>
    %cst_278 = arith.constant dense<0.000000e+00> : vector<128x12xf32>
    %554 = tpu.matmul %553, %538, %cst_278 {dimension_numbers = #tpu.dot_dimension_numbers<[1], [0], [0], [1], [0, 0, 1, 1], [], []>} : vector<128x64xbf16>, vector<64x12xbf16>, vector<128x12xf32> -> vector<128x12xf32>
    %555 = arith.truncf %536 : vector<128x64xf32> to vector<128x64xbf16>
    %cst_279 = arith.constant dense<0.000000e+00> : vector<128x12xf32>
    %556 = tpu.matmul %555, %540, %cst_279 {dimension_numbers = #tpu.dot_dimension_numbers<[1], [0], [0], [1], [0, 0, 1, 1], [], []>} : vector<128x64xbf16>, vector<64x12xbf16>, vector<128x12xf32> -> vector<128x12xf32>
    %557 = arith.addf %554, %556 : vector<128x12xf32>
    %c63_i32_280 = arith.constant 63 : i32
    %558 = vector.broadcast %c63_i32_280 : i32 to vector<128x1xi32>
    %559 = arith.cmpi slt, %0, %558 : vector<128x1xi32>
    %560 = vector.extract_strided_slice %536 {offsets = [1, 0], sizes = [127, 64], strides = [1, 1]} : vector<128x64xf32> to vector<127x64xf32>
    %561 = vector.extract_strided_slice %536 {offsets = [0, 0], sizes = [1, 64], strides = [1, 1]} : vector<128x64xf32> to vector<1x64xf32>
    %562 = tpu.concatenate %560, %561 in 0 : vector<127x64xf32>, vector<1x64xf32> -> vector<128x64xf32>
    %cst_281 = arith.constant 0.000000e+00 : f32
    %563 = vector.shape_cast %559 : vector<128x1xi1> to vector<128x1xi1>
    %564 = vector.broadcast %563 : vector<128x1xi1> to vector<128x64xi1>
    %565 = vector.broadcast %cst_281 : f32 to vector<128x64xf32>
    %566 = arith.select %564, %562, %565 : vector<128x64xi1>, vector<128x64xf32>
    %567 = arith.truncf %566 : vector<128x64xf32> to vector<128x64xbf16>
    %cst_282 = arith.constant dense<0.000000e+00> : vector<128x12xf32>
    %568 = tpu.matmul %567, %542, %cst_282 {dimension_numbers = #tpu.dot_dimension_numbers<[1], [0], [0], [1], [0, 0, 1, 1], [], []>} : vector<128x64xbf16>, vector<64x12xbf16>, vector<128x12xf32> -> vector<128x12xf32>
    %569 = arith.addf %557, %568 : vector<128x12xf32>
    %570 = vector.broadcast %543 : vector<1x12xf32> to vector<128x12xf32>
    %571 = arith.addf %569, %570 : vector<128x12xf32>
    %c0_283 = arith.constant 0 : index
    %c0_284 = arith.constant 0 : index
    %572 = vector.load %arg13[%c0_283, %c0_284] : memref<128x12xf32, #tpu.memory_space<vmem>>, vector<128x12xf32>
    tpu.vector_store %arg13[%c0_283, %c0_284], %571 {strides = array<i32>} : memref<128x12xf32, #tpu.memory_space<vmem>>, vector<128x12xf32>,
    return
  }
}

</mosaic_0001>

<llo_original>
// kernel: tpu_custom_call.1
$region0: #{tpu_custom_call.1}
  #allocation0 [shape = 'u32[]', space=smem, size = 0x4, offset = 0x4, fixed_abs, tag = 'smem constant byte address 0x4 - core index']
  #allocation1 [shape = 'u32[144,128]{1,0:T(1,128)}', space=vmem, size = 0x12000, scoped, tag = 'internal scratch']
  %s0 = inlined_call_operand.vmem [shape: f32[128,16], index: 0, kind: input, shape index: {}]
  %s1 = inlined_call_operand.vmem [shape: s32[128,1], index: 1, kind: input, shape index: {}]
  %s2 = inlined_call_operand.vmem [shape: bf16[3,16,64], index: 2, kind: input, shape index: {}]
  %s3 = inlined_call_operand.hbm [shape: f32[1,64], index: 3, kind: input, shape index: {}]
  %s4 = inlined_call_operand.vmem [shape: bf16[8,3,32,64], index: 4, kind: input, shape index: {}]
  %s5 = inlined_call_operand.hbm [shape: f32[8,1,64], index: 5, kind: input, shape index: {}]
  %s6 = inlined_call_operand.hbm [shape: bf16[8,32,96], index: 6, kind: input, shape index: {}]
  %s7 = inlined_call_operand.hbm [shape: f32[8,1,32], index: 7, kind: input, shape index: {}]
  %s8 = inlined_call_operand.vmem [shape: f32[1,64], index: 8, kind: input, shape index: {}]
  %s9 = inlined_call_operand.hbm [shape: bf16[3,64,64], index: 9, kind: input, shape index: {}]
  %s10 = inlined_call_operand.vmem [shape: f32[1,64], index: 10, kind: input, shape index: {}]
  %s11 = inlined_call_operand.vmem [shape: bf16[3,64,12], index: 11, kind: input, shape index: {}]
  %s12 = inlined_call_operand.vmem [shape: f32[1,12], index: 12, kind: input, shape index: {}]
  %s13 = inlined_call_operand.vmem [shape: f32[128,12], index: 13, kind: output, shape index: {}]
  %s14 = sld [smem:[#allocation0]]
  $region82: #{tpu_custom_call.1} parent=0
    _
  %s16 = ssub.s32 1, %s14
  %s17 = scalar_select 0, %s16, %s14
  $region1: #{tpu_custom_call.1} parent=0
    #allocation2 [shape = 'u8[512]{0}', space=vmem, size = 0x400, scoped, tag = 'input window, operand 3, single buffered']
    #allocation3 [shape = 's32[1]{0}', space=sflag, size = 0x4, scoped, tag = 'scoped memory for tpu_custom_call.1']
    #allocation4 [shape = 'u8[4096]{0}', space=vmem, size = 0x1000, scoped, tag = 'input window, operand 5, single buffered']
    #allocation5 [shape = 's32[1]{0}', space=sflag, size = 0x4, scoped, tag = 'scoped memory for tpu_custom_call.1']
    #allocation6 [shape = 'u8[65536]{0}', space=vmem, size = 0x10000, scoped, tag = 'input window, operand 6, single buffered']
    #allocation7 [shape = 'u8[4096]{0}', space=vmem, size = 0x1000, scoped, tag = 'input window, operand 7, single buffered']
    #allocation8 [shape = 's32[1]{0}', space=sflag, size = 0x4, scoped, tag = 'scoped memory for tpu_custom_call.1']
    #allocation9 [shape = 'u8[49152]{0}', space=vmem, size = 0xc000, scoped, tag = 'input window, operand 9, single buffered']
    %18 = vsyncpa [#allocation3], 0
    %19 = vsyncpa [#allocation5], 0
    %20 = vsyncpa [#allocation8], 0
    // Predicated region
    $region2: #{tpu_custom_call.1} parent=1 // pred_check
      _
    $region3: #{tpu_custom_call.1} parent=1 // pred_check_branch
      %22 = sbr.rel (0) target = $region5
    $region4: #{tpu_custom_call.1} parent=1 // pred_region
      _
    $region5: #{tpu_custom_call.1} parent=1 // pred_fallthru
      _
    // Predicated region
    $region6: #{tpu_custom_call.1} parent=1 // pred_check
      _
    $region7: #{tpu_custom_call.1} parent=1 // pred_check_branch
      %24 = sbr.rel (0) target = $region9
    $region8: #{tpu_custom_call.1} parent=1 // pred_region
      _
    $region9: #{tpu_custom_call.1} parent=1 // pred_fallthru
      _
    // Predicated region
    $region10: #{tpu_custom_call.1} parent=1 // pred_check
      _
    $region11: #{tpu_custom_call.1} parent=1 // pred_check_branch
      %26 = sbr.rel (0) target = $region13
    $region12: #{tpu_custom_call.1} parent=1 // pred_region
      _
    $region13: #{tpu_custom_call.1} parent=1 // pred_fallthru
      _
    // Predicated region
    $region14: #{tpu_custom_call.1} parent=1 // pred_check
      _
    $region15: #{tpu_custom_call.1} parent=1 // pred_check_branch
      %28 = sbr.rel (0) target = $region17
    $region16: #{tpu_custom_call.1} parent=1 // pred_region
      %s30 = ssub.s32 16, 16
      %31 = vsyncadd [#allocation3], %s30
      %s33 = sshll.u32 [#allocation2], 4
      %s34 = int_to_ptr.vmem [resolvable:$true] %s33
      %36 = dma.hbm_to_vmem [thread:$0]  %s3, 16, %s34, [#allocation3]
    $region17: #{tpu_custom_call.1} parent=1 // pred_fallthru
      _
    // Predicated region
    $region18: #{tpu_custom_call.1} parent=1 // pred_check
      _
    $region19: #{tpu_custom_call.1} parent=1 // pred_check_branch
      %38 = sbr.rel (0) target = $region21
    $region20: #{tpu_custom_call.1} parent=1 // pred_region
      _
    $region21: #{tpu_custom_call.1} parent=1 // pred_fallthru
      _
    // Predicated region
    $region22: #{tpu_custom_call.1} parent=1 // pred_check
      _
    $region23: #{tpu_custom_call.1} parent=1 // pred_check_branch
      %40 = sbr.rel (0) target = $region25
    $region24: #{tpu_custom_call.1} parent=1 // pred_region
      %s42 = ssub.s32 128, 128
      %43 = vsyncadd [#allocation5], %s42
      %s44 = sshll.u32 [#allocation4], 4
      %s45 = int_to_ptr.vmem [resolvable:$true] %s44
      %50 = dma.hbm_to_vmem [thread:$0]  %s5, 128, %s45, [#allocation5], 16, 16, 1
    $region25: #{tpu_custom_call.1} parent=1 // pred_fallthru
      _
    // Predicated region
    $region26: #{tpu_custom_call.1} parent=1 // pred_check
      _
    $region27: #{tpu_custom_call.1} parent=1 // pred_check_branch
      %52 = sbr.rel (0) target = $region29
    $region28: #{tpu_custom_call.1} parent=1 // pred_region
      %s54 = ssub.s32 2048, 2048
      %55 = vsyncadd [#allocation5], %s54
      %s56 = sshll.u32 [#allocation6], 4
      %s57 = int_to_ptr.vmem [resolvable:$true] %s56
      %62 = dma.hbm_to_vmem [thread:$0]  %s6, 2048, %s57, [#allocation5], 64, 64, 4
    $region29: #{tpu_custom_call.1} parent=1 // pred_fallthru
      _
    // Predicated region
    $region30: #{tpu_custom_call.1} parent=1 // pred_check
      _
    $region31: #{tpu_custom_call.1} parent=1 // pred_check_branch
      %64 = sbr.rel (0) target = $region33
    $region32: #{tpu_custom_call.1} parent=1 // pred_region
      %s66 = ssub.s32 128, 128
      %67 = vsyncadd [#allocation8], %s66
      %s68 = sshll.u32 [#allocation7], 4
      %s69 = int_to_ptr.vmem [resolvable:$true] %s68
      %74 = dma.hbm_to_vmem [thread:$0]  %s7, 128, %s69, [#allocation8], 16, 16, 1
    $region33: #{tpu_custom_call.1} parent=1 // pred_fallthru
      _
    // Predicated region
    $region34: #{tpu_custom_call.1} parent=1 // pred_check
      _
    $region35: #{tpu_custom_call.1} parent=1 // pred_check_branch
      %76 = sbr.rel (0) target = $region37
    $region36: #{tpu_custom_call.1} parent=1 // pred_region
      _
    $region37: #{tpu_custom_call.1} parent=1 // pred_fallthru
      _
    // Predicated region
    $region38: #{tpu_custom_call.1} parent=1 // pred_check
      _
    $region39: #{tpu_custom_call.1} parent=1 // pred_check_branch
      %78 = sbr.rel (0) target = $region41
    $region40: #{tpu_custom_call.1} parent=1 // pred_region
      %s80 = ssub.s32 1536, 1536
      %81 = vsyncadd [#allocation8], %s80
      %s82 = sshll.u32 [#allocation9], 4
      %s83 = int_to_ptr.vmem [resolvable:$true] %s82
      %88 = dma.hbm_to_vmem [thread:$0]  %s9, 1536, %s83, [#allocation8], 64, 64, 4
    $region41: #{tpu_custom_call.1} parent=1 // pred_fallthru
      _
    // Predicated region
    $region42: #{tpu_custom_call.1} parent=1 // pred_check
      _
    $region43: #{tpu_custom_call.1} parent=1 // pred_check_branch
      %90 = sbr.rel (0) target = $region45
    $region44: #{tpu_custom_call.1} parent=1 // pred_region
      _
    $region45: #{tpu_custom_call.1} parent=1 // pred_fallthru
      _
    // Predicated region
    $region46: #{tpu_custom_call.1} parent=1 // pred_check
      _
    $region47: #{tpu_custom_call.1} parent=1 // pred_check_branch
      %92 = sbr.rel (0) target = $region49
    $region48: #{tpu_custom_call.1} parent=1 // pred_region
      _
    $region49: #{tpu_custom_call.1} parent=1 // pred_fallthru
      _
    // Predicated region
    $region50: #{tpu_custom_call.1} parent=1 // pred_check
      _
    $region51: #{tpu_custom_call.1} parent=1 // pred_check_branch
      %94 = sbr.rel (0) target = $region53
    $region52: #{tpu_custom_call.1} parent=1 // pred_region
      _
    $region53: #{tpu_custom_call.1} parent=1 // pred_fallthru
      _
    // Predicated region
    $region54: #{tpu_custom_call.1} parent=1 // pred_check
      _
    $region55: #{tpu_custom_call.1} parent=1 // pred_check_branch
      %96 = sbr.rel (0) target = $region57
    $region56: #{tpu_custom_call.1} parent=1 // pred_region
      %97 = dma.done [#allocation3], 16
    $region57: #{tpu_custom_call.1} parent=1 // pred_fallthru
      _
    // Predicated region
    $region58: #{tpu_custom_call.1} parent=1 // pred_check
      _
    $region59: #{tpu_custom_call.1} parent=1 // pred_check_branch
      %99 = sbr.rel (0) target = $region61
    $region60: #{tpu_custom_call.1} parent=1 // pred_region
      %100 = dma.done [#allocation5], 128
    $region61: #{tpu_custom_call.1} parent=1 // pred_fallthru
      _
    // Predicated region
    $region62: #{tpu_custom_call.1} parent=1 // pred_check
      _
    $region63: #{tpu_custom_call.1} parent=1 // pred_check_branch
      %102 = sbr.rel (0) target = $region65
    $region64: #{tpu_custom_call.1} parent=1 // pred_region
      %103 = dma.done [#allocation5], 2048
    $region65: #{tpu_custom_call.1} parent=1 // pred_fallthru
      _
    // Predicated region
    $region66: #{tpu_custom_call.1} parent=1 // pred_check
      _
    $region67: #{tpu_custom_call.1} parent=1 // pred_check_branch
      %105 = sbr.rel (0) target = $region69
    $region68: #{tpu_custom_call.1} parent=1 // pred_region
      %106 = dma.done [#allocation8], 128
    $region69: #{tpu_custom_call.1} parent=1 // pred_fallthru
      _
    // Predicated region
    $region70: #{tpu_custom_call.1} parent=1 // pred_check
      _
    $region71: #{tpu_custom_call.1} parent=1 // pred_check_branch
      %108 = sbr.rel (0) target = $region73
    $region72: #{tpu_custom_call.1} parent=1 // pred_region
      %109 = dma.done [#allocation8], 1536
    $region73: #{tpu_custom_call.1} parent=1 // pred_fallthru
      _
    %v111 = vld [vmem:[%s1] sm:$0xff]
    %v112 = vld [vmem:[%s1 + $0x8] sm:$0xff]
    %v113 = vld [vmem:[%s1 + $0x10] sm:$0xff]
    %v114 = vld [vmem:[%s1 + $0x18] sm:$0xff]
    %v115 = vld [vmem:[%s1 + $0x20] sm:$0xff]
    %v116 = vld [vmem:[%s1 + $0x28] sm:$0xff]
    %v117 = vld [vmem:[%s1 + $0x30] sm:$0xff]
    %v118 = vld [vmem:[%s1 + $0x38] sm:$0xff]
    %v119 = vld [vmem:[%s1 + $0x40] sm:$0xff]
    %v120 = vld [vmem:[%s1 + $0x48] sm:$0xff]
    %v121 = vld [vmem:[%s1 + $0x50] sm:$0xff]
    %v122 = vld [vmem:[%s1 + $0x58] sm:$0xff]
    %v123 = vld [vmem:[%s1 + $0x60] sm:$0xff]
    %v124 = vld [vmem:[%s1 + $0x68] sm:$0xff]
    %v125 = vld [vmem:[%s1 + $0x70] sm:$0xff]
    %v126 = vld [vmem:[%s1 + $0x78] sm:$0xff]
    %v127 = vld [vmem:[%s0] sm:$0xff]
    %v128 = vld [vmem:[%s0 + $0x8] sm:$0xff]
    %v129 = vld [vmem:[%s0 + $0x10] sm:$0xff]
    %v130 = vld [vmem:[%s0 + $0x18] sm:$0xff]
    %v131 = vld [vmem:[%s0 + $0x20] sm:$0xff]
    %v132 = vld [vmem:[%s0 + $0x28] sm:$0xff]
    %v133 = vld [vmem:[%s0 + $0x30] sm:$0xff]
    %v134 = vld [vmem:[%s0 + $0x38] sm:$0xff]
    %v135 = vld [vmem:[%s0 + $0x40] sm:$0xff]
    %v136 = vld [vmem:[%s0 + $0x48] sm:$0xff]
    %v137 = vld [vmem:[%s0 + $0x50] sm:$0xff]
    %v138 = vld [vmem:[%s0 + $0x58] sm:$0xff]
    %v139 = vld [vmem:[%s0 + $0x60] sm:$0xff]
    %v140 = vld [vmem:[%s0 + $0x68] sm:$0xff]
    %v141 = vld [vmem:[%s0 + $0x70] sm:$0xff]
    %v142 = vld [vmem:[%s0 + $0x78] sm:$0xff]
    %v143 = vld [vmem:[%s2] sm:$0xf]
    %v144 = vld [vmem:[%s2 + $0x4] sm:$0xf]
    %s145 = scalar_lea.vmem %s2, 8
    %v146 = vld [vmem:[%s145] sm:$0xf]
    %v147 = vld [vmem:[%s145 + $0x4] sm:$0xf]
    %s148 = scalar_lea.vmem %s2, 16
    %v149 = vld [vmem:[%s148] sm:$0xf]
    %v150 = vld [vmem:[%s148 + $0x4] sm:$0xf]
    %v151 = vld [vmem:[#allocation2] sm:$0x1]
    %vm152 = vcmp.ge.s32.totalorder %v111, 1
    %vm153 = vcmp.ge.s32.totalorder %v112, 1
    %vm154 = vcmp.ge.s32.totalorder %v113, 1
    %vm155 = vcmp.ge.s32.totalorder %v114, 1
    %vm156 = vcmp.ge.s32.totalorder %v115, 1
    %vm157 = vcmp.ge.s32.totalorder %v116, 1
    %vm158 = vcmp.ge.s32.totalorder %v117, 1
    %vm159 = vcmp.ge.s32.totalorder %v118, 1
    %vm160 = vcmp.ge.s32.totalorder %v119, 1
    %vm161 = vcmp.ge.s32.totalorder %v120, 1
    %vm162 = vcmp.ge.s32.totalorder %v121, 1
    %vm163 = vcmp.ge.s32.totalorder %v122, 1
    %vm164 = vcmp.ge.s32.totalorder %v123, 1
    %vm165 = vcmp.ge.s32.totalorder %v124, 1
    %vm166 = vcmp.ge.s32.totalorder %v125, 1
    %vm167 = vcmp.ge.s32.totalorder %v126, 1
    %v169 = vrot.slane %v142, 7
    %vm186 = vcmask 1040384
    %v187 = vrot.slane %v127, 7
    %v188 = vrot.slane %v128, 7
    %v189 = vsel %vm186, %v187, %v188
    %v190 = vrot.slane %v129, 7
    %v191 = vsel %vm186, %v188, %v190
    %v192 = vrot.slane %v130, 7
    %v193 = vsel %vm186, %v190, %v192
    %v194 = vrot.slane %v131, 7
    %v195 = vsel %vm186, %v192, %v194
    %v196 = vrot.slane %v132, 7
    %v197 = vsel %vm186, %v194, %v196
    %v198 = vrot.slane %v133, 7
    %v199 = vsel %vm186, %v196, %v198
    %v200 = vrot.slane %v134, 7
    %v201 = vsel %vm186, %v198, %v200
    %v202 = vrot.slane %v135, 7
    %v203 = vsel %vm186, %v200, %v202
    %v204 = vrot.slane %v136, 7
    %v205 = vsel %vm186, %v202, %v204
    %v206 = vrot.slane %v137, 7
    %v207 = vsel %vm186, %v204, %v206
    %v208 = vrot.slane %v138, 7
    %v209 = vsel %vm186, %v206, %v208
    %v210 = vrot.slane %v139, 7
    %v211 = vsel %vm186, %v208, %v210
    %v212 = vrot.slane %v140, 7
    %v213 = vsel %vm186, %v210, %v212
    %v214 = vrot.slane %v141, 7
    %v215 = vsel %vm186, %v212, %v214
    %v216 = vsel %vm186, %v214, %v169
    %v233 = vsel %vm186, %v169, %v187
    %v234 = vsel %vm152, 1, 0
    %v235 = vsel %vm153, 1, 0
    %v236 = vsel %vm154, 1, 0
    %v237 = vsel %vm155, 1, 0
    %v238 = vsel %vm156, 1, 0
    %v239 = vsel %vm157, 1, 0
    %v240 = vsel %vm158, 1, 0
    %v241 = vsel %vm159, 1, 0
    %v242 = vsel %vm160, 1, 0
    %v243 = vsel %vm161, 1, 0
    %v244 = vsel %vm162, 1, 0
    %v245 = vsel %vm163, 1, 0
    %v246 = vsel %vm164, 1, 0
    %v247 = vsel %vm165, 1, 0
    %v248 = vsel %vm166, 1, 0
    %v249 = vsel %vm167, 1, 0
    %250 = vset.pattern.permute.xlu0 0
    %251 = vperm.xlu0 %250, %v234
    %v252 = vpop.permute.xlu0 %251
    %253 = vset.pattern.permute.xlu0 0
    %254 = vperm.xlu0 %253, %v235
    %v255 = vpop.permute.xlu0 %254
    %256 = vset.pattern.permute.xlu0 0
    %257 = vperm.xlu0 %256, %v236
    %v258 = vpop.permute.xlu0 %257
    %259 = vset.pattern.permute.xlu0 0
    %260 = vperm.xlu0 %259, %v237
    %v261 = vpop.permute.xlu0 %260
    %262 = vset.pattern.permute.xlu0 0
    %263 = vperm.xlu0 %262, %v238
    %v264 = vpop.permute.xlu0 %263
    %265 = vset.pattern.permute.xlu0 0
    %266 = vperm.xlu0 %265, %v239
    %v267 = vpop.permute.xlu0 %266
    %268 = vset.pattern.permute.xlu0 0
    %269 = vperm.xlu0 %268, %v240
    %v270 = vpop.permute.xlu0 %269
    %271 = vset.pattern.permute.xlu0 0
    %272 = vperm.xlu0 %271, %v241
    %v273 = vpop.permute.xlu0 %272
    %274 = vset.pattern.permute.xlu0 0
    %275 = vperm.xlu0 %274, %v242
    %v276 = vpop.permute.xlu0 %275
    %277 = vset.pattern.permute.xlu0 0
    %278 = vperm.xlu0 %277, %v243
    %v279 = vpop.permute.xlu0 %278
    %280 = vset.pattern.permute.xlu0 0
    %281 = vperm.xlu0 %280, %v244
    %v282 = vpop.permute.xlu0 %281
    %283 = vset.pattern.permute.xlu0 0
    %284 = vperm.xlu0 %283, %v245
    %v285 = vpop.permute.xlu0 %284
    %286 = vset.pattern.permute.xlu0 0
    %287 = vperm.xlu0 %286, %v246
    %v288 = vpop.permute.xlu0 %287
    %289 = vset.pattern.permute.xlu0 0
    %290 = vperm.xlu0 %289, %v247
    %v291 = vpop.permute.xlu0 %290
    %292 = vset.pattern.permute.xlu0 0
    %293 = vperm.xlu0 %292, %v248
    %v294 = vpop.permute.xlu0 %293
    %295 = vset.pattern.permute.xlu0 0
    %296 = vperm.xlu0 %295, %v249
    %v297 = vpop.permute.xlu0 %296
    %vm298 = vcmp.eq.s32.totalorder %v252, 1
    %vm299 = vcmp.eq.s32.totalorder %v255, 1
    %vm300 = vcmp.eq.s32.totalorder %v258, 1
    %vm301 = vcmp.eq.s32.totalorder %v261, 1
    %vm302 = vcmp.eq.s32.totalorder %v264, 1
    %vm303 = vcmp.eq.s32.totalorder %v267, 1
    %vm304 = vcmp.eq.s32.totalorder %v270, 1
    %vm305 = vcmp.eq.s32.totalorder %v273, 1
    %vm306 = vcmp.eq.s32.totalorder %v276, 1
    %vm307 = vcmp.eq.s32.totalorder %v279, 1
    %vm308 = vcmp.eq.s32.totalorder %v282, 1
    %vm309 = vcmp.eq.s32.totalorder %v285, 1
    %vm310 = vcmp.eq.s32.totalorder %v288, 1
    %vm311 = vcmp.eq.s32.totalorder %v291, 1
    %vm312 = vcmp.eq.s32.totalorder %v294, 1
    %vm313 = vcmp.eq.s32.totalorder %v297, 1
    %v314 = vsel %vm298, %v233, 0.0
    %v315 = vsel %vm299, %v189, 0.0
    %v316 = vsel %vm300, %v191, 0.0
    %v317 = vsel %vm301, %v193, 0.0
    %v318 = vsel %vm302, %v195, 0.0
    %v319 = vsel %vm303, %v197, 0.0
    %v320 = vsel %vm304, %v199, 0.0
    %v321 = vsel %vm305, %v201, 0.0
    %v322 = vsel %vm306, %v203, 0.0
    %v323 = vsel %vm307, %v205, 0.0
    %v324 = vsel %vm308, %v207, 0.0
    %v325 = vsel %vm309, %v209, 0.0
    %v326 = vsel %vm310, %v211, 0.0
    %v327 = vsel %vm311, %v213, 0.0
    %v328 = vsel %vm312, %v215, 0.0
    %v329 = vsel %vm313, %v216, 0.0
    %v330 = vpack.c.bf16 %v315, %v314
    %v331 = vpack.c.bf16 %v317, %v316
    %v332 = vpack.c.bf16 %v319, %v318
    %v333 = vpack.c.bf16 %v321, %v320
    %v334 = vpack.c.bf16 %v323, %v322
    %v335 = vpack.c.bf16 %v325, %v324
    %v336 = vpack.c.bf16 %v327, %v326
    %v337 = vpack.c.bf16 %v329, %v328
    %v338 = vpack.c.bf16 %v128, %v127
    %v339 = vpack.c.bf16 %v130, %v129
    %v340 = vpack.c.bf16 %v132, %v131
    %v341 = vpack.c.bf16 %v134, %v133
    %v342 = vpack.c.bf16 %v136, %v135
    %v343 = vpack.c.bf16 %v138, %v137
    %v344 = vpack.c.bf16 %v140, %v139
    %v345 = vpack.c.bf16 %v142, %v141
    %v348 = vunpack.c.l.b16 %v146
    %v349 = vunpack.c.l.b16 %v147
    %v350 = vpack.c.b16 %v349, %v348
    %vm352 = vcmask 130048
    %v354 = vsel %vm352, %v338, 0
    %v357 = vsel %vm352, %v339, 0
    %v360 = vsel %vm352, %v340, 0
    %v363 = vsel %vm352, %v341, 0
    %v366 = vsel %vm352, %v342, 0
    %v369 = vsel %vm352, %v343, 0
    %v372 = vsel %vm352, %v344, 0
    %v375 = vsel %vm352, %v345, 0
    %377 = vmatprep.subr.bf16.mxu0 0
    %378 = vmatpush1.bf16.msra.mxu0 %v350
    %379 = vmatprep.subr.bf16.mxu0 0
    %380 = vmatpush1.bf16.msra.mxu0 0
    %381 = vmatprep.subr.bf16.mxu0 0
    %382 = vmatpush1.bf16.msra.mxu0 0
    %383 = vmatprep.subr.bf16.mxu0 0
    %384 = vmatpush1.bf16.msra.mxu0 0
    %385 = vmatprep.subr.bf16.mxu0 0
    %386 = vmatpush1.bf16.msra.mxu0 0
    %387 = vmatprep.subr.bf16.mxu0 0
    %388 = vmatpush1.bf16.msra.mxu0 0
    %389 = vmatprep.subr.bf16.mxu0 0
    %390 = vmatpush1.bf16.msra.mxu0 0
    %391 = vmatprep.subr.bf16.mxu0 0
    %392 = vmatpush1.bf16.msra.mxu0 0
    %393 = vmatprep.subr.bf16.mxu0 0
    %394 = vmatpush1.bf16.msra.mxu0 0
    %395 = vmatprep.subr.bf16.mxu0 0
    %396 = vmatpush1.bf16.msra.mxu0 0
    %397 = vmatprep.subr.bf16.mxu0 0
    %398 = vmatpush1.bf16.msra.mxu0 0
    %399 = vmatprep.subr.bf16.mxu0 0
    %400 = vmatpush1.bf16.msra.mxu0 0
    %401 = vmatprep.subr.bf16.mxu0 0
    %402 = vmatpush1.bf16.msra.mxu0 0
    %403 = vmatprep.subr.bf16.mxu0 0
    %404 = vmatpush1.bf16.msra.mxu0 0
    %405 = vmatprep.subr.bf16.mxu0 0
    %406 = vmatpush1.bf16.msra.mxu0 0
    %407 = vmatprep.subr.bf16.mxu0 0
    %408 = vmatpush1.bf16.msra.mxu0 0
    %409 = vmatprep.mubr.bf16.mxu0 0
    %410 = vmatmul.mubr.bf16.gmra.mrb[0].mxu0 %v354
    %v411 = vpop.f32.mrb[0].mxu0
    %v412 = vadd.f32 0.0, %v411
    %v413 = vpop.f32.mrb[0].mxu0
    %v414 = vpop.f32.mrb[0].mxu0
    %v415 = vadd.f32 0.0, %v414
    %v416 = vpop.f32.mrb[0].mxu0
    %417 = vmatprep.mubr.bf16.mxu0 0
    %418 = vmatmul.mubr.bf16.gmra.mrb[0].mxu0 %v357
    %v419 = vpop.f32.mrb[0].mxu0
    %v420 = vadd.f32 0.0, %v419
    %v421 = vpop.f32.mrb[0].mxu0
    %v422 = vpop.f32.mrb[0].mxu0
    %v423 = vadd.f32 0.0, %v422
    %v424 = vpop.f32.mrb[0].mxu0
    %425 = vmatprep.mubr.bf16.mxu0 0
    %426 = vmatmul.mubr.bf16.gmra.mrb[0].mxu0 %v360
    %v427 = vpop.f32.mrb[0].mxu0
    %v428 = vadd.f32 0.0, %v427
    %v429 = vpop.f32.mrb[0].mxu0
    %v430 = vpop.f32.mrb[0].mxu0
    %v431 = vadd.f32 0.0, %v430
    %v432 = vpop.f32.mrb[0].mxu0
    %433 = vmatprep.mubr.bf16.mxu0 0
    %434 = vmatmul.mubr.bf16.gmra.mrb[0].mxu0 %v363
    %v435 = vpop.f32.mrb[0].mxu0
    %v436 = vadd.f32 0.0, %v435
    %v437 = vpop.f32.mrb[0].mxu0
    %v438 = vpop.f32.mrb[0].mxu0
    %v439 = vadd.f32 0.0, %v438
    %v440 = vpop.f32.mrb[0].mxu0
    %441 = vmatprep.mubr.bf16.mxu0 0
    %442 = vmatmul.mubr.bf16.gmra.mrb[0].mxu0 %v366
    %v443 = vpop.f32.mrb[0].mxu0
    %v444 = vadd.f32 0.0, %v443
    %v445 = vpop.f32.mrb[0].mxu0
    %v446 = vpop.f32.mrb[0].mxu0
    %v447 = vadd.f32 0.0, %v446
    %v448 = vpop.f32.mrb[0].mxu0
    %449 = vmatprep.mubr.bf16.mxu0 0
    %450 = vmatmul.mubr.bf16.gmra.mrb[0].mxu0 %v369
    %v451 = vpop.f32.mrb[0].mxu0
    %v452 = vadd.f32 0.0, %v451
    %v453 = vpop.f32.mrb[0].mxu0
    %v454 = vpop.f32.mrb[0].mxu0
    %v455 = vadd.f32 0.0, %v454
    %v456 = vpop.f32.mrb[0].mxu0
    %457 = vmatprep.mubr.bf16.mxu0 0
    %458 = vmatmul.mubr.bf16.gmra.mrb[0].mxu0 %v372
    %v459 = vpop.f32.mrb[0].mxu0
    %v460 = vadd.f32 0.0, %v459
    %v461 = vpop.f32.mrb[0].mxu0
    %v462 = vpop.f32.mrb[0].mxu0
    %v463 = vadd.f32 0.0, %v462
    %v464 = vpop.f32.mrb[0].mxu0
    %465 = vmatprep.mubr.bf16.mxu0 0
    %466 = vmatmul.mubr.bf16.gmra.mrb[0].mxu0 %v375
    %v467 = vpop.f32.mrb[0].mxu0
    %v468 = vadd.f32 0.0, %v467
    %v469 = vpop.f32.mrb[0].mxu0
    %v470 = vpop.f32.mrb[0].mxu0
    %v471 = vadd.f32 0.0, %v470
    %v472 = vpop.f32.mrb[0].mxu0
    %473 = vdwg.mxu0
    %v476 = vunpack.c.l.b16 %v143
    %v477 = vunpack.c.l.b16 %v144
    %v478 = vpack.c.b16 %v477, %v476
    %v481 = vsel %vm352, %v330, 0
    %v484 = vsel %vm352, %v331, 0
    %v487 = vsel %vm352, %v332, 0
    %v490 = vsel %vm352, %v333, 0
    %v493 = vsel %vm352, %v334, 0
    %v496 = vsel %vm352, %v335, 0
    %v499 = vsel %vm352, %v336, 0
    %v502 = vsel %vm352, %v337, 0
    %504 = vmatprep.subr.bf16.mxu0 0
    %505 = vmatpush1.bf16.msra.mxu0 %v478
    %506 = vmatprep.subr.bf16.mxu0 0
    %507 = vmatpush1.bf16.msra.mxu0 0
    %508 = vmatprep.subr.bf16.mxu0 0
    %509 = vmatpush1.bf16.msra.mxu0 0
    %510 = vmatprep.subr.bf16.mxu0 0
    %511 = vmatpush1.bf16.msra.mxu0 0
    %512 = vmatprep.subr.bf16.mxu0 0
    %513 = vmatpush1.bf16.msra.mxu0 0
    %514 = vmatprep.subr.bf16.mxu0 0
    %515 = vmatpush1.bf16.msra.mxu0 0
    %516 = vmatprep.subr.bf16.mxu0 0
    %517 = vmatpush1.bf16.msra.mxu0 0
    %518 = vmatprep.subr.bf16.mxu0 0
    %519 = vmatpush1.bf16.msra.mxu0 0
    %520 = vmatprep.subr.bf16.mxu0 0
    %521 = vmatpush1.bf16.msra.mxu0 0
    %522 = vmatprep.subr.bf16.mxu0 0
    %523 = vmatpush1.bf16.msra.mxu0 0
    %524 = vmatprep.subr.bf16.mxu0 0
    %525 = vmatpush1.bf16.msra.mxu0 0
    %526 = vmatprep.subr.bf16.mxu0 0
    %527 = vmatpush1.bf16.msra.mxu0 0
    %528 = vmatprep.subr.bf16.mxu0 0
    %529 = vmatpush1.bf16.msra.mxu0 0
    %530 = vmatprep.subr.bf16.mxu0 0
    %531 = vmatpush1.bf16.msra.mxu0 0
    %532 = vmatprep.subr.bf16.mxu0 0
    %533 = vmatpush1.bf16.msra.mxu0 0
    %534 = vmatprep.subr.bf16.mxu0 0
    %535 = vmatpush1.bf16.msra.mxu0 0
    %536 = vmatprep.mubr.bf16.mxu0 0
    %537 = vmatmul.mubr.bf16.gmra.mrb[0].mxu0 %v481
    %v538 = vpop.f32.mrb[0].mxu0
    %v539 = vadd.f32 %v412, %v538
    %v540 = vpop.f32.mrb[0].mxu0
    %v541 = vpop.f32.mrb[0].mxu0
    %v542 = vadd.f32 %v415, %v541
    %v543 = vpop.f32.mrb[0].mxu0
    %544 = vmatprep.mubr.bf16.mxu0 0
    %545 = vmatmul.mubr.bf16.gmra.mrb[0].mxu0 %v484
    %v546 = vpop.f32.mrb[0].mxu0
    %v547 = vadd.f32 %v420, %v546
    %v548 = vpop.f32.mrb[0].mxu0
    %v549 = vpop.f32.mrb[0].mxu0
    %v550 = vadd.f32 %v423, %v549
    %v551 = vpop.f32.mrb[0].mxu0
    %552 = vmatprep.mubr.bf16.mxu0 0
    %553 = vmatmul.mubr.bf16.gmra.mrb[0].mxu0 %v487
    %v554 = vpop.f32.mrb[0].mxu0
    %v555 = vadd.f32 %v428, %v554
    %v556 = vpop.f32.mrb[0].mxu0
    %v557 = vpop.f32.mrb[0].mxu0
    %v558 = vadd.f32 %v431, %v557
    %v559 = vpop.f32.mrb[0].mxu0
    %560 = vmatprep.mubr.bf16.mxu0 0
    %561 = vmatmul.mubr.bf16.gmra.mrb[0].mxu0 %v490
    %v562 = vpop.f32.mrb[0].mxu0
    %v563 = vadd.f32 %v436, %v562
    %v564 = vpop.f32.mrb[0].mxu0
    %v565 = vpop.f32.mrb[0].mxu0
    %v566 = vadd.f32 %v439, %v565
    %v567 = vpop.f32.mrb[0].mxu0
    %568 = vmatprep.mubr.bf16.mxu0 0
    %569 = vmatmul.mubr.bf16.gmra.mrb[0].mxu0 %v493
    %v570 = vpop.f32.mrb[0].mxu0
    %v571 = vadd.f32 %v444, %v570
    %v572 = vpop.f32.mrb[0].mxu0
    %v573 = vpop.f32.mrb[0].mxu0
    %v574 = vadd.f32 %v447, %v573
    %v575 = vpop.f32.mrb[0].mxu0
    %576 = vmatprep.mubr.bf16.mxu0 0
    %577 = vmatmul.mubr.bf16.gmra.mrb[0].mxu0 %v496
    %v578 = vpop.f32.mrb[0].mxu0
    %v579 = vadd.f32 %v452, %v578
    %v580 = vpop.f32.mrb[0].mxu0
    %v581 = vpop.f32.mrb[0].mxu0
    %v582 = vadd.f32 %v455, %v581
    %v583 = vpop.f32.mrb[0].mxu0
    %584 = vmatprep.mubr.bf16.mxu0 0
    %585 = vmatmul.mubr.bf16.gmra.mrb[0].mxu0 %v499
    %v586 = vpop.f32.mrb[0].mxu0
    %v587 = vadd.f32 %v460, %v586
    %v588 = vpop.f32.mrb[0].mxu0
    %v589 = vpop.f32.mrb[0].mxu0
    %v590 = vadd.f32 %v463, %v589
    %v591 = vpop.f32.mrb[0].mxu0
    %592 = vmatprep.mubr.bf16.mxu0 0
    %593 = vmatmul.mubr.bf16.gmra.mrb[0].mxu0 %v502
    %v594 = vpop.f32.mrb[0].mxu0
    %v595 = vadd.f32 %v468, %v594
    %v596 = vpop.f32.mrb[0].mxu0
    %v597 = vpop.f32.mrb[0].mxu0
    %v598 = vadd.f32 %v471, %v597
    %v599 = vpop.f32.mrb[0].mxu0
    %600 = vdwg.mxu0
    %vm601 = vcmp.lt.s32.totalorder %v111, 63
    %vm602 = vcmp.lt.s32.totalorder %v112, 63
    %vm603 = vcmp.lt.s32.totalorder %v113, 63
    %vm604 = vcmp.lt.s32.totalorder %v114, 63
    %vm605 = vcmp.lt.s32.totalorder %v115, 63
    %vm606 = vcmp.lt.s32.totalorder %v116, 63
    %vm607 = vcmp.lt.s32.totalorder %v117, 63
    %vm608 = vcmp.lt.s32.totalorder %v118, 63
    %vm609 = vcmp.lt.s32.totalorder %v119, 63
    %vm610 = vcmp.lt.s32.totalorder %v120, 63
    %vm611 = vcmp.lt.s32.totalorder %v121, 63
    %vm612 = vcmp.lt.s32.totalorder %v122, 63
    %vm613 = vcmp.lt.s32.totalorder %v123, 63
    %vm614 = vcmp.lt.s32.totalorder %v124, 63
    %vm615 = vcmp.lt.s32.totalorder %v125, 63
    %vm616 = vcmp.lt.s32.totalorder %v126, 63
    %vm617 = vcmask 1046528
    %v618 = vrot.slane %v127, 1
    %v619 = vrot.slane %v128, 1
    %v620 = vsel %vm617, %v618, %v619
    %v621 = vrot.slane %v129, 1
    %v622 = vsel %vm617, %v619, %v621
    %v623 = vrot.slane %v130, 1
    %v624 = vsel %vm617, %v621, %v623
    %v625 = vrot.slane %v131, 1
    %v626 = vsel %vm617, %v623, %v625
    %v627 = vrot.slane %v132, 1
    %v628 = vsel %vm617, %v625, %v627
    %v629 = vrot.slane %v133, 1
    %v630 = vsel %vm617, %v627, %v629
    %v631 = vrot.slane %v134, 1
    %v632 = vsel %vm617, %v629, %v631
    %v633 = vrot.slane %v135, 1
    %v634 = vsel %vm617, %v631, %v633
    %v635 = vrot.slane %v136, 1
    %v636 = vsel %vm617, %v633, %v635
    %v637 = vrot.slane %v137, 1
    %v638 = vsel %vm617, %v635, %v637
    %v639 = vrot.slane %v138, 1
    %v640 = vsel %vm617, %v637, %v639
    %v641 = vrot.slane %v139, 1
    %v642 = vsel %vm617, %v639, %v641
    %v643 = vrot.slane %v140, 1
    %v644 = vsel %vm617, %v641, %v643
    %v645 = vrot.slane %v141, 1
    %v646 = vsel %vm617, %v643, %v645
    %v647 = vrot.slane %v142, 1
    %v648 = vsel %vm617, %v645, %v647
    %v666 = vsel %vm617, %v647, %v618
    %v667 = vsel %vm601, 1, 0
    %v668 = vsel %vm602, 1, 0
    %v669 = vsel %vm603, 1, 0
    %v670 = vsel %vm604, 1, 0
    %v671 = vsel %vm605, 1, 0
    %v672 = vsel %vm606, 1, 0
    %v673 = vsel %vm607, 1, 0
    %v674 = vsel %vm608, 1, 0
    %v675 = vsel %vm609, 1, 0
    %v676 = vsel %vm610, 1, 0
    %v677 = vsel %vm611, 1, 0
    %v678 = vsel %vm612, 1, 0
    %v679 = vsel %vm613, 1, 0
    %v680 = vsel %vm614, 1, 0
    %v681 = vsel %vm615, 1, 0
    %v682 = vsel %vm616, 1, 0
    %683 = vset.pattern.permute.xlu0 0
    %684 = vperm.xlu0 %683, %v667
    %v685 = vpop.permute.xlu0 %684
    %686 = vset.pattern.permute.xlu0 0
    %687 = vperm.xlu0 %686, %v668
    %v688 = vpop.permute.xlu0 %687
    %689 = vset.pattern.permute.xlu0 0
    %690 = vperm.xlu0 %689, %v669
    %v691 = vpop.permute.xlu0 %690
    %692 = vset.pattern.permute.xlu0 0
    %693 = vperm.xlu0 %692, %v670
    %v694 = vpop.permute.xlu0 %693
    %695 = vset.pattern.permute.xlu0 0
    %696 = vperm.xlu0 %695, %v671
    %v697 = vpop.permute.xlu0 %696
    %698 = vset.pattern.permute.xlu0 0
    %699 = vperm.xlu0 %698, %v672
    %v700 = vpop.permute.xlu0 %699
    %701 = vset.pattern.permute.xlu0 0
    %702 = vperm.xlu0 %701, %v673
    %v703 = vpop.permute.xlu0 %702
    %704 = vset.pattern.permute.xlu0 0
    %705 = vperm.xlu0 %704, %v674
    %v706 = vpop.permute.xlu0 %705
    %707 = vset.pattern.permute.xlu0 0
    %708 = vperm.xlu0 %707, %v675
    %v709 = vpop.permute.xlu0 %708
    %710 = vset.pattern.permute.xlu0 0
    %711 = vperm.xlu0 %710, %v676
    %v712 = vpop.permute.xlu0 %711
    %713 = vset.pattern.permute.xlu0 0
    %714 = vperm.xlu0 %713, %v677
    %v715 = vpop.permute.xlu0 %714
    %716 = vset.pattern.permute.xlu0 0
    %717 = vperm.xlu0 %716, %v678
    %v718 = vpop.permute.xlu0 %717
    %719 = vset.pattern.permute.xlu0 0
    %720 = vperm.xlu0 %719, %v679
    %v721 = vpop.permute.xlu0 %720
    %722 = vset.pattern.permute.xlu0 0
    %723 = vperm.xlu0 %722, %v680
    %v724 = vpop.permute.xlu0 %723
    %725 = vset.pattern.permute.xlu0 0
    %726 = vperm.xlu0 %725, %v681
    %v727 = vpop.permute.xlu0 %726
    %728 = vset.pattern.permute.xlu0 0
    %729 = vperm.xlu0 %728, %v682
    %v730 = vpop.permute.xlu0 %729
    %vm731 = vcmp.eq.s32.totalorder %v685, 1
    %vm732 = vcmp.eq.s32.totalorder %v688, 1
    %vm733 = vcmp.eq.s32.totalorder %v691, 1
    %vm734 = vcmp.eq.s32.totalorder %v694, 1
    %vm735 = vcmp.eq.s32.totalorder %v697, 1
    %vm736 = vcmp.eq.s32.totalorder %v700, 1
    %vm737 = vcmp.eq.s32.totalorder %v703, 1
    %vm738 = vcmp.eq.s32.totalorder %v706, 1
    %vm739 = vcmp.eq.s32.totalorder %v709, 1
    %vm740 = vcmp.eq.s32.totalorder %v712, 1
    %vm741 = vcmp.eq.s32.totalorder %v715, 1
    %vm742 = vcmp.eq.s32.totalorder %v718, 1
    %vm743 = vcmp.eq.s32.totalorder %v721, 1
    %vm744 = vcmp.eq.s32.totalorder %v724, 1
    %vm745 = vcmp.eq.s32.totalorder %v727, 1
    %vm746 = vcmp.eq.s32.totalorder %v730, 1
    %v747 = vsel %vm731, %v620, 0.0
    %v748 = vsel %vm732, %v622, 0.0
    %v749 = vsel %vm733, %v624, 0.0
    %v750 = vsel %vm734, %v626, 0.0
    %v751 = vsel %vm735, %v628, 0.0
    %v752 = vsel %vm736, %v630, 0.0
    %v753 = vsel %vm737, %v632, 0.0
    %v754 = vsel %vm738, %v634, 0.0
    %v755 = vsel %vm739, %v636, 0.0
    %v756 = vsel %vm740, %v638, 0.0
    %v757 = vsel %vm741, %v640, 0.0
    %v758 = vsel %vm742, %v642, 0.0
    %v759 = vsel %vm743, %v644, 0.0
    %v760 = vsel %vm744, %v646, 0.0
    %v761 = vsel %vm745, %v648, 0.0
    %v762 = vsel %vm746, %v666, 0.0
    %v763 = vpack.c.bf16 %v748, %v747
    %v764 = vpack.c.bf16 %v750, %v749
    %v765 = vpack.c.bf16 %v752, %v751
    %v766 = vpack.c.bf16 %v754, %v753
    %v767 = vpack.c.bf16 %v756, %v755
    %v768 = vpack.c.bf16 %v758, %v757
    %v769 = vpack.c.bf16 %v760, %v759
    %v770 = vpack.c.bf16 %v762, %v761
    %v773 = vunpack.c.l.b16 %v149
    %v774 = vunpack.c.l.b16 %v150
    %v775 = vpack.c.b16 %v774, %v773
    %v778 = vsel %vm352, %v763, 0
    %v781 = vsel %vm352, %v764, 0
    %v784 = vsel %vm352, %v765, 0
    %v787 = vsel %vm352, %v766, 0
    %v790 = vsel %vm352, %v767, 0
    %v793 = vsel %vm352, %v768, 0
    %v796 = vsel %vm352, %v769, 0
    %v799 = vsel %vm352, %v770, 0
    %801 = vmatprep.subr.bf16.mxu0 0
    %802 = vmatpush1.bf16.msra.mxu0 %v775
    %803 = vmatprep.subr.bf16.mxu0 0
    %804 = vmatpush1.bf16.msra.mxu0 0
    %805 = vmatprep.subr.bf16.mxu0 0
    %806 = vmatpush1.bf16.msra.mxu0 0
    %807 = vmatprep.subr.bf16.mxu0 0
    %808 = vmatpush1.bf16.msra.mxu0 0
    %809 = vmatprep.subr.bf16.mxu0 0
    %810 = vmatpush1.bf16.msra.mxu0 0
    %811 = vmatprep.subr.bf16.mxu0 0
    %812 = vmatpush1.bf16.msra.mxu0 0
    %813 = vmatprep.subr.bf16.mxu0 0
    %814 = vmatpush1.bf16.msra.mxu0 0
    %815 = vmatprep.subr.bf16.mxu0 0
    %816 = vmatpush1.bf16.msra.mxu0 0
    %817 = vmatprep.subr.bf16.mxu0 0
    %818 = vmatpush1.bf16.msra.mxu0 0
    %819 = vmatprep.subr.bf16.mxu0 0
    %820 = vmatpush1.bf16.msra.mxu0 0
    %821 = vmatprep.subr.bf16.mxu0 0
    %822 = vmatpush1.bf16.msra.mxu0 0
    %823 = vmatprep.subr.bf16.mxu0 0
    %824 = vmatpush1.bf16.msra.mxu0 0
    %825 = vmatprep.subr.bf16.mxu0 0
    %826 = vmatpush1.bf16.msra.mxu0 0
    %827 = vmatprep.subr.bf16.mxu0 0
    %828 = vmatpush1.bf16.msra.mxu0 0
    %829 = vmatprep.subr.bf16.mxu0 0
    %830 = vmatpush1.bf16.msra.mxu0 0
    %831 = vmatprep.subr.bf16.mxu0 0
    %832 = vmatpush1.bf16.msra.mxu0 0
    %833 = vmatprep.mubr.bf16.mxu0 0
    %834 = vmatmul.mubr.bf16.gmra.mrb[0].mxu0 %v778
    %v835 = vpop.f32.mrb[0].mxu0
    %v836 = vadd.f32 0.0, %v835
    %v837 = vpop.f32.mrb[0].mxu0
    %v838 = vpop.f32.mrb[0].mxu0
    %v839 = vadd.f32 0.0, %v838
    %v840 = vpop.f32.mrb[0].mxu0
    %841 = vmatprep.mubr.bf16.mxu0 0
    %842 = vmatmul.mubr.bf16.gmra.mrb[0].mxu0 %v781
    %v843 = vpop.f32.mrb[0].mxu0
    %v844 = vadd.f32 0.0, %v843
    %v845 = vpop.f32.mrb[0].mxu0
    %v846 = vpop.f32.mrb[0].mxu0
    %v847 = vadd.f32 0.0, %v846
    %v848 = vpop.f32.mrb[0].mxu0
    %849 = vmatprep.mubr.bf16.mxu0 0
    %850 = vmatmul.mubr.bf16.gmra.mrb[0].mxu0 %v784
    %v851 = vpop.f32.mrb[0].mxu0
    %v852 = vadd.f32 0.0, %v851
    %v853 = vpop.f32.mrb[0].mxu0
    %v854 = vpop.f32.mrb[0].mxu0
    %v855 = vadd.f32 0.0, %v854
    %v856 = vpop.f32.mrb[0].mxu0
    %857 = vmatprep.mubr.bf16.mxu0 0
    %858 = vmatmul.mubr.bf16.gmra.mrb[0].mxu0 %v787
    %v859 = vpop.f32.mrb[0].mxu0
    %v860 = vadd.f32 0.0, %v859
    %v861 = vpop.f32.mrb[0].mxu0
    %v862 = vpop.f32.mrb[0].mxu0
    %v863 = vadd.f32 0.0, %v862
    %v864 = vpop.f32.mrb[0].mxu0
    %865 = vmatprep.mubr.bf16.mxu0 0
    %866 = vmatmul.mubr.bf16.gmra.mrb[0].mxu0 %v790
    %v867 = vpop.f32.mrb[0].mxu0
    %v868 = vadd.f32 0.0, %v867
    %v869 = vpop.f32.mrb[0].mxu0
    %v870 = vpop.f32.mrb[0].mxu0
    %v871 = vadd.f32 0.0, %v870
    %v872 = vpop.f32.mrb[0].mxu0
    %873 = vmatprep.mubr.bf16.mxu0 0
    %874 = vmatmul.mubr.bf16.gmra.mrb[0].mxu0 %v793
    %v875 = vpop.f32.mrb[0].mxu0
    %v876 = vadd.f32 0.0, %v875
    %v877 = vpop.f32.mrb[0].mxu0
    %v878 = vpop.f32.mrb[0].mxu0
    %v879 = vadd.f32 0.0, %v878
    %v880 = vpop.f32.mrb[0].mxu0
    %881 = vmatprep.mubr.bf16.mxu0 0
    %882 = vmatmul.mubr.bf16.gmra.mrb[0].mxu0 %v796
    %v883 = vpop.f32.mrb[0].mxu0
    %v884 = vadd.f32 0.0, %v883
    %v885 = vpop.f32.mrb[0].mxu0
    %v886 = vpop.f32.mrb[0].mxu0
    %v887 = vadd.f32 0.0, %v886
    %v888 = vpop.f32.mrb[0].mxu0
    %889 = vmatprep.mubr.bf16.mxu0 0
    %890 = vmatmul.mubr.bf16.gmra.mrb[0].mxu0 %v799
    %v891 = vpop.f32.mrb[0].mxu0
    %v892 = vadd.f32 0.0, %v891
    %v893 = vpop.f32.mrb[0].mxu0
    %v894 = vpop.f32.mrb[0].mxu0
    %v895 = vadd.f32 0.0, %v894
    %v896 = vpop.f32.mrb[0].mxu0
    %897 = vdwg.mxu0
    %v898 = vadd.f32 %v539, %v836
    %v899 = vadd.f32 %v542, %v839
    %v900 = vadd.f32 %v547, %v844
    %v901 = vadd.f32 %v550, %v847
    %v902 = vadd.f32 %v555, %v852
    %v903 = vadd.f32 %v558, %v855
    %v904 = vadd.f32 %v563, %v860
    %v905 = vadd.f32 %v566, %v863
    %v906 = vadd.f32 %v571, %v868
    %v907 = vadd.f32 %v574, %v871
    %v908 = vadd.f32 %v579, %v876
    %v909 = vadd.f32 %v582, %v879
    %v910 = vadd.f32 %v587, %v884
    %v911 = vadd.f32 %v590, %v887
    %v912 = vadd.f32 %v595, %v892
    %v913 = vadd.f32 %v598, %v895
    %v915 = vlaneseq
    %v916 = vshrl.u32 %v915, 7
    %v917 = vsub.s32 0, %v916
    %v918 = vrot.slane %v151, %v917
    %v920 = vadd.f32 %v898, %v918
    %v921 = vadd.f32 %v899, %v918
    %v922 = vadd.f32 %v900, %v918
    %v923 = vadd.f32 %v901, %v918
    %v924 = vadd.f32 %v902, %v918
    %v925 = vadd.f32 %v903, %v918
    %v926 = vadd.f32 %v904, %v918
    %v927 = vadd.f32 %v905, %v918
    %v928 = vadd.f32 %v906, %v918
    %v929 = vadd.f32 %v907, %v918
    %v930 = vadd.f32 %v908, %v918
    %v931 = vadd.f32 %v909, %v918
    %v932 = vadd.f32 %v910, %v918
    %v933 = vadd.f32 %v911, %v918
    %v934 = vadd.f32 %v912, %v918
    %v935 = vadd.f32 %v913, %v918
    %v936 = vtanh.pop %v920
    %v937 = vtanh.pop %v921
    %v938 = vtanh.pop %v922
    %v939 = vtanh.pop %v923
    %v940 = vtanh.pop %v924
    %v941 = vtanh.pop %v925
    %v942 = vtanh.pop %v926
    %v943 = vtanh.pop %v927
    %v944 = vtanh.pop %v928
    %v945 = vtanh.pop %v929
    %v946 = vtanh.pop %v930
    %v947 = vtanh.pop %v931
    %v948 = vtanh.pop %v932
    %v949 = vtanh.pop %v933
    %v950 = vtanh.pop %v934
    %v951 = vtanh.pop %v935
    %v952 = vxor.u32 %v920, 2147483648
    %v953 = vxor.u32 %v921, 2147483648
    %v954 = vxor.u32 %v922, 2147483648
    %v955 = vxor.u32 %v923, 2147483648
    %v956 = vxor.u32 %v924, 2147483648
    %v957 = vxor.u32 %v925, 2147483648
    %v958 = vxor.u32 %v926, 2147483648
    %v959 = vxor.u32 %v927, 2147483648
    %v960 = vxor.u32 %v928, 2147483648
    %v961 = vxor.u32 %v929, 2147483648
    %v962 = vxor.u32 %v930, 2147483648
    %v963 = vxor.u32 %v931, 2147483648
    %v964 = vxor.u32 %v932, 2147483648
    %v965 = vxor.u32 %v933, 2147483648
    %v966 = vxor.u32 %v934, 2147483648
    %v967 = vxor.u32 %v935, 2147483648
    %v968 = vmul.f32 %v952, 1.442695
    %v969 = vpow.pop %v968
    %v970 = vmul.f32 %v953, 1.442695
    %v971 = vpow.pop %v970
    %v972 = vmul.f32 %v954, 1.442695
    %v973 = vpow.pop %v972
    %v974 = vmul.f32 %v955, 1.442695
    %v975 = vpow.pop %v974
    %v976 = vmul.f32 %v956, 1.442695
    %v977 = vpow.pop %v976
    %v978 = vmul.f32 %v957, 1.442695
    %v979 = vpow.pop %v978
    %v980 = vmul.f32 %v958, 1.442695
    %v981 = vpow.pop %v980
    %v982 = vmul.f32 %v959, 1.442695
    %v983 = vpow.pop %v982
    %v984 = vmul.f32 %v960, 1.442695
    %v985 = vpow.pop %v984
    %v986 = vmul.f32 %v961, 1.442695
    %v987 = vpow.pop %v986
    %v988 = vmul.f32 %v962, 1.442695
    %v989 = vpow.pop %v988
    %v990 = vmul.f32 %v963, 1.442695
    %v991 = vpow.pop %v990
    %v992 = vmul.f32 %v964, 1.442695
    %v993 = vpow.pop %v992
    %v994 = vmul.f32 %v965, 1.442695
    %v995 = vpow.pop %v994
    %v996 = vmul.f32 %v966, 1.442695
    %v997 = vpow.pop %v996
    %v998 = vmul.f32 %v967, 1.442695
    %v999 = vpow.pop %v998
    %v1000 = vadd.f32 %v969, 1.0
    %v1001 = vadd.f32 %v971, 1.0
    %v1002 = vadd.f32 %v973, 1.0
    %v1003 = vadd.f32 %v975, 1.0
    %v1004 = vadd.f32 %v977, 1.0
    %v1005 = vadd.f32 %v979, 1.0
    %v1006 = vadd.f32 %v981, 1.0
    %v1007 = vadd.f32 %v983, 1.0
    %v1008 = vadd.f32 %v985, 1.0
    %v1009 = vadd.f32 %v987, 1.0
    %v1010 = vadd.f32 %v989, 1.0
    %v1011 = vadd.f32 %v991, 1.0
    %v1012 = vadd.f32 %v993, 1.0
    %v1013 = vadd.f32 %v995, 1.0
    %v1014 = vadd.f32 %v997, 1.0
    %v1015 = vadd.f32 %v999, 1.0
    %v1016 = vrcp.pop %v1000
    %v1017 = vmul.f32 1.0, %v1016
    %v1018 = vrcp.pop %v1001
    %v1019 = vmul.f32 1.0, %v1018
    %v1020 = vrcp.pop %v1002
    %v1021 = vmul.f32 1.0, %v1020
    %v1022 = vrcp.pop %v1003
    %v1023 = vmul.f32 1.0, %v1022
    %v1024 = vrcp.pop %v1004
    %v1025 = vmul.f32 1.0, %v1024
    %v1026 = vrcp.pop %v1005
    %v1027 = vmul.f32 1.0, %v1026
    %v1028 = vrcp.pop %v1006
    %v1029 = vmul.f32 1.0, %v1028
    %v1030 = vrcp.pop %v1007
    %v1031 = vmul.f32 1.0, %v1030
    %v1032 = vrcp.pop %v1008
    %v1033 = vmul.f32 1.0, %v1032
    %v1034 = vrcp.pop %v1009
    %v1035 = vmul.f32 1.0, %v1034
    %v1036 = vrcp.pop %v1010
    %v1037 = vmul.f32 1.0, %v1036
    %v1038 = vrcp.pop %v1011
    %v1039 = vmul.f32 1.0, %v1038
    %v1040 = vrcp.pop %v1012
    %v1041 = vmul.f32 1.0, %v1040
    %v1042 = vrcp.pop %v1013
    %v1043 = vmul.f32 1.0, %v1042
    %v1044 = vrcp.pop %v1014
    %v1045 = vmul.f32 1.0, %v1044
    %v1046 = vrcp.pop %v1015
    %v1047 = vmul.f32 1.0, %v1046
    %1064 = vrot.lane.b32.xlu0 %v1017, 96
    %v1065 = vpop.permute.xlu0 %1064
    %1066 = vrot.lane.b32.xlu0 %v1019, 96
    %v1067 = vpop.permute.xlu0 %1066
    %1068 = vrot.lane.b32.xlu0 %v1021, 96
    %v1069 = vpop.permute.xlu0 %1068
    %1070 = vrot.lane.b32.xlu0 %v1023, 96
    %v1071 = vpop.permute.xlu0 %1070
    %1072 = vrot.lane.b32.xlu0 %v1025, 96
    %v1073 = vpop.permute.xlu0 %1072
    %1074 = vrot.lane.b32.xlu0 %v1027, 96
    %v1075 = vpop.permute.xlu0 %1074
    %1076 = vrot.lane.b32.xlu0 %v1029, 96
    %v1077 = vpop.permute.xlu0 %1076
    %1078 = vrot.lane.b32.xlu0 %v1031, 96
    %v1079 = vpop.permute.xlu0 %1078
    %1080 = vrot.lane.b32.xlu0 %v1033, 96
    %v1081 = vpop.permute.xlu0 %1080
    %1082 = vrot.lane.b32.xlu0 %v1035, 96
    %v1083 = vpop.permute.xlu0 %1082
    %1084 = vrot.lane.b32.xlu0 %v1037, 96
    %v1085 = vpop.permute.xlu0 %1084
    %1086 = vrot.lane.b32.xlu0 %v1039, 96
    %v1087 = vpop.permute.xlu0 %1086
    %1088 = vrot.lane.b32.xlu0 %v1041, 96
    %v1089 = vpop.permute.xlu0 %1088
    %1090 = vrot.lane.b32.xlu0 %v1043, 96
    %v1091 = vpop.permute.xlu0 %1090
    %1092 = vrot.lane.b32.xlu0 %v1045, 96
    %v1093 = vpop.permute.xlu0 %1092
    %1094 = vrot.lane.b32.xlu0 %v1047, 96
    %v1095 = vpop.permute.xlu0 %1094
    %v1112 = vmul.f32 %v936, %v1065
    %v1113 = vmul.f32 %v937, %v1067
    %v1114 = vmul.f32 %v938, %v1069
    %v1115 = vmul.f32 %v939, %v1071
    %v1116 = vmul.f32 %v940, %v1073
    %v1117 = vmul.f32 %v941, %v1075
    %v1118 = vmul.f32 %v942, %v1077
    %v1119 = vmul.f32 %v943, %v1079
    %v1120 = vmul.f32 %v944, %v1081
    %v1121 = vmul.f32 %v945, %v1083
    %v1122 = vmul.f32 %v946, %v1085
    %v1123 = vmul.f32 %v947, %v1087
    %v1124 = vmul.f32 %v948, %v1089
    %v1125 = vmul.f32 %v949, %v1091
    %v1126 = vmul.f32 %v950, %v1093
    %v1127 = vmul.f32 %v951, %v1095
    %v1128 = vld [vmem:[%s4] sm:$0xf]
    %v1129 = vld [vmem:[%s4 + $0x4] sm:$0xf]
    %v1130 = vld [vmem:[%s4 + $0x8] sm:$0xf]
    %v1131 = vld [vmem:[%s4 + $0xc] sm:$0xf]
    %s1132 = scalar_lea.vmem %s4, 16
    %v1133 = vld [vmem:[%s1132] sm:$0xf]
    %v1134 = vld [vmem:[%s1132 + $0x4] sm:$0xf]
    %v1135 = vld [vmem:[%s1132 + $0x8] sm:$0xf]
    %v1136 = vld [vmem:[%s1132 + $0xc] sm:$0xf]
    %s1137 = scalar_lea.vmem %s4, 32
    %v1138 = vld [vmem:[%s1137] sm:$0xf]
    %v1139 = vld [vmem:[%s1137 + $0x4] sm:$0xf]
    %v1140 = vld [vmem:[%s1137 + $0x8] sm:$0xf]
    %v1141 = vld [vmem:[%s1137 + $0xc] sm:$0xf]
    %v1142 = vld [vmem:[#allocation4] sm:$0x1]
    %v1144 = vrot.slane %v1127, 7
    %v1161 = vrot.slane %v1112, 7
    %v1162 = vrot.slane %v1113, 7
    %v1163 = vsel %vm186, %v1161, %v1162
    %v1164 = vrot.slane %v1114, 7
    %v1165 = vsel %vm186, %v1162, %v1164
    %v1166 = vrot.slane %v1115, 7
    %v1167 = vsel %vm186, %v1164, %v1166
    %v1168 = vrot.slane %v1116, 7
    %v1169 = vsel %vm186, %v1166, %v1168
    %v1170 = vrot.slane %v1117, 7
    %v1171 = vsel %vm186, %v1168, %v1170
    %v1172 = vrot.slane %v1118, 7
    %v1173 = vsel %vm186, %v1170, %v1172
    %v1174 = vrot.slane %v1119, 7
    %v1175 = vsel %vm186, %v1172, %v1174
    %v1176 = vrot.slane %v1120, 7
    %v1177 = vsel %vm186, %v1174, %v1176
    %v1178 = vrot.slane %v1121, 7
    %v1179 = vsel %vm186, %v1176, %v1178
    %v1180 = vrot.slane %v1122, 7
    %v1181 = vsel %vm186, %v1178, %v1180
    %v1182 = vrot.slane %v1123, 7
    %v1183 = vsel %vm186, %v1180, %v1182
    %v1184 = vrot.slane %v1124, 7
    %v1185 = vsel %vm186, %v1182, %v1184
    %v1186 = vrot.slane %v1125, 7
    %v1187 = vsel %vm186, %v1184, %v1186
    %v1188 = vrot.slane %v1126, 7
    %v1189 = vsel %vm186, %v1186, %v1188
    %v1190 = vsel %vm186, %v1188, %v1144
    %v1207 = vsel %vm186, %v1144, %v1161
    %v1208 = vsel %vm298, %v1207, 0.0
    %v1209 = vsel %vm299, %v1163, 0.0
    %v1210 = vsel %vm300, %v1165, 0.0
    %v1211 = vsel %vm301, %v1167, 0.0
    %v1212 = vsel %vm302, %v1169, 0.0
    %v1213 = vsel %vm303, %v1171, 0.0
    %v1214 = vsel %vm304, %v1173, 0.0
    %v1215 = vsel %vm305, %v1175, 0.0
    %v1216 = vsel %vm306, %v1177, 0.0
    %v1217 = vsel %vm307, %v1179, 0.0
    %v1218 = vsel %vm308, %v1181, 0.0
    %v1219 = vsel %vm309, %v1183, 0.0
    %v1220 = vsel %vm310, %v1185, 0.0
    %v1221 = vsel %vm311, %v1187, 0.0
    %v1222 = vsel %vm312, %v1189, 0.0
    %v1223 = vsel %vm313, %v1190, 0.0
    %v1224 = vpack.c.bf16 %v1209, %v1208
    %v1225 = vpack.c.bf16 %v1211, %v1210
    %v1226 = vpack.c.bf16 %v1213, %v1212
    %v1227 = vpack.c.bf16 %v1215, %v1214
    %v1228 = vpack.c.bf16 %v1217, %v1216
    %v1229 = vpack.c.bf16 %v1219, %v1218
    %v1230 = vpack.c.bf16 %v1221, %v1220
    %v1231 = vpack.c.bf16 %v1223, %v1222
    %v1232 = vpack.c.bf16 %v1113, %v1112
    %v1233 = vpack.c.bf16 %v1115, %v1114
    %v1234 = vpack.c.bf16 %v1117, %v1116
    %v1235 = vpack.c.bf16 %v1119, %v1118
    %v1236 = vpack.c.bf16 %v1121, %v1120
    %v1237 = vpack.c.bf16 %v1123, %v1122
    %v1238 = vpack.c.bf16 %v1125, %v1124
    %v1239 = vpack.c.bf16 %v1127, %v1126
    %v1244 = vunpack.c.l.b16 %v1133
    %v1245 = vunpack.c.l.b16 %v1134
    %v1246 = vunpack.c.l.b16 %v1135
    %v1247 = vunpack.c.l.b16 %v1136
    %v1248 = vpack.c.b16 %v1245, %v1244
    %v1249 = vpack.c.b16 %v1247, %v1246
    %vm1252 = vcmask 261120
    %v1254 = vsel %vm1252, %v1232, 0
    %v1257 = vsel %vm1252, %v1233, 0
    %v1260 = vsel %vm1252, %v1234, 0
    %v1263 = vsel %vm1252, %v1235, 0
    %v1266 = vsel %vm1252, %v1236, 0
    %v1269 = vsel %vm1252, %v1237, 0
    %v1272 = vsel %vm1252, %v1238, 0
    %v1275 = vsel %vm1252, %v1239, 0
    %1277 = vmatprep.subr.bf16.mxu0 0
    %1278 = vmatpush1.bf16.msra.mxu0 %v1248
    %1279 = vmatprep.subr.bf16.mxu0 0
    %1280 = vmatpush1.bf16.msra.mxu0 %v1249
    %1281 = vmatprep.subr.bf16.mxu0 0
    %1282 = vmatpush1.bf16.msra.mxu0 0
    %1283 = vmatprep.subr.bf16.mxu0 0
    %1284 = vmatpush1.bf16.msra.mxu0 0
    %1285 = vmatprep.subr.bf16.mxu0 0
    %1286 = vmatpush1.bf16.msra.mxu0 0
    %1287 = vmatprep.subr.bf16.mxu0 0
    %1288 = vmatpush1.bf16.msra.mxu0 0
    %1289 = vmatprep.subr.bf16.mxu0 0
    %1290 = vmatpush1.bf16.msra.mxu0 0
    %1291 = vmatprep.subr.bf16.mxu0 0
    %1292 = vmatpush1.bf16.msra.mxu0 0
    %1293 = vmatprep.subr.bf16.mxu0 0
    %1294 = vmatpush1.bf16.msra.mxu0 0
    %1295 = vmatprep.subr.bf16.mxu0 0
    %1296 = vmatpush1.bf16.msra.mxu0 0
    %1297 = vmatprep.subr.bf16.mxu0 0
    %1298 = vmatpush1.bf16.msra.mxu0 0
    %1299 = vmatprep.subr.bf16.mxu0 0
    %1300 = vmatpush1.bf16.msra.mxu0 0
    %1301 = vmatprep.subr.bf16.mxu0 0
    %1302 = vmatpush1.bf16.msra.mxu0 0
    %1303 = vmatprep.subr.bf16.mxu0 0
    %1304 = vmatpush1.bf16.msra.mxu0 0
    %1305 = vmatprep.subr.bf16.mxu0 0
    %1306 = vmatpush1.bf16.msra.mxu0 0
    %1307 = vmatprep.subr.bf16.mxu0 0
    %1308 = vmatpush1.bf16.msra.mxu0 0
    %1309 = vmatprep.mubr.bf16.mxu0 0
    %1310 = vmatmul.mubr.bf16.gmra.mrb[0].mxu0 %v1254
    %v1311 = vpop.f32.mrb[0].mxu0
    %v1312 = vadd.f32 0.0, %v1311
    %v1313 = vpop.f32.mrb[0].mxu0
    %v1314 = vpop.f32.mrb[0].mxu0
    %v1315 = vadd.f32 0.0, %v1314
    %v1316 = vpop.f32.mrb[0].mxu0
    %1317 = vmatprep.mubr.bf16.mxu0 0
    %1318 = vmatmul.mubr.bf16.gmra.mrb[0].mxu0 %v1257
    %v1319 = vpop.f32.mrb[0].mxu0
    %v1320 = vadd.f32 0.0, %v1319
    %v1321 = vpop.f32.mrb[0].mxu0
    %v1322 = vpop.f32.mrb[0].mxu0
    %v1323 = vadd.f32 0.0, %v1322
    %v1324 = vpop.f32.mrb[0].mxu0
    %1325 = vmatprep.mubr.bf16.mxu0 0
    %1326 = vmatmul.mubr.bf16.gmra.mrb[0].mxu0 %v1260
    %v1327 = vpop.f32.mrb[0].mxu0
    %v1328 = vadd.f32 0.0, %v1327
    %v1329 = vpop.f32.mrb[0].mxu0
    %v1330 = vpop.f32.mrb[0].mxu0
    %v1331 = vadd.f32 0.0, %v1330
    %v1332 = vpop.f32.mrb[0].mxu0
    %1333 = vmatprep.mubr.bf16.mxu0 0
    %1334 = vmatmul.mubr.bf16.gmra.mrb[0].mxu0 %v1263
    %v1335 = vpop.f32.mrb[0].mxu0
    %v1336 = vadd.f32 0.0, %v1335
    %v1337 = vpop.f32.mrb[0].mxu0
    %v1338 = vpop.f32.mrb[0].mxu0
    %v1339 = vadd.f32 0.0, %v1338
    %v1340 = vpop.f32.mrb[0].mxu0
    %1341 = vmatprep.mubr.bf16.mxu0 0
    %1342 = vmatmul.mubr.bf16.gmra.mrb[0].mxu0 %v1266
    %v1343 = vpop.f32.mrb[0].mxu0
    %v1344 = vadd.f32 0.0, %v1343
    %v1345 = vpop.f32.mrb[0].mxu0
    %v1346 = vpop.f32.mrb[0].mxu0
    %v1347 = vadd.f32 0.0, %v1346
    %v1348 = vpop.f32.mrb[0].mxu0
    %1349 = vmatprep.mubr.bf16.mxu0 0
    %1350 = vmatmul.mubr.bf16.gmra.mrb[0].mxu0 %v1269
    %v1351 = vpop.f32.mrb[0].mxu0
    %v1352 = vadd.f32 0.0, %v1351
    %v1353 = vpop.f32.mrb[0].mxu0
    %v1354 = vpop.f32.mrb[0].mxu0
    %v1355 = vadd.f32 0.0, %v1354
    %v1356 = vpop.f32.mrb[0].mxu0
    %1357 = vmatprep.mubr.bf16.mxu0 0
    %1358 = vmatmul.mubr.bf16.gmra.mrb[0].mxu0 %v1272
    %v1359 = vpop.f32.mrb[0].mxu0
    %v1360 = vadd.f32 0.0, %v1359
    %v1361 = vpop.f32.mrb[0].mxu0
    %v1362 = vpop.f32.mrb[0].mxu0
    %v1363 = vadd.f32 0.0, %v1362
    %v1364 = vpop.f32.mrb[0].mxu0
    %1365 = vmatprep.mubr.bf16.mxu0 0
    %1366 = vmatmul.mubr.bf16.gmra.mrb[0].mxu0 %v1275
    %v1367 = vpop.f32.mrb[0].mxu0
    %v1368 = vadd.f32 0.0, %v1367
    %v1369 = vpop.f32.mrb[0].mxu0
    %v1370 = vpop.f32.mrb[0].mxu0
    %v1371 = vadd.f32 0.0, %v1370
    %v1372 = vpop.f32.mrb[0].mxu0
    %1373 = vdwg.mxu0
    %v1378 = vunpack.c.l.b16 %v1128
    %v1379 = vunpack.c.l.b16 %v1129
    %v1380 = vunpack.c.l.b16 %v1130
    %v1381 = vunpack.c.l.b16 %v1131
    %v1382 = vpack.c.b16 %v1379, %v1378
    %v1383 = vpack.c.b16 %v1381, %v1380
    %v1387 = vsel %vm1252, %v1224, 0
    %v1390 = vsel %vm1252, %v1225, 0
    %v1393 = vsel %vm1252, %v1226, 0
    %v1396 = vsel %vm1252, %v1227, 0
    %v1399 = vsel %vm1252, %v1228, 0
    %v1402 = vsel %vm1252, %v1229, 0
    %v1405 = vsel %vm1252, %v1230, 0
    %v1408 = vsel %vm1252, %v1231, 0
    %1410 = vmatprep.subr.bf16.mxu0 0
    %1411 = vmatpush1.bf16.msra.mxu0 %v1382
    %1412 = vmatprep.subr.bf16.mxu0 0
    %1413 = vmatpush1.bf16.msra.mxu0 %v1383
    %1414 = vmatprep.subr.bf16.mxu0 0
    %1415 = vmatpush1.bf16.msra.mxu0 0
    %1416 = vmatprep.subr.bf16.mxu0 0
    %1417 = vmatpush1.bf16.msra.mxu0 0
    %1418 = vmatprep.subr.bf16.mxu0 0
    %1419 = vmatpush1.bf16.msra.mxu0 0
    %1420 = vmatprep.subr.bf16.mxu0 0
    %1421 = vmatpush1.bf16.msra.mxu0 0
    %1422 = vmatprep.subr.bf16.mxu0 0
    %1423 = vmatpush1.bf16.msra.mxu0 0
    %1424 = vmatprep.subr.bf16.mxu0 0
    %1425 = vmatpush1.bf16.msra.mxu0 0
    %1426 = vmatprep.subr.bf16.mxu0 0
    %1427 = vmatpush1.bf16.msra.mxu0 0
    %1428 = vmatprep.subr.bf16.mxu0 0
    %1429 = vmatpush1.bf16.msra.mxu0 0
    %1430 = vmatprep.subr.bf16.mxu0 0
    %1431 = vmatpush1.bf16.msra.mxu0 0
    %1432 = vmatprep.subr.bf16.mxu0 0
    %1433 = vmatpush1.bf16.msra.mxu0 0
    %1434 = vmatprep.subr.bf16.mxu0 0
    %1435 = vmatpush1.bf16.msra.mxu0 0
    %1436 = vmatprep.subr.bf16.mxu0 0
    %1437 = vmatpush1.bf16.msra.mxu0 0
    %1438 = vmatprep.subr.bf16.mxu0 0
    %1439 = vmatpush1.bf16.msra.mxu0 0
    %1440 = vmatprep.subr.bf16.mxu0 0
    %1441 = vmatpush1.bf16.msra.mxu0 0
    %1442 = vmatprep.mubr.bf16.mxu0 0
    %1443 = vmatmul.mubr.bf16.gmra.mrb[0].mxu0 %v1387
    %v1444 = vpop.f32.mrb[0].mxu0
    %v1445 = vadd.f32 %v1312, %v1444
    %v1446 = vpop.f32.mrb[0].mxu0
    %v1447 = vpop.f32.mrb[0].mxu0
    %v1448 = vadd.f32 %v1315, %v1447
    %v1449 = vpop.f32.mrb[0].mxu0
    %1450 = vmatprep.mubr.bf16.mxu0 0
    %1451 = vmatmul.mubr.bf16.gmra.mrb[0].mxu0 %v1390
    %v1452 = vpop.f32.mrb[0].mxu0
    %v1453 = vadd.f32 %v1320, %v1452
    %v1454 = vpop.f32.mrb[0].mxu0
    %v1455 = vpop.f32.mrb[0].mxu0
    %v1456 = vadd.f32 %v1323, %v1455
    %v1457 = vpop.f32.mrb[0].mxu0
    %1458 = vmatprep.mubr.bf16.mxu0 0
    %1459 = vmatmul.mubr.bf16.gmra.mrb[0].mxu0 %v1393
    %v1460 = vpop.f32.mrb[0].mxu0
    %v1461 = vadd.f32 %v1328, %v1460
    %v1462 = vpop.f32.mrb[0].mxu0
    %v1463 = vpop.f32.mrb[0].mxu0
    %v1464 = vadd.f32 %v1331, %v1463
    %v1465 = vpop.f32.mrb[0].mxu0
    %1466 = vmatprep.mubr.bf16.mxu0 0
    %1467 = vmatmul.mubr.bf16.gmra.mrb[0].mxu0 %v1396
    %v1468 = vpop.f32.mrb[0].mxu0
    %v1469 = vadd.f32 %v1336, %v1468
    %v1470 = vpop.f32.mrb[0].mxu0
    %v1471 = vpop.f32.mrb[0].mxu0
    %v1472 = vadd.f32 %v1339, %v1471
    %v1473 = vpop.f32.mrb[0].mxu0
    %1474 = vmatprep.mubr.bf16.mxu0 0
    %1475 = vmatmul.mubr.bf16.gmra.mrb[0].mxu0 %v1399
    %v1476 = vpop.f32.mrb[0].mxu0
    %v1477 = vadd.f32 %v1344, %v1476
    %v1478 = vpop.f32.mrb[0].mxu0
    %v1479 = vpop.f32.mrb[0].mxu0
    %v1480 = vadd.f32 %v1347, %v1479
    %v1481 = vpop.f32.mrb[0].mxu0
    %1482 = vmatprep.mubr.bf16.mxu0 0
    %1483 = vmatmul.mubr.bf16.gmra.mrb[0].mxu0 %v1402
    %v1484 = vpop.f32.mrb[0].mxu0
    %v1485 = vadd.f32 %v1352, %v1484
    %v1486 = vpop.f32.mrb[0].mxu0
    %v1487 = vpop.f32.mrb[0].mxu0
    %v1488 = vadd.f32 %v1355, %v1487
    %v1489 = vpop.f32.mrb[0].mxu0
    %1490 = vmatprep.mubr.bf16.mxu0 0
    %1491 = vmatmul.mubr.bf16.gmra.mrb[0].mxu0 %v1405
    %v1492 = vpop.f32.mrb[0].mxu0
    %v1493 = vadd.f32 %v1360, %v1492
    %v1494 = vpop.f32.mrb[0].mxu0
    %v1495 = vpop.f32.mrb[0].mxu0
    %v1496 = vadd.f32 %v1363, %v1495
    %v1497 = vpop.f32.mrb[0].mxu0
    %1498 = vmatprep.mubr.bf16.mxu0 0
    %1499 = vmatmul.mubr.bf16.gmra.mrb[0].mxu0 %v1408
    %v1500 = vpop.f32.mrb[0].mxu0
    %v1501 = vadd.f32 %v1368, %v1500
    %v1502 = vpop.f32.mrb[0].mxu0
    %v1503 = vpop.f32.mrb[0].mxu0
    %v1504 = vadd.f32 %v1371, %v1503
    %v1505 = vpop.f32.mrb[0].mxu0
    %1506 = vdwg.mxu0
    %v1507 = vrot.slane %v1112, 1
    %v1508 = vrot.slane %v1113, 1
    %v1509 = vsel %vm617, %v1507, %v1508
    %v1510 = vrot.slane %v1114, 1
    %v1511 = vsel %vm617, %v1508, %v1510
    %v1512 = vrot.slane %v1115, 1
    %v1513 = vsel %vm617, %v1510, %v1512
    %v1514 = vrot.slane %v1116, 1
    %v1515 = vsel %vm617, %v1512, %v1514
    %v1516 = vrot.slane %v1117, 1
    %v1517 = vsel %vm617, %v1514, %v1516
    %v1518 = vrot.slane %v1118, 1
    %v1519 = vsel %vm617, %v1516, %v1518
    %v1520 = vrot.slane %v1119, 1
    %v1521 = vsel %vm617, %v1518, %v1520
    %v1522 = vrot.slane %v1120, 1
    %v1523 = vsel %vm617, %v1520, %v1522
    %v1524 = vrot.slane %v1121, 1
    %v1525 = vsel %vm617, %v1522, %v1524
    %v1526 = vrot.slane %v1122, 1
    %v1527 = vsel %vm617, %v1524, %v1526
    %v1528 = vrot.slane %v1123, 1
    %v1529 = vsel %vm617, %v1526, %v1528
    %v1530 = vrot.slane %v1124, 1
    %v1531 = vsel %vm617, %v1528, %v1530
    %v1532 = vrot.slane %v1125, 1
    %v1533 = vsel %vm617, %v1530, %v1532
    %v1534 = vrot.slane %v1126, 1
    %v1535 = vsel %vm617, %v1532, %v1534
    %v1536 = vrot.slane %v1127, 1
    %v1537 = vsel %vm617, %v1534, %v1536
    %v1555 = vsel %vm617, %v1536, %v1507
    %v1556 = vsel %vm731, %v1509, 0.0
    %v1557 = vsel %vm732, %v1511, 0.0
    %v1558 = vsel %vm733, %v1513, 0.0
    %v1559 = vsel %vm734, %v1515, 0.0
    %v1560 = vsel %vm735, %v1517, 0.0
    %v1561 = vsel %vm736, %v1519, 0.0
    %v1562 = vsel %vm737, %v1521, 0.0
    %v1563 = vsel %vm738, %v1523, 0.0
    %v1564 = vsel %vm739, %v1525, 0.0
    %v1565 = vsel %vm740, %v1527, 0.0
    %v1566 = vsel %vm741, %v1529, 0.0
    %v1567 = vsel %vm742, %v1531, 0.0
    %v1568 = vsel %vm743, %v1533, 0.0
    %v1569 = vsel %vm744, %v1535, 0.0
    %v1570 = vsel %vm745, %v1537, 0.0
    %v1571 = vsel %vm746, %v1555, 0.0
    %v1572 = vpack.c.bf16 %v1557, %v1556
    %v1573 = vpack.c.bf16 %v1559, %v1558
    %v1574 = vpack.c.bf16 %v1561, %v1560
    %v1575 = vpack.c.bf16 %v1563, %v1562
    %v1576 = vpack.c.bf16 %v1565, %v1564
    %v1577 = vpack.c.bf16 %v1567, %v1566
    %v1578 = vpack.c.bf16 %v1569, %v1568
    %v1579 = vpack.c.bf16 %v1571, %v1570
    %v1584 = vunpack.c.l.b16 %v1138
    %v1585 = vunpack.c.l.b16 %v1139
    %v1586 = vunpack.c.l.b16 %v1140
    %v1587 = vunpack.c.l.b16 %v1141
    %v1588 = vpack.c.b16 %v1585, %v1584
    %v1589 = vpack.c.b16 %v1587, %v1586
    %v1593 = vsel %vm1252, %v1572, 0
    %v1596 = vsel %vm1252, %v1573, 0
    %v1599 = vsel %vm1252, %v1574, 0
    %v1602 = vsel %vm1252, %v1575, 0
    %v1605 = vsel %vm1252, %v1576, 0
    %v1608 = vsel %vm1252, %v1577, 0
    %v1611 = vsel %vm1252, %v1578, 0
    %v1614 = vsel %vm1252, %v1579, 0
    %1616 = vmatprep.subr.bf16.mxu0 0
    %1617 = vmatpush1.bf16.msra.mxu0 %v1588
    %1618 = vmatprep.subr.bf16.mxu0 0
    %1619 = vmatpush1.bf16.msra.mxu0 %v1589
    %1620 = vmatprep.subr.bf16.mxu0 0
    %1621 = vmatpush1.bf16.msra.mxu0 0
    %1622 = vmatprep.subr.bf16.mxu0 0
    %1623 = vmatpush1.bf16.msra.mxu0 0
    %1624 = vmatprep.subr.bf16.mxu0 0
    %1625 = vmatpush1.bf16.msra.mxu0 0
    %1626 = vmatprep.subr.bf16.mxu0 0
    %1627 = vmatpush1.bf16.msra.mxu0 0
    %1628 = vmatprep.subr.bf16.mxu0 0
    %1629 = vmatpush1.bf16.msra.mxu0 0
    %1630 = vmatprep.subr.bf16.mxu0 0
    %1631 = vmatpush1.bf16.msra.mxu0 0
    %1632 = vmatprep.subr.bf16.mxu0 0
    %1633 = vmatpush1.bf16.msra.mxu0 0
    %1634 = vmatprep.subr.bf16.mxu0 0
    %1635 = vmatpush1.bf16.msra.mxu0 0
    %1636 = vmatprep.subr.bf16.mxu0 0
    %1637 = vmatpush1.bf16.msra.mxu0 0
    %1638 = vmatprep.subr.bf16.mxu0 0
    %1639 = vmatpush1.bf16.msra.mxu0 0
    %1640 = vmatprep.subr.bf16.mxu0 0
    %1641 = vmatpush1.bf16.msra.mxu0 0
    %1642 = vmatprep.subr.bf16.mxu0 0
    %1643 = vmatpush1.bf16.msra.mxu0 0
    %1644 = vmatprep.subr.bf16.mxu0 0
    %1645 = vmatpush1.bf16.msra.mxu0 0
    %1646 = vmatprep.subr.bf16.mxu0 0
    %1647 = vmatpush1.bf16.msra.mxu0 0
    %1648 = vmatprep.mubr.bf16.mxu0 0
    %1649 = vmatmul.mubr.bf16.gmra.mrb[0].mxu0 %v1593
    %v1650 = vpop.f32.mrb[0].mxu0
    %v1651 = vadd.f32 0.0, %v1650
    %v1652 = vpop.f32.mrb[0].mxu0
    %v1653 = vpop.f32.mrb[0].mxu0
    %v1654 = vadd.f32 0.0, %v1653
    %v1655 = vpop.f32.mrb[0].mxu0
    %1656 = vmatprep.mubr.bf16.mxu0 0
    %1657 = vmatmul.mubr.bf16.gmra.mrb[0].mxu0 %v1596
    %v1658 = vpop.f32.mrb[0].mxu0
    %v1659 = vadd.f32 0.0, %v1658
    %v1660 = vpop.f32.mrb[0].mxu0
    %v1661 = vpop.f32.mrb[0].mxu0
    %v1662 = vadd.f32 0.0, %v1661
    %v1663 = vpop.f32.mrb[0].mxu0
    %1664 = vmatprep.mubr.bf16.mxu0 0
    %1665 = vmatmul.mubr.bf16.gmra.mrb[0].mxu0 %v1599
    %v1666 = vpop.f32.mrb[0].mxu0
    %v1667 = vadd.f32 0.0, %v1666
    %v1668 = vpop.f32.mrb[0].mxu0
    %v1669 = vpop.f32.mrb[0].mxu0
    %v1670 = vadd.f32 0.0, %v1669
    %v1671 = vpop.f32.mrb[0].mxu0
    %1672 = vmatprep.mubr.bf16.mxu0 0
    %1673 = vmatmul.mubr.bf16.gmra.mrb[0].mxu0 %v1602
    %v1674 = vpop.f32.mrb[0].mxu0
    %v1675 = vadd.f32 0.0, %v1674
    %v1676 = vpop.f32.mrb[0].mxu0
    %v1677 = vpop.f32.mrb[0].mxu0
    %v1678 = vadd.f32 0.0, %v1677
    %v1679 = vpop.f32.mrb[0].mxu0
    %1680 = vmatprep.mubr.bf16.mxu0 0
    %1681 = vmatmul.mubr.bf16.gmra.mrb[0].mxu0 %v1605
    %v1682 = vpop.f32.mrb[0].mxu0
    %v1683 = vadd.f32 0.0, %v1682
    %v1684 = vpop.f32.mrb[0].mxu0
    %v1685 = vpop.f32.mrb[0].mxu0
    %v1686 = vadd.f32 0.0, %v1685
    %v1687 = vpop.f32.mrb[0].mxu0
    %1688 = vmatprep.mubr.bf16.mxu0 0
    %1689 = vmatmul.mubr.bf16.gmra.mrb[0].mxu0 %v1608
    %v1690 = vpop.f32.mrb[0].mxu0
    %v1691 = vadd.f32 0.0, %v1690
    %v1692 = vpop.f32.mrb[0].mxu0
    %v1693 = vpop.f32.mrb[0].mxu0
    %v1694 = vadd.f32 0.0, %v1693
    %v1695 = vpop.f32.mrb[0].mxu0
    %1696 = vmatprep.mubr.bf16.mxu0 0
    %1697 = vmatmul.mubr.bf16.gmra.mrb[0].mxu0 %v1611
    %v1698 = vpop.f32.mrb[0].mxu0
    %v1699 = vadd.f32 0.0, %v1698
    %v1700 = vpop.f32.mrb[0].mxu0
    %v1701 = vpop.f32.mrb[0].mxu0
    %v1702 = vadd.f32 0.0, %v1701
    %v1703 = vpop.f32.mrb[0].mxu0
    %1704 = vmatprep.mubr.bf16.mxu0 0
    %1705 = vmatmul.mubr.bf16.gmra.mrb[0].mxu0 %v1614
    %v1706 = vpop.f32.mrb[0].mxu0
    %v1707 = vadd.f32 0.0, %v1706
    %v1708 = vpop.f32.mrb[0].mxu0
    %v1709 = vpop.f32.mrb[0].mxu0
    %v1710 = vadd.f32 0.0, %v1709
    %v1711 = vpop.f32.mrb[0].mxu0
    %1712 = vdwg.mxu0
    %v1713 = vadd.f32 %v1445, %v1651
    %v1714 = vadd.f32 %v1448, %v1654
    %v1715 = vadd.f32 %v1453, %v1659
    %v1716 = vadd.f32 %v1456, %v1662
    %v1717 = vadd.f32 %v1461, %v1667
    %v1718 = vadd.f32 %v1464, %v1670
    %v1719 = vadd.f32 %v1469, %v1675
    %v1720 = vadd.f32 %v1472, %v1678
    %v1721 = vadd.f32 %v1477, %v1683
    %v1722 = vadd.f32 %v1480, %v1686
    %v1723 = vadd.f32 %v1485, %v1691
    %v1724 = vadd.f32 %v1488, %v1694
    %v1725 = vadd.f32 %v1493, %v1699
    %v1726 = vadd.f32 %v1496, %v1702
    %v1727 = vadd.f32 %v1501, %v1707
    %v1728 = vadd.f32 %v1504, %v1710
    %v1730 = vlaneseq
    %v1731 = vshrl.u32 %v1730, 7
    %v1732 = vsub.s32 0, %v1731
    %v1733 = vrot.slane %v1142, %v1732
    %v1735 = vadd.f32 %v1713, %v1733
    %v1736 = vadd.f32 %v1714, %v1733
    %v1737 = vadd.f32 %v1715, %v1733
    %v1738 = vadd.f32 %v1716, %v1733
    %v1739 = vadd.f32 %v1717, %v1733
    %v1740 = vadd.f32 %v1718, %v1733
    %v1741 = vadd.f32 %v1719, %v1733
    %v1742 = vadd.f32 %v1720, %v1733
    %v1743 = vadd.f32 %v1721, %v1733
    %v1744 = vadd.f32 %v1722, %v1733
    %v1745 = vadd.f32 %v1723, %v1733
    %v1746 = vadd.f32 %v1724, %v1733
    %v1747 = vadd.f32 %v1725, %v1733
    %v1748 = vadd.f32 %v1726, %v1733
    %v1749 = vadd.f32 %v1727, %v1733
    %v1750 = vadd.f32 %v1728, %v1733
    %v1751 = vtanh.pop %v1735
    %v1752 = vtanh.pop %v1736
    %v1753 = vtanh.pop %v1737
    %v1754 = vtanh.pop %v1738
    %v1755 = vtanh.pop %v1739
    %v1756 = vtanh.pop %v1740
    %v1757 = vtanh.pop %v1741
    %v1758 = vtanh.pop %v1742
    %v1759 = vtanh.pop %v1743
    %v1760 = vtanh.pop %v1744
    %v1761 = vtanh.pop %v1745
    %v1762 = vtanh.pop %v1746
    %v1763 = vtanh.pop %v1747
    %v1764 = vtanh.pop %v1748
    %v1765 = vtanh.pop %v1749
    %v1766 = vtanh.pop %v1750
    %v1767 = vxor.u32 %v1735, 2147483648
    %v1768 = vxor.u32 %v1736, 2147483648
    %v1769 = vxor.u32 %v1737, 2147483648
    %v1770 = vxor.u32 %v1738, 2147483648
    %v1771 = vxor.u32 %v1739, 2147483648
    %v1772 = vxor.u32 %v1740, 2147483648
    %v1773 = vxor.u32 %v1741, 2147483648
    %v1774 = vxor.u32 %v1742, 2147483648
    %v1775 = vxor.u32 %v1743, 2147483648
    %v1776 = vxor.u32 %v1744, 2147483648
    %v1777 = vxor.u32 %v1745, 2147483648
    %v1778 = vxor.u32 %v1746, 2147483648
    %v1779 = vxor.u32 %v1747, 2147483648
    %v1780 = vxor.u32 %v1748, 2147483648
    %v1781 = vxor.u32 %v1749, 2147483648
    %v1782 = vxor.u32 %v1750, 2147483648
    %v1783 = vmul.f32 %v1767, 1.442695
    %v1784 = vpow.pop %v1783
    %v1785 = vmul.f32 %v1768, 1.442695
    %v1786 = vpow.pop %v1785
    %v1787 = vmul.f32 %v1769, 1.442695
    %v1788 = vpow.pop %v1787
    %v1789 = vmul.f32 %v1770, 1.442695
    %v1790 = vpow.pop %v1789
    %v1791 = vmul.f32 %v1771, 1.442695
    %v1792 = vpow.pop %v1791
    %v1793 = vmul.f32 %v1772, 1.442695
    %v1794 = vpow.pop %v1793
    %v1795 = vmul.f32 %v1773, 1.442695
    %v1796 = vpow.pop %v1795
    %v1797 = vmul.f32 %v1774, 1.442695
    %v1798 = vpow.pop %v1797
    %v1799 = vmul.f32 %v1775, 1.442695
    %v1800 = vpow.pop %v1799
    %v1801 = vmul.f32 %v1776, 1.442695
    %v1802 = vpow.pop %v1801
    %v1803 = vmul.f32 %v1777, 1.442695
    %v1804 = vpow.pop %v1803
    %v1805 = vmul.f32 %v1778, 1.442695
    %v1806 = vpow.pop %v1805
    %v1807 = vmul.f32 %v1779, 1.442695
    %v1808 = vpow.pop %v1807
    %v1809 = vmul.f32 %v1780, 1.442695
    %v1810 = vpow.pop %v1809
    %v1811 = vmul.f32 %v1781, 1.442695
    %v1812 = vpow.pop %v1811
    %v1813 = vmul.f32 %v1782, 1.442695
    %v1814 = vpow.pop %v1813
    %v1815 = vadd.f32 %v1784, 1.0
    %v1816 = vadd.f32 %v1786, 1.0
    %v1817 = vadd.f32 %v1788, 1.0
    %v1818 = vadd.f32 %v1790, 1.0
    %v1819 = vadd.f32 %v1792, 1.0
    %v1820 = vadd.f32 %v1794, 1.0
    %v1821 = vadd.f32 %v1796, 1.0
    %v1822 = vadd.f32 %v1798, 1.0
    %v1823 = vadd.f32 %v1800, 1.0
    %v1824 = vadd.f32 %v1802, 1.0
    %v1825 = vadd.f32 %v1804, 1.0
    %v1826 = vadd.f32 %v1806, 1.0
    %v1827 = vadd.f32 %v1808, 1.0
    %v1828 = vadd.f32 %v1810, 1.0
    %v1829 = vadd.f32 %v1812, 1.0
    %v1830 = vadd.f32 %v1814, 1.0
    %v1831 = vrcp.pop %v1815
    %v1832 = vmul.f32 1.0, %v1831
    %v1833 = vrcp.pop %v1816
    %v1834 = vmul.f32 1.0, %v1833
    %v1835 = vrcp.pop %v1817
    %v1836 = vmul.f32 1.0, %v1835
    %v1837 = vrcp.pop %v1818
    %v1838 = vmul.f32 1.0, %v1837
    %v1839 = vrcp.pop %v1819
    %v1840 = vmul.f32 1.0, %v1839
    %v1841 = vrcp.pop %v1820
    %v1842 = vmul.f32 1.0, %v1841
    %v1843 = vrcp.pop %v1821
    %v1844 = vmul.f32 1.0, %v1843
    %v1845 = vrcp.pop %v1822
    %v1846 = vmul.f32 1.0, %v1845
    %v1847 = vrcp.pop %v1823
    %v1848 = vmul.f32 1.0, %v1847
    %v1849 = vrcp.pop %v1824
    %v1850 = vmul.f32 1.0, %v1849
    %v1851 = vrcp.pop %v1825
    %v1852 = vmul.f32 1.0, %v1851
    %v1853 = vrcp.pop %v1826
    %v1854 = vmul.f32 1.0, %v1853
    %v1855 = vrcp.pop %v1827
    %v1856 = vmul.f32 1.0, %v1855
    %v1857 = vrcp.pop %v1828
    %v1858 = vmul.f32 1.0, %v1857
    %v1859 = vrcp.pop %v1829
    %v1860 = vmul.f32 1.0, %v1859
    %v1861 = vrcp.pop %v1830
    %v1862 = vmul.f32 1.0, %v1861
    %1879 = vrot.lane.b32.xlu0 %v1832, 96
    %v1880 = vpop.permute.xlu0 %1879
    %1881 = vrot.lane.b32.xlu0 %v1834, 96
    %v1882 = vpop.permute.xlu0 %1881
    %1883 = vrot.lane.b32.xlu0 %v1836, 96
    %v1884 = vpop.permute.xlu0 %1883
    %1885 = vrot.lane.b32.xlu0 %v1838, 96
    %v1886 = vpop.permute.xlu0 %1885
    %1887 = vrot.lane.b32.xlu0 %v1840, 96
    %v1888 = vpop.permute.xlu0 %1887
    %1889 = vrot.lane.b32.xlu0 %v1842, 96
    %v1890 = vpop.permute.xlu0 %1889
    %1891 = vrot.lane.b32.xlu0 %v1844, 96
    %v1892 = vpop.permute.xlu0 %1891
    %1893 = vrot.lane.b32.xlu0 %v1846, 96
    %v1894 = vpop.permute.xlu0 %1893
    %1895 = vrot.lane.b32.xlu0 %v1848, 96
    %v1896 = vpop.permute.xlu0 %1895
    %1897 = vrot.lane.b32.xlu0 %v1850, 96
    %v1898 = vpop.permute.xlu0 %1897
    %1899 = vrot.lane.b32.xlu0 %v1852, 96
    %v1900 = vpop.permute.xlu0 %1899
    %1901 = vrot.lane.b32.xlu0 %v1854, 96
    %v1902 = vpop.permute.xlu0 %1901
    %1903 = vrot.lane.b32.xlu0 %v1856, 96
    %v1904 = vpop.permute.xlu0 %1903
    %1905 = vrot.lane.b32.xlu0 %v1858, 96
    %v1906 = vpop.permute.xlu0 %1905
    %1907 = vrot.lane.b32.xlu0 %v1860, 96
    %v1908 = vpop.permute.xlu0 %1907
    %1909 = vrot.lane.b32.xlu0 %v1862, 96
    %v1910 = vpop.permute.xlu0 %1909
    %v1927 = vmul.f32 %v1751, %v1880
    %v1928 = vmul.f32 %v1752, %v1882
    %v1929 = vmul.f32 %v1753, %v1884
    %v1930 = vmul.f32 %v1754, %v1886
    %v1931 = vmul.f32 %v1755, %v1888
    %v1932 = vmul.f32 %v1756, %v1890
    %v1933 = vmul.f32 %v1757, %v1892
    %v1934 = vmul.f32 %v1758, %v1894
    %v1935 = vmul.f32 %v1759, %v1896
    %v1936 = vmul.f32 %v1760, %v1898
    %v1937 = vmul.f32 %v1761, %v1900
    %v1938 = vmul.f32 %v1762, %v1902
    %v1939 = vmul.f32 %v1763, %v1904
    %v1940 = vmul.f32 %v1764, %v1906
    %v1941 = vmul.f32 %v1765, %v1908
    %v1942 = vmul.f32 %v1766, %v1910
    %v1943 = vpack.c.bf16 %v1928, %v1927
    %v1944 = vpack.c.bf16 %v1930, %v1929
    %v1945 = vpack.c.bf16 %v1932, %v1931
    %v1946 = vpack.c.bf16 %v1934, %v1933
    %v1947 = vpack.c.bf16 %v1936, %v1935
    %v1948 = vpack.c.bf16 %v1938, %v1937
    %v1949 = vpack.c.bf16 %v1940, %v1939
    %v1950 = vpack.c.bf16 %v1942, %v1941
    %v1951 = vld [vmem:[#allocation6] sm:$0xf]
    %v1952 = vld [vmem:[#allocation6 + $0x4] sm:$0xf]
    %v1953 = vld [vmem:[#allocation6 + $0x8] sm:$0xf]
    %v1954 = vld [vmem:[#allocation6 + $0xc] sm:$0xf]
    %v1959 = vunpack.c.l.b16 %v1951
    %v1960 = vunpack.c.l.b16 %v1952
    %v1961 = vunpack.c.l.b16 %v1953
    %v1962 = vunpack.c.l.b16 %v1954
    %v1963 = vpack.c.b16 %v1960, %v1959
    %v1964 = vpack.c.b16 %v1962, %v1961
    %v1968 = vsel %vm1252, %v1943, 0
    %v1971 = vsel %vm1252, %v1944, 0
    %v1974 = vsel %vm1252, %v1945, 0
    %v1977 = vsel %vm1252, %v1946, 0
    %v1980 = vsel %vm1252, %v1947, 0
    %v1983 = vsel %vm1252, %v1948, 0
    %v1986 = vsel %vm1252, %v1949, 0
    %v1989 = vsel %vm1252, %v1950, 0
    %1991 = vmatprep.subr.bf16.mxu0 0
    %1992 = vmatpush1.bf16.msra.mxu0 %v1963
    %1993 = vmatprep.subr.bf16.mxu0 0
    %1994 = vmatpush1.bf16.msra.mxu0 %v1964
    %1995 = vmatprep.subr.bf16.mxu0 0
    %1996 = vmatpush1.bf16.msra.mxu0 0
    %1997 = vmatprep.subr.bf16.mxu0 0
    %1998 = vmatpush1.bf16.msra.mxu0 0
    %1999 = vmatprep.subr.bf16.mxu0 0
    %2000 = vmatpush1.bf16.msra.mxu0 0
    %2001 = vmatprep.subr.bf16.mxu0 0
    %2002 = vmatpush1.bf16.msra.mxu0 0
    %2003 = vmatprep.subr.bf16.mxu0 0
    %2004 = vmatpush1.bf16.msra.mxu0 0
    %2005 = vmatprep.subr.bf16.mxu0 0
    %2006 = vmatpush1.bf16.msra.mxu0 0
    %2007 = vmatprep.subr.bf16.mxu0 0
    %2008 = vmatpush1.bf16.msra.mxu0 0
    %2009 = vmatprep.subr.bf16.mxu0 0
    %2010 = vmatpush1.bf16.msra.mxu0 0
    %2011 = vmatprep.subr.bf16.mxu0 0
    %2012 = vmatpush1.bf16.msra.mxu0 0
    %2013 = vmatprep.subr.bf16.mxu0 0
    %2014 = vmatpush1.bf16.msra.mxu0 0
    %2015 = vmatprep.subr.bf16.mxu0 0
    %2016 = vmatpush1.bf16.msra.mxu0 0
    %2017 = vmatprep.subr.bf16.mxu0 0
    %2018 = vmatpush1.bf16.msra.mxu0 0
    %2019 = vmatprep.subr.bf16.mxu0 0
    %2020 = vmatpush1.bf16.msra.mxu0 0
    %2021 = vmatprep.subr.bf16.mxu0 0
    %2022 = vmatpush1.bf16.msra.mxu0 0
    %2023 = vmatprep.mubr.bf16.mxu0 0
    %2024 = vmatmul.mubr.bf16.gmra.mrb[0].mxu0 %v1968
    %v2025 = vpop.f32.mrb[0].mxu0
    %v2026 = vadd.f32 0.0, %v2025
    %v2027 = vpop.f32.mrb[0].mxu0
    %v2028 = vpop.f32.mrb[0].mxu0
    %v2029 = vadd.f32 0.0, %v2028
    %v2030 = vpop.f32.mrb[0].mxu0
    %2031 = vmatprep.mubr.bf16.mxu0 0
    %2032 = vmatmul.mubr.bf16.gmra.mrb[0].mxu0 %v1971
    %v2033 = vpop.f32.mrb[0].mxu0
    %v2034 = vadd.f32 0.0, %v2033
    %v2035 = vpop.f32.mrb[0].mxu0
    %v2036 = vpop.f32.mrb[0].mxu0
    %v2037 = vadd.f32 0.0, %v2036
    %v2038 = vpop.f32.mrb[0].mxu0
    %2039 = vmatprep.mubr.bf16.mxu0 0
    %2040 = vmatmul.mubr.bf16.gmra.mrb[0].mxu0 %v1974
    %v2041 = vpop.f32.mrb[0].mxu0
    %v2042 = vadd.f32 0.0, %v2041
    %v2043 = vpop.f32.mrb[0].mxu0
    %v2044 = vpop.f32.mrb[0].mxu0
    %v2045 = vadd.f32 0.0, %v2044
    %v2046 = vpop.f32.mrb[0].mxu0
    %2047 = vmatprep.mubr.bf16.mxu0 0
    %2048 = vmatmul.mubr.bf16.gmra.mrb[0].mxu0 %v1977
    %v2049 = vpop.f32.mrb[0].mxu0
    %v2050 = vadd.f32 0.0, %v2049
    %v2051 = vpop.f32.mrb[0].mxu0
    %v2052 = vpop.f32.mrb[0].mxu0
    %v2053 = vadd.f32 0.0, %v2052
    %v2054 = vpop.f32.mrb[0].mxu0
    %2055 = vmatprep.mubr.bf16.mxu0 0
    %2056 = vmatmul.mubr.bf16.gmra.mrb[0].mxu0 %v1980
    %v2057 = vpop.f32.mrb[0].mxu0
    %v2058 = vadd.f32 0.0, %v2057
    %v2059 = vpop.f32.mrb[0].mxu0
    %v2060 = vpop.f32.mrb[0].mxu0
    %v2061 = vadd.f32 0.0, %v2060
    %v2062 = vpop.f32.mrb[0].mxu0
    %2063 = vmatprep.mubr.bf16.mxu0 0
    %2064 = vmatmul.mubr.bf16.gmra.mrb[0].mxu0 %v1983
    %v2065 = vpop.f32.mrb[0].mxu0
    %v2066 = vadd.f32 0.0, %v2065
    %v2067 = vpop.f32.mrb[0].mxu0
    %v2068 = vpop.f32.mrb[0].mxu0
    %v2069 = vadd.f32 0.0, %v2068
    %v2070 = vpop.f32.mrb[0].mxu0
    %2071 = vmatprep.mubr.bf16.mxu0 0
    %2072 = vmatmul.mubr.bf16.gmra.mrb[0].mxu0 %v1986
    %v2073 = vpop.f32.mrb[0].mxu0
    %v2074 = vadd.f32 0.0, %v2073
    %v2075 = vpop.f32.mrb[0].mxu0
    %v2076 = vpop.f32.mrb[0].mxu0
    %v2077 = vadd.f32 0.0, %v2076
    %v2078 = vpop.f32.mrb[0].mxu0
    %2079 = vmatprep.mubr.bf16.mxu0 0
    %2080 = vmatmul.mubr.bf16.gmra.mrb[0].mxu0 %v1989
    %v2081 = vpop.f32.mrb[0].mxu0
    %v2082 = vadd.f32 0.0, %v2081
    %v2083 = vpop.f32.mrb[0].mxu0
    %v2084 = vpop.f32.mrb[0].mxu0
    %v2085 = vadd.f32 0.0, %v2084
    %v2086 = vpop.f32.mrb[0].mxu0
    %2087 = vdwg.mxu0
    %v2088 = vadd.f32 %v2026, 0.0
    %v2089 = vadd.f32 %v2029, 0.0
    %v2090 = vadd.f32 %v2034, 0.0
    %v2091 = vadd.f32 %v2037, 0.0
    %v2092 = vadd.f32 %v2042, 0.0
    %v2093 = vadd.f32 %v2045, 0.0
    %v2094 = vadd.f32 %v2050, 0.0
    %v2095 = vadd.f32 %v2053, 0.0
    %v2096 = vadd.f32 %v2058, 0.0
    %v2097 = vadd.f32 %v2061, 0.0
    %v2098 = vadd.f32 %v2066, 0.0
    %v2099 = vadd.f32 %v2069, 0.0
    %v2100 = vadd.f32 %v2074, 0.0
    %v2101 = vadd.f32 %v2077, 0.0
    %v2102 = vadd.f32 %v2082, 0.0
    %v2103 = vadd.f32 %v2085, 0.0
    %v2104 = vld [vmem:[#allocation7] sm:$0x1]
    %v2106 = vlaneseq
    %v2107 = vshrl.u32 %v2106, 7
    %v2108 = vsub.s32 0, %v2107
    %v2109 = vrot.slane %v2104, %v2108
    %2110 = vrot.lane.b32.xlu0 %v2109, 64
    %v2111 = vpop.permute.xlu0 %2110
    %v2113 = vadd.f32 %v2026, %v2111
    %v2114 = vadd.f32 %v2029, %v2111
    %v2115 = vadd.f32 %v2034, %v2111
    %v2116 = vadd.f32 %v2037, %v2111
    %v2117 = vadd.f32 %v2042, %v2111
    %v2118 = vadd.f32 %v2045, %v2111
    %v2119 = vadd.f32 %v2050, %v2111
    %v2120 = vadd.f32 %v2053, %v2111
    %v2121 = vadd.f32 %v2058, %v2111
    %v2122 = vadd.f32 %v2061, %v2111
    %v2123 = vadd.f32 %v2066, %v2111
    %v2124 = vadd.f32 %v2069, %v2111
    %v2125 = vadd.f32 %v2074, %v2111
    %v2126 = vadd.f32 %v2077, %v2111
    %v2127 = vadd.f32 %v2082, %v2111
    %v2128 = vadd.f32 %v2085, %v2111
    %2129 = vrot.lane.b32.xlu0 %v1112, 64
    %v2130 = vpop.permute.xlu0 %2129
    %2131 = vrot.lane.b32.xlu0 %v1113, 64
    %v2132 = vpop.permute.xlu0 %2131
    %2133 = vrot.lane.b32.xlu0 %v1114, 64
    %v2134 = vpop.permute.xlu0 %2133
    %2135 = vrot.lane.b32.xlu0 %v1115, 64
    %v2136 = vpop.permute.xlu0 %2135
    %2137 = vrot.lane.b32.xlu0 %v1116, 64
    %v2138 = vpop.permute.xlu0 %2137
    %2139 = vrot.lane.b32.xlu0 %v1117, 64
    %v2140 = vpop.permute.xlu0 %2139
    %2141 = vrot.lane.b32.xlu0 %v1118, 64
    %v2142 = vpop.permute.xlu0 %2141
    %2143 = vrot.lane.b32.xlu0 %v1119, 64
    %v2144 = vpop.permute.xlu0 %2143
    %2145 = vrot.lane.b32.xlu0 %v1120, 64
    %v2146 = vpop.permute.xlu0 %2145
    %2147 = vrot.lane.b32.xlu0 %v1121, 64
    %v2148 = vpop.permute.xlu0 %2147
    %2149 = vrot.lane.b32.xlu0 %v1122, 64
    %v2150 = vpop.permute.xlu0 %2149
    %2151 = vrot.lane.b32.xlu0 %v1123, 64
    %v2152 = vpop.permute.xlu0 %2151
    %2153 = vrot.lane.b32.xlu0 %v1124, 64
    %v2154 = vpop.permute.xlu0 %2153
    %2155 = vrot.lane.b32.xlu0 %v1125, 64
    %v2156 = vpop.permute.xlu0 %2155
    %2157 = vrot.lane.b32.xlu0 %v1126, 64
    %v2158 = vpop.permute.xlu0 %2157
    %2159 = vrot.lane.b32.xlu0 %v1127, 64
    %v2160 = vpop.permute.xlu0 %2159
    %v2177 = vadd.f32 %v2113, %v2130
    %v2178 = vadd.f32 %v2114, %v2132
    %v2179 = vadd.f32 %v2115, %v2134
    %v2180 = vadd.f32 %v2116, %v2136
    %v2181 = vadd.f32 %v2117, %v2138
    %v2182 = vadd.f32 %v2118, %v2140
    %v2183 = vadd.f32 %v2119, %v2142
    %v2184 = vadd.f32 %v2120, %v2144
    %v2185 = vadd.f32 %v2121, %v2146
    %v2186 = vadd.f32 %v2122, %v2148
    %v2187 = vadd.f32 %v2123, %v2150
    %v2188 = vadd.f32 %v2124, %v2152
    %v2189 = vadd.f32 %v2125, %v2154
    %v2190 = vadd.f32 %v2126, %v2156
    %v2191 = vadd.f32 %v2127, %v2158
    %v2192 = vadd.f32 %v2128, %v2160
    %s2193 = scalar_lea.vmem %s4, 48
    %v2194 = vld [vmem:[%s2193] sm:$0xf]
    %v2195 = vld [vmem:[%s2193 + $0x4] sm:$0xf]
    %v2196 = vld [vmem:[%s2193 + $0x8] sm:$0xf]
    %v2197 = vld [vmem:[%s2193 + $0xc] sm:$0xf]
    %s2198 = scalar_lea.vmem %s4, 64
    %v2199 = vld [vmem:[%s2198] sm:$0xf]
    %v2200 = vld [vmem:[%s2198 + $0x4] sm:$0xf]
    %v2201 = vld [vmem:[%s2198 + $0x8] sm:$0xf]
    %v2202 = vld [vmem:[%s2198 + $0xc] sm:$0xf]
    %s2203 = scalar_lea.vmem %s4, 80
    %v2204 = vld [vmem:[%s2203] sm:$0xf]
    %v2205 = vld [vmem:[%s2203 + $0x4] sm:$0xf]
    %v2206 = vld [vmem:[%s2203 + $0x8] sm:$0xf]
    %v2207 = vld [vmem:[%s2203 + $0xc] sm:$0xf]
    %s2208 = scalar_lea.vmem [#allocation4], 1
    %v2209 = vld [vmem:[%s2208] sm:$0x1]
    %vm2210 = vcmp.ge.s32.totalorder %v111, 2
    %vm2211 = vcmp.ge.s32.totalorder %v112, 2
    %vm2212 = vcmp.ge.s32.totalorder %v113, 2
    %vm2213 = vcmp.ge.s32.totalorder %v114, 2
    %vm2214 = vcmp.ge.s32.totalorder %v115, 2
    %vm2215 = vcmp.ge.s32.totalorder %v116, 2
    %vm2216 = vcmp.ge.s32.totalorder %v117, 2
    %vm2217 = vcmp.ge.s32.totalorder %v118, 2
    %vm2218 = vcmp.ge.s32.totalorder %v119, 2
    %vm2219 = vcmp.ge.s32.totalorder %v120, 2
    %vm2220 = vcmp.ge.s32.totalorder %v121, 2
    %vm2221 = vcmp.ge.s32.totalorder %v122, 2
    %vm2222 = vcmp.ge.s32.totalorder %v123, 2
    %vm2223 = vcmp.ge.s32.totalorder %v124, 2
    %vm2224 = vcmp.ge.s32.totalorder %v125, 2
    %vm2225 = vcmp.ge.s32.totalorder %v126, 2
    %v2227 = vrot.slane %v2192, 6
    %vm2244 = vcmask 1041408
    %v2245 = vrot.slane %v2177, 6
    %v2246 = vrot.slane %v2178, 6
    %v2247 = vsel %vm2244, %v2245, %v2246
    %v2248 = vrot.slane %v2179, 6
    %v2249 = vsel %vm2244, %v2246, %v2248
    %v2250 = vrot.slane %v2180, 6
    %v2251 = vsel %vm2244, %v2248, %v2250
    %v2252 = vrot.slane %v2181, 6
    %v2253 = vsel %vm2244, %v2250, %v2252
    %v2254 = vrot.slane %v2182, 6
    %v2255 = vsel %vm2244, %v2252, %v2254
    %v2256 = vrot.slane %v2183, 6
    %v2257 = vsel %vm2244, %v2254, %v2256
    %v2258 = vrot.slane %v2184, 6
    %v2259 = vsel %vm2244, %v2256, %v2258
    %v2260 = vrot.slane %v2185, 6
    %v2261 = vsel %vm2244, %v2258, %v2260
    %v2262 = vrot.slane %v2186, 6
    %v2263 = vsel %vm2244, %v2260, %v2262
    %v2264 = vrot.slane %v2187, 6
    %v2265 = vsel %vm2244, %v2262, %v2264
    %v2266 = vrot.slane %v2188, 6
    %v2267 = vsel %vm2244, %v2264, %v2266
    %v2268 = vrot.slane %v2189, 6
    %v2269 = vsel %vm2244, %v2266, %v2268
    %v2270 = vrot.slane %v2190, 6
    %v2271 = vsel %vm2244, %v2268, %v2270
    %v2272 = vrot.slane %v2191, 6
    %v2273 = vsel %vm2244, %v2270, %v2272
    %v2274 = vsel %vm2244, %v2272, %v2227
    %v2291 = vsel %vm2244, %v2227, %v2245
    %v2292 = vsel %vm2210, 1, 0
    %v2293 = vsel %vm2211, 1, 0
    %v2294 = vsel %vm2212, 1, 0
    %v2295 = vsel %vm2213, 1, 0
    %v2296 = vsel %vm2214, 1, 0
    %v2297 = vsel %vm2215, 1, 0
    %v2298 = vsel %vm2216, 1, 0
    %v2299 = vsel %vm2217, 1, 0
    %v2300 = vsel %vm2218, 1, 0
    %v2301 = vsel %vm2219, 1, 0
    %v2302 = vsel %vm2220, 1, 0
    %v2303 = vsel %vm2221, 1, 0
    %v2304 = vsel %vm2222, 1, 0
    %v2305 = vsel %vm2223, 1, 0
    %v2306 = vsel %vm2224, 1, 0
    %v2307 = vsel %vm2225, 1, 0
    %2308 = vset.pattern.permute.xlu0 0
    %2309 = vperm.xlu0 %2308, %v2292
    %v2310 = vpop.permute.xlu0 %2309
    %2311 = vset.pattern.permute.xlu0 0
    %2312 = vperm.xlu0 %2311, %v2293
    %v2313 = vpop.permute.xlu0 %2312
    %2314 = vset.pattern.permute.xlu0 0
    %2315 = vperm.xlu0 %2314, %v2294
    %v2316 = vpop.permute.xlu0 %2315
    %2317 = vset.pattern.permute.xlu0 0
    %2318 = vperm.xlu0 %2317, %v2295
    %v2319 = vpop.permute.xlu0 %2318
    %2320 = vset.pattern.permute.xlu0 0
    %2321 = vperm.xlu0 %2320, %v2296
    %v2322 = vpop.permute.xlu0 %2321
    %2323 = vset.pattern.permute.xlu0 0
    %2324 = vperm.xlu0 %2323, %v2297
    %v2325 = vpop.permute.xlu0 %2324
    %2326 = vset.pattern.permute.xlu0 0
    %2327 = vperm.xlu0 %2326, %v2298
    %v2328 = vpop.permute.xlu0 %2327
    %2329 = vset.pattern.permute.xlu0 0
    %2330 = vperm.xlu0 %2329, %v2299
    %v2331 = vpop.permute.xlu0 %2330
    %2332 = vset.pattern.permute.xlu0 0
    %2333 = vperm.xlu0 %2332, %v2300
    %v2334 = vpop.permute.xlu0 %2333
    %2335 = vset.pattern.permute.xlu0 0
    %2336 = vperm.xlu0 %2335, %v2301
    %v2337 = vpop.permute.xlu0 %2336
    %2338 = vset.pattern.permute.xlu0 0
    %2339 = vperm.xlu0 %2338, %v2302
    %v2340 = vpop.permute.xlu0 %2339
    %2341 = vset.pattern.permute.xlu0 0
    %2342 = vperm.xlu0 %2341, %v2303
    %v2343 = vpop.permute.xlu0 %2342
    %2344 = vset.pattern.permute.xlu0 0
    %2345 = vperm.xlu0 %2344, %v2304
    %v2346 = vpop.permute.xlu0 %2345
    %2347 = vset.pattern.permute.xlu0 0
    %2348 = vperm.xlu0 %2347, %v2305
    %v2349 = vpop.permute.xlu0 %2348
    %2350 = vset.pattern.permute.xlu0 0
    %2351 = vperm.xlu0 %2350, %v2306
    %v2352 = vpop.permute.xlu0 %2351
    %2353 = vset.pattern.permute.xlu0 0
    %2354 = vperm.xlu0 %2353, %v2307
    %v2355 = vpop.permute.xlu0 %2354
    %vm2356 = vcmp.eq.s32.totalorder %v2310, 1
    %vm2357 = vcmp.eq.s32.totalorder %v2313, 1
    %vm2358 = vcmp.eq.s32.totalorder %v2316, 1
    %vm2359 = vcmp.eq.s32.totalorder %v2319, 1
    %vm2360 = vcmp.eq.s32.totalorder %v2322, 1
    %vm2361 = vcmp.eq.s32.totalorder %v2325, 1
    %vm2362 = vcmp.eq.s32.totalorder %v2328, 1
    %vm2363 = vcmp.eq.s32.totalorder %v2331, 1
    %vm2364 = vcmp.eq.s32.totalorder %v2334, 1
    %vm2365 = vcmp.eq.s32.totalorder %v2337, 1
    %vm2366 = vcmp.eq.s32.totalorder %v2340, 1
    %vm2367 = vcmp.eq.s32.totalorder %v2343, 1
    %vm2368 = vcmp.eq.s32.totalorder %v2346, 1
    %vm2369 = vcmp.eq.s32.totalorder %v2349, 1
    %vm2370 = vcmp.eq.s32.totalorder %v2352, 1
    %vm2371 = vcmp.eq.s32.totalorder %v2355, 1
    %v2372 = vsel %vm2356, %v2291, 0.0
    %v2373 = vsel %vm2357, %v2247, 0.0
    %v2374 = vsel %vm2358, %v2249, 0.0
    %v2375 = vsel %vm2359, %v2251, 0.0
    %v2376 = vsel %vm2360, %v2253, 0.0
    %v2377 = vsel %vm2361, %v2255, 0.0
    %v2378 = vsel %vm2362, %v2257, 0.0
    %v2379 = vsel %vm2363, %v2259, 0.0
    %v2380 = vsel %vm2364, %v2261, 0.0
    %v2381 = vsel %vm2365, %v2263, 0.0
    %v2382 = vsel %vm2366, %v2265, 0.0
    %v2383 = vsel %vm2367, %v2267, 0.0
    %v2384 = vsel %vm2368, %v2269, 0.0
    %v2385 = vsel %vm2369, %v2271, 0.0
    %v2386 = vsel %vm2370, %v2273, 0.0
    %v2387 = vsel %vm2371, %v2274, 0.0
    %v2388 = vpack.c.bf16 %v2373, %v2372
    %v2389 = vpack.c.bf16 %v2375, %v2374
    %v2390 = vpack.c.bf16 %v2377, %v2376
    %v2391 = vpack.c.bf16 %v2379, %v2378
    %v2392 = vpack.c.bf16 %v2381, %v2380
    %v2393 = vpack.c.bf16 %v2383, %v2382
    %v2394 = vpack.c.bf16 %v2385, %v2384
    %v2395 = vpack.c.bf16 %v2387, %v2386
    %v2396 = vpack.c.bf16 %v2178, %v2177
    %v2397 = vpack.c.bf16 %v2180, %v2179
    %v2398 = vpack.c.bf16 %v2182, %v2181
    %v2399 = vpack.c.bf16 %v2184, %v2183
    %v2400 = vpack.c.bf16 %v2186, %v2185
    %v2401 = vpack.c.bf16 %v2188, %v2187
    %v2402 = vpack.c.bf16 %v2190, %v2189
    %v2403 = vpack.c.bf16 %v2192, %v2191
    %2412 = vrot.lane.b32.xlu0 %v2396, 64
    %v2413 = vpop.permute.xlu0 %2412
    %2414 = vrot.lane.b32.xlu0 %v2397, 64
    %v2415 = vpop.permute.xlu0 %2414
    %2416 = vrot.lane.b32.xlu0 %v2398, 64
    %v2417 = vpop.permute.xlu0 %2416
    %2418 = vrot.lane.b32.xlu0 %v2399, 64
    %v2419 = vpop.permute.xlu0 %2418
    %2420 = vrot.lane.b32.xlu0 %v2400, 64
    %v2421 = vpop.permute.xlu0 %2420
    %2422 = vrot.lane.b32.xlu0 %v2401, 64
    %v2423 = vpop.permute.xlu0 %2422
    %2424 = vrot.lane.b32.xlu0 %v2402, 64
    %v2425 = vpop.permute.xlu0 %2424
    %2426 = vrot.lane.b32.xlu0 %v2403, 64
    %v2427 = vpop.permute.xlu0 %2426
    %v2432 = vunpack.c.l.b16 %v2199
    %v2433 = vunpack.c.l.b16 %v2200
    %v2434 = vunpack.c.l.b16 %v2201
    %v2435 = vunpack.c.l.b16 %v2202
    %v2436 = vpack.c.b16 %v2433, %v2432
    %v2437 = vpack.c.b16 %v2435, %v2434
    %v2441 = vsel %vm1252, %v2413, 0
    %v2444 = vsel %vm1252, %v2415, 0
    %v2447 = vsel %vm1252, %v2417, 0
    %v2450 = vsel %vm1252, %v2419, 0
    %v2453 = vsel %vm1252, %v2421, 0
    %v2456 = vsel %vm1252, %v2423, 0
    %v2459 = vsel %vm1252, %v2425, 0
    %v2462 = vsel %vm1252, %v2427, 0
    %2464 = vmatprep.subr.bf16.mxu0 0
    %2465 = vmatpush1.bf16.msra.mxu0 %v2436
    %2466 = vmatprep.subr.bf16.mxu0 0
    %2467 = vmatpush1.bf16.msra.mxu0 %v2437
    %2468 = vmatprep.subr.bf16.mxu0 0
    %2469 = vmatpush1.bf16.msra.mxu0 0
    %2470 = vmatprep.subr.bf16.mxu0 0
    %2471 = vmatpush1.bf16.msra.mxu0 0
    %2472 = vmatprep.subr.bf16.mxu0 0
    %2473 = vmatpush1.bf16.msra.mxu0 0
    %2474 = vmatprep.subr.bf16.mxu0 0
    %2475 = vmatpush1.bf16.msra.mxu0 0
    %2476 = vmatprep.subr.bf16.mxu0 0
    %2477 = vmatpush1.bf16.msra.mxu0 0
    %2478 = vmatprep.subr.bf16.mxu0 0
    %2479 = vmatpush1.bf16.msra.mxu0 0
    %2480 = vmatprep.subr.bf16.mxu0 0
    %2481 = vmatpush1.bf16.msra.mxu0 0
    %2482 = vmatprep.subr.bf16.mxu0 0
    %2483 = vmatpush1.bf16.msra.mxu0 0
    %2484 = vmatprep.subr.bf16.mxu0 0
    %2485 = vmatpush1.bf16.msra.mxu0 0
    %2486 = vmatprep.subr.bf16.mxu0 0
    %2487 = vmatpush1.bf16.msra.mxu0 0
    %2488 = vmatprep.subr.bf16.mxu0 0
    %2489 = vmatpush1.bf16.msra.mxu0 0
    %2490 = vmatprep.subr.bf16.mxu0 0
    %2491 = vmatpush1.bf16.msra.mxu0 0
    %2492 = vmatprep.subr.bf16.mxu0 0
    %2493 = vmatpush1.bf16.msra.mxu0 0
    %2494 = vmatprep.subr.bf16.mxu0 0
    %2495 = vmatpush1.bf16.msra.mxu0 0
    %2496 = vmatprep.mubr.bf16.mxu0 0
    %2497 = vmatmul.mubr.bf16.gmra.mrb[0].mxu0 %v2441
    %v2498 = vpop.f32.mrb[0].mxu0
    %v2499 = vadd.f32 0.0, %v2498
    %v2500 = vpop.f32.mrb[0].mxu0
    %v2501 = vpop.f32.mrb[0].mxu0
    %v2502 = vadd.f32 0.0, %v2501
    %v2503 = vpop.f32.mrb[0].mxu0
    %2504 = vmatprep.mubr.bf16.mxu0 0
    %2505 = vmatmul.mubr.bf16.gmra.mrb[0].mxu0 %v2444
    %v2506 = vpop.f32.mrb[0].mxu0
    %v2507 = vadd.f32 0.0, %v2506
    %v2508 = vpop.f32.mrb[0].mxu0
    %v2509 = vpop.f32.mrb[0].mxu0
    %v2510 = vadd.f32 0.0, %v2509
    %v2511 = vpop.f32.mrb[0].mxu0
    %2512 = vmatprep.mubr.bf16.mxu0 0
    %2513 = vmatmul.mubr.bf16.gmra.mrb[0].mxu0 %v2447
    %v2514 = vpop.f32.mrb[0].mxu0
    %v2515 = vadd.f32 0.0, %v2514
    %v2516 = vpop.f32.mrb[0].mxu0
    %v2517 = vpop.f32.mrb[0].mxu0
    %v2518 = vadd.f32 0.0, %v2517
    %v2519 = vpop.f32.mrb[0].mxu0
    %2520 = vmatprep.mubr.bf16.mxu0 0
    %2521 = vmatmul.mubr.bf16.gmra.mrb[0].mxu0 %v2450
    %v2522 = vpop.f32.mrb[0].mxu0
    %v2523 = vadd.f32 0.0, %v2522
    %v2524 = vpop.f32.mrb[0].mxu0
    %v2525 = vpop.f32.mrb[0].mxu0
    %v2526 = vadd.f32 0.0, %v2525
    %v2527 = vpop.f32.mrb[0].mxu0
    %2528 = vmatprep.mubr.bf16.mxu0 0
    %2529 = vmatmul.mubr.bf16.gmra.mrb[0].mxu0 %v2453
    %v2530 = vpop.f32.mrb[0].mxu0
    %v2531 = vadd.f32 0.0, %v2530
    %v2532 = vpop.f32.mrb[0].mxu0
    %v2533 = vpop.f32.mrb[0].mxu0
    %v2534 = vadd.f32 0.0, %v2533
    %v2535 = vpop.f32.mrb[0].mxu0
    %2536 = vmatprep.mubr.bf16.mxu0 0
    %2537 = vmatmul.mubr.bf16.gmra.mrb[0].mxu0 %v2456
    %v2538 = vpop.f32.mrb[0].mxu0
    %v2539 = vadd.f32 0.0, %v2538
    %v2540 = vpop.f32.mrb[0].mxu0
    %v2541 = vpop.f32.mrb[0].mxu0
    %v2542 = vadd.f32 0.0, %v2541
    %v2543 = vpop.f32.mrb[0].mxu0
    %2544 = vmatprep.mubr.bf16.mxu0 0
    %2545 = vmatmul.mubr.bf16.gmra.mrb[0].mxu0 %v2459
    %v2546 = vpop.f32.mrb[0].mxu0
    %v2547 = vadd.f32 0.0, %v2546
    %v2548 = vpop.f32.mrb[0].mxu0
    %v2549 = vpop.f32.mrb[0].mxu0
    %v2550 = vadd.f32 0.0, %v2549
    %v2551 = vpop.f32.mrb[0].mxu0
    %2552 = vmatprep.mubr.bf16.mxu0 0
    %2553 = vmatmul.mubr.bf16.gmra.mrb[0].mxu0 %v2462
    %v2554 = vpop.f32.mrb[0].mxu0
    %v2555 = vadd.f32 0.0, %v2554
    %v2556 = vpop.f32.mrb[0].mxu0
    %v2557 = vpop.f32.mrb[0].mxu0
    %v2558 = vadd.f32 0.0, %v2557
    %v2559 = vpop.f32.mrb[0].mxu0
    %2560 = vdwg.mxu0
    %2569 = vrot.lane.b32.xlu0 %v2388, 64
    %v2570 = vpop.permute.xlu0 %2569
    %2571 = vrot.lane.b32.xlu0 %v2389, 64
    %v2572 = vpop.permute.xlu0 %2571
    %2573 = vrot.lane.b32.xlu0 %v2390, 64
    %v2574 = vpop.permute.xlu0 %2573
    %2575 = vrot.lane.b32.xlu0 %v2391, 64
    %v2576 = vpop.permute.xlu0 %2575
    %2577 = vrot.lane.b32.xlu0 %v2392, 64
    %v2578 = vpop.permute.xlu0 %2577
    %2579 = vrot.lane.b32.xlu0 %v2393, 64
    %v2580 = vpop.permute.xlu0 %2579
    %2581 = vrot.lane.b32.xlu0 %v2394, 64
    %v2582 = vpop.permute.xlu0 %2581
    %2583 = vrot.lane.b32.xlu0 %v2395, 64
    %v2584 = vpop.permute.xlu0 %2583
    %v2589 = vunpack.c.l.b16 %v2194
    %v2590 = vunpack.c.l.b16 %v2195
    %v2591 = vunpack.c.l.b16 %v2196
    %v2592 = vunpack.c.l.b16 %v2197
    %v2593 = vpack.c.b16 %v2590, %v2589
    %v2594 = vpack.c.b16 %v2592, %v2591
    %v2598 = vsel %vm1252, %v2570, 0
    %v2601 = vsel %vm1252, %v2572, 0
    %v2604 = vsel %vm1252, %v2574, 0
    %v2607 = vsel %vm1252, %v2576, 0
    %v2610 = vsel %vm1252, %v2578, 0
    %v2613 = vsel %vm1252, %v2580, 0
    %v2616 = vsel %vm1252, %v2582, 0
    %v2619 = vsel %vm1252, %v2584, 0
    %2621 = vmatprep.subr.bf16.mxu0 0
    %2622 = vmatpush1.bf16.msra.mxu0 %v2593
    %2623 = vmatprep.subr.bf16.mxu0 0
    %2624 = vmatpush1.bf16.msra.mxu0 %v2594
    %2625 = vmatprep.subr.bf16.mxu0 0
    %2626 = vmatpush1.bf16.msra.mxu0 0
    %2627 = vmatprep.subr.bf16.mxu0 0
    %2628 = vmatpush1.bf16.msra.mxu0 0
    %2629 = vmatprep.subr.bf16.mxu0 0
    %2630 = vmatpush1.bf16.msra.mxu0 0
    %2631 = vmatprep.subr.bf16.mxu0 0
    %2632 = vmatpush1.bf16.msra.mxu0 0
    %2633 = vmatprep.subr.bf16.mxu0 0
    %2634 = vmatpush1.bf16.msra.mxu0 0
    %2635 = vmatprep.subr.bf16.mxu0 0
    %2636 = vmatpush1.bf16.msra.mxu0 0
    %2637 = vmatprep.subr.bf16.mxu0 0
    %2638 = vmatpush1.bf16.msra.mxu0 0
    %2639 = vmatprep.subr.bf16.mxu0 0
    %2640 = vmatpush1.bf16.msra.mxu0 0
    %2641 = vmatprep.subr.bf16.mxu0 0
    %2642 = vmatpush1.bf16.msra.mxu0 0
    %2643 = vmatprep.subr.bf16.mxu0 0
    %2644 = vmatpush1.bf16.msra.mxu0 0
    %2645 = vmatprep.subr.bf16.mxu0 0
    %2646 = vmatpush1.bf16.msra.mxu0 0
    %2647 = vmatprep.subr.bf16.mxu0 0
    %2648 = vmatpush1.bf16.msra.mxu0 0
    %2649 = vmatprep.subr.bf16.mxu0 0
    %2650 = vmatpush1.bf16.msra.mxu0 0
    %2651 = vmatprep.subr.bf16.mxu0 0
    %2652 = vmatpush1.bf16.msra.mxu0 0
    %2653 = vmatprep.mubr.bf16.mxu0 0
    %2654 = vmatmul.mubr.bf16.gmra.mrb[0].mxu0 %v2598
    %v2655 = vpop.f32.mrb[0].mxu0
    %v2656 = vadd.f32 %v2499, %v2655
    %v2657 = vpop.f32.mrb[0].mxu0
    %v2658 = vpop.f32.mrb[0].mxu0
    %v2659 = vadd.f32 %v2502, %v2658
    %v2660 = vpop.f32.mrb[0].mxu0
    %2661 = vmatprep.mubr.bf16.mxu0 0
    %2662 = vmatmul.mubr.bf16.gmra.mrb[0].mxu0 %v2601
    %v2663 = vpop.f32.mrb[0].mxu0
    %v2664 = vadd.f32 %v2507, %v2663
    %v2665 = vpop.f32.mrb[0].mxu0
    %v2666 = vpop.f32.mrb[0].mxu0
    %v2667 = vadd.f32 %v2510, %v2666
    %v2668 = vpop.f32.mrb[0].mxu0
    %2669 = vmatprep.mubr.bf16.mxu0 0
    %2670 = vmatmul.mubr.bf16.gmra.mrb[0].mxu0 %v2604
    %v2671 = vpop.f32.mrb[0].mxu0
    %v2672 = vadd.f32 %v2515, %v2671
    %v2673 = vpop.f32.mrb[0].mxu0
    %v2674 = vpop.f32.mrb[0].mxu0
    %v2675 = vadd.f32 %v2518, %v2674
    %v2676 = vpop.f32.mrb[0].mxu0
    %2677 = vmatprep.mubr.bf16.mxu0 0
    %2678 = vmatmul.mubr.bf16.gmra.mrb[0].mxu0 %v2607
    %v2679 = vpop.f32.mrb[0].mxu0
    %v2680 = vadd.f32 %v2523, %v2679
    %v2681 = vpop.f32.mrb[0].mxu0
    %v2682 = vpop.f32.mrb[0].mxu0
    %v2683 = vadd.f32 %v2526, %v2682
    %v2684 = vpop.f32.mrb[0].mxu0
    %2685 = vmatprep.mubr.bf16.mxu0 0
    %2686 = vmatmul.mubr.bf16.gmra.mrb[0].mxu0 %v2610
    %v2687 = vpop.f32.mrb[0].mxu0
    %v2688 = vadd.f32 %v2531, %v2687
    %v2689 = vpop.f32.mrb[0].mxu0
    %v2690 = vpop.f32.mrb[0].mxu0
    %v2691 = vadd.f32 %v2534, %v2690
    %v2692 = vpop.f32.mrb[0].mxu0
    %2693 = vmatprep.mubr.bf16.mxu0 0
    %2694 = vmatmul.mubr.bf16.gmra.mrb[0].mxu0 %v2613
    %v2695 = vpop.f32.mrb[0].mxu0
    %v2696 = vadd.f32 %v2539, %v2695
    %v2697 = vpop.f32.mrb[0].mxu0
    %v2698 = vpop.f32.mrb[0].mxu0
    %v2699 = vadd.f32 %v2542, %v2698
    %v2700 = vpop.f32.mrb[0].mxu0
    %2701 = vmatprep.mubr.bf16.mxu0 0
    %2702 = vmatmul.mubr.bf16.gmra.mrb[0].mxu0 %v2616
    %v2703 = vpop.f32.mrb[0].mxu0
    %v2704 = vadd.f32 %v2547, %v2703
    %v2705 = vpop.f32.mrb[0].mxu0
    %v2706 = vpop.f32.mrb[0].mxu0
    %v2707 = vadd.f32 %v2550, %v2706
    %v2708 = vpop.f32.mrb[0].mxu0
    %2709 = vmatprep.mubr.bf16.mxu0 0
    %2710 = vmatmul.mubr.bf16.gmra.mrb[0].mxu0 %v2619
    %v2711 = vpop.f32.mrb[0].mxu0
    %v2712 = vadd.f32 %v2555, %v2711
    %v2713 = vpop.f32.mrb[0].mxu0
    %v2714 = vpop.f32.mrb[0].mxu0
    %v2715 = vadd.f32 %v2558, %v2714
    %v2716 = vpop.f32.mrb[0].mxu0
    %2717 = vdwg.mxu0
    %vm2718 = vcmp.lt.s32.totalorder %v111, 62
    %vm2719 = vcmp.lt.s32.totalorder %v112, 62
    %vm2720 = vcmp.lt.s32.totalorder %v113, 62
    %vm2721 = vcmp.lt.s32.totalorder %v114, 62
    %vm2722 = vcmp.lt.s32.totalorder %v115, 62
    %vm2723 = vcmp.lt.s32.totalorder %v116, 62
    %vm2724 = vcmp.lt.s32.totalorder %v117, 62
    %vm2725 = vcmp.lt.s32.totalorder %v118, 62
    %vm2726 = vcmp.lt.s32.totalorder %v119, 62
    %vm2727 = vcmp.lt.s32.totalorder %v120, 62
    %vm2728 = vcmp.lt.s32.totalorder %v121, 62
    %vm2729 = vcmp.lt.s32.totalorder %v122, 62
    %vm2730 = vcmp.lt.s32.totalorder %v123, 62
    %vm2731 = vcmp.lt.s32.totalorder %v124, 62
    %vm2732 = vcmp.lt.s32.totalorder %v125, 62
    %vm2733 = vcmp.lt.s32.totalorder %v126, 62
    %vm2734 = vcmask 1045504
    %v2735 = vrot.slane %v2177, 2
    %v2736 = vrot.slane %v2178, 2
    %v2737 = vsel %vm2734, %v2735, %v2736
    %v2738 = vrot.slane %v2179, 2
    %v2739 = vsel %vm2734, %v2736, %v2738
    %v2740 = vrot.slane %v2180, 2
    %v2741 = vsel %vm2734, %v2738, %v2740
    %v2742 = vrot.slane %v2181, 2
    %v2743 = vsel %vm2734, %v2740, %v2742
    %v2744 = vrot.slane %v2182, 2
    %v2745 = vsel %vm2734, %v2742, %v2744
    %v2746 = vrot.slane %v2183, 2
    %v2747 = vsel %vm2734, %v2744, %v2746
    %v2748 = vrot.slane %v2184, 2
    %v2749 = vsel %vm2734, %v2746, %v2748
    %v2750 = vrot.slane %v2185, 2
    %v2751 = vsel %vm2734, %v2748, %v2750
    %v2752 = vrot.slane %v2186, 2
    %v2753 = vsel %vm2734, %v2750, %v2752
    %v2754 = vrot.slane %v2187, 2
    %v2755 = vsel %vm2734, %v2752, %v2754
    %v2756 = vrot.slane %v2188, 2
    %v2757 = vsel %vm2734, %v2754, %v2756
    %v2758 = vrot.slane %v2189, 2
    %v2759 = vsel %vm2734, %v2756, %v2758
    %v2760 = vrot.slane %v2190, 2
    %v2761 = vsel %vm2734, %v2758, %v2760
    %v2762 = vrot.slane %v2191, 2
    %v2763 = vsel %vm2734, %v2760, %v2762
    %v2764 = vrot.slane %v2192, 2
    %v2765 = vsel %vm2734, %v2762, %v2764
    %v2783 = vsel %vm2734, %v2764, %v2735
    %v2784 = vsel %vm2718, 1, 0
    %v2785 = vsel %vm2719, 1, 0
    %v2786 = vsel %vm2720, 1, 0
    %v2787 = vsel %vm2721, 1, 0
    %v2788 = vsel %vm2722, 1, 0
    %v2789 = vsel %vm2723, 1, 0
    %v2790 = vsel %vm2724, 1, 0
    %v2791 = vsel %vm2725, 1, 0
    %v2792 = vsel %vm2726, 1, 0
    %v2793 = vsel %vm2727, 1, 0
    %v2794 = vsel %vm2728, 1, 0
    %v2795 = vsel %vm2729, 1, 0
    %v2796 = vsel %vm2730, 1, 0
    %v2797 = vsel %vm2731, 1, 0
    %v2798 = vsel %vm2732, 1, 0
    %v2799 = vsel %vm2733, 1, 0
    %2800 = vset.pattern.permute.xlu0 0
    %2801 = vperm.xlu0 %2800, %v2784
    %v2802 = vpop.permute.xlu0 %2801
    %2803 = vset.pattern.permute.xlu0 0
    %2804 = vperm.xlu0 %2803, %v2785
    %v2805 = vpop.permute.xlu0 %2804
    %2806 = vset.pattern.permute.xlu0 0
    %2807 = vperm.xlu0 %2806, %v2786
    %v2808 = vpop.permute.xlu0 %2807
    %2809 = vset.pattern.permute.xlu0 0
    %2810 = vperm.xlu0 %2809, %v2787
    %v2811 = vpop.permute.xlu0 %2810
    %2812 = vset.pattern.permute.xlu0 0
    %2813 = vperm.xlu0 %2812, %v2788
    %v2814 = vpop.permute.xlu0 %2813
    %2815 = vset.pattern.permute.xlu0 0
    %2816 = vperm.xlu0 %2815, %v2789
    %v2817 = vpop.permute.xlu0 %2816
    %2818 = vset.pattern.permute.xlu0 0
    %2819 = vperm.xlu0 %2818, %v2790
    %v2820 = vpop.permute.xlu0 %2819
    %2821 = vset.pattern.permute.xlu0 0
    %2822 = vperm.xlu0 %2821, %v2791
    %v2823 = vpop.permute.xlu0 %2822
    %2824 = vset.pattern.permute.xlu0 0
    %2825 = vperm.xlu0 %2824, %v2792
    %v2826 = vpop.permute.xlu0 %2825
    %2827 = vset.pattern.permute.xlu0 0
    %2828 = vperm.xlu0 %2827, %v2793
    %v2829 = vpop.permute.xlu0 %2828
    %2830 = vset.pattern.permute.xlu0 0
    %2831 = vperm.xlu0 %2830, %v2794
    %v2832 = vpop.permute.xlu0 %2831
    %2833 = vset.pattern.permute.xlu0 0
    %2834 = vperm.xlu0 %2833, %v2795
    %v2835 = vpop.permute.xlu0 %2834
    %2836 = vset.pattern.permute.xlu0 0
    %2837 = vperm.xlu0 %2836, %v2796
    %v2838 = vpop.permute.xlu0 %2837
    %2839 = vset.pattern.permute.xlu0 0
    %2840 = vperm.xlu0 %2839, %v2797
    %v2841 = vpop.permute.xlu0 %2840
    %2842 = vset.pattern.permute.xlu0 0
    %2843 = vperm.xlu0 %2842, %v2798
    %v2844 = vpop.permute.xlu0 %2843
    %2845 = vset.pattern.permute.xlu0 0
    %2846 = vperm.xlu0 %2845, %v2799
    %v2847 = vpop.permute.xlu0 %2846
    %vm2848 = vcmp.eq.s32.totalorder %v2802, 1
    %vm2849 = vcmp.eq.s32.totalorder %v2805, 1
    %vm2850 = vcmp.eq.s32.totalorder %v2808, 1
    %vm2851 = vcmp.eq.s32.totalorder %v2811, 1
    %vm2852 = vcmp.eq.s32.totalorder %v2814, 1
    %vm2853 = vcmp.eq.s32.totalorder %v2817, 1
    %vm2854 = vcmp.eq.s32.totalorder %v2820, 1
    %vm2855 = vcmp.eq.s32.totalorder %v2823, 1
    %vm2856 = vcmp.eq.s32.totalorder %v2826, 1
    %vm2857 = vcmp.eq.s32.totalorder %v2829, 1
    %vm2858 = vcmp.eq.s32.totalorder %v2832, 1
    %vm2859 = vcmp.eq.s32.totalorder %v2835, 1
    %vm2860 = vcmp.eq.s32.totalorder %v2838, 1
    %vm2861 = vcmp.eq.s32.totalorder %v2841, 1
    %vm2862 = vcmp.eq.s32.totalorder %v2844, 1
    %vm2863 = vcmp.eq.s32.totalorder %v2847, 1
    %v2864 = vsel %vm2848, %v2737, 0.0
    %v2865 = vsel %vm2849, %v2739, 0.0
    %v2866 = vsel %vm2850, %v2741, 0.0
    %v2867 = vsel %vm2851, %v2743, 0.0
    %v2868 = vsel %vm2852, %v2745, 0.0
    %v2869 = vsel %vm2853, %v2747, 0.0
    %v2870 = vsel %vm2854, %v2749, 0.0
    %v2871 = vsel %vm2855, %v2751, 0.0
    %v2872 = vsel %vm2856, %v2753, 0.0
    %v2873 = vsel %vm2857, %v2755, 0.0
    %v2874 = vsel %vm2858, %v2757, 0.0
    %v2875 = vsel %vm2859, %v2759, 0.0
    %v2876 = vsel %vm2860, %v2761, 0.0
    %v2877 = vsel %vm2861, %v2763, 0.0
    %v2878 = vsel %vm2862, %v2765, 0.0
    %v2879 = vsel %vm2863, %v2783, 0.0
    %v2880 = vpack.c.bf16 %v2865, %v2864
    %v2881 = vpack.c.bf16 %v2867, %v2866
    %v2882 = vpack.c.bf16 %v2869, %v2868
    %v2883 = vpack.c.bf16 %v2871, %v2870
    %v2884 = vpack.c.bf16 %v2873, %v2872
    %v2885 = vpack.c.bf16 %v2875, %v2874
    %v2886 = vpack.c.bf16 %v2877, %v2876
    %v2887 = vpack.c.bf16 %v2879, %v2878
    %2896 = vrot.lane.b32.xlu0 %v2880, 64
    %v2897 = vpop.permute.xlu0 %2896
    %2898 = vrot.lane.b32.xlu0 %v2881, 64
    %v2899 = vpop.permute.xlu0 %2898
    %2900 = vrot.lane.b32.xlu0 %v2882, 64
    %v2901 = vpop.permute.xlu0 %2900
    %2902 = vrot.lane.b32.xlu0 %v2883, 64
    %v2903 = vpop.permute.xlu0 %2902
    %2904 = vrot.lane.b32.xlu0 %v2884, 64
    %v2905 = vpop.permute.xlu0 %2904
    %2906 = vrot.lane.b32.xlu0 %v2885, 64
    %v2907 = vpop.permute.xlu0 %2906
    %2908 = vrot.lane.b32.xlu0 %v2886, 64
    %v2909 = vpop.permute.xlu0 %2908
    %2910 = vrot.lane.b32.xlu0 %v2887, 64
    %v2911 = vpop.permute.xlu0 %2910
    %v2916 = vunpack.c.l.b16 %v2204
    %v2917 = vunpack.c.l.b16 %v2205
    %v2918 = vunpack.c.l.b16 %v2206
    %v2919 = vunpack.c.l.b16 %v2207
    %v2920 = vpack.c.b16 %v2917, %v2916
    %v2921 = vpack.c.b16 %v2919, %v2918
    %v2925 = vsel %vm1252, %v2897, 0
    %v2928 = vsel %vm1252, %v2899, 0
    %v2931 = vsel %vm1252, %v2901, 0
    %v2934 = vsel %vm1252, %v2903, 0
    %v2937 = vsel %vm1252, %v2905, 0
    %v2940 = vsel %vm1252, %v2907, 0
    %v2943 = vsel %vm1252, %v2909, 0
    %v2946 = vsel %vm1252, %v2911, 0
    %2948 = vmatprep.subr.bf16.mxu0 0
    %2949 = vmatpush1.bf16.msra.mxu0 %v2920
    %2950 = vmatprep.subr.bf16.mxu0 0
    %2951 = vmatpush1.bf16.msra.mxu0 %v2921
    %2952 = vmatprep.subr.bf16.mxu0 0
    %2953 = vmatpush1.bf16.msra.mxu0 0
    %2954 = vmatprep.subr.bf16.mxu0 0
    %2955 = vmatpush1.bf16.msra.mxu0 0
    %2956 = vmatprep.subr.bf16.mxu0 0
    %2957 = vmatpush1.bf16.msra.mxu0 0
    %2958 = vmatprep.subr.bf16.mxu0 0
    %2959 = vmatpush1.bf16.msra.mxu0 0
    %2960 = vmatprep.subr.bf16.mxu0 0
    %2961 = vmatpush1.bf16.msra.mxu0 0
    %2962 = vmatprep.subr.bf16.mxu0 0
    %2963 = vmatpush1.bf16.msra.mxu0 0
    %2964 = vmatprep.subr.bf16.mxu0 0
    %2965 = vmatpush1.bf16.msra.mxu0 0
    %2966 = vmatprep.subr.bf16.mxu0 0
    %2967 = vmatpush1.bf16.msra.mxu0 0
    %2968 = vmatprep.subr.bf16.mxu0 0
    %2969 = vmatpush1.bf16.msra.mxu0 0
    %2970 = vmatprep.subr.bf16.mxu0 0
    %2971 = vmatpush1.bf16.msra.mxu0 0
    %2972 = vmatprep.subr.bf16.mxu0 0
    %2973 = vmatpush1.bf16.msra.mxu0 0
    %2974 = vmatprep.subr.bf16.mxu0 0
    %2975 = vmatpush1.bf16.msra.mxu0 0
    %2976 = vmatprep.subr.bf16.mxu0 0
    %2977 = vmatpush1.bf16.msra.mxu0 0
    %2978 = vmatprep.subr.bf16.mxu0 0
    %2979 = vmatpush1.bf16.msra.mxu0 0
    %2980 = vmatprep.mubr.bf16.mxu0 0
    %2981 = vmatmul.mubr.bf16.gmra.mrb[0].mxu0 %v2925
    %v2982 = vpop.f32.mrb[0].mxu0
    %v2983 = vadd.f32 0.0, %v2982
    %v2984 = vpop.f32.mrb[0].mxu0
    %v2985 = vpop.f32.mrb[0].mxu0
    %v2986 = vadd.f32 0.0, %v2985
    %v2987 = vpop.f32.mrb[0].mxu0
    %2988 = vmatprep.mubr.bf16.mxu0 0
    %2989 = vmatmul.mubr.bf16.gmra.mrb[0].mxu0 %v2928
    %v2990 = vpop.f32.mrb[0].mxu0
    %v2991 = vadd.f32 0.0, %v2990
    %v2992 = vpop.f32.mrb[0].mxu0
    %v2993 = vpop.f32.mrb[0].mxu0
    %v2994 = vadd.f32 0.0, %v2993
    %v2995 = vpop.f32.mrb[0].mxu0
    %2996 = vmatprep.mubr.bf16.mxu0 0
    %2997 = vmatmul.mubr.bf16.gmra.mrb[0].mxu0 %v2931
    %v2998 = vpop.f32.mrb[0].mxu0
    %v2999 = vadd.f32 0.0, %v2998
    %v3000 = vpop.f32.mrb[0].mxu0
    %v3001 = vpop.f32.mrb[0].mxu0
    %v3002 = vadd.f32 0.0, %v3001
    %v3003 = vpop.f32.mrb[0].mxu0
    %3004 = vmatprep.mubr.bf16.mxu0 0
    %3005 = vmatmul.mubr.bf16.gmra.mrb[0].mxu0 %v2934
    %v3006 = vpop.f32.mrb[0].mxu0
    %v3007 = vadd.f32 0.0, %v3006
    %v3008 = vpop.f32.mrb[0].mxu0
    %v3009 = vpop.f32.mrb[0].mxu0
    %v3010 = vadd.f32 0.0, %v3009
    %v3011 = vpop.f32.mrb[0].mxu0
    %3012 = vmatprep.mubr.bf16.mxu0 0
    %3013 = vmatmul.mubr.bf16.gmra.mrb[0].mxu0 %v2937
    %v3014 = vpop.f32.mrb[0].mxu0
    %v3015 = vadd.f32 0.0, %v3014
    %v3016 = vpop.f32.mrb[0].mxu0
    %v3017 = vpop.f32.mrb[0].mxu0
    %v3018 = vadd.f32 0.0, %v3017
    %v3019 = vpop.f32.mrb[0].mxu0
    %3020 = vmatprep.mubr.bf16.mxu0 0
    %3021 = vmatmul.mubr.bf16.gmra.mrb[0].mxu0 %v2940
    %v3022 = vpop.f32.mrb[0].mxu0
    %v3023 = vadd.f32 0.0, %v3022
    %v3024 = vpop.f32.mrb[0].mxu0
    %v3025 = vpop.f32.mrb[0].mxu0
    %v3026 = vadd.f32 0.0, %v3025
    %v3027 = vpop.f32.mrb[0].mxu0
    %3028 = vmatprep.mubr.bf16.mxu0 0
    %3029 = vmatmul.mubr.bf16.gmra.mrb[0].mxu0 %v2943
    %v3030 = vpop.f32.mrb[0].mxu0
    %v3031 = vadd.f32 0.0, %v3030
    %v3032 = vpop.f32.mrb[0].mxu0
    %v3033 = vpop.f32.mrb[0].mxu0
    %v3034 = vadd.f32 0.0, %v3033
    %v3035 = vpop.f32.mrb[0].mxu0
    %3036 = vmatprep.mubr.bf16.mxu0 0
    %3037 = vmatmul.mubr.bf16.gmra.mrb[0].mxu0 %v2946
    %v3038 = vpop.f32.mrb[0].mxu0
    %v3039 = vadd.f32 0.0, %v3038
    %v3040 = vpop.f32.mrb[0].mxu0
    %v3041 = vpop.f32.mrb[0].mxu0
    %v3042 = vadd.f32 0.0, %v3041
    %v3043 = vpop.f32.mrb[0].mxu0
    %3044 = vdwg.mxu0
    %v3045 = vadd.f32 %v2656, %v2983
    %v3046 = vadd.f32 %v2659, %v2986
    %v3047 = vadd.f32 %v2664, %v2991
    %v3048 = vadd.f32 %v2667, %v2994
    %v3049 = vadd.f32 %v2672, %v2999
    %v3050 = vadd.f32 %v2675, %v3002
    %v3051 = vadd.f32 %v2680, %v3007
    %v3052 = vadd.f32 %v2683, %v3010
    %v3053 = vadd.f32 %v2688, %v3015
    %v3054 = vadd.f32 %v2691, %v3018
    %v3055 = vadd.f32 %v2696, %v3023
    %v3056 = vadd.f32 %v2699, %v3026
    %v3057 = vadd.f32 %v2704, %v3031
    %v3058 = vadd.f32 %v2707, %v3034
    %v3059 = vadd.f32 %v2712, %v3039
    %v3060 = vadd.f32 %v2715, %v3042
    %v3062 = vlaneseq
    %v3063 = vshrl.u32 %v3062, 7
    %v3064 = vsub.s32 0, %v3063
    %v3065 = vrot.slane %v2209, %v3064
    %v3067 = vadd.f32 %v3045, %v3065
    %v3068 = vadd.f32 %v3046, %v3065
    %v3069 = vadd.f32 %v3047, %v3065
    %v3070 = vadd.f32 %v3048, %v3065
    %v3071 = vadd.f32 %v3049, %v3065
    %v3072 = vadd.f32 %v3050, %v3065
    %v3073 = vadd.f32 %v3051, %v3065
    %v3074 = vadd.f32 %v3052, %v3065
    %v3075 = vadd.f32 %v3053, %v3065
    %v3076 = vadd.f32 %v3054, %v3065
    %v3077 = vadd.f32 %v3055, %v3065
    %v3078 = vadd.f32 %v3056, %v3065
    %v3079 = vadd.f32 %v3057, %v3065
    %v3080 = vadd.f32 %v3058, %v3065
    %v3081 = vadd.f32 %v3059, %v3065
    %v3082 = vadd.f32 %v3060, %v3065
    %v3083 = vtanh.pop %v3067
    %v3084 = vtanh.pop %v3068
    %v3085 = vtanh.pop %v3069
    %v3086 = vtanh.pop %v3070
    %v3087 = vtanh.pop %v3071
    %v3088 = vtanh.pop %v3072
    %v3089 = vtanh.pop %v3073
    %v3090 = vtanh.pop %v3074
    %v3091 = vtanh.pop %v3075
    %v3092 = vtanh.pop %v3076
    %v3093 = vtanh.pop %v3077
    %v3094 = vtanh.pop %v3078
    %v3095 = vtanh.pop %v3079
    %v3096 = vtanh.pop %v3080
    %v3097 = vtanh.pop %v3081
    %v3098 = vtanh.pop %v3082
    %v3099 = vxor.u32 %v3067, 2147483648
    %v3100 = vxor.u32 %v3068, 2147483648
    %v3101 = vxor.u32 %v3069, 2147483648
    %v3102 = vxor.u32 %v3070, 2147483648
    %v3103 = vxor.u32 %v3071, 2147483648
    %v3104 = vxor.u32 %v3072, 2147483648
    %v3105 = vxor.u32 %v3073, 2147483648
    %v3106 = vxor.u32 %v3074, 2147483648
    %v3107 = vxor.u32 %v3075, 2147483648
    %v3108 = vxor.u32 %v3076, 2147483648
    %v3109 = vxor.u32 %v3077, 2147483648
    %v3110 = vxor.u32 %v3078, 2147483648
    %v3111 = vxor.u32 %v3079, 2147483648
    %v3112 = vxor.u32 %v3080, 2147483648
    %v3113 = vxor.u32 %v3081, 2147483648
    %v3114 = vxor.u32 %v3082, 2147483648
    %v3115 = vmul.f32 %v3099, 1.442695
    %v3116 = vpow.pop %v3115
    %v3117 = vmul.f32 %v3100, 1.442695
    %v3118 = vpow.pop %v3117
    %v3119 = vmul.f32 %v3101, 1.442695
    %v3120 = vpow.pop %v3119
    %v3121 = vmul.f32 %v3102, 1.442695
    %v3122 = vpow.pop %v3121
    %v3123 = vmul.f32 %v3103, 1.442695
    %v3124 = vpow.pop %v3123
    %v3125 = vmul.f32 %v3104, 1.442695
    %v3126 = vpow.pop %v3125
    %v3127 = vmul.f32 %v3105, 1.442695
    %v3128 = vpow.pop %v3127
    %v3129 = vmul.f32 %v3106, 1.442695
    %v3130 = vpow.pop %v3129
    %v3131 = vmul.f32 %v3107, 1.442695
    %v3132 = vpow.pop %v3131
    %v3133 = vmul.f32 %v3108, 1.442695
    %v3134 = vpow.pop %v3133
    %v3135 = vmul.f32 %v3109, 1.442695
    %v3136 = vpow.pop %v3135
    %v3137 = vmul.f32 %v3110, 1.442695
    %v3138 = vpow.pop %v3137
    %v3139 = vmul.f32 %v3111, 1.442695
    %v3140 = vpow.pop %v3139
    %v3141 = vmul.f32 %v3112, 1.442695
    %v3142 = vpow.pop %v3141
    %v3143 = vmul.f32 %v3113, 1.442695
    %v3144 = vpow.pop %v3143
    %v3145 = vmul.f32 %v3114, 1.442695
    %v3146 = vpow.pop %v3145
    %v3147 = vadd.f32 %v3116, 1.0
    %v3148 = vadd.f32 %v3118, 1.0
    %v3149 = vadd.f32 %v3120, 1.0
    %v3150 = vadd.f32 %v3122, 1.0
    %v3151 = vadd.f32 %v3124, 1.0
    %v3152 = vadd.f32 %v3126, 1.0
    %v3153 = vadd.f32 %v3128, 1.0
    %v3154 = vadd.f32 %v3130, 1.0
    %v3155 = vadd.f32 %v3132, 1.0
    %v3156 = vadd.f32 %v3134, 1.0
    %v3157 = vadd.f32 %v3136, 1.0
    %v3158 = vadd.f32 %v3138, 1.0
    %v3159 = vadd.f32 %v3140, 1.0
    %v3160 = vadd.f32 %v3142, 1.0
    %v3161 = vadd.f32 %v3144, 1.0
    %v3162 = vadd.f32 %v3146, 1.0
    %v3163 = vrcp.pop %v3147
    %v3164 = vmul.f32 1.0, %v3163
    %v3165 = vrcp.pop %v3148
    %v3166 = vmul.f32 1.0, %v3165
    %v3167 = vrcp.pop %v3149
    %v3168 = vmul.f32 1.0, %v3167
    %v3169 = vrcp.pop %v3150
    %v3170 = vmul.f32 1.0, %v3169
    %v3171 = vrcp.pop %v3151
    %v3172 = vmul.f32 1.0, %v3171
    %v3173 = vrcp.pop %v3152
    %v3174 = vmul.f32 1.0, %v3173
    %v3175 = vrcp.pop %v3153
    %v3176 = vmul.f32 1.0, %v3175
    %v3177 = vrcp.pop %v3154
    %v3178 = vmul.f32 1.0, %v3177
    %v3179 = vrcp.pop %v3155
    %v3180 = vmul.f32 1.0, %v3179
    %v3181 = vrcp.pop %v3156
    %v3182 = vmul.f32 1.0, %v3181
    %v3183 = vrcp.pop %v3157
    %v3184 = vmul.f32 1.0, %v3183
    %v3185 = vrcp.pop %v3158
    %v3186 = vmul.f32 1.0, %v3185
    %v3187 = vrcp.pop %v3159
    %v3188 = vmul.f32 1.0, %v3187
    %v3189 = vrcp.pop %v3160
    %v3190 = vmul.f32 1.0, %v3189
    %v3191 = vrcp.pop %v3161
    %v3192 = vmul.f32 1.0, %v3191
    %v3193 = vrcp.pop %v3162
    %v3194 = vmul.f32 1.0, %v3193
    %3211 = vrot.lane.b32.xlu0 %v3164, 96
    %v3212 = vpop.permute.xlu0 %3211
    %3213 = vrot.lane.b32.xlu0 %v3166, 96
    %v3214 = vpop.permute.xlu0 %3213
    %3215 = vrot.lane.b32.xlu0 %v3168, 96
    %v3216 = vpop.permute.xlu0 %3215
    %3217 = vrot.lane.b32.xlu0 %v3170, 96
    %v3218 = vpop.permute.xlu0 %3217
    %3219 = vrot.lane.b32.xlu0 %v3172, 96
    %v3220 = vpop.permute.xlu0 %3219
    %3221 = vrot.lane.b32.xlu0 %v3174, 96
    %v3222 = vpop.permute.xlu0 %3221
    %3223 = vrot.lane.b32.xlu0 %v3176, 96
    %v3224 = vpop.permute.xlu0 %3223
    %3225 = vrot.lane.b32.xlu0 %v3178, 96
    %v3226 = vpop.permute.xlu0 %3225
    %3227 = vrot.lane.b32.xlu0 %v3180, 96
    %v3228 = vpop.permute.xlu0 %3227
    %3229 = vrot.lane.b32.xlu0 %v3182, 96
    %v3230 = vpop.permute.xlu0 %3229
    %3231 = vrot.lane.b32.xlu0 %v3184, 96
    %v3232 = vpop.permute.xlu0 %3231
    %3233 = vrot.lane.b32.xlu0 %v3186, 96
    %v3234 = vpop.permute.xlu0 %3233
    %3235 = vrot.lane.b32.xlu0 %v3188, 96
    %v3236 = vpop.permute.xlu0 %3235
    %3237 = vrot.lane.b32.xlu0 %v3190, 96
    %v3238 = vpop.permute.xlu0 %3237
    %3239 = vrot.lane.b32.xlu0 %v3192, 96
    %v3240 = vpop.permute.xlu0 %3239
    %3241 = vrot.lane.b32.xlu0 %v3194, 96
    %v3242 = vpop.permute.xlu0 %3241
    %v3259 = vmul.f32 %v3083, %v3212
    %v3260 = vmul.f32 %v3084, %v3214
    %v3261 = vmul.f32 %v3085, %v3216
    %v3262 = vmul.f32 %v3086, %v3218
    %v3263 = vmul.f32 %v3087, %v3220
    %v3264 = vmul.f32 %v3088, %v3222
    %v3265 = vmul.f32 %v3089, %v3224
    %v3266 = vmul.f32 %v3090, %v3226
    %v3267 = vmul.f32 %v3091, %v3228
    %v3268 = vmul.f32 %v3092, %v3230
    %v3269 = vmul.f32 %v3093, %v3232
    %v3270 = vmul.f32 %v3094, %v3234
    %v3271 = vmul.f32 %v3095, %v3236
    %v3272 = vmul.f32 %v3096, %v3238
    %v3273 = vmul.f32 %v3097, %v3240
    %v3274 = vmul.f32 %v3098, %v3242
    %v3275 = vpack.c.bf16 %v3260, %v3259
    %v3276 = vpack.c.bf16 %v3262, %v3261
    %v3277 = vpack.c.bf16 %v3264, %v3263
    %v3278 = vpack.c.bf16 %v3266, %v3265
    %v3279 = vpack.c.bf16 %v3268, %v3267
    %v3280 = vpack.c.bf16 %v3270, %v3269
    %v3281 = vpack.c.bf16 %v3272, %v3271
    %v3282 = vpack.c.bf16 %v3274, %v3273
    %s3283 = scalar_lea.vmem [#allocation6], 16
    %v3284 = vld [vmem:[%s3283] sm:$0xf]
    %v3285 = vld [vmem:[%s3283 + $0x4] sm:$0xf]
    %v3286 = vld [vmem:[%s3283 + $0x8] sm:$0xf]
    %v3287 = vld [vmem:[%s3283 + $0xc] sm:$0xf]
    %v3292 = vunpack.c.l.b16 %v3284
    %v3293 = vunpack.c.l.b16 %v3285
    %v3294 = vunpack.c.l.b16 %v3286
    %v3295 = vunpack.c.l.b16 %v3287
    %v3296 = vpack.c.b16 %v3293, %v3292
    %v3297 = vpack.c.b16 %v3295, %v3294
    %v3301 = vsel %vm1252, %v3275, 0
    %v3304 = vsel %vm1252, %v3276, 0
    %v3307 = vsel %vm1252, %v3277, 0
    %v3310 = vsel %vm1252, %v3278, 0
    %v3313 = vsel %vm1252, %v3279, 0
    %v3316 = vsel %vm1252, %v3280, 0
    %v3319 = vsel %vm1252, %v3281, 0
    %v3322 = vsel %vm1252, %v3282, 0
    %3324 = vmatprep.subr.bf16.mxu0 0
    %3325 = vmatpush1.bf16.msra.mxu0 %v3296
    %3326 = vmatprep.subr.bf16.mxu0 0
    %3327 = vmatpush1.bf16.msra.mxu0 %v3297
    %3328 = vmatprep.subr.bf16.mxu0 0
    %3329 = vmatpush1.bf16.msra.mxu0 0
    %3330 = vmatprep.subr.bf16.mxu0 0
    %3331 = vmatpush1.bf16.msra.mxu0 0
    %3332 = vmatprep.subr.bf16.mxu0 0
    %3333 = vmatpush1.bf16.msra.mxu0 0
    %3334 = vmatprep.subr.bf16.mxu0 0
    %3335 = vmatpush1.bf16.msra.mxu0 0
    %3336 = vmatprep.subr.bf16.mxu0 0
    %3337 = vmatpush1.bf16.msra.mxu0 0
    %3338 = vmatprep.subr.bf16.mxu0 0
    %3339 = vmatpush1.bf16.msra.mxu0 0
    %3340 = vmatprep.subr.bf16.mxu0 0
    %3341 = vmatpush1.bf16.msra.mxu0 0
    %3342 = vmatprep.subr.bf16.mxu0 0
    %3343 = vmatpush1.bf16.msra.mxu0 0
    %3344 = vmatprep.subr.bf16.mxu0 0
    %3345 = vmatpush1.bf16.msra.mxu0 0
    %3346 = vmatprep.subr.bf16.mxu0 0
    %3347 = vmatpush1.bf16.msra.mxu0 0
    %3348 = vmatprep.subr.bf16.mxu0 0
    %3349 = vmatpush1.bf16.msra.mxu0 0
    %3350 = vmatprep.subr.bf16.mxu0 0
    %3351 = vmatpush1.bf16.msra.mxu0 0
    %3352 = vmatprep.subr.bf16.mxu0 0
    %3353 = vmatpush1.bf16.msra.mxu0 0
    %3354 = vmatprep.subr.bf16.mxu0 0
    %3355 = vmatpush1.bf16.msra.mxu0 0
    %3356 = vmatprep.mubr.bf16.mxu0 0
    %3357 = vmatmul.mubr.bf16.gmra.mrb[0].mxu0 %v3301
    %v3358 = vpop.f32.mrb[0].mxu0
    %v3359 = vadd.f32 0.0, %v3358
    %v3360 = vpop.f32.mrb[0].mxu0
    %v3361 = vpop.f32.mrb[0].mxu0
    %v3362 = vadd.f32 0.0, %v3361
    %v3363 = vpop.f32.mrb[0].mxu0
    %3364 = vmatprep.mubr.bf16.mxu0 0
    %3365 = vmatmul.mubr.bf16.gmra.mrb[0].mxu0 %v3304
    %v3366 = vpop.f32.mrb[0].mxu0
    %v3367 = vadd.f32 0.0, %v3366
    %v3368 = vpop.f32.mrb[0].mxu0
    %v3369 = vpop.f32.mrb[0].mxu0
    %v3370 = vadd.f32 0.0, %v3369
    %v3371 = vpop.f32.mrb[0].mxu0
    %3372 = vmatprep.mubr.bf16.mxu0 0
    %3373 = vmatmul.mubr.bf16.gmra.mrb[0].mxu0 %v3307
    %v3374 = vpop.f32.mrb[0].mxu0
    %v3375 = vadd.f32 0.0, %v3374
    %v3376 = vpop.f32.mrb[0].mxu0
    %v3377 = vpop.f32.mrb[0].mxu0
    %v3378 = vadd.f32 0.0, %v3377
    %v3379 = vpop.f32.mrb[0].mxu0
    %3380 = vmatprep.mubr.bf16.mxu0 0
    %3381 = vmatmul.mubr.bf16.gmra.mrb[0].mxu0 %v3310
    %v3382 = vpop.f32.mrb[0].mxu0
    %v3383 = vadd.f32 0.0, %v3382
    %v3384 = vpop.f32.mrb[0].mxu0
    %v3385 = vpop.f32.mrb[0].mxu0
    %v3386 = vadd.f32 0.0, %v3385
    %v3387 = vpop.f32.mrb[0].mxu0
    %3388 = vmatprep.mubr.bf16.mxu0 0
    %3389 = vmatmul.mubr.bf16.gmra.mrb[0].mxu0 %v3313
    %v3390 = vpop.f32.mrb[0].mxu0
    %v3391 = vadd.f32 0.0, %v3390
    %v3392 = vpop.f32.mrb[0].mxu0
    %v3393 = vpop.f32.mrb[0].mxu0
    %v3394 = vadd.f32 0.0, %v3393
    %v3395 = vpop.f32.mrb[0].mxu0
    %3396 = vmatprep.mubr.bf16.mxu0 0
    %3397 = vmatmul.mubr.bf16.gmra.mrb[0].mxu0 %v3316
    %v3398 = vpop.f32.mrb[0].mxu0
    %v3399 = vadd.f32 0.0, %v3398
    %v3400 = vpop.f32.mrb[0].mxu0
    %v3401 = vpop.f32.mrb[0].mxu0
    %v3402 = vadd.f32 0.0, %v3401
    %v3403 = vpop.f32.mrb[0].mxu0
    %3404 = vmatprep.mubr.bf16.mxu0 0
    %3405 = vmatmul.mubr.bf16.gmra.mrb[0].mxu0 %v3319
    %v3406 = vpop.f32.mrb[0].mxu0
    %v3407 = vadd.f32 0.0, %v3406
    %v3408 = vpop.f32.mrb[0].mxu0
    %v3409 = vpop.f32.mrb[0].mxu0
    %v3410 = vadd.f32 0.0, %v3409
    %v3411 = vpop.f32.mrb[0].mxu0
    %3412 = vmatprep.mubr.bf16.mxu0 0
    %3413 = vmatmul.mubr.bf16.gmra.mrb[0].mxu0 %v3322
    %v3414 = vpop.f32.mrb[0].mxu0
    %v3415 = vadd.f32 0.0, %v3414
    %v3416 = vpop.f32.mrb[0].mxu0
    %v3417 = vpop.f32.mrb[0].mxu0
    %v3418 = vadd.f32 0.0, %v3417
    %v3419 = vpop.f32.mrb[0].mxu0
    %3420 = vdwg.mxu0
    %v3421 = vadd.f32 %v2088, %v3359
    %v3422 = vadd.f32 %v2089, %v3362
    %v3423 = vadd.f32 %v2090, %v3367
    %v3424 = vadd.f32 %v2091, %v3370
    %v3425 = vadd.f32 %v2092, %v3375
    %v3426 = vadd.f32 %v2093, %v3378
    %v3427 = vadd.f32 %v2094, %v3383
    %v3428 = vadd.f32 %v2095, %v3386
    %v3429 = vadd.f32 %v2096, %v3391
    %v3430 = vadd.f32 %v2097, %v3394
    %v3431 = vadd.f32 %v2098, %v3399
    %v3432 = vadd.f32 %v2099, %v3402
    %v3433 = vadd.f32 %v2100, %v3407
    %v3434 = vadd.f32 %v2101, %v3410
    %v3435 = vadd.f32 %v2102, %v3415
    %v3436 = vadd.f32 %v2103, %v3418
    %s3437 = scalar_lea.vmem [#allocation7], 1
    %v3438 = vld [vmem:[%s3437] sm:$0x1]
    %v3440 = vlaneseq
    %v3441 = vshrl.u32 %v3440, 7
    %v3442 = vsub.s32 0, %v3441
    %v3443 = vrot.slane %v3438, %v3442
    %3444 = vrot.lane.b32.xlu0 %v3443, 64
    %v3445 = vpop.permute.xlu0 %3444
    %v3447 = vadd.f32 %v3359, %v3445
    %v3448 = vadd.f32 %v3362, %v3445
    %v3449 = vadd.f32 %v3367, %v3445
    %v3450 = vadd.f32 %v3370, %v3445
    %v3451 = vadd.f32 %v3375, %v3445
    %v3452 = vadd.f32 %v3378, %v3445
    %v3453 = vadd.f32 %v3383, %v3445
    %v3454 = vadd.f32 %v3386, %v3445
    %v3455 = vadd.f32 %v3391, %v3445
    %v3456 = vadd.f32 %v3394, %v3445
    %v3457 = vadd.f32 %v3399, %v3445
    %v3458 = vadd.f32 %v3402, %v3445
    %v3459 = vadd.f32 %v3407, %v3445
    %v3460 = vadd.f32 %v3410, %v3445
    %v3461 = vadd.f32 %v3415, %v3445
    %v3462 = vadd.f32 %v3418, %v3445
    %v3463 = vadd.f32 %v3447, %v2177
    %v3464 = vadd.f32 %v3448, %v2178
    %v3465 = vadd.f32 %v3449, %v2179
    %v3466 = vadd.f32 %v3450, %v2180
    %v3467 = vadd.f32 %v3451, %v2181
    %v3468 = vadd.f32 %v3452, %v2182
    %v3469 = vadd.f32 %v3453, %v2183
    %v3470 = vadd.f32 %v3454, %v2184
    %v3471 = vadd.f32 %v3455, %v2185
    %v3472 = vadd.f32 %v3456, %v2186
    %v3473 = vadd.f32 %v3457, %v2187
    %v3474 = vadd.f32 %v3458, %v2188
    %v3475 = vadd.f32 %v3459, %v2189
    %v3476 = vadd.f32 %v3460, %v2190
    %v3477 = vadd.f32 %v3461, %v2191
    %v3478 = vadd.f32 %v3462, %v2192
    %s3479 = scalar_lea.vmem %s4, 96
    %v3480 = vld [vmem:[%s3479] sm:$0xf]
    %v3481 = vld [vmem:[%s3479 + $0x4] sm:$0xf]
    %v3482 = vld [vmem:[%s3479 + $0x8] sm:$0xf]
    %v3483 = vld [vmem:[%s3479 + $0xc] sm:$0xf]
    %s3484 = scalar_lea.vmem %s4, 112
    %v3485 = vld [vmem:[%s3484] sm:$0xf]
    %v3486 = vld [vmem:[%s3484 + $0x4] sm:$0xf]
    %v3487 = vld [vmem:[%s3484 + $0x8] sm:$0xf]
    %v3488 = vld [vmem:[%s3484 + $0xc] sm:$0xf]
    %s3489 = scalar_lea.vmem %s4, 128
    %v3490 = vld [vmem:[%s3489] sm:$0xf]
    %v3491 = vld [vmem:[%s3489 + $0x4] sm:$0xf]
    %v3492 = vld [vmem:[%s3489 + $0x8] sm:$0xf]
    %v3493 = vld [vmem:[%s3489 + $0xc] sm:$0xf]
    %s3494 = scalar_lea.vmem [#allocation4], 2
    %v3495 = vld [vmem:[%s3494] sm:$0x1]
    %vm3496 = vcmp.ge.s32.totalorder %v111, 4
    %vm3497 = vcmp.ge.s32.totalorder %v112, 4
    %vm3498 = vcmp.ge.s32.totalorder %v113, 4
    %vm3499 = vcmp.ge.s32.totalorder %v114, 4
    %vm3500 = vcmp.ge.s32.totalorder %v115, 4
    %vm3501 = vcmp.ge.s32.totalorder %v116, 4
    %vm3502 = vcmp.ge.s32.totalorder %v117, 4
    %vm3503 = vcmp.ge.s32.totalorder %v118, 4
    %vm3504 = vcmp.ge.s32.totalorder %v119, 4
    %vm3505 = vcmp.ge.s32.totalorder %v120, 4
    %vm3506 = vcmp.ge.s32.totalorder %v121, 4
    %vm3507 = vcmp.ge.s32.totalorder %v122, 4
    %vm3508 = vcmp.ge.s32.totalorder %v123, 4
    %vm3509 = vcmp.ge.s32.totalorder %v124, 4
    %vm3510 = vcmp.ge.s32.totalorder %v125, 4
    %vm3511 = vcmp.ge.s32.totalorder %v126, 4
    %v3513 = vrot.slane %v3478, 4
    %vm3530 = vcmask 1043456
    %v3531 = vrot.slane %v3463, 4
    %v3532 = vrot.slane %v3464, 4
    %v3533 = vsel %vm3530, %v3531, %v3532
    %v3534 = vrot.slane %v3465, 4
    %v3535 = vsel %vm3530, %v3532, %v3534
    %v3536 = vrot.slane %v3466, 4
    %v3537 = vsel %vm3530, %v3534, %v3536
    %v3538 = vrot.slane %v3467, 4
    %v3539 = vsel %vm3530, %v3536, %v3538
    %v3540 = vrot.slane %v3468, 4
    %v3541 = vsel %vm3530, %v3538, %v3540
    %v3542 = vrot.slane %v3469, 4
    %v3543 = vsel %vm3530, %v3540, %v3542
    %v3544 = vrot.slane %v3470, 4
    %v3545 = vsel %vm3530, %v3542, %v3544
    %v3546 = vrot.slane %v3471, 4
    %v3547 = vsel %vm3530, %v3544, %v3546
    %v3548 = vrot.slane %v3472, 4
    %v3549 = vsel %vm3530, %v3546, %v3548
    %v3550 = vrot.slane %v3473, 4
    %v3551 = vsel %vm3530, %v3548, %v3550
    %v3552 = vrot.slane %v3474, 4
    %v3553 = vsel %vm3530, %v3550, %v3552
    %v3554 = vrot.slane %v3475, 4
    %v3555 = vsel %vm3530, %v3552, %v3554
    %v3556 = vrot.slane %v3476, 4
    %v3557 = vsel %vm3530, %v3554, %v3556
    %v3558 = vrot.slane %v3477, 4
    %v3559 = vsel %vm3530, %v3556, %v3558
    %v3560 = vsel %vm3530, %v3558, %v3513
    %v3577 = vsel %vm3530, %v3513, %v3531
    %v3578 = vsel %vm3496, 1, 0
    %v3579 = vsel %vm3497, 1, 0
    %v3580 = vsel %vm3498, 1, 0
    %v3581 = vsel %vm3499, 1, 0
    %v3582 = vsel %vm3500, 1, 0
    %v3583 = vsel %vm3501, 1, 0
    %v3584 = vsel %vm3502, 1, 0
    %v3585 = vsel %vm3503, 1, 0
    %v3586 = vsel %vm3504, 1, 0
    %v3587 = vsel %vm3505, 1, 0
    %v3588 = vsel %vm3506, 1, 0
    %v3589 = vsel %vm3507, 1, 0
    %v3590 = vsel %vm3508, 1, 0
    %v3591 = vsel %vm3509, 1, 0
    %v3592 = vsel %vm3510, 1, 0
    %v3593 = vsel %vm3511, 1, 0
    %3594 = vset.pattern.permute.xlu0 0
    %3595 = vperm.xlu0 %3594, %v3578
    %v3596 = vpop.permute.xlu0 %3595
    %3597 = vset.pattern.permute.xlu0 0
    %3598 = vperm.xlu0 %3597, %v3579
    %v3599 = vpop.permute.xlu0 %3598
    %3600 = vset.pattern.permute.xlu0 0
    %3601 = vperm.xlu0 %3600, %v3580
    %v3602 = vpop.permute.xlu0 %3601
    %3603 = vset.pattern.permute.xlu0 0
    %3604 = vperm.xlu0 %3603, %v3581
    %v3605 = vpop.permute.xlu0 %3604
    %3606 = vset.pattern.permute.xlu0 0
    %3607 = vperm.xlu0 %3606, %v3582
    %v3608 = vpop.permute.xlu0 %3607
    %3609 = vset.pattern.permute.xlu0 0
    %3610 = vperm.xlu0 %3609, %v3583
    %v3611 = vpop.permute.xlu0 %3610
    %3612 = vset.pattern.permute.xlu0 0
    %3613 = vperm.xlu0 %3612, %v3584
    %v3614 = vpop.permute.xlu0 %3613
    %3615 = vset.pattern.permute.xlu0 0
    %3616 = vperm.xlu0 %3615, %v3585
    %v3617 = vpop.permute.xlu0 %3616
    %3618 = vset.pattern.permute.xlu0 0
    %3619 = vperm.xlu0 %3618, %v3586
    %v3620 = vpop.permute.xlu0 %3619
    %3621 = vset.pattern.permute.xlu0 0
    %3622 = vperm.xlu0 %3621, %v3587
    %v3623 = vpop.permute.xlu0 %3622
    %3624 = vset.pattern.permute.xlu0 0
    %3625 = vperm.xlu0 %3624, %v3588
    %v3626 = vpop.permute.xlu0 %3625
    %3627 = vset.pattern.permute.xlu0 0
    %3628 = vperm.xlu0 %3627, %v3589
    %v3629 = vpop.permute.xlu0 %3628
    %3630 = vset.pattern.permute.xlu0 0
    %3631 = vperm.xlu0 %3630, %v3590
    %v3632 = vpop.permute.xlu0 %3631
    %3633 = vset.pattern.permute.xlu0 0
    %3634 = vperm.xlu0 %3633, %v3591
    %v3635 = vpop.permute.xlu0 %3634
    %3636 = vset.pattern.permute.xlu0 0
    %3637 = vperm.xlu0 %3636, %v3592
    %v3638 = vpop.permute.xlu0 %3637
    %3639 = vset.pattern.permute.xlu0 0
    %3640 = vperm.xlu0 %3639, %v3593
    %v3641 = vpop.permute.xlu0 %3640
    %vm3642 = vcmp.eq.s32.totalorder %v3596, 1
    %vm3643 = vcmp.eq.s32.totalorder %v3599, 1
    %vm3644 = vcmp.eq.s32.totalorder %v3602, 1
    %vm3645 = vcmp.eq.s32.totalorder %v3605, 1
    %vm3646 = vcmp.eq.s32.totalorder %v3608, 1
    %vm3647 = vcmp.eq.s32.totalorder %v3611, 1
    %vm3648 = vcmp.eq.s32.totalorder %v3614, 1
    %vm3649 = vcmp.eq.s32.totalorder %v3617, 1
    %vm3650 = vcmp.eq.s32.totalorder %v3620, 1
    %vm3651 = vcmp.eq.s32.totalorder %v3623, 1
    %vm3652 = vcmp.eq.s32.totalorder %v3626, 1
    %vm3653 = vcmp.eq.s32.totalorder %v3629, 1
    %vm3654 = vcmp.eq.s32.totalorder %v3632, 1
    %vm3655 = vcmp.eq.s32.totalorder %v3635, 1
    %vm3656 = vcmp.eq.s32.totalorder %v3638, 1
    %vm3657 = vcmp.eq.s32.totalorder %v3641, 1
    %v3658 = vsel %vm3642, %v3577, 0.0
    %v3659 = vsel %vm3643, %v3533, 0.0
    %v3660 = vsel %vm3644, %v3535, 0.0
    %v3661 = vsel %vm3645, %v3537, 0.0
    %v3662 = vsel %vm3646, %v3539, 0.0
    %v3663 = vsel %vm3647, %v3541, 0.0
    %v3664 = vsel %vm3648, %v3543, 0.0
    %v3665 = vsel %vm3649, %v3545, 0.0
    %v3666 = vsel %vm3650, %v3547, 0.0
    %v3667 = vsel %vm3651, %v3549, 0.0
    %v3668 = vsel %vm3652, %v3551, 0.0
    %v3669 = vsel %vm3653, %v3553, 0.0
    %v3670 = vsel %vm3654, %v3555, 0.0
    %v3671 = vsel %vm3655, %v3557, 0.0
    %v3672 = vsel %vm3656, %v3559, 0.0
    %v3673 = vsel %vm3657, %v3560, 0.0
    %v3674 = vpack.c.bf16 %v3659, %v3658
    %v3675 = vpack.c.bf16 %v3661, %v3660
    %v3676 = vpack.c.bf16 %v3663, %v3662
    %v3677 = vpack.c.bf16 %v3665, %v3664
    %v3678 = vpack.c.bf16 %v3667, %v3666
    %v3679 = vpack.c.bf16 %v3669, %v3668
    %v3680 = vpack.c.bf16 %v3671, %v3670
    %v3681 = vpack.c.bf16 %v3673, %v3672
    %v3682 = vpack.c.bf16 %v3464, %v3463
    %v3683 = vpack.c.bf16 %v3466, %v3465
    %v3684 = vpack.c.bf16 %v3468, %v3467
    %v3685 = vpack.c.bf16 %v3470, %v3469
    %v3686 = vpack.c.bf16 %v3472, %v3471
    %v3687 = vpack.c.bf16 %v3474, %v3473
    %v3688 = vpack.c.bf16 %v3476, %v3475
    %v3689 = vpack.c.bf16 %v3478, %v3477
    %3698 = vrot.lane.b32.xlu0 %v3682, 64
    %v3699 = vpop.permute.xlu0 %3698
    %3700 = vrot.lane.b32.xlu0 %v3683, 64
    %v3701 = vpop.permute.xlu0 %3700
    %3702 = vrot.lane.b32.xlu0 %v3684, 64
    %v3703 = vpop.permute.xlu0 %3702
    %3704 = vrot.lane.b32.xlu0 %v3685, 64
    %v3705 = vpop.permute.xlu0 %3704
    %3706 = vrot.lane.b32.xlu0 %v3686, 64
    %v3707 = vpop.permute.xlu0 %3706
    %3708 = vrot.lane.b32.xlu0 %v3687, 64
    %v3709 = vpop.permute.xlu0 %3708
    %3710 = vrot.lane.b32.xlu0 %v3688, 64
    %v3711 = vpop.permute.xlu0 %3710
    %3712 = vrot.lane.b32.xlu0 %v3689, 64
    %v3713 = vpop.permute.xlu0 %3712
    %v3718 = vunpack.c.l.b16 %v3485
    %v3719 = vunpack.c.l.b16 %v3486
    %v3720 = vunpack.c.l.b16 %v3487
    %v3721 = vunpack.c.l.b16 %v3488
    %v3722 = vpack.c.b16 %v3719, %v3718
    %v3723 = vpack.c.b16 %v3721, %v3720
    %v3727 = vsel %vm1252, %v3699, 0
    %v3730 = vsel %vm1252, %v3701, 0
    %v3733 = vsel %vm1252, %v3703, 0
    %v3736 = vsel %vm1252, %v3705, 0
    %v3739 = vsel %vm1252, %v3707, 0
    %v3742 = vsel %vm1252, %v3709, 0
    %v3745 = vsel %vm1252, %v3711, 0
    %v3748 = vsel %vm1252, %v3713, 0
    %3750 = vmatprep.subr.bf16.mxu0 0
    %3751 = vmatpush1.bf16.msra.mxu0 %v3722
    %3752 = vmatprep.subr.bf16.mxu0 0
    %3753 = vmatpush1.bf16.msra.mxu0 %v3723
    %3754 = vmatprep.subr.bf16.mxu0 0
    %3755 = vmatpush1.bf16.msra.mxu0 0
    %3756 = vmatprep.subr.bf16.mxu0 0
    %3757 = vmatpush1.bf16.msra.mxu0 0
    %3758 = vmatprep.subr.bf16.mxu0 0
    %3759 = vmatpush1.bf16.msra.mxu0 0
    %3760 = vmatprep.subr.bf16.mxu0 0
    %3761 = vmatpush1.bf16.msra.mxu0 0
    %3762 = vmatprep.subr.bf16.mxu0 0
    %3763 = vmatpush1.bf16.msra.mxu0 0
    %3764 = vmatprep.subr.bf16.mxu0 0
    %3765 = vmatpush1.bf16.msra.mxu0 0
    %3766 = vmatprep.subr.bf16.mxu0 0
    %3767 = vmatpush1.bf16.msra.mxu0 0
    %3768 = vmatprep.subr.bf16.mxu0 0
    %3769 = vmatpush1.bf16.msra.mxu0 0
    %3770 = vmatprep.subr.bf16.mxu0 0
    %3771 = vmatpush1.bf16.msra.mxu0 0
    %3772 = vmatprep.subr.bf16.mxu0 0
    %3773 = vmatpush1.bf16.msra.mxu0 0
    %3774 = vmatprep.subr.bf16.mxu0 0
    %3775 = vmatpush1.bf16.msra.mxu0 0
    %3776 = vmatprep.subr.bf16.mxu0 0
    %3777 = vmatpush1.bf16.msra.mxu0 0
    %3778 = vmatprep.subr.bf16.mxu0 0
    %3779 = vmatpush1.bf16.msra.mxu0 0
    %3780 = vmatprep.subr.bf16.mxu0 0
    %3781 = vmatpush1.bf16.msra.mxu0 0
    %3782 = vmatprep.mubr.bf16.mxu0 0
    %3783 = vmatmul.mubr.bf16.gmra.mrb[0].mxu0 %v3727
    %v3784 = vpop.f32.mrb[0].mxu0
    %v3785 = vadd.f32 0.0, %v3784
    %v3786 = vpop.f32.mrb[0].mxu0
    %v3787 = vpop.f32.mrb[0].mxu0
    %v3788 = vadd.f32 0.0, %v3787
    %v3789 = vpop.f32.mrb[0].mxu0
    %3790 = vmatprep.mubr.bf16.mxu0 0
    %3791 = vmatmul.mubr.bf16.gmra.mrb[0].mxu0 %v3730
    %v3792 = vpop.f32.mrb[0].mxu0
    %v3793 = vadd.f32 0.0, %v3792
    %v3794 = vpop.f32.mrb[0].mxu0
    %v3795 = vpop.f32.mrb[0].mxu0
    %v3796 = vadd.f32 0.0, %v3795
    %v3797 = vpop.f32.mrb[0].mxu0
    %3798 = vmatprep.mubr.bf16.mxu0 0
    %3799 = vmatmul.mubr.bf16.gmra.mrb[0].mxu0 %v3733
    %v3800 = vpop.f32.mrb[0].mxu0
    %v3801 = vadd.f32 0.0, %v3800
    %v3802 = vpop.f32.mrb[0].mxu0
    %v3803 = vpop.f32.mrb[0].mxu0
    %v3804 = vadd.f32 0.0, %v3803
    %v3805 = vpop.f32.mrb[0].mxu0
    %3806 = vmatprep.mubr.bf16.mxu0 0
    %3807 = vmatmul.mubr.bf16.gmra.mrb[0].mxu0 %v3736
    %v3808 = vpop.f32.mrb[0].mxu0
    %v3809 = vadd.f32 0.0, %v3808
    %v3810 = vpop.f32.mrb[0].mxu0
    %v3811 = vpop.f32.mrb[0].mxu0
    %v3812 = vadd.f32 0.0, %v3811
    %v3813 = vpop.f32.mrb[0].mxu0
    %3814 = vmatprep.mubr.bf16.mxu0 0
    %3815 = vmatmul.mubr.bf16.gmra.mrb[0].mxu0 %v3739
    %v3816 = vpop.f32.mrb[0].mxu0
    %v3817 = vadd.f32 0.0, %v3816
    %v3818 = vpop.f32.mrb[0].mxu0
    %v3819 = vpop.f32.mrb[0].mxu0
    %v3820 = vadd.f32 0.0, %v3819
    %v3821 = vpop.f32.mrb[0].mxu0
    %3822 = vmatprep.mubr.bf16.mxu0 0
    %3823 = vmatmul.mubr.bf16.gmra.mrb[0].mxu0 %v3742
    %v3824 = vpop.f32.mrb[0].mxu0
    %v3825 = vadd.f32 0.0, %v3824
    %v3826 = vpop.f32.mrb[0].mxu0
    %v3827 = vpop.f32.mrb[0].mxu0
    %v3828 = vadd.f32 0.0, %v3827
    %v3829 = vpop.f32.mrb[0].mxu0
    %3830 = vmatprep.mubr.bf16.mxu0 0
    %3831 = vmatmul.mubr.bf16.gmra.mrb[0].mxu0 %v3745
    %v3832 = vpop.f32.mrb[0].mxu0
    %v3833 = vadd.f32 0.0, %v3832
    %v3834 = vpop.f32.mrb[0].mxu0
    %v3835 = vpop.f32.mrb[0].mxu0
    %v3836 = vadd.f32 0.0, %v3835
    %v3837 = vpop.f32.mrb[0].mxu0
    %3838 = vmatprep.mubr.bf16.mxu0 0
    %3839 = vmatmul.mubr.bf16.gmra.mrb[0].mxu0 %v3748
    %v3840 = vpop.f32.mrb[0].mxu0
    %v3841 = vadd.f32 0.0, %v3840
    %v3842 = vpop.f32.mrb[0].mxu0
    %v3843 = vpop.f32.mrb[0].mxu0
    %v3844 = vadd.f32 0.0, %v3843
    %v3845 = vpop.f32.mrb[0].mxu0
    %3846 = vdwg.mxu0
    %3855 = vrot.lane.b32.xlu0 %v3674, 64
    %v3856 = vpop.permute.xlu0 %3855
    %3857 = vrot.lane.b32.xlu0 %v3675, 64
    %v3858 = vpop.permute.xlu0 %3857
    %3859 = vrot.lane.b32.xlu0 %v3676, 64
    %v3860 = vpop.permute.xlu0 %3859
    %3861 = vrot.lane.b32.xlu0 %v3677, 64
    %v3862 = vpop.permute.xlu0 %3861
    %3863 = vrot.lane.b32.xlu0 %v3678, 64
    %v3864 = vpop.permute.xlu0 %3863
    %3865 = vrot.lane.b32.xlu0 %v3679, 64
    %v3866 = vpop.permute.xlu0 %3865
    %3867 = vrot.lane.b32.xlu0 %v3680, 64
    %v3868 = vpop.permute.xlu0 %3867
    %3869 = vrot.lane.b32.xlu0 %v3681, 64
    %v3870 = vpop.permute.xlu0 %3869
    %v3875 = vunpack.c.l.b16 %v3480
    %v3876 = vunpack.c.l.b16 %v3481
    %v3877 = vunpack.c.l.b16 %v3482
    %v3878 = vunpack.c.l.b16 %v3483
    %v3879 = vpack.c.b16 %v3876, %v3875
    %v3880 = vpack.c.b16 %v3878, %v3877
    %v3884 = vsel %vm1252, %v3856, 0
    %v3887 = vsel %vm1252, %v3858, 0
    %v3890 = vsel %vm1252, %v3860, 0
    %v3893 = vsel %vm1252, %v3862, 0
    %v3896 = vsel %vm1252, %v3864, 0
    %v3899 = vsel %vm1252, %v3866, 0
    %v3902 = vsel %vm1252, %v3868, 0
    %v3905 = vsel %vm1252, %v3870, 0
    %3907 = vmatprep.subr.bf16.mxu0 0
    %3908 = vmatpush1.bf16.msra.mxu0 %v3879
    %3909 = vmatprep.subr.bf16.mxu0 0
    %3910 = vmatpush1.bf16.msra.mxu0 %v3880
    %3911 = vmatprep.subr.bf16.mxu0 0
    %3912 = vmatpush1.bf16.msra.mxu0 0
    %3913 = vmatprep.subr.bf16.mxu0 0
    %3914 = vmatpush1.bf16.msra.mxu0 0
    %3915 = vmatprep.subr.bf16.mxu0 0
    %3916 = vmatpush1.bf16.msra.mxu0 0
    %3917 = vmatprep.subr.bf16.mxu0 0
    %3918 = vmatpush1.bf16.msra.mxu0 0
    %3919 = vmatprep.subr.bf16.mxu0 0
    %3920 = vmatpush1.bf16.msra.mxu0 0
    %3921 = vmatprep.subr.bf16.mxu0 0
    %3922 = vmatpush1.bf16.msra.mxu0 0
    %3923 = vmatprep.subr.bf16.mxu0 0
    %3924 = vmatpush1.bf16.msra.mxu0 0
    %3925 = vmatprep.subr.bf16.mxu0 0
    %3926 = vmatpush1.bf16.msra.mxu0 0
    %3927 = vmatprep.subr.bf16.mxu0 0
    %3928 = vmatpush1.bf16.msra.mxu0 0
    %3929 = vmatprep.subr.bf16.mxu0 0
    %3930 = vmatpush1.bf16.msra.mxu0 0
    %3931 = vmatprep.subr.bf16.mxu0 0
    %3932 = vmatpush1.bf16.msra.mxu0 0
    %3933 = vmatprep.subr.bf16.mxu0 0
    %3934 = vmatpush1.bf16.msra.mxu0 0
    %3935 = vmatprep.subr.bf16.mxu0 0
    %3936 = vmatpush1.bf16.msra.mxu0 0
    %3937 = vmatprep.subr.bf16.mxu0 0
    %3938 = vmatpush1.bf16.msra.mxu0 0
    %3939 = vmatprep.mubr.bf16.mxu0 0
    %3940 = vmatmul.mubr.bf16.gmra.mrb[0].mxu0 %v3884
    %v3941 = vpop.f32.mrb[0].mxu0
    %v3942 = vadd.f32 %v3785, %v3941
    %v3943 = vpop.f32.mrb[0].mxu0
    %v3944 = vpop.f32.mrb[0].mxu0
    %v3945 = vadd.f32 %v3788, %v3944
    %v3946 = vpop.f32.mrb[0].mxu0
    %3947 = vmatprep.mubr.bf16.mxu0 0
    %3948 = vmatmul.mubr.bf16.gmra.mrb[0].mxu0 %v3887
    %v3949 = vpop.f32.mrb[0].mxu0
    %v3950 = vadd.f32 %v3793, %v3949
    %v3951 = vpop.f32.mrb[0].mxu0
    %v3952 = vpop.f32.mrb[0].mxu0
    %v3953 = vadd.f32 %v3796, %v3952
    %v3954 = vpop.f32.mrb[0].mxu0
    %3955 = vmatprep.mubr.bf16.mxu0 0
    %3956 = vmatmul.mubr.bf16.gmra.mrb[0].mxu0 %v3890
    %v3957 = vpop.f32.mrb[0].mxu0
    %v3958 = vadd.f32 %v3801, %v3957
    %v3959 = vpop.f32.mrb[0].mxu0
    %v3960 = vpop.f32.mrb[0].mxu0
    %v3961 = vadd.f32 %v3804, %v3960
    %v3962 = vpop.f32.mrb[0].mxu0
    %3963 = vmatprep.mubr.bf16.mxu0 0
    %3964 = vmatmul.mubr.bf16.gmra.mrb[0].mxu0 %v3893
    %v3965 = vpop.f32.mrb[0].mxu0
    %v3966 = vadd.f32 %v3809, %v3965
    %v3967 = vpop.f32.mrb[0].mxu0
    %v3968 = vpop.f32.mrb[0].mxu0
    %v3969 = vadd.f32 %v3812, %v3968
    %v3970 = vpop.f32.mrb[0].mxu0
    %3971 = vmatprep.mubr.bf16.mxu0 0
    %3972 = vmatmul.mubr.bf16.gmra.mrb[0].mxu0 %v3896
    %v3973 = vpop.f32.mrb[0].mxu0
    %v3974 = vadd.f32 %v3817, %v3973
    %v3975 = vpop.f32.mrb[0].mxu0
    %v3976 = vpop.f32.mrb[0].mxu0
    %v3977 = vadd.f32 %v3820, %v3976
    %v3978 = vpop.f32.mrb[0].mxu0
    %3979 = vmatprep.mubr.bf16.mxu0 0
    %3980 = vmatmul.mubr.bf16.gmra.mrb[0].mxu0 %v3899
    %v3981 = vpop.f32.mrb[0].mxu0
    %v3982 = vadd.f32 %v3825, %v3981
    %v3983 = vpop.f32.mrb[0].mxu0
    %v3984 = vpop.f32.mrb[0].mxu0
    %v3985 = vadd.f32 %v3828, %v3984
    %v3986 = vpop.f32.mrb[0].mxu0
    %3987 = vmatprep.mubr.bf16.mxu0 0
    %3988 = vmatmul.mubr.bf16.gmra.mrb[0].mxu0 %v3902
    %v3989 = vpop.f32.mrb[0].mxu0
    %v3990 = vadd.f32 %v3833, %v3989
    %v3991 = vpop.f32.mrb[0].mxu0
    %v3992 = vpop.f32.mrb[0].mxu0
    %v3993 = vadd.f32 %v3836, %v3992
    %v3994 = vpop.f32.mrb[0].mxu0
    %3995 = vmatprep.mubr.bf16.mxu0 0
    %3996 = vmatmul.mubr.bf16.gmra.mrb[0].mxu0 %v3905
    %v3997 = vpop.f32.mrb[0].mxu0
    %v3998 = vadd.f32 %v3841, %v3997
    %v3999 = vpop.f32.mrb[0].mxu0
    %v4000 = vpop.f32.mrb[0].mxu0
    %v4001 = vadd.f32 %v3844, %v4000
    %v4002 = vpop.f32.mrb[0].mxu0
    %4003 = vdwg.mxu0
    %vm4004 = vcmp.lt.s32.totalorder %v111, 60
    %vm4005 = vcmp.lt.s32.totalorder %v112, 60
    %vm4006 = vcmp.lt.s32.totalorder %v113, 60
    %vm4007 = vcmp.lt.s32.totalorder %v114, 60
    %vm4008 = vcmp.lt.s32.totalorder %v115, 60
    %vm4009 = vcmp.lt.s32.totalorder %v116, 60
    %vm4010 = vcmp.lt.s32.totalorder %v117, 60
    %vm4011 = vcmp.lt.s32.totalorder %v118, 60
    %vm4012 = vcmp.lt.s32.totalorder %v119, 60
    %vm4013 = vcmp.lt.s32.totalorder %v120, 60
    %vm4014 = vcmp.lt.s32.totalorder %v121, 60
    %vm4015 = vcmp.lt.s32.totalorder %v122, 60
    %vm4016 = vcmp.lt.s32.totalorder %v123, 60
    %vm4017 = vcmp.lt.s32.totalorder %v124, 60
    %vm4018 = vcmp.lt.s32.totalorder %v125, 60
    %vm4019 = vcmp.lt.s32.totalorder %v126, 60
    %v4020 = vsel %vm4004, 1, 0
    %v4021 = vsel %vm4005, 1, 0
    %v4022 = vsel %vm4006, 1, 0
    %v4023 = vsel %vm4007, 1, 0
    %v4024 = vsel %vm4008, 1, 0
    %v4025 = vsel %vm4009, 1, 0
    %v4026 = vsel %vm4010, 1, 0
    %v4027 = vsel %vm4011, 1, 0
    %v4028 = vsel %vm4012, 1, 0
    %v4029 = vsel %vm4013, 1, 0
    %v4030 = vsel %vm4014, 1, 0
    %v4031 = vsel %vm4015, 1, 0
    %v4032 = vsel %vm4016, 1, 0
    %v4033 = vsel %vm4017, 1, 0
    %v4034 = vsel %vm4018, 1, 0
    %v4035 = vsel %vm4019, 1, 0
    %4036 = vset.pattern.permute.xlu0 0
    %4037 = vperm.xlu0 %4036, %v4020
    %v4038 = vpop.permute.xlu0 %4037
    %4039 = vset.pattern.permute.xlu0 0
    %4040 = vperm.xlu0 %4039, %v4021
    %v4041 = vpop.permute.xlu0 %4040
    %4042 = vset.pattern.permute.xlu0 0
    %4043 = vperm.xlu0 %4042, %v4022
    %v4044 = vpop.permute.xlu0 %4043
    %4045 = vset.pattern.permute.xlu0 0
    %4046 = vperm.xlu0 %4045, %v4023
    %v4047 = vpop.permute.xlu0 %4046
    %4048 = vset.pattern.permute.xlu0 0
    %4049 = vperm.xlu0 %4048, %v4024
    %v4050 = vpop.permute.xlu0 %4049
    %4051 = vset.pattern.permute.xlu0 0
    %4052 = vperm.xlu0 %4051, %v4025
    %v4053 = vpop.permute.xlu0 %4052
    %4054 = vset.pattern.permute.xlu0 0
    %4055 = vperm.xlu0 %4054, %v4026
    %v4056 = vpop.permute.xlu0 %4055
    %4057 = vset.pattern.permute.xlu0 0
    %4058 = vperm.xlu0 %4057, %v4027
    %v4059 = vpop.permute.xlu0 %4058
    %4060 = vset.pattern.permute.xlu0 0
    %4061 = vperm.xlu0 %4060, %v4028
    %v4062 = vpop.permute.xlu0 %4061
    %4063 = vset.pattern.permute.xlu0 0
    %4064 = vperm.xlu0 %4063, %v4029
    %v4065 = vpop.permute.xlu0 %4064
    %4066 = vset.pattern.permute.xlu0 0
    %4067 = vperm.xlu0 %4066, %v4030
    %v4068 = vpop.permute.xlu0 %4067
    %4069 = vset.pattern.permute.xlu0 0
    %4070 = vperm.xlu0 %4069, %v4031
    %v4071 = vpop.permute.xlu0 %4070
    %4072 = vset.pattern.permute.xlu0 0
    %4073 = vperm.xlu0 %4072, %v4032
    %v4074 = vpop.permute.xlu0 %4073
    %4075 = vset.pattern.permute.xlu0 0
    %4076 = vperm.xlu0 %4075, %v4033
    %v4077 = vpop.permute.xlu0 %4076
    %4078 = vset.pattern.permute.xlu0 0
    %4079 = vperm.xlu0 %4078, %v4034
    %v4080 = vpop.permute.xlu0 %4079
    %4081 = vset.pattern.permute.xlu0 0
    %4082 = vperm.xlu0 %4081, %v4035
    %v4083 = vpop.permute.xlu0 %4082
    %vm4084 = vcmp.eq.s32.totalorder %v4038, 1
    %vm4085 = vcmp.eq.s32.totalorder %v4041, 1
    %vm4086 = vcmp.eq.s32.totalorder %v4044, 1
    %vm4087 = vcmp.eq.s32.totalorder %v4047, 1
    %vm4088 = vcmp.eq.s32.totalorder %v4050, 1
    %vm4089 = vcmp.eq.s32.totalorder %v4053, 1
    %vm4090 = vcmp.eq.s32.totalorder %v4056, 1
    %vm4091 = vcmp.eq.s32.totalorder %v4059, 1
    %vm4092 = vcmp.eq.s32.totalorder %v4062, 1
    %vm4093 = vcmp.eq.s32.totalorder %v4065, 1
    %vm4094 = vcmp.eq.s32.totalorder %v4068, 1
    %vm4095 = vcmp.eq.s32.totalorder %v4071, 1
    %vm4096 = vcmp.eq.s32.totalorder %v4074, 1
    %vm4097 = vcmp.eq.s32.totalorder %v4077, 1
    %vm4098 = vcmp.eq.s32.totalorder %v4080, 1
    %vm4099 = vcmp.eq.s32.totalorder %v4083, 1
    %v4100 = vsel %vm4084, %v3533, 0.0
    %v4101 = vsel %vm4085, %v3535, 0.0
    %v4102 = vsel %vm4086, %v3537, 0.0
    %v4103 = vsel %vm4087, %v3539, 0.0
    %v4104 = vsel %vm4088, %v3541, 0.0
    %v4105 = vsel %vm4089, %v3543, 0.0
    %v4106 = vsel %vm4090, %v3545, 0.0
    %v4107 = vsel %vm4091, %v3547, 0.0
    %v4108 = vsel %vm4092, %v3549, 0.0
    %v4109 = vsel %vm4093, %v3551, 0.0
    %v4110 = vsel %vm4094, %v3553, 0.0
    %v4111 = vsel %vm4095, %v3555, 0.0
    %v4112 = vsel %vm4096, %v3557, 0.0
    %v4113 = vsel %vm4097, %v3559, 0.0
    %v4114 = vsel %vm4098, %v3560, 0.0
    %v4115 = vsel %vm4099, %v3577, 0.0
    %v4116 = vpack.c.bf16 %v4101, %v4100
    %v4117 = vpack.c.bf16 %v4103, %v4102
    %v4118 = vpack.c.bf16 %v4105, %v4104
    %v4119 = vpack.c.bf16 %v4107, %v4106
    %v4120 = vpack.c.bf16 %v4109, %v4108
    %v4121 = vpack.c.bf16 %v4111, %v4110
    %v4122 = vpack.c.bf16 %v4113, %v4112
    %v4123 = vpack.c.bf16 %v4115, %v4114
    %4132 = vrot.lane.b32.xlu0 %v4116, 64
    %v4133 = vpop.permute.xlu0 %4132
    %4134 = vrot.lane.b32.xlu0 %v4117, 64
    %v4135 = vpop.permute.xlu0 %4134
    %4136 = vrot.lane.b32.xlu0 %v4118, 64
    %v4137 = vpop.permute.xlu0 %4136
    %4138 = vrot.lane.b32.xlu0 %v4119, 64
    %v4139 = vpop.permute.xlu0 %4138
    %4140 = vrot.lane.b32.xlu0 %v4120, 64
    %v4141 = vpop.permute.xlu0 %4140
    %4142 = vrot.lane.b32.xlu0 %v4121, 64
    %v4143 = vpop.permute.xlu0 %4142
    %4144 = vrot.lane.b32.xlu0 %v4122, 64
    %v4145 = vpop.permute.xlu0 %4144
    %4146 = vrot.lane.b32.xlu0 %v4123, 64
    %v4147 = vpop.permute.xlu0 %4146
    %v4152 = vunpack.c.l.b16 %v3490
    %v4153 = vunpack.c.l.b16 %v3491
    %v4154 = vunpack.c.l.b16 %v3492
    %v4155 = vunpack.c.l.b16 %v3493
    %v4156 = vpack.c.b16 %v4153, %v4152
    %v4157 = vpack.c.b16 %v4155, %v4154
    %v4161 = vsel %vm1252, %v4133, 0
    %v4164 = vsel %vm1252, %v4135, 0
    %v4167 = vsel %vm1252, %v4137, 0
    %v4170 = vsel %vm1252, %v4139, 0
    %v4173 = vsel %vm1252, %v4141, 0
    %v4176 = vsel %vm1252, %v4143, 0
    %v4179 = vsel %vm1252, %v4145, 0
    %v4182 = vsel %vm1252, %v4147, 0
    %4184 = vmatprep.subr.bf16.mxu0 0
    %4185 = vmatpush1.bf16.msra.mxu0 %v4156
    %4186 = vmatprep.subr.bf16.mxu0 0
    %4187 = vmatpush1.bf16.msra.mxu0 %v4157
    %4188 = vmatprep.subr.bf16.mxu0 0
    %4189 = vmatpush1.bf16.msra.mxu0 0
    %4190 = vmatprep.subr.bf16.mxu0 0
    %4191 = vmatpush1.bf16.msra.mxu0 0
    %4192 = vmatprep.subr.bf16.mxu0 0
    %4193 = vmatpush1.bf16.msra.mxu0 0
    %4194 = vmatprep.subr.bf16.mxu0 0
    %4195 = vmatpush1.bf16.msra.mxu0 0
    %4196 = vmatprep.subr.bf16.mxu0 0
    %4197 = vmatpush1.bf16.msra.mxu0 0
    %4198 = vmatprep.subr.bf16.mxu0 0
    %4199 = vmatpush1.bf16.msra.mxu0 0
    %4200 = vmatprep.subr.bf16.mxu0 0
    %4201 = vmatpush1.bf16.msra.mxu0 0
    %4202 = vmatprep.subr.bf16.mxu0 0
    %4203 = vmatpush1.bf16.msra.mxu0 0
    %4204 = vmatprep.subr.bf16.mxu0 0
    %4205 = vmatpush1.bf16.msra.mxu0 0
    %4206 = vmatprep.subr.bf16.mxu0 0
    %4207 = vmatpush1.bf16.msra.mxu0 0
    %4208 = vmatprep.subr.bf16.mxu0 0
    %4209 = vmatpush1.bf16.msra.mxu0 0
    %4210 = vmatprep.subr.bf16.mxu0 0
    %4211 = vmatpush1.bf16.msra.mxu0 0
    %4212 = vmatprep.subr.bf16.mxu0 0
    %4213 = vmatpush1.bf16.msra.mxu0 0
    %4214 = vmatprep.subr.bf16.mxu0 0
    %4215 = vmatpush1.bf16.msra.mxu0 0
    %4216 = vmatprep.mubr.bf16.mxu0 0
    %4217 = vmatmul.mubr.bf16.gmra.mrb[0].mxu0 %v4161
    %v4218 = vpop.f32.mrb[0].mxu0
    %v4219 = vadd.f32 0.0, %v4218
    %v4220 = vpop.f32.mrb[0].mxu0
    %v4221 = vpop.f32.mrb[0].mxu0
    %v4222 = vadd.f32 0.0, %v4221
    %v4223 = vpop.f32.mrb[0].mxu0
    %4224 = vmatprep.mubr.bf16.mxu0 0
    %4225 = vmatmul.mubr.bf16.gmra.mrb[0].mxu0 %v4164
    %v4226 = vpop.f32.mrb[0].mxu0
    %v4227 = vadd.f32 0.0, %v4226
    %v4228 = vpop.f32.mrb[0].mxu0
    %v4229 = vpop.f32.mrb[0].mxu0
    %v4230 = vadd.f32 0.0, %v4229
    %v4231 = vpop.f32.mrb[0].mxu0
    %4232 = vmatprep.mubr.bf16.mxu0 0
    %4233 = vmatmul.mubr.bf16.gmra.mrb[0].mxu0 %v4167
    %v4234 = vpop.f32.mrb[0].mxu0
    %v4235 = vadd.f32 0.0, %v4234
    %v4236 = vpop.f32.mrb[0].mxu0
    %v4237 = vpop.f32.mrb[0].mxu0
    %v4238 = vadd.f32 0.0, %v4237
    %v4239 = vpop.f32.mrb[0].mxu0
    %4240 = vmatprep.mubr.bf16.mxu0 0
    %4241 = vmatmul.mubr.bf16.gmra.mrb[0].mxu0 %v4170
    %v4242 = vpop.f32.mrb[0].mxu0
    %v4243 = vadd.f32 0.0, %v4242
    %v4244 = vpop.f32.mrb[0].mxu0
    %v4245 = vpop.f32.mrb[0].mxu0
    %v4246 = vadd.f32 0.0, %v4245
    %v4247 = vpop.f32.mrb[0].mxu0
    %4248 = vmatprep.mubr.bf16.mxu0 0
    %4249 = vmatmul.mubr.bf16.gmra.mrb[0].mxu0 %v4173
    %v4250 = vpop.f32.mrb[0].mxu0
    %v4251 = vadd.f32 0.0, %v4250
    %v4252 = vpop.f32.mrb[0].mxu0
    %v4253 = vpop.f32.mrb[0].mxu0
    %v4254 = vadd.f32 0.0, %v4253
    %v4255 = vpop.f32.mrb[0].mxu0
    %4256 = vmatprep.mubr.bf16.mxu0 0
    %4257 = vmatmul.mubr.bf16.gmra.mrb[0].mxu0 %v4176
    %v4258 = vpop.f32.mrb[0].mxu0
    %v4259 = vadd.f32 0.0, %v4258
    %v4260 = vpop.f32.mrb[0].mxu0
    %v4261 = vpop.f32.mrb[0].mxu0
    %v4262 = vadd.f32 0.0, %v4261
    %v4263 = vpop.f32.mrb[0].mxu0
    %4264 = vmatprep.mubr.bf16.mxu0 0
    %4265 = vmatmul.mubr.bf16.gmra.mrb[0].mxu0 %v4179
    %v4266 = vpop.f32.mrb[0].mxu0
    %v4267 = vadd.f32 0.0, %v4266
    %v4268 = vpop.f32.mrb[0].mxu0
    %v4269 = vpop.f32.mrb[0].mxu0
    %v4270 = vadd.f32 0.0, %v4269
    %v4271 = vpop.f32.mrb[0].mxu0
    %4272 = vmatprep.mubr.bf16.mxu0 0
    %4273 = vmatmul.mubr.bf16.gmra.mrb[0].mxu0 %v4182
    %v4274 = vpop.f32.mrb[0].mxu0
    %v4275 = vadd.f32 0.0, %v4274
    %v4276 = vpop.f32.mrb[0].mxu0
    %v4277 = vpop.f32.mrb[0].mxu0
    %v4278 = vadd.f32 0.0, %v4277
    %v4279 = vpop.f32.mrb[0].mxu0
    %4280 = vdwg.mxu0
    %v4281 = vadd.f32 %v3942, %v4219
    %v4282 = vadd.f32 %v3945, %v4222
    %v4283 = vadd.f32 %v3950, %v4227
    %v4284 = vadd.f32 %v3953, %v4230
    %v4285 = vadd.f32 %v3958, %v4235
    %v4286 = vadd.f32 %v3961, %v4238
    %v4287 = vadd.f32 %v3966, %v4243
    %v4288 = vadd.f32 %v3969, %v4246
    %v4289 = vadd.f32 %v3974, %v4251
    %v4290 = vadd.f32 %v3977, %v4254
    %v4291 = vadd.f32 %v3982, %v4259
    %v4292 = vadd.f32 %v3985, %v4262
    %v4293 = vadd.f32 %v3990, %v4267
    %v4294 = vadd.f32 %v3993, %v4270
    %v4295 = vadd.f32 %v3998, %v4275
    %v4296 = vadd.f32 %v4001, %v4278
    %v4298 = vlaneseq
    %v4299 = vshrl.u32 %v4298, 7
    %v4300 = vsub.s32 0, %v4299
    %v4301 = vrot.slane %v3495, %v4300
    %v4303 = vadd.f32 %v4281, %v4301
    %v4304 = vadd.f32 %v4282, %v4301
    %v4305 = vadd.f32 %v4283, %v4301
    %v4306 = vadd.f32 %v4284, %v4301
    %v4307 = vadd.f32 %v4285, %v4301
    %v4308 = vadd.f32 %v4286, %v4301
    %v4309 = vadd.f32 %v4287, %v4301
    %v4310 = vadd.f32 %v4288, %v4301
    %v4311 = vadd.f32 %v4289, %v4301
    %v4312 = vadd.f32 %v4290, %v4301
    %v4313 = vadd.f32 %v4291, %v4301
    %v4314 = vadd.f32 %v4292, %v4301
    %v4315 = vadd.f32 %v4293, %v4301
    %v4316 = vadd.f32 %v4294, %v4301
    %v4317 = vadd.f32 %v4295, %v4301
    %v4318 = vadd.f32 %v4296, %v4301
    %v4319 = vtanh.pop %v4303
    %v4320 = vtanh.pop %v4304
    %v4321 = vtanh.pop %v4305
    %v4322 = vtanh.pop %v4306
    %v4323 = vtanh.pop %v4307
    %v4324 = vtanh.pop %v4308
    %v4325 = vtanh.pop %v4309
    %v4326 = vtanh.pop %v4310
    %v4327 = vtanh.pop %v4311
    %v4328 = vtanh.pop %v4312
    %v4329 = vtanh.pop %v4313
    %v4330 = vtanh.pop %v4314
    %v4331 = vtanh.pop %v4315
    %v4332 = vtanh.pop %v4316
    %v4333 = vtanh.pop %v4317
    %v4334 = vtanh.pop %v4318
    %v4335 = vxor.u32 %v4303, 2147483648
    %v4336 = vxor.u32 %v4304, 2147483648
    %v4337 = vxor.u32 %v4305, 2147483648
    %v4338 = vxor.u32 %v4306, 2147483648
    %v4339 = vxor.u32 %v4307, 2147483648
    %v4340 = vxor.u32 %v4308, 2147483648
    %v4341 = vxor.u32 %v4309, 2147483648
    %v4342 = vxor.u32 %v4310, 2147483648
    %v4343 = vxor.u32 %v4311, 2147483648
    %v4344 = vxor.u32 %v4312, 2147483648
    %v4345 = vxor.u32 %v4313, 2147483648
    %v4346 = vxor.u32 %v4314, 2147483648
    %v4347 = vxor.u32 %v4315, 2147483648
    %v4348 = vxor.u32 %v4316, 2147483648
    %v4349 = vxor.u32 %v4317, 2147483648
    %v4350 = vxor.u32 %v4318, 2147483648
    %v4351 = vmul.f32 %v4335, 1.442695
    %v4352 = vpow.pop %v4351
    %v4353 = vmul.f32 %v4336, 1.442695
    %v4354 = vpow.pop %v4353
    %v4355 = vmul.f32 %v4337, 1.442695
    %v4356 = vpow.pop %v4355
    %v4357 = vmul.f32 %v4338, 1.442695
    %v4358 = vpow.pop %v4357
    %v4359 = vmul.f32 %v4339, 1.442695
    %v4360 = vpow.pop %v4359
    %v4361 = vmul.f32 %v4340, 1.442695
    %v4362 = vpow.pop %v4361
    %v4363 = vmul.f32 %v4341, 1.442695
    %v4364 = vpow.pop %v4363
    %v4365 = vmul.f32 %v4342, 1.442695
    %v4366 = vpow.pop %v4365
    %v4367 = vmul.f32 %v4343, 1.442695
    %v4368 = vpow.pop %v4367
    %v4369 = vmul.f32 %v4344, 1.442695
    %v4370 = vpow.pop %v4369
    %v4371 = vmul.f32 %v4345, 1.442695
    %v4372 = vpow.pop %v4371
    %v4373 = vmul.f32 %v4346, 1.442695
    %v4374 = vpow.pop %v4373
    %v4375 = vmul.f32 %v4347, 1.442695
    %v4376 = vpow.pop %v4375
    %v4377 = vmul.f32 %v4348, 1.442695
    %v4378 = vpow.pop %v4377
    %v4379 = vmul.f32 %v4349, 1.442695
    %v4380 = vpow.pop %v4379
    %v4381 = vmul.f32 %v4350, 1.442695
    %v4382 = vpow.pop %v4381
    %v4383 = vadd.f32 %v4352, 1.0
    %v4384 = vadd.f32 %v4354, 1.0
    %v4385 = vadd.f32 %v4356, 1.0
    %v4386 = vadd.f32 %v4358, 1.0
    %v4387 = vadd.f32 %v4360, 1.0
    %v4388 = vadd.f32 %v4362, 1.0
    %v4389 = vadd.f32 %v4364, 1.0
    %v4390 = vadd.f32 %v4366, 1.0
    %v4391 = vadd.f32 %v4368, 1.0
    %v4392 = vadd.f32 %v4370, 1.0
    %v4393 = vadd.f32 %v4372, 1.0
    %v4394 = vadd.f32 %v4374, 1.0
    %v4395 = vadd.f32 %v4376, 1.0
    %v4396 = vadd.f32 %v4378, 1.0
    %v4397 = vadd.f32 %v4380, 1.0
    %v4398 = vadd.f32 %v4382, 1.0
    %v4399 = vrcp.pop %v4383
    %v4400 = vmul.f32 1.0, %v4399
    %v4401 = vrcp.pop %v4384
    %v4402 = vmul.f32 1.0, %v4401
    %v4403 = vrcp.pop %v4385
    %v4404 = vmul.f32 1.0, %v4403
    %v4405 = vrcp.pop %v4386
    %v4406 = vmul.f32 1.0, %v4405
    %v4407 = vrcp.pop %v4387
    %v4408 = vmul.f32 1.0, %v4407
    %v4409 = vrcp.pop %v4388
    %v4410 = vmul.f32 1.0, %v4409
    %v4411 = vrcp.pop %v4389
    %v4412 = vmul.f32 1.0, %v4411
    %v4413 = vrcp.pop %v4390
    %v4414 = vmul.f32 1.0, %v4413
    %v4415 = vrcp.pop %v4391
    %v4416 = vmul.f32 1.0, %v4415
    %v4417 = vrcp.pop %v4392
    %v4418 = vmul.f32 1.0, %v4417
    %v4419 = vrcp.pop %v4393
    %v4420 = vmul.f32 1.0, %v4419
    %v4421 = vrcp.pop %v4394
    %v4422 = vmul.f32 1.0, %v4421
    %v4423 = vrcp.pop %v4395
    %v4424 = vmul.f32 1.0, %v4423
    %v4425 = vrcp.pop %v4396
    %v4426 = vmul.f32 1.0, %v4425
    %v4427 = vrcp.pop %v4397
    %v4428 = vmul.f32 1.0, %v4427
    %v4429 = vrcp.pop %v4398
    %v4430 = vmul.f32 1.0, %v4429
    %4447 = vrot.lane.b32.xlu0 %v4400, 96
    %v4448 = vpop.permute.xlu0 %4447
    %4449 = vrot.lane.b32.xlu0 %v4402, 96
    %v4450 = vpop.permute.xlu0 %4449
    %4451 = vrot.lane.b32.xlu0 %v4404, 96
    %v4452 = vpop.permute.xlu0 %4451
    %4453 = vrot.lane.b32.xlu0 %v4406, 96
    %v4454 = vpop.permute.xlu0 %4453
    %4455 = vrot.lane.b32.xlu0 %v4408, 96
    %v4456 = vpop.permute.xlu0 %4455
    %4457 = vrot.lane.b32.xlu0 %v4410, 96
    %v4458 = vpop.permute.xlu0 %4457
    %4459 = vrot.lane.b32.xlu0 %v4412, 96
    %v4460 = vpop.permute.xlu0 %4459
    %4461 = vrot.lane.b32.xlu0 %v4414, 96
    %v4462 = vpop.permute.xlu0 %4461
    %4463 = vrot.lane.b32.xlu0 %v4416, 96
    %v4464 = vpop.permute.xlu0 %4463
    %4465 = vrot.lane.b32.xlu0 %v4418, 96
    %v4466 = vpop.permute.xlu0 %4465
    %4467 = vrot.lane.b32.xlu0 %v4420, 96
    %v4468 = vpop.permute.xlu0 %4467
    %4469 = vrot.lane.b32.xlu0 %v4422, 96
    %v4470 = vpop.permute.xlu0 %4469
    %4471 = vrot.lane.b32.xlu0 %v4424, 96
    %v4472 = vpop.permute.xlu0 %4471
    %4473 = vrot.lane.b32.xlu0 %v4426, 96
    %v4474 = vpop.permute.xlu0 %4473
    %4475 = vrot.lane.b32.xlu0 %v4428, 96
    %v4476 = vpop.permute.xlu0 %4475
    %4477 = vrot.lane.b32.xlu0 %v4430, 96
    %v4478 = vpop.permute.xlu0 %4477
    %v4495 = vmul.f32 %v4319, %v4448
    %v4496 = vmul.f32 %v4320, %v4450
    %v4497 = vmul.f32 %v4321, %v4452
    %v4498 = vmul.f32 %v4322, %v4454
    %v4499 = vmul.f32 %v4323, %v4456
    %v4500 = vmul.f32 %v4324, %v4458
    %v4501 = vmul.f32 %v4325, %v4460
    %v4502 = vmul.f32 %v4326, %v4462
    %v4503 = vmul.f32 %v4327, %v4464
    %v4504 = vmul.f32 %v4328, %v4466
    %v4505 = vmul.f32 %v4329, %v4468
    %v4506 = vmul.f32 %v4330, %v4470
    %v4507 = vmul.f32 %v4331, %v4472
    %v4508 = vmul.f32 %v4332, %v4474
    %v4509 = vmul.f32 %v4333, %v4476
    %v4510 = vmul.f32 %v4334, %v4478
    %v4511 = vpack.c.bf16 %v4496, %v4495
    %v4512 = vpack.c.bf16 %v4498, %v4497
    %v4513 = vpack.c.bf16 %v4500, %v4499
    %v4514 = vpack.c.bf16 %v4502, %v4501
    %v4515 = vpack.c.bf16 %v4504, %v4503
    %v4516 = vpack.c.bf16 %v4506, %v4505
    %v4517 = vpack.c.bf16 %v4508, %v4507
    %v4518 = vpack.c.bf16 %v4510, %v4509
    %s4519 = scalar_lea.vmem [#allocation6], 32
    %v4520 = vld [vmem:[%s4519] sm:$0xf]
    %v4521 = vld [vmem:[%s4519 + $0x4] sm:$0xf]
    %v4522 = vld [vmem:[%s4519 + $0x8] sm:$0xf]
    %v4523 = vld [vmem:[%s4519 + $0xc] sm:$0xf]
    %v4528 = vunpack.c.l.b16 %v4520
    %v4529 = vunpack.c.l.b16 %v4521
    %v4530 = vunpack.c.l.b16 %v4522
    %v4531 = vunpack.c.l.b16 %v4523
    %v4532 = vpack.c.b16 %v4529, %v4528
    %v4533 = vpack.c.b16 %v4531, %v4530
    %v4537 = vsel %vm1252, %v4511, 0
    %v4540 = vsel %vm1252, %v4512, 0
    %v4543 = vsel %vm1252, %v4513, 0
    %v4546 = vsel %vm1252, %v4514, 0
    %v4549 = vsel %vm1252, %v4515, 0
    %v4552 = vsel %vm1252, %v4516, 0
    %v4555 = vsel %vm1252, %v4517, 0
    %v4558 = vsel %vm1252, %v4518, 0
    %4560 = vmatprep.subr.bf16.mxu0 0
    %4561 = vmatpush1.bf16.msra.mxu0 %v4532
    %4562 = vmatprep.subr.bf16.mxu0 0
    %4563 = vmatpush1.bf16.msra.mxu0 %v4533
    %4564 = vmatprep.subr.bf16.mxu0 0
    %4565 = vmatpush1.bf16.msra.mxu0 0
    %4566 = vmatprep.subr.bf16.mxu0 0
    %4567 = vmatpush1.bf16.msra.mxu0 0
    %4568 = vmatprep.subr.bf16.mxu0 0
    %4569 = vmatpush1.bf16.msra.mxu0 0
    %4570 = vmatprep.subr.bf16.mxu0 0
    %4571 = vmatpush1.bf16.msra.mxu0 0
    %4572 = vmatprep.subr.bf16.mxu0 0
    %4573 = vmatpush1.bf16.msra.mxu0 0
    %4574 = vmatprep.subr.bf16.mxu0 0
    %4575 = vmatpush1.bf16.msra.mxu0 0
    %4576 = vmatprep.subr.bf16.mxu0 0
    %4577 = vmatpush1.bf16.msra.mxu0 0
    %4578 = vmatprep.subr.bf16.mxu0 0
    %4579 = vmatpush1.bf16.msra.mxu0 0
    %4580 = vmatprep.subr.bf16.mxu0 0
    %4581 = vmatpush1.bf16.msra.mxu0 0
    %4582 = vmatprep.subr.bf16.mxu0 0
    %4583 = vmatpush1.bf16.msra.mxu0 0
    %4584 = vmatprep.subr.bf16.mxu0 0
    %4585 = vmatpush1.bf16.msra.mxu0 0
    %4586 = vmatprep.subr.bf16.mxu0 0
    %4587 = vmatpush1.bf16.msra.mxu0 0
    %4588 = vmatprep.subr.bf16.mxu0 0
    %4589 = vmatpush1.bf16.msra.mxu0 0
    %4590 = vmatprep.subr.bf16.mxu0 0
    %4591 = vmatpush1.bf16.msra.mxu0 0
    %4592 = vmatprep.mubr.bf16.mxu0 0
    %4593 = vmatmul.mubr.bf16.gmra.mrb[0].mxu0 %v4537
    %v4594 = vpop.f32.mrb[0].mxu0
    %v4595 = vadd.f32 0.0, %v4594
    %v4596 = vpop.f32.mrb[0].mxu0
    %v4597 = vpop.f32.mrb[0].mxu0
    %v4598 = vadd.f32 0.0, %v4597
    %v4599 = vpop.f32.mrb[0].mxu0
    %4600 = vmatprep.mubr.bf16.mxu0 0
    %4601 = vmatmul.mubr.bf16.gmra.mrb[0].mxu0 %v4540
    %v4602 = vpop.f32.mrb[0].mxu0
    %v4603 = vadd.f32 0.0, %v4602
    %v4604 = vpop.f32.mrb[0].mxu0
    %v4605 = vpop.f32.mrb[0].mxu0
    %v4606 = vadd.f32 0.0, %v4605
    %v4607 = vpop.f32.mrb[0].mxu0
    %4608 = vmatprep.mubr.bf16.mxu0 0
    %4609 = vmatmul.mubr.bf16.gmra.mrb[0].mxu0 %v4543
    %v4610 = vpop.f32.mrb[0].mxu0
    %v4611 = vadd.f32 0.0, %v4610
    %v4612 = vpop.f32.mrb[0].mxu0
    %v4613 = vpop.f32.mrb[0].mxu0
    %v4614 = vadd.f32 0.0, %v4613
    %v4615 = vpop.f32.mrb[0].mxu0
    %4616 = vmatprep.mubr.bf16.mxu0 0
    %4617 = vmatmul.mubr.bf16.gmra.mrb[0].mxu0 %v4546
    %v4618 = vpop.f32.mrb[0].mxu0
    %v4619 = vadd.f32 0.0, %v4618
    %v4620 = vpop.f32.mrb[0].mxu0
    %v4621 = vpop.f32.mrb[0].mxu0
    %v4622 = vadd.f32 0.0, %v4621
    %v4623 = vpop.f32.mrb[0].mxu0
    %4624 = vmatprep.mubr.bf16.mxu0 0
    %4625 = vmatmul.mubr.bf16.gmra.mrb[0].mxu0 %v4549
    %v4626 = vpop.f32.mrb[0].mxu0
    %v4627 = vadd.f32 0.0, %v4626
    %v4628 = vpop.f32.mrb[0].mxu0
    %v4629 = vpop.f32.mrb[0].mxu0
    %v4630 = vadd.f32 0.0, %v4629
    %v4631 = vpop.f32.mrb[0].mxu0
    %4632 = vmatprep.mubr.bf16.mxu0 0
    %4633 = vmatmul.mubr.bf16.gmra.mrb[0].mxu0 %v4552
    %v4634 = vpop.f32.mrb[0].mxu0
    %v4635 = vadd.f32 0.0, %v4634
    %v4636 = vpop.f32.mrb[0].mxu0
    %v4637 = vpop.f32.mrb[0].mxu0
    %v4638 = vadd.f32 0.0, %v4637
    %v4639 = vpop.f32.mrb[0].mxu0
    %4640 = vmatprep.mubr.bf16.mxu0 0
    %4641 = vmatmul.mubr.bf16.gmra.mrb[0].mxu0 %v4555
    %v4642 = vpop.f32.mrb[0].mxu0
    %v4643 = vadd.f32 0.0, %v4642
    %v4644 = vpop.f32.mrb[0].mxu0
    %v4645 = vpop.f32.mrb[0].mxu0
    %v4646 = vadd.f32 0.0, %v4645
    %v4647 = vpop.f32.mrb[0].mxu0
    %4648 = vmatprep.mubr.bf16.mxu0 0
    %4649 = vmatmul.mubr.bf16.gmra.mrb[0].mxu0 %v4558
    %v4650 = vpop.f32.mrb[0].mxu0
    %v4651 = vadd.f32 0.0, %v4650
    %v4652 = vpop.f32.mrb[0].mxu0
    %v4653 = vpop.f32.mrb[0].mxu0
    %v4654 = vadd.f32 0.0, %v4653
    %v4655 = vpop.f32.mrb[0].mxu0
    %4656 = vdwg.mxu0
    %v4657 = vadd.f32 %v3421, %v4595
    %v4658 = vadd.f32 %v3422, %v4598
    %v4659 = vadd.f32 %v3423, %v4603
    %v4660 = vadd.f32 %v3424, %v4606
    %v4661 = vadd.f32 %v3425, %v4611
    %v4662 = vadd.f32 %v3426, %v4614
    %v4663 = vadd.f32 %v3427, %v4619
    %v4664 = vadd.f32 %v3428, %v4622
    %v4665 = vadd.f32 %v3429, %v4627
    %v4666 = vadd.f32 %v3430, %v4630
    %v4667 = vadd.f32 %v3431, %v4635
    %v4668 = vadd.f32 %v3432, %v4638
    %v4669 = vadd.f32 %v3433, %v4643
    %v4670 = vadd.f32 %v3434, %v4646
    %v4671 = vadd.f32 %v3435, %v4651
    %v4672 = vadd.f32 %v3436, %v4654
    %s4673 = scalar_lea.vmem [#allocation7], 2
    %v4674 = vld [vmem:[%s4673] sm:$0x1]
    %v4676 = vlaneseq
    %v4677 = vshrl.u32 %v4676, 7
    %v4678 = vsub.s32 0, %v4677
    %v4679 = vrot.slane %v4674, %v4678
    %4680 = vrot.lane.b32.xlu0 %v4679, 64
    %v4681 = vpop.permute.xlu0 %4680
    %v4683 = vadd.f32 %v4595, %v4681
    %v4684 = vadd.f32 %v4598, %v4681
    %v4685 = vadd.f32 %v4603, %v4681
    %v4686 = vadd.f32 %v4606, %v4681
    %v4687 = vadd.f32 %v4611, %v4681
    %v4688 = vadd.f32 %v4614, %v4681
    %v4689 = vadd.f32 %v4619, %v4681
    %v4690 = vadd.f32 %v4622, %v4681
    %v4691 = vadd.f32 %v4627, %v4681
    %v4692 = vadd.f32 %v4630, %v4681
    %v4693 = vadd.f32 %v4635, %v4681
    %v4694 = vadd.f32 %v4638, %v4681
    %v4695 = vadd.f32 %v4643, %v4681
    %v4696 = vadd.f32 %v4646, %v4681
    %v4697 = vadd.f32 %v4651, %v4681
    %v4698 = vadd.f32 %v4654, %v4681
    %v4699 = vadd.f32 %v4683, %v3463
    %v4700 = vadd.f32 %v4684, %v3464
    %v4701 = vadd.f32 %v4685, %v3465
    %v4702 = vadd.f32 %v4686, %v3466
    %v4703 = vadd.f32 %v4687, %v3467
    %v4704 = vadd.f32 %v4688, %v3468
    %v4705 = vadd.f32 %v4689, %v3469
    %v4706 = vadd.f32 %v4690, %v3470
    %v4707 = vadd.f32 %v4691, %v3471
    %v4708 = vadd.f32 %v4692, %v3472
    %v4709 = vadd.f32 %v4693, %v3473
    %v4710 = vadd.f32 %v4694, %v3474
    %v4711 = vadd.f32 %v4695, %v3475
    %v4712 = vadd.f32 %v4696, %v3476
    %v4713 = vadd.f32 %v4697, %v3477
    %v4714 = vadd.f32 %v4698, %v3478
    %s4715 = scalar_lea.vmem %s4, 144
    %v4716 = vld [vmem:[%s4715] sm:$0xf]
    %v4717 = vld [vmem:[%s4715 + $0x4] sm:$0xf]
    %v4718 = vld [vmem:[%s4715 + $0x8] sm:$0xf]
    %v4719 = vld [vmem:[%s4715 + $0xc] sm:$0xf]
    %s4720 = scalar_lea.vmem %s4, 160
    %v4721 = vld [vmem:[%s4720] sm:$0xf]
    %v4722 = vld [vmem:[%s4720 + $0x4] sm:$0xf]
    %v4723 = vld [vmem:[%s4720 + $0x8] sm:$0xf]
    %v4724 = vld [vmem:[%s4720 + $0xc] sm:$0xf]
    %s4725 = scalar_lea.vmem %s4, 176
    %v4726 = vld [vmem:[%s4725] sm:$0xf]
    %v4727 = vld [vmem:[%s4725 + $0x4] sm:$0xf]
    %v4728 = vld [vmem:[%s4725 + $0x8] sm:$0xf]
    %v4729 = vld [vmem:[%s4725 + $0xc] sm:$0xf]
    %s4730 = scalar_lea.vmem [#allocation4], 3
    %v4731 = vld [vmem:[%s4730] sm:$0x1]
    %vm4732 = vcmp.ge.s32.totalorder %v111, 8
    %vm4733 = vcmp.ge.s32.totalorder %v112, 8
    %vm4734 = vcmp.ge.s32.totalorder %v113, 8
    %vm4735 = vcmp.ge.s32.totalorder %v114, 8
    %vm4736 = vcmp.ge.s32.totalorder %v115, 8
    %vm4737 = vcmp.ge.s32.totalorder %v116, 8
    %vm4738 = vcmp.ge.s32.totalorder %v117, 8
    %vm4739 = vcmp.ge.s32.totalorder %v118, 8
    %vm4740 = vcmp.ge.s32.totalorder %v119, 8
    %vm4741 = vcmp.ge.s32.totalorder %v120, 8
    %vm4742 = vcmp.ge.s32.totalorder %v121, 8
    %vm4743 = vcmp.ge.s32.totalorder %v122, 8
    %vm4744 = vcmp.ge.s32.totalorder %v123, 8
    %vm4745 = vcmp.ge.s32.totalorder %v124, 8
    %vm4746 = vcmp.ge.s32.totalorder %v125, 8
    %vm4747 = vcmp.ge.s32.totalorder %v126, 8
    %v4748 = vsel %vm4732, 1, 0
    %v4749 = vsel %vm4733, 1, 0
    %v4750 = vsel %vm4734, 1, 0
    %v4751 = vsel %vm4735, 1, 0
    %v4752 = vsel %vm4736, 1, 0
    %v4753 = vsel %vm4737, 1, 0
    %v4754 = vsel %vm4738, 1, 0
    %v4755 = vsel %vm4739, 1, 0
    %v4756 = vsel %vm4740, 1, 0
    %v4757 = vsel %vm4741, 1, 0
    %v4758 = vsel %vm4742, 1, 0
    %v4759 = vsel %vm4743, 1, 0
    %v4760 = vsel %vm4744, 1, 0
    %v4761 = vsel %vm4745, 1, 0
    %v4762 = vsel %vm4746, 1, 0
    %v4763 = vsel %vm4747, 1, 0
    %4764 = vset.pattern.permute.xlu0 0
    %4765 = vperm.xlu0 %4764, %v4748
    %v4766 = vpop.permute.xlu0 %4765
    %4767 = vset.pattern.permute.xlu0 0
    %4768 = vperm.xlu0 %4767, %v4749
    %v4769 = vpop.permute.xlu0 %4768
    %4770 = vset.pattern.permute.xlu0 0
    %4771 = vperm.xlu0 %4770, %v4750
    %v4772 = vpop.permute.xlu0 %4771
    %4773 = vset.pattern.permute.xlu0 0
    %4774 = vperm.xlu0 %4773, %v4751
    %v4775 = vpop.permute.xlu0 %4774
    %4776 = vset.pattern.permute.xlu0 0
    %4777 = vperm.xlu0 %4776, %v4752
    %v4778 = vpop.permute.xlu0 %4777
    %4779 = vset.pattern.permute.xlu0 0
    %4780 = vperm.xlu0 %4779, %v4753
    %v4781 = vpop.permute.xlu0 %4780
    %4782 = vset.pattern.permute.xlu0 0
    %4783 = vperm.xlu0 %4782, %v4754
    %v4784 = vpop.permute.xlu0 %4783
    %4785 = vset.pattern.permute.xlu0 0
    %4786 = vperm.xlu0 %4785, %v4755
    %v4787 = vpop.permute.xlu0 %4786
    %4788 = vset.pattern.permute.xlu0 0
    %4789 = vperm.xlu0 %4788, %v4756
    %v4790 = vpop.permute.xlu0 %4789
    %4791 = vset.pattern.permute.xlu0 0
    %4792 = vperm.xlu0 %4791, %v4757
    %v4793 = vpop.permute.xlu0 %4792
    %4794 = vset.pattern.permute.xlu0 0
    %4795 = vperm.xlu0 %4794, %v4758
    %v4796 = vpop.permute.xlu0 %4795
    %4797 = vset.pattern.permute.xlu0 0
    %4798 = vperm.xlu0 %4797, %v4759
    %v4799 = vpop.permute.xlu0 %4798
    %4800 = vset.pattern.permute.xlu0 0
    %4801 = vperm.xlu0 %4800, %v4760
    %v4802 = vpop.permute.xlu0 %4801
    %4803 = vset.pattern.permute.xlu0 0
    %4804 = vperm.xlu0 %4803, %v4761
    %v4805 = vpop.permute.xlu0 %4804
    %4806 = vset.pattern.permute.xlu0 0
    %4807 = vperm.xlu0 %4806, %v4762
    %v4808 = vpop.permute.xlu0 %4807
    %4809 = vset.pattern.permute.xlu0 0
    %4810 = vperm.xlu0 %4809, %v4763
    %v4811 = vpop.permute.xlu0 %4810
    %vm4812 = vcmp.eq.s32.totalorder %v4766, 1
    %vm4813 = vcmp.eq.s32.totalorder %v4769, 1
    %vm4814 = vcmp.eq.s32.totalorder %v4772, 1
    %vm4815 = vcmp.eq.s32.totalorder %v4775, 1
    %vm4816 = vcmp.eq.s32.totalorder %v4778, 1
    %vm4817 = vcmp.eq.s32.totalorder %v4781, 1
    %vm4818 = vcmp.eq.s32.totalorder %v4784, 1
    %vm4819 = vcmp.eq.s32.totalorder %v4787, 1
    %vm4820 = vcmp.eq.s32.totalorder %v4790, 1
    %vm4821 = vcmp.eq.s32.totalorder %v4793, 1
    %vm4822 = vcmp.eq.s32.totalorder %v4796, 1
    %vm4823 = vcmp.eq.s32.totalorder %v4799, 1
    %vm4824 = vcmp.eq.s32.totalorder %v4802, 1
    %vm4825 = vcmp.eq.s32.totalorder %v4805, 1
    %vm4826 = vcmp.eq.s32.totalorder %v4808, 1
    %vm4827 = vcmp.eq.s32.totalorder %v4811, 1
    %v4828 = vsel %vm4812, %v4714, 0.0
    %v4829 = vsel %vm4813, %v4699, 0.0
    %v4830 = vsel %vm4814, %v4700, 0.0
    %v4831 = vsel %vm4815, %v4701, 0.0
    %v4832 = vsel %vm4816, %v4702, 0.0
    %v4833 = vsel %vm4817, %v4703, 0.0
    %v4834 = vsel %vm4818, %v4704, 0.0
    %v4835 = vsel %vm4819, %v4705, 0.0
    %v4836 = vsel %vm4820, %v4706, 0.0
    %v4837 = vsel %vm4821, %v4707, 0.0
    %v4838 = vsel %vm4822, %v4708, 0.0
    %v4839 = vsel %vm4823, %v4709, 0.0
    %v4840 = vsel %vm4824, %v4710, 0.0
    %v4841 = vsel %vm4825, %v4711, 0.0
    %v4842 = vsel %vm4826, %v4712, 0.0
    %v4843 = vsel %vm4827, %v4713, 0.0
    %v4844 = vpack.c.bf16 %v4829, %v4828
    %v4845 = vpack.c.bf16 %v4831, %v4830
    %v4846 = vpack.c.bf16 %v4833, %v4832
    %v4847 = vpack.c.bf16 %v4835, %v4834
    %v4848 = vpack.c.bf16 %v4837, %v4836
    %v4849 = vpack.c.bf16 %v4839, %v4838
    %v4850 = vpack.c.bf16 %v4841, %v4840
    %v4851 = vpack.c.bf16 %v4843, %v4842
    %v4852 = vpack.c.bf16 %v4700, %v4699
    %v4853 = vpack.c.bf16 %v4702, %v4701
    %v4854 = vpack.c.bf16 %v4704, %v4703
    %v4855 = vpack.c.bf16 %v4706, %v4705
    %v4856 = vpack.c.bf16 %v4708, %v4707
    %v4857 = vpack.c.bf16 %v4710, %v4709
    %v4858 = vpack.c.bf16 %v4712, %v4711
    %v4859 = vpack.c.bf16 %v4714, %v4713
    %4868 = vrot.lane.b32.xlu0 %v4852, 64
    %v4869 = vpop.permute.xlu0 %4868
    %4870 = vrot.lane.b32.xlu0 %v4853, 64
    %v4871 = vpop.permute.xlu0 %4870
    %4872 = vrot.lane.b32.xlu0 %v4854, 64
    %v4873 = vpop.permute.xlu0 %4872
    %4874 = vrot.lane.b32.xlu0 %v4855, 64
    %v4875 = vpop.permute.xlu0 %4874
    %4876 = vrot.lane.b32.xlu0 %v4856, 64
    %v4877 = vpop.permute.xlu0 %4876
    %4878 = vrot.lane.b32.xlu0 %v4857, 64
    %v4879 = vpop.permute.xlu0 %4878
    %4880 = vrot.lane.b32.xlu0 %v4858, 64
    %v4881 = vpop.permute.xlu0 %4880
    %4882 = vrot.lane.b32.xlu0 %v4859, 64
    %v4883 = vpop.permute.xlu0 %4882
    %v4888 = vunpack.c.l.b16 %v4721
    %v4889 = vunpack.c.l.b16 %v4722
    %v4890 = vunpack.c.l.b16 %v4723
    %v4891 = vunpack.c.l.b16 %v4724
    %v4892 = vpack.c.b16 %v4889, %v4888
    %v4893 = vpack.c.b16 %v4891, %v4890
    %v4897 = vsel %vm1252, %v4869, 0
    %v4900 = vsel %vm1252, %v4871, 0
    %v4903 = vsel %vm1252, %v4873, 0
    %v4906 = vsel %vm1252, %v4875, 0
    %v4909 = vsel %vm1252, %v4877, 0
    %v4912 = vsel %vm1252, %v4879, 0
    %v4915 = vsel %vm1252, %v4881, 0
    %v4918 = vsel %vm1252, %v4883, 0
    %4920 = vmatprep.subr.bf16.mxu0 0
    %4921 = vmatpush1.bf16.msra.mxu0 %v4892
    %4922 = vmatprep.subr.bf16.mxu0 0
    %4923 = vmatpush1.bf16.msra.mxu0 %v4893
    %4924 = vmatprep.subr.bf16.mxu0 0
    %4925 = vmatpush1.bf16.msra.mxu0 0
    %4926 = vmatprep.subr.bf16.mxu0 0
    %4927 = vmatpush1.bf16.msra.mxu0 0
    %4928 = vmatprep.subr.bf16.mxu0 0
    %4929 = vmatpush1.bf16.msra.mxu0 0
    %4930 = vmatprep.subr.bf16.mxu0 0
    %4931 = vmatpush1.bf16.msra.mxu0 0
    %4932 = vmatprep.subr.bf16.mxu0 0
    %4933 = vmatpush1.bf16.msra.mxu0 0
    %4934 = vmatprep.subr.bf16.mxu0 0
    %4935 = vmatpush1.bf16.msra.mxu0 0
    %4936 = vmatprep.subr.bf16.mxu0 0
    %4937 = vmatpush1.bf16.msra.mxu0 0
    %4938 = vmatprep.subr.bf16.mxu0 0
    %4939 = vmatpush1.bf16.msra.mxu0 0
    %4940 = vmatprep.subr.bf16.mxu0 0
    %4941 = vmatpush1.bf16.msra.mxu0 0
    %4942 = vmatprep.subr.bf16.mxu0 0
    %4943 = vmatpush1.bf16.msra.mxu0 0
    %4944 = vmatprep.subr.bf16.mxu0 0
    %4945 = vmatpush1.bf16.msra.mxu0 0
    %4946 = vmatprep.subr.bf16.mxu0 0
    %4947 = vmatpush1.bf16.msra.mxu0 0
    %4948 = vmatprep.subr.bf16.mxu0 0
    %4949 = vmatpush1.bf16.msra.mxu0 0
    %4950 = vmatprep.subr.bf16.mxu0 0
    %4951 = vmatpush1.bf16.msra.mxu0 0
    %4952 = vmatprep.mubr.bf16.mxu0 0
    %4953 = vmatmul.mubr.bf16.gmra.mrb[0].mxu0 %v4897
    %v4954 = vpop.f32.mrb[0].mxu0
    %v4955 = vadd.f32 0.0, %v4954
    %v4956 = vpop.f32.mrb[0].mxu0
    %v4957 = vpop.f32.mrb[0].mxu0
    %v4958 = vadd.f32 0.0, %v4957
    %v4959 = vpop.f32.mrb[0].mxu0
    %4960 = vmatprep.mubr.bf16.mxu0 0
    %4961 = vmatmul.mubr.bf16.gmra.mrb[0].mxu0 %v4900
    %v4962 = vpop.f32.mrb[0].mxu0
    %v4963 = vadd.f32 0.0, %v4962
    %v4964 = vpop.f32.mrb[0].mxu0
    %v4965 = vpop.f32.mrb[0].mxu0
    %v4966 = vadd.f32 0.0, %v4965
    %v4967 = vpop.f32.mrb[0].mxu0
    %4968 = vmatprep.mubr.bf16.mxu0 0
    %4969 = vmatmul.mubr.bf16.gmra.mrb[0].mxu0 %v4903
    %v4970 = vpop.f32.mrb[0].mxu0
    %v4971 = vadd.f32 0.0, %v4970
    %v4972 = vpop.f32.mrb[0].mxu0
    %v4973 = vpop.f32.mrb[0].mxu0
    %v4974 = vadd.f32 0.0, %v4973
    %v4975 = vpop.f32.mrb[0].mxu0
    %4976 = vmatprep.mubr.bf16.mxu0 0
    %4977 = vmatmul.mubr.bf16.gmra.mrb[0].mxu0 %v4906
    %v4978 = vpop.f32.mrb[0].mxu0
    %v4979 = vadd.f32 0.0, %v4978
    %v4980 = vpop.f32.mrb[0].mxu0
    %v4981 = vpop.f32.mrb[0].mxu0
    %v4982 = vadd.f32 0.0, %v4981
    %v4983 = vpop.f32.mrb[0].mxu0
    %4984 = vmatprep.mubr.bf16.mxu0 0
    %4985 = vmatmul.mubr.bf16.gmra.mrb[0].mxu0 %v4909
    %v4986 = vpop.f32.mrb[0].mxu0
    %v4987 = vadd.f32 0.0, %v4986
    %v4988 = vpop.f32.mrb[0].mxu0
    %v4989 = vpop.f32.mrb[0].mxu0
    %v4990 = vadd.f32 0.0, %v4989
    %v4991 = vpop.f32.mrb[0].mxu0
    %4992 = vmatprep.mubr.bf16.mxu0 0
    %4993 = vmatmul.mubr.bf16.gmra.mrb[0].mxu0 %v4912
    %v4994 = vpop.f32.mrb[0].mxu0
    %v4995 = vadd.f32 0.0, %v4994
    %v4996 = vpop.f32.mrb[0].mxu0
    %v4997 = vpop.f32.mrb[0].mxu0
    %v4998 = vadd.f32 0.0, %v4997
    %v4999 = vpop.f32.mrb[0].mxu0
    %5000 = vmatprep.mubr.bf16.mxu0 0
    %5001 = vmatmul.mubr.bf16.gmra.mrb[0].mxu0 %v4915
    %v5002 = vpop.f32.mrb[0].mxu0
    %v5003 = vadd.f32 0.0, %v5002
    %v5004 = vpop.f32.mrb[0].mxu0
    %v5005 = vpop.f32.mrb[0].mxu0
    %v5006 = vadd.f32 0.0, %v5005
    %v5007 = vpop.f32.mrb[0].mxu0
    %5008 = vmatprep.mubr.bf16.mxu0 0
    %5009 = vmatmul.mubr.bf16.gmra.mrb[0].mxu0 %v4918
    %v5010 = vpop.f32.mrb[0].mxu0
    %v5011 = vadd.f32 0.0, %v5010
    %v5012 = vpop.f32.mrb[0].mxu0
    %v5013 = vpop.f32.mrb[0].mxu0
    %v5014 = vadd.f32 0.0, %v5013
    %v5015 = vpop.f32.mrb[0].mxu0
    %5016 = vdwg.mxu0
    %5025 = vrot.lane.b32.xlu0 %v4844, 64
    %v5026 = vpop.permute.xlu0 %5025
    %5027 = vrot.lane.b32.xlu0 %v4845, 64
    %v5028 = vpop.permute.xlu0 %5027
    %5029 = vrot.lane.b32.xlu0 %v4846, 64
    %v5030 = vpop.permute.xlu0 %5029
    %5031 = vrot.lane.b32.xlu0 %v4847, 64
    %v5032 = vpop.permute.xlu0 %5031
    %5033 = vrot.lane.b32.xlu0 %v4848, 64
    %v5034 = vpop.permute.xlu0 %5033
    %5035 = vrot.lane.b32.xlu0 %v4849, 64
    %v5036 = vpop.permute.xlu0 %5035
    %5037 = vrot.lane.b32.xlu0 %v4850, 64
    %v5038 = vpop.permute.xlu0 %5037
    %5039 = vrot.lane.b32.xlu0 %v4851, 64
    %v5040 = vpop.permute.xlu0 %5039
    %v5045 = vunpack.c.l.b16 %v4716
    %v5046 = vunpack.c.l.b16 %v4717
    %v5047 = vunpack.c.l.b16 %v4718
    %v5048 = vunpack.c.l.b16 %v4719
    %v5049 = vpack.c.b16 %v5046, %v5045
    %v5050 = vpack.c.b16 %v5048, %v5047
    %v5054 = vsel %vm1252, %v5026, 0
    %v5057 = vsel %vm1252, %v5028, 0
    %v5060 = vsel %vm1252, %v5030, 0
    %v5063 = vsel %vm1252, %v5032, 0
    %v5066 = vsel %vm1252, %v5034, 0
    %v5069 = vsel %vm1252, %v5036, 0
    %v5072 = vsel %vm1252, %v5038, 0
    %v5075 = vsel %vm1252, %v5040, 0
    %5077 = vmatprep.subr.bf16.mxu0 0
    %5078 = vmatpush1.bf16.msra.mxu0 %v5049
    %5079 = vmatprep.subr.bf16.mxu0 0
    %5080 = vmatpush1.bf16.msra.mxu0 %v5050
    %5081 = vmatprep.subr.bf16.mxu0 0
    %5082 = vmatpush1.bf16.msra.mxu0 0
    %5083 = vmatprep.subr.bf16.mxu0 0
    %5084 = vmatpush1.bf16.msra.mxu0 0
    %5085 = vmatprep.subr.bf16.mxu0 0
    %5086 = vmatpush1.bf16.msra.mxu0 0
    %5087 = vmatprep.subr.bf16.mxu0 0
    %5088 = vmatpush1.bf16.msra.mxu0 0
    %5089 = vmatprep.subr.bf16.mxu0 0
    %5090 = vmatpush1.bf16.msra.mxu0 0
    %5091 = vmatprep.subr.bf16.mxu0 0
    %5092 = vmatpush1.bf16.msra.mxu0 0
    %5093 = vmatprep.subr.bf16.mxu0 0
    %5094 = vmatpush1.bf16.msra.mxu0 0
    %5095 = vmatprep.subr.bf16.mxu0 0
    %5096 = vmatpush1.bf16.msra.mxu0 0
    %5097 = vmatprep.subr.bf16.mxu0 0
    %5098 = vmatpush1.bf16.msra.mxu0 0
    %5099 = vmatprep.subr.bf16.mxu0 0
    %5100 = vmatpush1.bf16.msra.mxu0 0
    %5101 = vmatprep.subr.bf16.mxu0 0
    %5102 = vmatpush1.bf16.msra.mxu0 0
    %5103 = vmatprep.subr.bf16.mxu0 0
    %5104 = vmatpush1.bf16.msra.mxu0 0
    %5105 = vmatprep.subr.bf16.mxu0 0
    %5106 = vmatpush1.bf16.msra.mxu0 0
    %5107 = vmatprep.subr.bf16.mxu0 0
    %5108 = vmatpush1.bf16.msra.mxu0 0
    %5109 = vmatprep.mubr.bf16.mxu0 0
    %5110 = vmatmul.mubr.bf16.gmra.mrb[0].mxu0 %v5054
    %v5111 = vpop.f32.mrb[0].mxu0
    %v5112 = vadd.f32 %v4955, %v5111
    %v5113 = vpop.f32.mrb[0].mxu0
    %v5114 = vpop.f32.mrb[0].mxu0
    %v5115 = vadd.f32 %v4958, %v5114
    %v5116 = vpop.f32.mrb[0].mxu0
    %5117 = vmatprep.mubr.bf16.mxu0 0
    %5118 = vmatmul.mubr.bf16.gmra.mrb[0].mxu0 %v5057
    %v5119 = vpop.f32.mrb[0].mxu0
    %v5120 = vadd.f32 %v4963, %v5119
    %v5121 = vpop.f32.mrb[0].mxu0
    %v5122 = vpop.f32.mrb[0].mxu0
    %v5123 = vadd.f32 %v4966, %v5122
    %v5124 = vpop.f32.mrb[0].mxu0
    %5125 = vmatprep.mubr.bf16.mxu0 0
    %5126 = vmatmul.mubr.bf16.gmra.mrb[0].mxu0 %v5060
    %v5127 = vpop.f32.mrb[0].mxu0
    %v5128 = vadd.f32 %v4971, %v5127
    %v5129 = vpop.f32.mrb[0].mxu0
    %v5130 = vpop.f32.mrb[0].mxu0
    %v5131 = vadd.f32 %v4974, %v5130
    %v5132 = vpop.f32.mrb[0].mxu0
    %5133 = vmatprep.mubr.bf16.mxu0 0
    %5134 = vmatmul.mubr.bf16.gmra.mrb[0].mxu0 %v5063
    %v5135 = vpop.f32.mrb[0].mxu0
    %v5136 = vadd.f32 %v4979, %v5135
    %v5137 = vpop.f32.mrb[0].mxu0
    %v5138 = vpop.f32.mrb[0].mxu0
    %v5139 = vadd.f32 %v4982, %v5138
    %v5140 = vpop.f32.mrb[0].mxu0
    %5141 = vmatprep.mubr.bf16.mxu0 0
    %5142 = vmatmul.mubr.bf16.gmra.mrb[0].mxu0 %v5066
    %v5143 = vpop.f32.mrb[0].mxu0
    %v5144 = vadd.f32 %v4987, %v5143
    %v5145 = vpop.f32.mrb[0].mxu0
    %v5146 = vpop.f32.mrb[0].mxu0
    %v5147 = vadd.f32 %v4990, %v5146
    %v5148 = vpop.f32.mrb[0].mxu0
    %5149 = vmatprep.mubr.bf16.mxu0 0
    %5150 = vmatmul.mubr.bf16.gmra.mrb[0].mxu0 %v5069
    %v5151 = vpop.f32.mrb[0].mxu0
    %v5152 = vadd.f32 %v4995, %v5151
    %v5153 = vpop.f32.mrb[0].mxu0
    %v5154 = vpop.f32.mrb[0].mxu0
    %v5155 = vadd.f32 %v4998, %v5154
    %v5156 = vpop.f32.mrb[0].mxu0
    %5157 = vmatprep.mubr.bf16.mxu0 0
    %5158 = vmatmul.mubr.bf16.gmra.mrb[0].mxu0 %v5072
    %v5159 = vpop.f32.mrb[0].mxu0
    %v5160 = vadd.f32 %v5003, %v5159
    %v5161 = vpop.f32.mrb[0].mxu0
    %v5162 = vpop.f32.mrb[0].mxu0
    %v5163 = vadd.f32 %v5006, %v5162
    %v5164 = vpop.f32.mrb[0].mxu0
    %5165 = vmatprep.mubr.bf16.mxu0 0
    %5166 = vmatmul.mubr.bf16.gmra.mrb[0].mxu0 %v5075
    %v5167 = vpop.f32.mrb[0].mxu0
    %v5168 = vadd.f32 %v5011, %v5167
    %v5169 = vpop.f32.mrb[0].mxu0
    %v5170 = vpop.f32.mrb[0].mxu0
    %v5171 = vadd.f32 %v5014, %v5170
    %v5172 = vpop.f32.mrb[0].mxu0
    %5173 = vdwg.mxu0
    %vm5174 = vcmp.lt.s32.totalorder %v111, 56
    %vm5175 = vcmp.lt.s32.totalorder %v112, 56
    %vm5176 = vcmp.lt.s32.totalorder %v113, 56
    %vm5177 = vcmp.lt.s32.totalorder %v114, 56
    %vm5178 = vcmp.lt.s32.totalorder %v115, 56
    %vm5179 = vcmp.lt.s32.totalorder %v116, 56
    %vm5180 = vcmp.lt.s32.totalorder %v117, 56
    %vm5181 = vcmp.lt.s32.totalorder %v118, 56
    %vm5182 = vcmp.lt.s32.totalorder %v119, 56
    %vm5183 = vcmp.lt.s32.totalorder %v120, 56
    %vm5184 = vcmp.lt.s32.totalorder %v121, 56
    %vm5185 = vcmp.lt.s32.totalorder %v122, 56
    %vm5186 = vcmp.lt.s32.totalorder %v123, 56
    %vm5187 = vcmp.lt.s32.totalorder %v124, 56
    %vm5188 = vcmp.lt.s32.totalorder %v125, 56
    %vm5189 = vcmp.lt.s32.totalorder %v126, 56
    %v5190 = vsel %vm5174, 1, 0
    %v5191 = vsel %vm5175, 1, 0
    %v5192 = vsel %vm5176, 1, 0
    %v5193 = vsel %vm5177, 1, 0
    %v5194 = vsel %vm5178, 1, 0
    %v5195 = vsel %vm5179, 1, 0
    %v5196 = vsel %vm5180, 1, 0
    %v5197 = vsel %vm5181, 1, 0
    %v5198 = vsel %vm5182, 1, 0
    %v5199 = vsel %vm5183, 1, 0
    %v5200 = vsel %vm5184, 1, 0
    %v5201 = vsel %vm5185, 1, 0
    %v5202 = vsel %vm5186, 1, 0
    %v5203 = vsel %vm5187, 1, 0
    %v5204 = vsel %vm5188, 1, 0
    %v5205 = vsel %vm5189, 1, 0
    %5206 = vset.pattern.permute.xlu0 0
    %5207 = vperm.xlu0 %5206, %v5190
    %v5208 = vpop.permute.xlu0 %5207
    %5209 = vset.pattern.permute.xlu0 0
    %5210 = vperm.xlu0 %5209, %v5191
    %v5211 = vpop.permute.xlu0 %5210
    %5212 = vset.pattern.permute.xlu0 0
    %5213 = vperm.xlu0 %5212, %v5192
    %v5214 = vpop.permute.xlu0 %5213
    %5215 = vset.pattern.permute.xlu0 0
    %5216 = vperm.xlu0 %5215, %v5193
    %v5217 = vpop.permute.xlu0 %5216
    %5218 = vset.pattern.permute.xlu0 0
    %5219 = vperm.xlu0 %5218, %v5194
    %v5220 = vpop.permute.xlu0 %5219
    %5221 = vset.pattern.permute.xlu0 0
    %5222 = vperm.xlu0 %5221, %v5195
    %v5223 = vpop.permute.xlu0 %5222
    %5224 = vset.pattern.permute.xlu0 0
    %5225 = vperm.xlu0 %5224, %v5196
    %v5226 = vpop.permute.xlu0 %5225
    %5227 = vset.pattern.permute.xlu0 0
    %5228 = vperm.xlu0 %5227, %v5197
    %v5229 = vpop.permute.xlu0 %5228
    %5230 = vset.pattern.permute.xlu0 0
    %5231 = vperm.xlu0 %5230, %v5198
    %v5232 = vpop.permute.xlu0 %5231
    %5233 = vset.pattern.permute.xlu0 0
    %5234 = vperm.xlu0 %5233, %v5199
    %v5235 = vpop.permute.xlu0 %5234
    %5236 = vset.pattern.permute.xlu0 0
    %5237 = vperm.xlu0 %5236, %v5200
    %v5238 = vpop.permute.xlu0 %5237
    %5239 = vset.pattern.permute.xlu0 0
    %5240 = vperm.xlu0 %5239, %v5201
    %v5241 = vpop.permute.xlu0 %5240
    %5242 = vset.pattern.permute.xlu0 0
    %5243 = vperm.xlu0 %5242, %v5202
    %v5244 = vpop.permute.xlu0 %5243
    %5245 = vset.pattern.permute.xlu0 0
    %5246 = vperm.xlu0 %5245, %v5203
    %v5247 = vpop.permute.xlu0 %5246
    %5248 = vset.pattern.permute.xlu0 0
    %5249 = vperm.xlu0 %5248, %v5204
    %v5250 = vpop.permute.xlu0 %5249
    %5251 = vset.pattern.permute.xlu0 0
    %5252 = vperm.xlu0 %5251, %v5205
    %v5253 = vpop.permute.xlu0 %5252
    %vm5254 = vcmp.eq.s32.totalorder %v5208, 1
    %vm5255 = vcmp.eq.s32.totalorder %v5211, 1
    %vm5256 = vcmp.eq.s32.totalorder %v5214, 1
    %vm5257 = vcmp.eq.s32.totalorder %v5217, 1
    %vm5258 = vcmp.eq.s32.totalorder %v5220, 1
    %vm5259 = vcmp.eq.s32.totalorder %v5223, 1
    %vm5260 = vcmp.eq.s32.totalorder %v5226, 1
    %vm5261 = vcmp.eq.s32.totalorder %v5229, 1
    %vm5262 = vcmp.eq.s32.totalorder %v5232, 1
    %vm5263 = vcmp.eq.s32.totalorder %v5235, 1
    %vm5264 = vcmp.eq.s32.totalorder %v5238, 1
    %vm5265 = vcmp.eq.s32.totalorder %v5241, 1
    %vm5266 = vcmp.eq.s32.totalorder %v5244, 1
    %vm5267 = vcmp.eq.s32.totalorder %v5247, 1
    %vm5268 = vcmp.eq.s32.totalorder %v5250, 1
    %vm5269 = vcmp.eq.s32.totalorder %v5253, 1
    %v5270 = vsel %vm5254, %v4700, 0.0
    %v5271 = vsel %vm5255, %v4701, 0.0
    %v5272 = vsel %vm5256, %v4702, 0.0
    %v5273 = vsel %vm5257, %v4703, 0.0
    %v5274 = vsel %vm5258, %v4704, 0.0
    %v5275 = vsel %vm5259, %v4705, 0.0
    %v5276 = vsel %vm5260, %v4706, 0.0
    %v5277 = vsel %vm5261, %v4707, 0.0
    %v5278 = vsel %vm5262, %v4708, 0.0
    %v5279 = vsel %vm5263, %v4709, 0.0
    %v5280 = vsel %vm5264, %v4710, 0.0
    %v5281 = vsel %vm5265, %v4711, 0.0
    %v5282 = vsel %vm5266, %v4712, 0.0
    %v5283 = vsel %vm5267, %v4713, 0.0
    %v5284 = vsel %vm5268, %v4714, 0.0
    %v5285 = vsel %vm5269, %v4699, 0.0
    %v5286 = vpack.c.bf16 %v5271, %v5270
    %v5287 = vpack.c.bf16 %v5273, %v5272
    %v5288 = vpack.c.bf16 %v5275, %v5274
    %v5289 = vpack.c.bf16 %v5277, %v5276
    %v5290 = vpack.c.bf16 %v5279, %v5278
    %v5291 = vpack.c.bf16 %v5281, %v5280
    %v5292 = vpack.c.bf16 %v5283, %v5282
    %v5293 = vpack.c.bf16 %v5285, %v5284
    %5302 = vrot.lane.b32.xlu0 %v5286, 64
    %v5303 = vpop.permute.xlu0 %5302
    %5304 = vrot.lane.b32.xlu0 %v5287, 64
    %v5305 = vpop.permute.xlu0 %5304
    %5306 = vrot.lane.b32.xlu0 %v5288, 64
    %v5307 = vpop.permute.xlu0 %5306
    %5308 = vrot.lane.b32.xlu0 %v5289, 64
    %v5309 = vpop.permute.xlu0 %5308
    %5310 = vrot.lane.b32.xlu0 %v5290, 64
    %v5311 = vpop.permute.xlu0 %5310
    %5312 = vrot.lane.b32.xlu0 %v5291, 64
    %v5313 = vpop.permute.xlu0 %5312
    %5314 = vrot.lane.b32.xlu0 %v5292, 64
    %v5315 = vpop.permute.xlu0 %5314
    %5316 = vrot.lane.b32.xlu0 %v5293, 64
    %v5317 = vpop.permute.xlu0 %5316
    %v5322 = vunpack.c.l.b16 %v4726
    %v5323 = vunpack.c.l.b16 %v4727
    %v5324 = vunpack.c.l.b16 %v4728
    %v5325 = vunpack.c.l.b16 %v4729
    %v5326 = vpack.c.b16 %v5323, %v5322
    %v5327 = vpack.c.b16 %v5325, %v5324
    %v5331 = vsel %vm1252, %v5303, 0
    %v5334 = vsel %vm1252, %v5305, 0
    %v5337 = vsel %vm1252, %v5307, 0
    %v5340 = vsel %vm1252, %v5309, 0
    %v5343 = vsel %vm1252, %v5311, 0
    %v5346 = vsel %vm1252, %v5313, 0
    %v5349 = vsel %vm1252, %v5315, 0
    %v5352 = vsel %vm1252, %v5317, 0
    %5354 = vmatprep.subr.bf16.mxu0 0
    %5355 = vmatpush1.bf16.msra.mxu0 %v5326
    %5356 = vmatprep.subr.bf16.mxu0 0
    %5357 = vmatpush1.bf16.msra.mxu0 %v5327
    %5358 = vmatprep.subr.bf16.mxu0 0
    %5359 = vmatpush1.bf16.msra.mxu0 0
    %5360 = vmatprep.subr.bf16.mxu0 0
    %5361 = vmatpush1.bf16.msra.mxu0 0
    %5362 = vmatprep.subr.bf16.mxu0 0
    %5363 = vmatpush1.bf16.msra.mxu0 0
    %5364 = vmatprep.subr.bf16.mxu0 0
    %5365 = vmatpush1.bf16.msra.mxu0 0
    %5366 = vmatprep.subr.bf16.mxu0 0
    %5367 = vmatpush1.bf16.msra.mxu0 0
    %5368 = vmatprep.subr.bf16.mxu0 0
    %5369 = vmatpush1.bf16.msra.mxu0 0
    %5370 = vmatprep.subr.bf16.mxu0 0
    %5371 = vmatpush1.bf16.msra.mxu0 0
    %5372 = vmatprep.subr.bf16.mxu0 0
    %5373 = vmatpush1.bf16.msra.mxu0 0
    %5374 = vmatprep.subr.bf16.mxu0 0
    %5375 = vmatpush1.bf16.msra.mxu0 0
    %5376 = vmatprep.subr.bf16.mxu0 0
    %5377 = vmatpush1.bf16.msra.mxu0 0
    %5378 = vmatprep.subr.bf16.mxu0 0
    %5379 = vmatpush1.bf16.msra.mxu0 0
    %5380 = vmatprep.subr.bf16.mxu0 0
    %5381 = vmatpush1.bf16.msra.mxu0 0
    %5382 = vmatprep.subr.bf16.mxu0 0
    %5383 = vmatpush1.bf16.msra.mxu0 0
    %5384 = vmatprep.subr.bf16.mxu0 0
    %5385 = vmatpush1.bf16.msra.mxu0 0
    %5386 = vmatprep.mubr.bf16.mxu0 0
    %5387 = vmatmul.mubr.bf16.gmra.mrb[0].mxu0 %v5331
    %v5388 = vpop.f32.mrb[0].mxu0
    %v5389 = vadd.f32 0.0, %v5388
    %v5390 = vpop.f32.mrb[0].mxu0
    %v5391 = vpop.f32.mrb[0].mxu0
    %v5392 = vadd.f32 0.0, %v5391
    %v5393 = vpop.f32.mrb[0].mxu0
    %5394 = vmatprep.mubr.bf16.mxu0 0
    %5395 = vmatmul.mubr.bf16.gmra.mrb[0].mxu0 %v5334
    %v5396 = vpop.f32.mrb[0].mxu0
    %v5397 = vadd.f32 0.0, %v5396
    %v5398 = vpop.f32.mrb[0].mxu0
    %v5399 = vpop.f32.mrb[0].mxu0
    %v5400 = vadd.f32 0.0, %v5399
    %v5401 = vpop.f32.mrb[0].mxu0
    %5402 = vmatprep.mubr.bf16.mxu0 0
    %5403 = vmatmul.mubr.bf16.gmra.mrb[0].mxu0 %v5337
    %v5404 = vpop.f32.mrb[0].mxu0
    %v5405 = vadd.f32 0.0, %v5404
    %v5406 = vpop.f32.mrb[0].mxu0
    %v5407 = vpop.f32.mrb[0].mxu0
    %v5408 = vadd.f32 0.0, %v5407
    %v5409 = vpop.f32.mrb[0].mxu0
    %5410 = vmatprep.mubr.bf16.mxu0 0
    %5411 = vmatmul.mubr.bf16.gmra.mrb[0].mxu0 %v5340
    %v5412 = vpop.f32.mrb[0].mxu0
    %v5413 = vadd.f32 0.0, %v5412
    %v5414 = vpop.f32.mrb[0].mxu0
    %v5415 = vpop.f32.mrb[0].mxu0
    %v5416 = vadd.f32 0.0, %v5415
    %v5417 = vpop.f32.mrb[0].mxu0
    %5418 = vmatprep.mubr.bf16.mxu0 0
    %5419 = vmatmul.mubr.bf16.gmra.mrb[0].mxu0 %v5343
    %v5420 = vpop.f32.mrb[0].mxu0
    %v5421 = vadd.f32 0.0, %v5420
    %v5422 = vpop.f32.mrb[0].mxu0
    %v5423 = vpop.f32.mrb[0].mxu0
    %v5424 = vadd.f32 0.0, %v5423
    %v5425 = vpop.f32.mrb[0].mxu0
    %5426 = vmatprep.mubr.bf16.mxu0 0
    %5427 = vmatmul.mubr.bf16.gmra.mrb[0].mxu0 %v5346
    %v5428 = vpop.f32.mrb[0].mxu0
    %v5429 = vadd.f32 0.0, %v5428
    %v5430 = vpop.f32.mrb[0].mxu0
    %v5431 = vpop.f32.mrb[0].mxu0
    %v5432 = vadd.f32 0.0, %v5431
    %v5433 = vpop.f32.mrb[0].mxu0
    %5434 = vmatprep.mubr.bf16.mxu0 0
    %5435 = vmatmul.mubr.bf16.gmra.mrb[0].mxu0 %v5349
    %v5436 = vpop.f32.mrb[0].mxu0
    %v5437 = vadd.f32 0.0, %v5436
    %v5438 = vpop.f32.mrb[0].mxu0
    %v5439 = vpop.f32.mrb[0].mxu0
    %v5440 = vadd.f32 0.0, %v5439
    %v5441 = vpop.f32.mrb[0].mxu0
    %5442 = vmatprep.mubr.bf16.mxu0 0
    %5443 = vmatmul.mubr.bf16.gmra.mrb[0].mxu0 %v5352
    %v5444 = vpop.f32.mrb[0].mxu0
    %v5445 = vadd.f32 0.0, %v5444
    %v5446 = vpop.f32.mrb[0].mxu0
    %v5447 = vpop.f32.mrb[0].mxu0
    %v5448 = vadd.f32 0.0, %v5447
    %v5449 = vpop.f32.mrb[0].mxu0
    %5450 = vdwg.mxu0
    %v5451 = vadd.f32 %v5112, %v5389
    %v5452 = vadd.f32 %v5115, %v5392
    %v5453 = vadd.f32 %v5120, %v5397
    %v5454 = vadd.f32 %v5123, %v5400
    %v5455 = vadd.f32 %v5128, %v5405
    %v5456 = vadd.f32 %v5131, %v5408
    %v5457 = vadd.f32 %v5136, %v5413
    %v5458 = vadd.f32 %v5139, %v5416
    %v5459 = vadd.f32 %v5144, %v5421
    %v5460 = vadd.f32 %v5147, %v5424
    %v5461 = vadd.f32 %v5152, %v5429
    %v5462 = vadd.f32 %v5155, %v5432
    %v5463 = vadd.f32 %v5160, %v5437
    %v5464 = vadd.f32 %v5163, %v5440
    %v5465 = vadd.f32 %v5168, %v5445
    %v5466 = vadd.f32 %v5171, %v5448
    %v5468 = vlaneseq
    %v5469 = vshrl.u32 %v5468, 7
    %v5470 = vsub.s32 0, %v5469
    %v5471 = vrot.slane %v4731, %v5470
    %v5473 = vadd.f32 %v5451, %v5471
    %v5474 = vadd.f32 %v5452, %v5471
    %v5475 = vadd.f32 %v5453, %v5471
    %v5476 = vadd.f32 %v5454, %v5471
    %v5477 = vadd.f32 %v5455, %v5471
    %v5478 = vadd.f32 %v5456, %v5471
    %v5479 = vadd.f32 %v5457, %v5471
    %v5480 = vadd.f32 %v5458, %v5471
    %v5481 = vadd.f32 %v5459, %v5471
    %v5482 = vadd.f32 %v5460, %v5471
    %v5483 = vadd.f32 %v5461, %v5471
    %v5484 = vadd.f32 %v5462, %v5471
    %v5485 = vadd.f32 %v5463, %v5471
    %v5486 = vadd.f32 %v5464, %v5471
    %v5487 = vadd.f32 %v5465, %v5471
    %v5488 = vadd.f32 %v5466, %v5471
    %v5489 = vtanh.pop %v5473
    %v5490 = vtanh.pop %v5474
    %v5491 = vtanh.pop %v5475
    %v5492 = vtanh.pop %v5476
    %v5493 = vtanh.pop %v5477
    %v5494 = vtanh.pop %v5478
    %v5495 = vtanh.pop %v5479
    %v5496 = vtanh.pop %v5480
    %v5497 = vtanh.pop %v5481
    %v5498 = vtanh.pop %v5482
    %v5499 = vtanh.pop %v5483
    %v5500 = vtanh.pop %v5484
    %v5501 = vtanh.pop %v5485
    %v5502 = vtanh.pop %v5486
    %v5503 = vtanh.pop %v5487
    %v5504 = vtanh.pop %v5488
    %v5505 = vxor.u32 %v5473, 2147483648
    %v5506 = vxor.u32 %v5474, 2147483648
    %v5507 = vxor.u32 %v5475, 2147483648
    %v5508 = vxor.u32 %v5476, 2147483648
    %v5509 = vxor.u32 %v5477, 2147483648
    %v5510 = vxor.u32 %v5478, 2147483648
    %v5511 = vxor.u32 %v5479, 2147483648
    %v5512 = vxor.u32 %v5480, 2147483648
    %v5513 = vxor.u32 %v5481, 2147483648
    %v5514 = vxor.u32 %v5482, 2147483648
    %v5515 = vxor.u32 %v5483, 2147483648
    %v5516 = vxor.u32 %v5484, 2147483648
    %v5517 = vxor.u32 %v5485, 2147483648
    %v5518 = vxor.u32 %v5486, 2147483648
    %v5519 = vxor.u32 %v5487, 2147483648
    %v5520 = vxor.u32 %v5488, 2147483648
    %v5521 = vmul.f32 %v5505, 1.442695
    %v5522 = vpow.pop %v5521
    %v5523 = vmul.f32 %v5506, 1.442695
    %v5524 = vpow.pop %v5523
    %v5525 = vmul.f32 %v5507, 1.442695
    %v5526 = vpow.pop %v5525
    %v5527 = vmul.f32 %v5508, 1.442695
    %v5528 = vpow.pop %v5527
    %v5529 = vmul.f32 %v5509, 1.442695
    %v5530 = vpow.pop %v5529
    %v5531 = vmul.f32 %v5510, 1.442695
    %v5532 = vpow.pop %v5531
    %v5533 = vmul.f32 %v5511, 1.442695
    %v5534 = vpow.pop %v5533
    %v5535 = vmul.f32 %v5512, 1.442695
    %v5536 = vpow.pop %v5535
    %v5537 = vmul.f32 %v5513, 1.442695
    %v5538 = vpow.pop %v5537
    %v5539 = vmul.f32 %v5514, 1.442695
    %v5540 = vpow.pop %v5539
    %v5541 = vmul.f32 %v5515, 1.442695
    %v5542 = vpow.pop %v5541
    %v5543 = vmul.f32 %v5516, 1.442695
    %v5544 = vpow.pop %v5543
    %v5545 = vmul.f32 %v5517, 1.442695
    %v5546 = vpow.pop %v5545
    %v5547 = vmul.f32 %v5518, 1.442695
    %v5548 = vpow.pop %v5547
    %v5549 = vmul.f32 %v5519, 1.442695
    %v5550 = vpow.pop %v5549
    %v5551 = vmul.f32 %v5520, 1.442695
    %v5552 = vpow.pop %v5551
    %v5553 = vadd.f32 %v5522, 1.0
    %v5554 = vadd.f32 %v5524, 1.0
    %v5555 = vadd.f32 %v5526, 1.0
    %v5556 = vadd.f32 %v5528, 1.0
    %v5557 = vadd.f32 %v5530, 1.0
    %v5558 = vadd.f32 %v5532, 1.0
    %v5559 = vadd.f32 %v5534, 1.0
    %v5560 = vadd.f32 %v5536, 1.0
    %v5561 = vadd.f32 %v5538, 1.0
    %v5562 = vadd.f32 %v5540, 1.0
    %v5563 = vadd.f32 %v5542, 1.0
    %v5564 = vadd.f32 %v5544, 1.0
    %v5565 = vadd.f32 %v5546, 1.0
    %v5566 = vadd.f32 %v5548, 1.0
    %v5567 = vadd.f32 %v5550, 1.0
    %v5568 = vadd.f32 %v5552, 1.0
    %v5569 = vrcp.pop %v5553
    %v5570 = vmul.f32 1.0, %v5569
    %v5571 = vrcp.pop %v5554
    %v5572 = vmul.f32 1.0, %v5571
    %v5573 = vrcp.pop %v5555
    %v5574 = vmul.f32 1.0, %v5573
    %v5575 = vrcp.pop %v5556
    %v5576 = vmul.f32 1.0, %v5575
    %v5577 = vrcp.pop %v5557
    %v5578 = vmul.f32 1.0, %v5577
    %v5579 = vrcp.pop %v5558
    %v5580 = vmul.f32 1.0, %v5579
    %v5581 = vrcp.pop %v5559
    %v5582 = vmul.f32 1.0, %v5581
    %v5583 = vrcp.pop %v5560
    %v5584 = vmul.f32 1.0, %v5583
    %v5585 = vrcp.pop %v5561
    %v5586 = vmul.f32 1.0, %v5585
    %v5587 = vrcp.pop %v5562
    %v5588 = vmul.f32 1.0, %v5587
    %v5589 = vrcp.pop %v5563
    %v5590 = vmul.f32 1.0, %v5589
    %v5591 = vrcp.pop %v5564
    %v5592 = vmul.f32 1.0, %v5591
    %v5593 = vrcp.pop %v5565
    %v5594 = vmul.f32 1.0, %v5593
    %v5595 = vrcp.pop %v5566
    %v5596 = vmul.f32 1.0, %v5595
    %v5597 = vrcp.pop %v5567
    %v5598 = vmul.f32 1.0, %v5597
    %v5599 = vrcp.pop %v5568
    %v5600 = vmul.f32 1.0, %v5599
    %5617 = vrot.lane.b32.xlu0 %v5570, 96
    %v5618 = vpop.permute.xlu0 %5617
    %5619 = vrot.lane.b32.xlu0 %v5572, 96
    %v5620 = vpop.permute.xlu0 %5619
    %5621 = vrot.lane.b32.xlu0 %v5574, 96
    %v5622 = vpop.permute.xlu0 %5621
    %5623 = vrot.lane.b32.xlu0 %v5576, 96
    %v5624 = vpop.permute.xlu0 %5623
    %5625 = vrot.lane.b32.xlu0 %v5578, 96
    %v5626 = vpop.permute.xlu0 %5625
    %5627 = vrot.lane.b32.xlu0 %v5580, 96
    %v5628 = vpop.permute.xlu0 %5627
    %5629 = vrot.lane.b32.xlu0 %v5582, 96
    %v5630 = vpop.permute.xlu0 %5629
    %5631 = vrot.lane.b32.xlu0 %v5584, 96
    %v5632 = vpop.permute.xlu0 %5631
    %5633 = vrot.lane.b32.xlu0 %v5586, 96
    %v5634 = vpop.permute.xlu0 %5633
    %5635 = vrot.lane.b32.xlu0 %v5588, 96
    %v5636 = vpop.permute.xlu0 %5635
    %5637 = vrot.lane.b32.xlu0 %v5590, 96
    %v5638 = vpop.permute.xlu0 %5637
    %5639 = vrot.lane.b32.xlu0 %v5592, 96
    %v5640 = vpop.permute.xlu0 %5639
    %5641 = vrot.lane.b32.xlu0 %v5594, 96
    %v5642 = vpop.permute.xlu0 %5641
    %5643 = vrot.lane.b32.xlu0 %v5596, 96
    %v5644 = vpop.permute.xlu0 %5643
    %5645 = vrot.lane.b32.xlu0 %v5598, 96
    %v5646 = vpop.permute.xlu0 %5645
    %5647 = vrot.lane.b32.xlu0 %v5600, 96
    %v5648 = vpop.permute.xlu0 %5647
    %v5665 = vmul.f32 %v5489, %v5618
    %v5666 = vmul.f32 %v5490, %v5620
    %v5667 = vmul.f32 %v5491, %v5622
    %v5668 = vmul.f32 %v5492, %v5624
    %v5669 = vmul.f32 %v5493, %v5626
    %v5670 = vmul.f32 %v5494, %v5628
    %v5671 = vmul.f32 %v5495, %v5630
    %v5672 = vmul.f32 %v5496, %v5632
    %v5673 = vmul.f32 %v5497, %v5634
    %v5674 = vmul.f32 %v5498, %v5636
    %v5675 = vmul.f32 %v5499, %v5638
    %v5676 = vmul.f32 %v5500, %v5640
    %v5677 = vmul.f32 %v5501, %v5642
    %v5678 = vmul.f32 %v5502, %v5644
    %v5679 = vmul.f32 %v5503, %v5646
    %v5680 = vmul.f32 %v5504, %v5648
    %v5681 = vpack.c.bf16 %v5666, %v5665
    %v5682 = vpack.c.bf16 %v5668, %v5667
    %v5683 = vpack.c.bf16 %v5670, %v5669
    %v5684 = vpack.c.bf16 %v5672, %v5671
    %v5685 = vpack.c.bf16 %v5674, %v5673
    %v5686 = vpack.c.bf16 %v5676, %v5675
    %v5687 = vpack.c.bf16 %v5678, %v5677
    %v5688 = vpack.c.bf16 %v5680, %v5679
    %s5689 = scalar_lea.vmem [#allocation6], 48
    %v5690 = vld [vmem:[%s5689] sm:$0xf]
    %v5691 = vld [vmem:[%s5689 + $0x4] sm:$0xf]
    %v5692 = vld [vmem:[%s5689 + $0x8] sm:$0xf]
    %v5693 = vld [vmem:[%s5689 + $0xc] sm:$0xf]
    %v5698 = vunpack.c.l.b16 %v5690
    %v5699 = vunpack.c.l.b16 %v5691
    %v5700 = vunpack.c.l.b16 %v5692
    %v5701 = vunpack.c.l.b16 %v5693
    %v5702 = vpack.c.b16 %v5699, %v5698
    %v5703 = vpack.c.b16 %v5701, %v5700
    %v5707 = vsel %vm1252, %v5681, 0
    %v5710 = vsel %vm1252, %v5682, 0
    %v5713 = vsel %vm1252, %v5683, 0
    %v5716 = vsel %vm1252, %v5684, 0
    %v5719 = vsel %vm1252, %v5685, 0
    %v5722 = vsel %vm1252, %v5686, 0
    %v5725 = vsel %vm1252, %v5687, 0
    %v5728 = vsel %vm1252, %v5688, 0
    %5730 = vmatprep.subr.bf16.mxu0 0
    %5731 = vmatpush1.bf16.msra.mxu0 %v5702
    %5732 = vmatprep.subr.bf16.mxu0 0
    %5733 = vmatpush1.bf16.msra.mxu0 %v5703
    %5734 = vmatprep.subr.bf16.mxu0 0
    %5735 = vmatpush1.bf16.msra.mxu0 0
    %5736 = vmatprep.subr.bf16.mxu0 0
    %5737 = vmatpush1.bf16.msra.mxu0 0
    %5738 = vmatprep.subr.bf16.mxu0 0
    %5739 = vmatpush1.bf16.msra.mxu0 0
    %5740 = vmatprep.subr.bf16.mxu0 0
    %5741 = vmatpush1.bf16.msra.mxu0 0
    %5742 = vmatprep.subr.bf16.mxu0 0
    %5743 = vmatpush1.bf16.msra.mxu0 0
    %5744 = vmatprep.subr.bf16.mxu0 0
    %5745 = vmatpush1.bf16.msra.mxu0 0
    %5746 = vmatprep.subr.bf16.mxu0 0
    %5747 = vmatpush1.bf16.msra.mxu0 0
    %5748 = vmatprep.subr.bf16.mxu0 0
    %5749 = vmatpush1.bf16.msra.mxu0 0
    %5750 = vmatprep.subr.bf16.mxu0 0
    %5751 = vmatpush1.bf16.msra.mxu0 0
    %5752 = vmatprep.subr.bf16.mxu0 0
    %5753 = vmatpush1.bf16.msra.mxu0 0
    %5754 = vmatprep.subr.bf16.mxu0 0
    %5755 = vmatpush1.bf16.msra.mxu0 0
    %5756 = vmatprep.subr.bf16.mxu0 0
    %5757 = vmatpush1.bf16.msra.mxu0 0
    %5758 = vmatprep.subr.bf16.mxu0 0
    %5759 = vmatpush1.bf16.msra.mxu0 0
    %5760 = vmatprep.subr.bf16.mxu0 0
    %5761 = vmatpush1.bf16.msra.mxu0 0
    %5762 = vmatprep.mubr.bf16.mxu0 0
    %5763 = vmatmul.mubr.bf16.gmra.mrb[0].mxu0 %v5707
    %v5764 = vpop.f32.mrb[0].mxu0
    %v5765 = vadd.f32 0.0, %v5764
    %v5766 = vpop.f32.mrb[0].mxu0
    %v5767 = vpop.f32.mrb[0].mxu0
    %v5768 = vadd.f32 0.0, %v5767
    %v5769 = vpop.f32.mrb[0].mxu0
    %5770 = vmatprep.mubr.bf16.mxu0 0
    %5771 = vmatmul.mubr.bf16.gmra.mrb[0].mxu0 %v5710
    %v5772 = vpop.f32.mrb[0].mxu0
    %v5773 = vadd.f32 0.0, %v5772
    %v5774 = vpop.f32.mrb[0].mxu0
    %v5775 = vpop.f32.mrb[0].mxu0
    %v5776 = vadd.f32 0.0, %v5775
    %v5777 = vpop.f32.mrb[0].mxu0
    %5778 = vmatprep.mubr.bf16.mxu0 0
    %5779 = vmatmul.mubr.bf16.gmra.mrb[0].mxu0 %v5713
    %v5780 = vpop.f32.mrb[0].mxu0
    %v5781 = vadd.f32 0.0, %v5780
    %v5782 = vpop.f32.mrb[0].mxu0
    %v5783 = vpop.f32.mrb[0].mxu0
    %v5784 = vadd.f32 0.0, %v5783
    %v5785 = vpop.f32.mrb[0].mxu0
    %5786 = vmatprep.mubr.bf16.mxu0 0
    %5787 = vmatmul.mubr.bf16.gmra.mrb[0].mxu0 %v5716
    %v5788 = vpop.f32.mrb[0].mxu0
    %v5789 = vadd.f32 0.0, %v5788
    %v5790 = vpop.f32.mrb[0].mxu0
    %v5791 = vpop.f32.mrb[0].mxu0
    %v5792 = vadd.f32 0.0, %v5791
    %v5793 = vpop.f32.mrb[0].mxu0
    %5794 = vmatprep.mubr.bf16.mxu0 0
    %5795 = vmatmul.mubr.bf16.gmra.mrb[0].mxu0 %v5719
    %v5796 = vpop.f32.mrb[0].mxu0
    %v5797 = vadd.f32 0.0, %v5796
    %v5798 = vpop.f32.mrb[0].mxu0
    %v5799 = vpop.f32.mrb[0].mxu0
    %v5800 = vadd.f32 0.0, %v5799
    %v5801 = vpop.f32.mrb[0].mxu0
    %5802 = vmatprep.mubr.bf16.mxu0 0
    %5803 = vmatmul.mubr.bf16.gmra.mrb[0].mxu0 %v5722
    %v5804 = vpop.f32.mrb[0].mxu0
    %v5805 = vadd.f32 0.0, %v5804
    %v5806 = vpop.f32.mrb[0].mxu0
    %v5807 = vpop.f32.mrb[0].mxu0
    %v5808 = vadd.f32 0.0, %v5807
    %v5809 = vpop.f32.mrb[0].mxu0
    %5810 = vmatprep.mubr.bf16.mxu0 0
    %5811 = vmatmul.mubr.bf16.gmra.mrb[0].mxu0 %v5725
    %v5812 = vpop.f32.mrb[0].mxu0
    %v5813 = vadd.f32 0.0, %v5812
    %v5814 = vpop.f32.mrb[0].mxu0
    %v5815 = vpop.f32.mrb[0].mxu0
    %v5816 = vadd.f32 0.0, %v5815
    %v5817 = vpop.f32.mrb[0].mxu0
    %5818 = vmatprep.mubr.bf16.mxu0 0
    %5819 = vmatmul.mubr.bf16.gmra.mrb[0].mxu0 %v5728
    %v5820 = vpop.f32.mrb[0].mxu0
    %v5821 = vadd.f32 0.0, %v5820
    %v5822 = vpop.f32.mrb[0].mxu0
    %v5823 = vpop.f32.mrb[0].mxu0
    %v5824 = vadd.f32 0.0, %v5823
    %v5825 = vpop.f32.mrb[0].mxu0
    %5826 = vdwg.mxu0
    %v5827 = vadd.f32 %v4657, %v5765
    %v5828 = vadd.f32 %v4658, %v5768
    %v5829 = vadd.f32 %v4659, %v5773
    %v5830 = vadd.f32 %v4660, %v5776
    %v5831 = vadd.f32 %v4661, %v5781
    %v5832 = vadd.f32 %v4662, %v5784
    %v5833 = vadd.f32 %v4663, %v5789
    %v5834 = vadd.f32 %v4664, %v5792
    %v5835 = vadd.f32 %v4665, %v5797
    %v5836 = vadd.f32 %v4666, %v5800
    %v5837 = vadd.f32 %v4667, %v5805
    %v5838 = vadd.f32 %v4668, %v5808
    %v5839 = vadd.f32 %v4669, %v5813
    %v5840 = vadd.f32 %v4670, %v5816
    %v5841 = vadd.f32 %v4671, %v5821
    %v5842 = vadd.f32 %v4672, %v5824
    %s5843 = scalar_lea.vmem [#allocation7], 3
    %v5844 = vld [vmem:[%s5843] sm:$0x1]
    %v5846 = vlaneseq
    %v5847 = vshrl.u32 %v5846, 7
    %v5848 = vsub.s32 0, %v5847
    %v5849 = vrot.slane %v5844, %v5848
    %5850 = vrot.lane.b32.xlu0 %v5849, 64
    %v5851 = vpop.permute.xlu0 %5850
    %v5853 = vadd.f32 %v5765, %v5851
    %v5854 = vadd.f32 %v5768, %v5851
    %v5855 = vadd.f32 %v5773, %v5851
    %v5856 = vadd.f32 %v5776, %v5851
    %v5857 = vadd.f32 %v5781, %v5851
    %v5858 = vadd.f32 %v5784, %v5851
    %v5859 = vadd.f32 %v5789, %v5851
    %v5860 = vadd.f32 %v5792, %v5851
    %v5861 = vadd.f32 %v5797, %v5851
    %v5862 = vadd.f32 %v5800, %v5851
    %v5863 = vadd.f32 %v5805, %v5851
    %v5864 = vadd.f32 %v5808, %v5851
    %v5865 = vadd.f32 %v5813, %v5851
    %v5866 = vadd.f32 %v5816, %v5851
    %v5867 = vadd.f32 %v5821, %v5851
    %v5868 = vadd.f32 %v5824, %v5851
    %v5869 = vadd.f32 %v5853, %v4699
    %v5870 = vadd.f32 %v5854, %v4700
    %v5871 = vadd.f32 %v5855, %v4701
    %v5872 = vadd.f32 %v5856, %v4702
    %v5873 = vadd.f32 %v5857, %v4703
    %v5874 = vadd.f32 %v5858, %v4704
    %v5875 = vadd.f32 %v5859, %v4705
    %v5876 = vadd.f32 %v5860, %v4706
    %v5877 = vadd.f32 %v5861, %v4707
    %v5878 = vadd.f32 %v5862, %v4708
    %v5879 = vadd.f32 %v5863, %v4709
    %v5880 = vadd.f32 %v5864, %v4710
    %v5881 = vadd.f32 %v5865, %v4711
    %v5882 = vadd.f32 %v5866, %v4712
    %v5883 = vadd.f32 %v5867, %v4713
    %v5884 = vadd.f32 %v5868, %v4714
    %s5885 = scalar_lea.vmem %s4, 192
    %v5886 = vld [vmem:[%s5885] sm:$0xf]
    %v5887 = vld [vmem:[%s5885 + $0x4] sm:$0xf]
    %v5888 = vld [vmem:[%s5885 + $0x8] sm:$0xf]
    %v5889 = vld [vmem:[%s5885 + $0xc] sm:$0xf]
    %s5890 = scalar_lea.vmem %s4, 208
    %v5891 = vld [vmem:[%s5890] sm:$0xf]
    %v5892 = vld [vmem:[%s5890 + $0x4] sm:$0xf]
    %v5893 = vld [vmem:[%s5890 + $0x8] sm:$0xf]
    %v5894 = vld [vmem:[%s5890 + $0xc] sm:$0xf]
    %s5895 = scalar_lea.vmem %s4, 224
    %v5896 = vld [vmem:[%s5895] sm:$0xf]
    %v5897 = vld [vmem:[%s5895 + $0x4] sm:$0xf]
    %v5898 = vld [vmem:[%s5895 + $0x8] sm:$0xf]
    %v5899 = vld [vmem:[%s5895 + $0xc] sm:$0xf]
    %s5900 = scalar_lea.vmem [#allocation4], 4
    %v5901 = vld [vmem:[%s5900] sm:$0x1]
    %v5903 = vrot.slane %v5884, 7
    %v5920 = vrot.slane %v5869, 7
    %v5921 = vrot.slane %v5870, 7
    %v5922 = vsel %vm186, %v5920, %v5921
    %v5923 = vrot.slane %v5871, 7
    %v5924 = vsel %vm186, %v5921, %v5923
    %v5925 = vrot.slane %v5872, 7
    %v5926 = vsel %vm186, %v5923, %v5925
    %v5927 = vrot.slane %v5873, 7
    %v5928 = vsel %vm186, %v5925, %v5927
    %v5929 = vrot.slane %v5874, 7
    %v5930 = vsel %vm186, %v5927, %v5929
    %v5931 = vrot.slane %v5875, 7
    %v5932 = vsel %vm186, %v5929, %v5931
    %v5933 = vrot.slane %v5876, 7
    %v5934 = vsel %vm186, %v5931, %v5933
    %v5935 = vrot.slane %v5877, 7
    %v5936 = vsel %vm186, %v5933, %v5935
    %v5937 = vrot.slane %v5878, 7
    %v5938 = vsel %vm186, %v5935, %v5937
    %v5939 = vrot.slane %v5879, 7
    %v5940 = vsel %vm186, %v5937, %v5939
    %v5941 = vrot.slane %v5880, 7
    %v5942 = vsel %vm186, %v5939, %v5941
    %v5943 = vrot.slane %v5881, 7
    %v5944 = vsel %vm186, %v5941, %v5943
    %v5945 = vrot.slane %v5882, 7
    %v5946 = vsel %vm186, %v5943, %v5945
    %v5947 = vrot.slane %v5883, 7
    %v5948 = vsel %vm186, %v5945, %v5947
    %v5949 = vsel %vm186, %v5947, %v5903
    %v5966 = vsel %vm186, %v5903, %v5920
    %v5967 = vsel %vm298, %v5966, 0.0
    %v5968 = vsel %vm299, %v5922, 0.0
    %v5969 = vsel %vm300, %v5924, 0.0
    %v5970 = vsel %vm301, %v5926, 0.0
    %v5971 = vsel %vm302, %v5928, 0.0
    %v5972 = vsel %vm303, %v5930, 0.0
    %v5973 = vsel %vm304, %v5932, 0.0
    %v5974 = vsel %vm305, %v5934, 0.0
    %v5975 = vsel %vm306, %v5936, 0.0
    %v5976 = vsel %vm307, %v5938, 0.0
    %v5977 = vsel %vm308, %v5940, 0.0
    %v5978 = vsel %vm309, %v5942, 0.0
    %v5979 = vsel %vm310, %v5944, 0.0
    %v5980 = vsel %vm311, %v5946, 0.0
    %v5981 = vsel %vm312, %v5948, 0.0
    %v5982 = vsel %vm313, %v5949, 0.0
    %v5983 = vpack.c.bf16 %v5968, %v5967
    %v5984 = vpack.c.bf16 %v5970, %v5969
    %v5985 = vpack.c.bf16 %v5972, %v5971
    %v5986 = vpack.c.bf16 %v5974, %v5973
    %v5987 = vpack.c.bf16 %v5976, %v5975
    %v5988 = vpack.c.bf16 %v5978, %v5977
    %v5989 = vpack.c.bf16 %v5980, %v5979
    %v5990 = vpack.c.bf16 %v5982, %v5981
    %v5991 = vpack.c.bf16 %v5870, %v5869
    %v5992 = vpack.c.bf16 %v5872, %v5871
    %v5993 = vpack.c.bf16 %v5874, %v5873
    %v5994 = vpack.c.bf16 %v5876, %v5875
    %v5995 = vpack.c.bf16 %v5878, %v5877
    %v5996 = vpack.c.bf16 %v5880, %v5879
    %v5997 = vpack.c.bf16 %v5882, %v5881
    %v5998 = vpack.c.bf16 %v5884, %v5883
    %6007 = vrot.lane.b32.xlu0 %v5991, 64
    %v6008 = vpop.permute.xlu0 %6007
    %6009 = vrot.lane.b32.xlu0 %v5992, 64
    %v6010 = vpop.permute.xlu0 %6009
    %6011 = vrot.lane.b32.xlu0 %v5993, 64
    %v6012 = vpop.permute.xlu0 %6011
    %6013 = vrot.lane.b32.xlu0 %v5994, 64
    %v6014 = vpop.permute.xlu0 %6013
    %6015 = vrot.lane.b32.xlu0 %v5995, 64
    %v6016 = vpop.permute.xlu0 %6015
    %6017 = vrot.lane.b32.xlu0 %v5996, 64
    %v6018 = vpop.permute.xlu0 %6017
    %6019 = vrot.lane.b32.xlu0 %v5997, 64
    %v6020 = vpop.permute.xlu0 %6019
    %6021 = vrot.lane.b32.xlu0 %v5998, 64
    %v6022 = vpop.permute.xlu0 %6021
    %v6027 = vunpack.c.l.b16 %v5891
    %v6028 = vunpack.c.l.b16 %v5892
    %v6029 = vunpack.c.l.b16 %v5893
    %v6030 = vunpack.c.l.b16 %v5894
    %v6031 = vpack.c.b16 %v6028, %v6027
    %v6032 = vpack.c.b16 %v6030, %v6029
    %v6036 = vsel %vm1252, %v6008, 0
    %v6039 = vsel %vm1252, %v6010, 0
    %v6042 = vsel %vm1252, %v6012, 0
    %v6045 = vsel %vm1252, %v6014, 0
    %v6048 = vsel %vm1252, %v6016, 0
    %v6051 = vsel %vm1252, %v6018, 0
    %v6054 = vsel %vm1252, %v6020, 0
    %v6057 = vsel %vm1252, %v6022, 0
    %6059 = vmatprep.subr.bf16.mxu0 0
    %6060 = vmatpush1.bf16.msra.mxu0 %v6031
    %6061 = vmatprep.subr.bf16.mxu0 0
    %6062 = vmatpush1.bf16.msra.mxu0 %v6032
    %6063 = vmatprep.subr.bf16.mxu0 0
    %6064 = vmatpush1.bf16.msra.mxu0 0
    %6065 = vmatprep.subr.bf16.mxu0 0
    %6066 = vmatpush1.bf16.msra.mxu0 0
    %6067 = vmatprep.subr.bf16.mxu0 0
    %6068 = vmatpush1.bf16.msra.mxu0 0
    %6069 = vmatprep.subr.bf16.mxu0 0
    %6070 = vmatpush1.bf16.msra.mxu0 0
    %6071 = vmatprep.subr.bf16.mxu0 0
    %6072 = vmatpush1.bf16.msra.mxu0 0
    %6073 = vmatprep.subr.bf16.mxu0 0
    %6074 = vmatpush1.bf16.msra.mxu0 0
    %6075 = vmatprep.subr.bf16.mxu0 0
    %6076 = vmatpush1.bf16.msra.mxu0 0
    %6077 = vmatprep.subr.bf16.mxu0 0
    %6078 = vmatpush1.bf16.msra.mxu0 0
    %6079 = vmatprep.subr.bf16.mxu0 0
    %6080 = vmatpush1.bf16.msra.mxu0 0
    %6081 = vmatprep.subr.bf16.mxu0 0
    %6082 = vmatpush1.bf16.msra.mxu0 0
    %6083 = vmatprep.subr.bf16.mxu0 0
    %6084 = vmatpush1.bf16.msra.mxu0 0
    %6085 = vmatprep.subr.bf16.mxu0 0
    %6086 = vmatpush1.bf16.msra.mxu0 0
    %6087 = vmatprep.subr.bf16.mxu0 0
    %6088 = vmatpush1.bf16.msra.mxu0 0
    %6089 = vmatprep.subr.bf16.mxu0 0
    %6090 = vmatpush1.bf16.msra.mxu0 0
    %6091 = vmatprep.mubr.bf16.mxu0 0
    %6092 = vmatmul.mubr.bf16.gmra.mrb[0].mxu0 %v6036
    %v6093 = vpop.f32.mrb[0].mxu0
    %v6094 = vadd.f32 0.0, %v6093
    %v6095 = vpop.f32.mrb[0].mxu0
    %v6096 = vpop.f32.mrb[0].mxu0
    %v6097 = vadd.f32 0.0, %v6096
    %v6098 = vpop.f32.mrb[0].mxu0
    %6099 = vmatprep.mubr.bf16.mxu0 0
    %6100 = vmatmul.mubr.bf16.gmra.mrb[0].mxu0 %v6039
    %v6101 = vpop.f32.mrb[0].mxu0
    %v6102 = vadd.f32 0.0, %v6101
    %v6103 = vpop.f32.mrb[0].mxu0
    %v6104 = vpop.f32.mrb[0].mxu0
    %v6105 = vadd.f32 0.0, %v6104
    %v6106 = vpop.f32.mrb[0].mxu0
    %6107 = vmatprep.mubr.bf16.mxu0 0
    %6108 = vmatmul.mubr.bf16.gmra.mrb[0].mxu0 %v6042
    %v6109 = vpop.f32.mrb[0].mxu0
    %v6110 = vadd.f32 0.0, %v6109
    %v6111 = vpop.f32.mrb[0].mxu0
    %v6112 = vpop.f32.mrb[0].mxu0
    %v6113 = vadd.f32 0.0, %v6112
    %v6114 = vpop.f32.mrb[0].mxu0
    %6115 = vmatprep.mubr.bf16.mxu0 0
    %6116 = vmatmul.mubr.bf16.gmra.mrb[0].mxu0 %v6045
    %v6117 = vpop.f32.mrb[0].mxu0
    %v6118 = vadd.f32 0.0, %v6117
    %v6119 = vpop.f32.mrb[0].mxu0
    %v6120 = vpop.f32.mrb[0].mxu0
    %v6121 = vadd.f32 0.0, %v6120
    %v6122 = vpop.f32.mrb[0].mxu0
    %6123 = vmatprep.mubr.bf16.mxu0 0
    %6124 = vmatmul.mubr.bf16.gmra.mrb[0].mxu0 %v6048
    %v6125 = vpop.f32.mrb[0].mxu0
    %v6126 = vadd.f32 0.0, %v6125
    %v6127 = vpop.f32.mrb[0].mxu0
    %v6128 = vpop.f32.mrb[0].mxu0
    %v6129 = vadd.f32 0.0, %v6128
    %v6130 = vpop.f32.mrb[0].mxu0
    %6131 = vmatprep.mubr.bf16.mxu0 0
    %6132 = vmatmul.mubr.bf16.gmra.mrb[0].mxu0 %v6051
    %v6133 = vpop.f32.mrb[0].mxu0
    %v6134 = vadd.f32 0.0, %v6133
    %v6135 = vpop.f32.mrb[0].mxu0
    %v6136 = vpop.f32.mrb[0].mxu0
    %v6137 = vadd.f32 0.0, %v6136
    %v6138 = vpop.f32.mrb[0].mxu0
    %6139 = vmatprep.mubr.bf16.mxu0 0
    %6140 = vmatmul.mubr.bf16.gmra.mrb[0].mxu0 %v6054
    %v6141 = vpop.f32.mrb[0].mxu0
    %v6142 = vadd.f32 0.0, %v6141
    %v6143 = vpop.f32.mrb[0].mxu0
    %v6144 = vpop.f32.mrb[0].mxu0
    %v6145 = vadd.f32 0.0, %v6144
    %v6146 = vpop.f32.mrb[0].mxu0
    %6147 = vmatprep.mubr.bf16.mxu0 0
    %6148 = vmatmul.mubr.bf16.gmra.mrb[0].mxu0 %v6057
    %v6149 = vpop.f32.mrb[0].mxu0
    %v6150 = vadd.f32 0.0, %v6149
    %v6151 = vpop.f32.mrb[0].mxu0
    %v6152 = vpop.f32.mrb[0].mxu0
    %v6153 = vadd.f32 0.0, %v6152
    %v6154 = vpop.f32.mrb[0].mxu0
    %6155 = vdwg.mxu0
    %6164 = vrot.lane.b32.xlu0 %v5983, 64
    %v6165 = vpop.permute.xlu0 %6164
    %6166 = vrot.lane.b32.xlu0 %v5984, 64
    %v6167 = vpop.permute.xlu0 %6166
    %6168 = vrot.lane.b32.xlu0 %v5985, 64
    %v6169 = vpop.permute.xlu0 %6168
    %6170 = vrot.lane.b32.xlu0 %v5986, 64
    %v6171 = vpop.permute.xlu0 %6170
    %6172 = vrot.lane.b32.xlu0 %v5987, 64
    %v6173 = vpop.permute.xlu0 %6172
    %6174 = vrot.lane.b32.xlu0 %v5988, 64
    %v6175 = vpop.permute.xlu0 %6174
    %6176 = vrot.lane.b32.xlu0 %v5989, 64
    %v6177 = vpop.permute.xlu0 %6176
    %6178 = vrot.lane.b32.xlu0 %v5990, 64
    %v6179 = vpop.permute.xlu0 %6178
    %v6184 = vunpack.c.l.b16 %v5886
    %v6185 = vunpack.c.l.b16 %v5887
    %v6186 = vunpack.c.l.b16 %v5888
    %v6187 = vunpack.c.l.b16 %v5889
    %v6188 = vpack.c.b16 %v6185, %v6184
    %v6189 = vpack.c.b16 %v6187, %v6186
    %v6193 = vsel %vm1252, %v6165, 0
    %v6196 = vsel %vm1252, %v6167, 0
    %v6199 = vsel %vm1252, %v6169, 0
    %v6202 = vsel %vm1252, %v6171, 0
    %v6205 = vsel %vm1252, %v6173, 0
    %v6208 = vsel %vm1252, %v6175, 0
    %v6211 = vsel %vm1252, %v6177, 0
    %v6214 = vsel %vm1252, %v6179, 0
    %6216 = vmatprep.subr.bf16.mxu0 0
    %6217 = vmatpush1.bf16.msra.mxu0 %v6188
    %6218 = vmatprep.subr.bf16.mxu0 0
    %6219 = vmatpush1.bf16.msra.mxu0 %v6189
    %6220 = vmatprep.subr.bf16.mxu0 0
    %6221 = vmatpush1.bf16.msra.mxu0 0
    %6222 = vmatprep.subr.bf16.mxu0 0
    %6223 = vmatpush1.bf16.msra.mxu0 0
    %6224 = vmatprep.subr.bf16.mxu0 0
    %6225 = vmatpush1.bf16.msra.mxu0 0
    %6226 = vmatprep.subr.bf16.mxu0 0
    %6227 = vmatpush1.bf16.msra.mxu0 0
    %6228 = vmatprep.subr.bf16.mxu0 0
    %6229 = vmatpush1.bf16.msra.mxu0 0
    %6230 = vmatprep.subr.bf16.mxu0 0
    %6231 = vmatpush1.bf16.msra.mxu0 0
    %6232 = vmatprep.subr.bf16.mxu0 0
    %6233 = vmatpush1.bf16.msra.mxu0 0
    %6234 = vmatprep.subr.bf16.mxu0 0
    %6235 = vmatpush1.bf16.msra.mxu0 0
    %6236 = vmatprep.subr.bf16.mxu0 0
    %6237 = vmatpush1.bf16.msra.mxu0 0
    %6238 = vmatprep.subr.bf16.mxu0 0
    %6239 = vmatpush1.bf16.msra.mxu0 0
    %6240 = vmatprep.subr.bf16.mxu0 0
    %6241 = vmatpush1.bf16.msra.mxu0 0
    %6242 = vmatprep.subr.bf16.mxu0 0
    %6243 = vmatpush1.bf16.msra.mxu0 0
    %6244 = vmatprep.subr.bf16.mxu0 0
    %6245 = vmatpush1.bf16.msra.mxu0 0
    %6246 = vmatprep.subr.bf16.mxu0 0
    %6247 = vmatpush1.bf16.msra.mxu0 0
    %6248 = vmatprep.mubr.bf16.mxu0 0
    %6249 = vmatmul.mubr.bf16.gmra.mrb[0].mxu0 %v6193
    %v6250 = vpop.f32.mrb[0].mxu0
    %v6251 = vadd.f32 %v6094, %v6250
    %v6252 = vpop.f32.mrb[0].mxu0
    %v6253 = vpop.f32.mrb[0].mxu0
    %v6254 = vadd.f32 %v6097, %v6253
    %v6255 = vpop.f32.mrb[0].mxu0
    %6256 = vmatprep.mubr.bf16.mxu0 0
    %6257 = vmatmul.mubr.bf16.gmra.mrb[0].mxu0 %v6196
    %v6258 = vpop.f32.mrb[0].mxu0
    %v6259 = vadd.f32 %v6102, %v6258
    %v6260 = vpop.f32.mrb[0].mxu0
    %v6261 = vpop.f32.mrb[0].mxu0
    %v6262 = vadd.f32 %v6105, %v6261
    %v6263 = vpop.f32.mrb[0].mxu0
    %6264 = vmatprep.mubr.bf16.mxu0 0
    %6265 = vmatmul.mubr.bf16.gmra.mrb[0].mxu0 %v6199
    %v6266 = vpop.f32.mrb[0].mxu0
    %v6267 = vadd.f32 %v6110, %v6266
    %v6268 = vpop.f32.mrb[0].mxu0
    %v6269 = vpop.f32.mrb[0].mxu0
    %v6270 = vadd.f32 %v6113, %v6269
    %v6271 = vpop.f32.mrb[0].mxu0
    %6272 = vmatprep.mubr.bf16.mxu0 0
    %6273 = vmatmul.mubr.bf16.gmra.mrb[0].mxu0 %v6202
    %v6274 = vpop.f32.mrb[0].mxu0
    %v6275 = vadd.f32 %v6118, %v6274
    %v6276 = vpop.f32.mrb[0].mxu0
    %v6277 = vpop.f32.mrb[0].mxu0
    %v6278 = vadd.f32 %v6121, %v6277
    %v6279 = vpop.f32.mrb[0].mxu0
    %6280 = vmatprep.mubr.bf16.mxu0 0
    %6281 = vmatmul.mubr.bf16.gmra.mrb[0].mxu0 %v6205
    %v6282 = vpop.f32.mrb[0].mxu0
    %v6283 = vadd.f32 %v6126, %v6282
    %v6284 = vpop.f32.mrb[0].mxu0
    %v6285 = vpop.f32.mrb[0].mxu0
    %v6286 = vadd.f32 %v6129, %v6285
    %v6287 = vpop.f32.mrb[0].mxu0
    %6288 = vmatprep.mubr.bf16.mxu0 0
    %6289 = vmatmul.mubr.bf16.gmra.mrb[0].mxu0 %v6208
    %v6290 = vpop.f32.mrb[0].mxu0
    %v6291 = vadd.f32 %v6134, %v6290
    %v6292 = vpop.f32.mrb[0].mxu0
    %v6293 = vpop.f32.mrb[0].mxu0
    %v6294 = vadd.f32 %v6137, %v6293
    %v6295 = vpop.f32.mrb[0].mxu0
    %6296 = vmatprep.mubr.bf16.mxu0 0
    %6297 = vmatmul.mubr.bf16.gmra.mrb[0].mxu0 %v6211
    %v6298 = vpop.f32.mrb[0].mxu0
    %v6299 = vadd.f32 %v6142, %v6298
    %v6300 = vpop.f32.mrb[0].mxu0
    %v6301 = vpop.f32.mrb[0].mxu0
    %v6302 = vadd.f32 %v6145, %v6301
    %v6303 = vpop.f32.mrb[0].mxu0
    %6304 = vmatprep.mubr.bf16.mxu0 0
    %6305 = vmatmul.mubr.bf16.gmra.mrb[0].mxu0 %v6214
    %v6306 = vpop.f32.mrb[0].mxu0
    %v6307 = vadd.f32 %v6150, %v6306
    %v6308 = vpop.f32.mrb[0].mxu0
    %v6309 = vpop.f32.mrb[0].mxu0
    %v6310 = vadd.f32 %v6153, %v6309
    %v6311 = vpop.f32.mrb[0].mxu0
    %6312 = vdwg.mxu0
    %v6313 = vrot.slane %v5869, 1
    %v6314 = vrot.slane %v5870, 1
    %v6315 = vsel %vm617, %v6313, %v6314
    %v6316 = vrot.slane %v5871, 1
    %v6317 = vsel %vm617, %v6314, %v6316
    %v6318 = vrot.slane %v5872, 1
    %v6319 = vsel %vm617, %v6316, %v6318
    %v6320 = vrot.slane %v5873, 1
    %v6321 = vsel %vm617, %v6318, %v6320
    %v6322 = vrot.slane %v5874, 1
    %v6323 = vsel %vm617, %v6320, %v6322
    %v6324 = vrot.slane %v5875, 1
    %v6325 = vsel %vm617, %v6322, %v6324
    %v6326 = vrot.slane %v5876, 1
    %v6327 = vsel %vm617, %v6324, %v6326
    %v6328 = vrot.slane %v5877, 1
    %v6329 = vsel %vm617, %v6326, %v6328
    %v6330 = vrot.slane %v5878, 1
    %v6331 = vsel %vm617, %v6328, %v6330
    %v6332 = vrot.slane %v5879, 1
    %v6333 = vsel %vm617, %v6330, %v6332
    %v6334 = vrot.slane %v5880, 1
    %v6335 = vsel %vm617, %v6332, %v6334
    %v6336 = vrot.slane %v5881, 1
    %v6337 = vsel %vm617, %v6334, %v6336
    %v6338 = vrot.slane %v5882, 1
    %v6339 = vsel %vm617, %v6336, %v6338
    %v6340 = vrot.slane %v5883, 1
    %v6341 = vsel %vm617, %v6338, %v6340
    %v6342 = vrot.slane %v5884, 1
    %v6343 = vsel %vm617, %v6340, %v6342
    %v6361 = vsel %vm617, %v6342, %v6313
    %v6362 = vsel %vm731, %v6315, 0.0
    %v6363 = vsel %vm732, %v6317, 0.0
    %v6364 = vsel %vm733, %v6319, 0.0
    %v6365 = vsel %vm734, %v6321, 0.0
    %v6366 = vsel %vm735, %v6323, 0.0
    %v6367 = vsel %vm736, %v6325, 0.0
    %v6368 = vsel %vm737, %v6327, 0.0
    %v6369 = vsel %vm738, %v6329, 0.0
    %v6370 = vsel %vm739, %v6331, 0.0
    %v6371 = vsel %vm740, %v6333, 0.0
    %v6372 = vsel %vm741, %v6335, 0.0
    %v6373 = vsel %vm742, %v6337, 0.0
    %v6374 = vsel %vm743, %v6339, 0.0
    %v6375 = vsel %vm744, %v6341, 0.0
    %v6376 = vsel %vm745, %v6343, 0.0
    %v6377 = vsel %vm746, %v6361, 0.0
    %v6378 = vpack.c.bf16 %v6363, %v6362
    %v6379 = vpack.c.bf16 %v6365, %v6364
    %v6380 = vpack.c.bf16 %v6367, %v6366
    %v6381 = vpack.c.bf16 %v6369, %v6368
    %v6382 = vpack.c.bf16 %v6371, %v6370
    %v6383 = vpack.c.bf16 %v6373, %v6372
    %v6384 = vpack.c.bf16 %v6375, %v6374
    %v6385 = vpack.c.bf16 %v6377, %v6376
    %6394 = vrot.lane.b32.xlu0 %v6378, 64
    %v6395 = vpop.permute.xlu0 %6394
    %6396 = vrot.lane.b32.xlu0 %v6379, 64
    %v6397 = vpop.permute.xlu0 %6396
    %6398 = vrot.lane.b32.xlu0 %v6380, 64
    %v6399 = vpop.permute.xlu0 %6398
    %6400 = vrot.lane.b32.xlu0 %v6381, 64
    %v6401 = vpop.permute.xlu0 %6400
    %6402 = vrot.lane.b32.xlu0 %v6382, 64
    %v6403 = vpop.permute.xlu0 %6402
    %6404 = vrot.lane.b32.xlu0 %v6383, 64
    %v6405 = vpop.permute.xlu0 %6404
    %6406 = vrot.lane.b32.xlu0 %v6384, 64
    %v6407 = vpop.permute.xlu0 %6406
    %6408 = vrot.lane.b32.xlu0 %v6385, 64
    %v6409 = vpop.permute.xlu0 %6408
    %v6414 = vunpack.c.l.b16 %v5896
    %v6415 = vunpack.c.l.b16 %v5897
    %v6416 = vunpack.c.l.b16 %v5898
    %v6417 = vunpack.c.l.b16 %v5899
    %v6418 = vpack.c.b16 %v6415, %v6414
    %v6419 = vpack.c.b16 %v6417, %v6416
    %v6423 = vsel %vm1252, %v6395, 0
    %v6426 = vsel %vm1252, %v6397, 0
    %v6429 = vsel %vm1252, %v6399, 0
    %v6432 = vsel %vm1252, %v6401, 0
    %v6435 = vsel %vm1252, %v6403, 0
    %v6438 = vsel %vm1252, %v6405, 0
    %v6441 = vsel %vm1252, %v6407, 0
    %v6444 = vsel %vm1252, %v6409, 0
    %6446 = vmatprep.subr.bf16.mxu0 0
    %6447 = vmatpush1.bf16.msra.mxu0 %v6418
    %6448 = vmatprep.subr.bf16.mxu0 0
    %6449 = vmatpush1.bf16.msra.mxu0 %v6419
    %6450 = vmatprep.subr.bf16.mxu0 0
    %6451 = vmatpush1.bf16.msra.mxu0 0
    %6452 = vmatprep.subr.bf16.mxu0 0
    %6453 = vmatpush1.bf16.msra.mxu0 0
    %6454 = vmatprep.subr.bf16.mxu0 0
    %6455 = vmatpush1.bf16.msra.mxu0 0
    %6456 = vmatprep.subr.bf16.mxu0 0
    %6457 = vmatpush1.bf16.msra.mxu0 0
    %6458 = vmatprep.subr.bf16.mxu0 0
    %6459 = vmatpush1.bf16.msra.mxu0 0
    %6460 = vmatprep.subr.bf16.mxu0 0
    %6461 = vmatpush1.bf16.msra.mxu0 0
    %6462 = vmatprep.subr.bf16.mxu0 0
    %6463 = vmatpush1.bf16.msra.mxu0 0
    %6464 = vmatprep.subr.bf16.mxu0 0
    %6465 = vmatpush1.bf16.msra.mxu0 0
    %6466 = vmatprep.subr.bf16.mxu0 0
    %6467 = vmatpush1.bf16.msra.mxu0 0
    %6468 = vmatprep.subr.bf16.mxu0 0
    %6469 = vmatpush1.bf16.msra.mxu0 0
    %6470 = vmatprep.subr.bf16.mxu0 0
    %6471 = vmatpush1.bf16.msra.mxu0 0
    %6472 = vmatprep.subr.bf16.mxu0 0
    %6473 = vmatpush1.bf16.msra.mxu0 0
    %6474 = vmatprep.subr.bf16.mxu0 0
    %6475 = vmatpush1.bf16.msra.mxu0 0
    %6476 = vmatprep.subr.bf16.mxu0 0
    %6477 = vmatpush1.bf16.msra.mxu0 0
    %6478 = vmatprep.mubr.bf16.mxu0 0
    %6479 = vmatmul.mubr.bf16.gmra.mrb[0].mxu0 %v6423
    %v6480 = vpop.f32.mrb[0].mxu0
    %v6481 = vadd.f32 0.0, %v6480
    %v6482 = vpop.f32.mrb[0].mxu0
    %v6483 = vpop.f32.mrb[0].mxu0
    %v6484 = vadd.f32 0.0, %v6483
    %v6485 = vpop.f32.mrb[0].mxu0
    %6486 = vmatprep.mubr.bf16.mxu0 0
    %6487 = vmatmul.mubr.bf16.gmra.mrb[0].mxu0 %v6426
    %v6488 = vpop.f32.mrb[0].mxu0
    %v6489 = vadd.f32 0.0, %v6488
    %v6490 = vpop.f32.mrb[0].mxu0
    %v6491 = vpop.f32.mrb[0].mxu0
    %v6492 = vadd.f32 0.0, %v6491
    %v6493 = vpop.f32.mrb[0].mxu0
    %6494 = vmatprep.mubr.bf16.mxu0 0
    %6495 = vmatmul.mubr.bf16.gmra.mrb[0].mxu0 %v6429
    %v6496 = vpop.f32.mrb[0].mxu0
    %v6497 = vadd.f32 0.0, %v6496
    %v6498 = vpop.f32.mrb[0].mxu0
    %v6499 = vpop.f32.mrb[0].mxu0
    %v6500 = vadd.f32 0.0, %v6499
    %v6501 = vpop.f32.mrb[0].mxu0
    %6502 = vmatprep.mubr.bf16.mxu0 0
    %6503 = vmatmul.mubr.bf16.gmra.mrb[0].mxu0 %v6432
    %v6504 = vpop.f32.mrb[0].mxu0
    %v6505 = vadd.f32 0.0, %v6504
    %v6506 = vpop.f32.mrb[0].mxu0
    %v6507 = vpop.f32.mrb[0].mxu0
    %v6508 = vadd.f32 0.0, %v6507
    %v6509 = vpop.f32.mrb[0].mxu0
    %6510 = vmatprep.mubr.bf16.mxu0 0
    %6511 = vmatmul.mubr.bf16.gmra.mrb[0].mxu0 %v6435
    %v6512 = vpop.f32.mrb[0].mxu0
    %v6513 = vadd.f32 0.0, %v6512
    %v6514 = vpop.f32.mrb[0].mxu0
    %v6515 = vpop.f32.mrb[0].mxu0
    %v6516 = vadd.f32 0.0, %v6515
    %v6517 = vpop.f32.mrb[0].mxu0
    %6518 = vmatprep.mubr.bf16.mxu0 0
    %6519 = vmatmul.mubr.bf16.gmra.mrb[0].mxu0 %v6438
    %v6520 = vpop.f32.mrb[0].mxu0
    %v6521 = vadd.f32 0.0, %v6520
    %v6522 = vpop.f32.mrb[0].mxu0
    %v6523 = vpop.f32.mrb[0].mxu0
    %v6524 = vadd.f32 0.0, %v6523
    %v6525 = vpop.f32.mrb[0].mxu0
    %6526 = vmatprep.mubr.bf16.mxu0 0
    %6527 = vmatmul.mubr.bf16.gmra.mrb[0].mxu0 %v6441
    %v6528 = vpop.f32.mrb[0].mxu0
    %v6529 = vadd.f32 0.0, %v6528
    %v6530 = vpop.f32.mrb[0].mxu0
    %v6531 = vpop.f32.mrb[0].mxu0
    %v6532 = vadd.f32 0.0, %v6531
    %v6533 = vpop.f32.mrb[0].mxu0
    %6534 = vmatprep.mubr.bf16.mxu0 0
    %6535 = vmatmul.mubr.bf16.gmra.mrb[0].mxu0 %v6444
    %v6536 = vpop.f32.mrb[0].mxu0
    %v6537 = vadd.f32 0.0, %v6536
    %v6538 = vpop.f32.mrb[0].mxu0
    %v6539 = vpop.f32.mrb[0].mxu0
    %v6540 = vadd.f32 0.0, %v6539
    %v6541 = vpop.f32.mrb[0].mxu0
    %6542 = vdwg.mxu0
    %v6543 = vadd.f32 %v6251, %v6481
    %v6544 = vadd.f32 %v6254, %v6484
    %v6545 = vadd.f32 %v6259, %v6489
    %v6546 = vadd.f32 %v6262, %v6492
    %v6547 = vadd.f32 %v6267, %v6497
    %v6548 = vadd.f32 %v6270, %v6500
    %v6549 = vadd.f32 %v6275, %v6505
    %v6550 = vadd.f32 %v6278, %v6508
    %v6551 = vadd.f32 %v6283, %v6513
    %v6552 = vadd.f32 %v6286, %v6516
    %v6553 = vadd.f32 %v6291, %v6521
    %v6554 = vadd.f32 %v6294, %v6524
    %v6555 = vadd.f32 %v6299, %v6529
    %v6556 = vadd.f32 %v6302, %v6532
    %v6557 = vadd.f32 %v6307, %v6537
    %v6558 = vadd.f32 %v6310, %v6540
    %v6560 = vlaneseq
    %v6561 = vshrl.u32 %v6560, 7
    %v6562 = vsub.s32 0, %v6561
    %v6563 = vrot.slane %v5901, %v6562
    %v6565 = vadd.f32 %v6543, %v6563
    %v6566 = vadd.f32 %v6544, %v6563
    %v6567 = vadd.f32 %v6545, %v6563
    %v6568 = vadd.f32 %v6546, %v6563
    %v6569 = vadd.f32 %v6547, %v6563
    %v6570 = vadd.f32 %v6548, %v6563
    %v6571 = vadd.f32 %v6549, %v6563
    %v6572 = vadd.f32 %v6550, %v6563
    %v6573 = vadd.f32 %v6551, %v6563
    %v6574 = vadd.f32 %v6552, %v6563
    %v6575 = vadd.f32 %v6553, %v6563
    %v6576 = vadd.f32 %v6554, %v6563
    %v6577 = vadd.f32 %v6555, %v6563
    %v6578 = vadd.f32 %v6556, %v6563
    %v6579 = vadd.f32 %v6557, %v6563
    %v6580 = vadd.f32 %v6558, %v6563
    %v6581 = vtanh.pop %v6565
    %v6582 = vtanh.pop %v6566
    %v6583 = vtanh.pop %v6567
    %v6584 = vtanh.pop %v6568
    %v6585 = vtanh.pop %v6569
    %v6586 = vtanh.pop %v6570
    %v6587 = vtanh.pop %v6571
    %v6588 = vtanh.pop %v6572
    %v6589 = vtanh.pop %v6573
    %v6590 = vtanh.pop %v6574
    %v6591 = vtanh.pop %v6575
    %v6592 = vtanh.pop %v6576
    %v6593 = vtanh.pop %v6577
    %v6594 = vtanh.pop %v6578
    %v6595 = vtanh.pop %v6579
    %v6596 = vtanh.pop %v6580
    %v6597 = vxor.u32 %v6565, 2147483648
    %v6598 = vxor.u32 %v6566, 2147483648
    %v6599 = vxor.u32 %v6567, 2147483648
    %v6600 = vxor.u32 %v6568, 2147483648
    %v6601 = vxor.u32 %v6569, 2147483648
    %v6602 = vxor.u32 %v6570, 2147483648
    %v6603 = vxor.u32 %v6571, 2147483648
    %v6604 = vxor.u32 %v6572, 2147483648
    %v6605 = vxor.u32 %v6573, 2147483648
    %v6606 = vxor.u32 %v6574, 2147483648
    %v6607 = vxor.u32 %v6575, 2147483648
    %v6608 = vxor.u32 %v6576, 2147483648
    %v6609 = vxor.u32 %v6577, 2147483648
    %v6610 = vxor.u32 %v6578, 2147483648
    %v6611 = vxor.u32 %v6579, 2147483648
    %v6612 = vxor.u32 %v6580, 2147483648
    %v6613 = vmul.f32 %v6597, 1.442695
    %v6614 = vpow.pop %v6613
    %v6615 = vmul.f32 %v6598, 1.442695
    %v6616 = vpow.pop %v6615
    %v6617 = vmul.f32 %v6599, 1.442695
    %v6618 = vpow.pop %v6617
    %v6619 = vmul.f32 %v6600, 1.442695
    %v6620 = vpow.pop %v6619
    %v6621 = vmul.f32 %v6601, 1.442695
    %v6622 = vpow.pop %v6621
    %v6623 = vmul.f32 %v6602, 1.442695
    %v6624 = vpow.pop %v6623
    %v6625 = vmul.f32 %v6603, 1.442695
    %v6626 = vpow.pop %v6625
    %v6627 = vmul.f32 %v6604, 1.442695
    %v6628 = vpow.pop %v6627
    %v6629 = vmul.f32 %v6605, 1.442695
    %v6630 = vpow.pop %v6629
    %v6631 = vmul.f32 %v6606, 1.442695
    %v6632 = vpow.pop %v6631
    %v6633 = vmul.f32 %v6607, 1.442695
    %v6634 = vpow.pop %v6633
    %v6635 = vmul.f32 %v6608, 1.442695
    %v6636 = vpow.pop %v6635
    %v6637 = vmul.f32 %v6609, 1.442695
    %v6638 = vpow.pop %v6637
    %v6639 = vmul.f32 %v6610, 1.442695
    %v6640 = vpow.pop %v6639
    %v6641 = vmul.f32 %v6611, 1.442695
    %v6642 = vpow.pop %v6641
    %v6643 = vmul.f32 %v6612, 1.442695
    %v6644 = vpow.pop %v6643
    %v6645 = vadd.f32 %v6614, 1.0
    %v6646 = vadd.f32 %v6616, 1.0
    %v6647 = vadd.f32 %v6618, 1.0
    %v6648 = vadd.f32 %v6620, 1.0
    %v6649 = vadd.f32 %v6622, 1.0
    %v6650 = vadd.f32 %v6624, 1.0
    %v6651 = vadd.f32 %v6626, 1.0
    %v6652 = vadd.f32 %v6628, 1.0
    %v6653 = vadd.f32 %v6630, 1.0
    %v6654 = vadd.f32 %v6632, 1.0
    %v6655 = vadd.f32 %v6634, 1.0
    %v6656 = vadd.f32 %v6636, 1.0
    %v6657 = vadd.f32 %v6638, 1.0
    %v6658 = vadd.f32 %v6640, 1.0
    %v6659 = vadd.f32 %v6642, 1.0
    %v6660 = vadd.f32 %v6644, 1.0
    %v6661 = vrcp.pop %v6645
    %v6662 = vmul.f32 1.0, %v6661
    %v6663 = vrcp.pop %v6646
    %v6664 = vmul.f32 1.0, %v6663
    %v6665 = vrcp.pop %v6647
    %v6666 = vmul.f32 1.0, %v6665
    %v6667 = vrcp.pop %v6648
    %v6668 = vmul.f32 1.0, %v6667
    %v6669 = vrcp.pop %v6649
    %v6670 = vmul.f32 1.0, %v6669
    %v6671 = vrcp.pop %v6650
    %v6672 = vmul.f32 1.0, %v6671
    %v6673 = vrcp.pop %v6651
    %v6674 = vmul.f32 1.0, %v6673
    %v6675 = vrcp.pop %v6652
    %v6676 = vmul.f32 1.0, %v6675
    %v6677 = vrcp.pop %v6653
    %v6678 = vmul.f32 1.0, %v6677
    %v6679 = vrcp.pop %v6654
    %v6680 = vmul.f32 1.0, %v6679
    %v6681 = vrcp.pop %v6655
    %v6682 = vmul.f32 1.0, %v6681
    %v6683 = vrcp.pop %v6656
    %v6684 = vmul.f32 1.0, %v6683
    %v6685 = vrcp.pop %v6657
    %v6686 = vmul.f32 1.0, %v6685
    %v6687 = vrcp.pop %v6658
    %v6688 = vmul.f32 1.0, %v6687
    %v6689 = vrcp.pop %v6659
    %v6690 = vmul.f32 1.0, %v6689
    %v6691 = vrcp.pop %v6660
    %v6692 = vmul.f32 1.0, %v6691
    %6709 = vrot.lane.b32.xlu0 %v6662, 96
    %v6710 = vpop.permute.xlu0 %6709
    %6711 = vrot.lane.b32.xlu0 %v6664, 96
    %v6712 = vpop.permute.xlu0 %6711
    %6713 = vrot.lane.b32.xlu0 %v6666, 96
    %v6714 = vpop.permute.xlu0 %6713
    %6715 = vrot.lane.b32.xlu0 %v6668, 96
    %v6716 = vpop.permute.xlu0 %6715
    %6717 = vrot.lane.b32.xlu0 %v6670, 96
    %v6718 = vpop.permute.xlu0 %6717
    %6719 = vrot.lane.b32.xlu0 %v6672, 96
    %v6720 = vpop.permute.xlu0 %6719
    %6721 = vrot.lane.b32.xlu0 %v6674, 96
    %v6722 = vpop.permute.xlu0 %6721
    %6723 = vrot.lane.b32.xlu0 %v6676, 96
    %v6724 = vpop.permute.xlu0 %6723
    %6725 = vrot.lane.b32.xlu0 %v6678, 96
    %v6726 = vpop.permute.xlu0 %6725
    %6727 = vrot.lane.b32.xlu0 %v6680, 96
    %v6728 = vpop.permute.xlu0 %6727
    %6729 = vrot.lane.b32.xlu0 %v6682, 96
    %v6730 = vpop.permute.xlu0 %6729
    %6731 = vrot.lane.b32.xlu0 %v6684, 96
    %v6732 = vpop.permute.xlu0 %6731
    %6733 = vrot.lane.b32.xlu0 %v6686, 96
    %v6734 = vpop.permute.xlu0 %6733
    %6735 = vrot.lane.b32.xlu0 %v6688, 96
    %v6736 = vpop.permute.xlu0 %6735
    %6737 = vrot.lane.b32.xlu0 %v6690, 96
    %v6738 = vpop.permute.xlu0 %6737
    %6739 = vrot.lane.b32.xlu0 %v6692, 96
    %v6740 = vpop.permute.xlu0 %6739
    %v6757 = vmul.f32 %v6581, %v6710
    %v6758 = vmul.f32 %v6582, %v6712
    %v6759 = vmul.f32 %v6583, %v6714
    %v6760 = vmul.f32 %v6584, %v6716
    %v6761 = vmul.f32 %v6585, %v6718
    %v6762 = vmul.f32 %v6586, %v6720
    %v6763 = vmul.f32 %v6587, %v6722
    %v6764 = vmul.f32 %v6588, %v6724
    %v6765 = vmul.f32 %v6589, %v6726
    %v6766 = vmul.f32 %v6590, %v6728
    %v6767 = vmul.f32 %v6591, %v6730
    %v6768 = vmul.f32 %v6592, %v6732
    %v6769 = vmul.f32 %v6593, %v6734
    %v6770 = vmul.f32 %v6594, %v6736
    %v6771 = vmul.f32 %v6595, %v6738
    %v6772 = vmul.f32 %v6596, %v6740
    %v6773 = vpack.c.bf16 %v6758, %v6757
    %v6774 = vpack.c.bf16 %v6760, %v6759
    %v6775 = vpack.c.bf16 %v6762, %v6761
    %v6776 = vpack.c.bf16 %v6764, %v6763
    %v6777 = vpack.c.bf16 %v6766, %v6765
    %v6778 = vpack.c.bf16 %v6768, %v6767
    %v6779 = vpack.c.bf16 %v6770, %v6769
    %v6780 = vpack.c.bf16 %v6772, %v6771
    %s6781 = scalar_lea.vmem [#allocation6], 64
    %v6782 = vld [vmem:[%s6781] sm:$0xf]
    %v6783 = vld [vmem:[%s6781 + $0x4] sm:$0xf]
    %v6784 = vld [vmem:[%s6781 + $0x8] sm:$0xf]
    %v6785 = vld [vmem:[%s6781 + $0xc] sm:$0xf]
    %v6790 = vunpack.c.l.b16 %v6782
    %v6791 = vunpack.c.l.b16 %v6783
    %v6792 = vunpack.c.l.b16 %v6784
    %v6793 = vunpack.c.l.b16 %v6785
    %v6794 = vpack.c.b16 %v6791, %v6790
    %v6795 = vpack.c.b16 %v6793, %v6792
    %v6799 = vsel %vm1252, %v6773, 0
    %v6802 = vsel %vm1252, %v6774, 0
    %v6805 = vsel %vm1252, %v6775, 0
    %v6808 = vsel %vm1252, %v6776, 0
    %v6811 = vsel %vm1252, %v6777, 0
    %v6814 = vsel %vm1252, %v6778, 0
    %v6817 = vsel %vm1252, %v6779, 0
    %v6820 = vsel %vm1252, %v6780, 0
    %6822 = vmatprep.subr.bf16.mxu0 0
    %6823 = vmatpush1.bf16.msra.mxu0 %v6794
    %6824 = vmatprep.subr.bf16.mxu0 0
    %6825 = vmatpush1.bf16.msra.mxu0 %v6795
    %6826 = vmatprep.subr.bf16.mxu0 0
    %6827 = vmatpush1.bf16.msra.mxu0 0
    %6828 = vmatprep.subr.bf16.mxu0 0
    %6829 = vmatpush1.bf16.msra.mxu0 0
    %6830 = vmatprep.subr.bf16.mxu0 0
    %6831 = vmatpush1.bf16.msra.mxu0 0
    %6832 = vmatprep.subr.bf16.mxu0 0
    %6833 = vmatpush1.bf16.msra.mxu0 0
    %6834 = vmatprep.subr.bf16.mxu0 0
    %6835 = vmatpush1.bf16.msra.mxu0 0
    %6836 = vmatprep.subr.bf16.mxu0 0
    %6837 = vmatpush1.bf16.msra.mxu0 0
    %6838 = vmatprep.subr.bf16.mxu0 0
    %6839 = vmatpush1.bf16.msra.mxu0 0
    %6840 = vmatprep.subr.bf16.mxu0 0
    %6841 = vmatpush1.bf16.msra.mxu0 0
    %6842 = vmatprep.subr.bf16.mxu0 0
    %6843 = vmatpush1.bf16.msra.mxu0 0
    %6844 = vmatprep.subr.bf16.mxu0 0
    %6845 = vmatpush1.bf16.msra.mxu0 0
    %6846 = vmatprep.subr.bf16.mxu0 0
    %6847 = vmatpush1.bf16.msra.mxu0 0
    %6848 = vmatprep.subr.bf16.mxu0 0
    %6849 = vmatpush1.bf16.msra.mxu0 0
    %6850 = vmatprep.subr.bf16.mxu0 0
    %6851 = vmatpush1.bf16.msra.mxu0 0
    %6852 = vmatprep.subr.bf16.mxu0 0
    %6853 = vmatpush1.bf16.msra.mxu0 0
    %6854 = vmatprep.mubr.bf16.mxu0 0
    %6855 = vmatmul.mubr.bf16.gmra.mrb[0].mxu0 %v6799
    %v6856 = vpop.f32.mrb[0].mxu0
    %v6857 = vadd.f32 0.0, %v6856
    %v6858 = vpop.f32.mrb[0].mxu0
    %v6859 = vpop.f32.mrb[0].mxu0
    %v6860 = vadd.f32 0.0, %v6859
    %v6861 = vpop.f32.mrb[0].mxu0
    %6862 = vmatprep.mubr.bf16.mxu0 0
    %6863 = vmatmul.mubr.bf16.gmra.mrb[0].mxu0 %v6802
    %v6864 = vpop.f32.mrb[0].mxu0
    %v6865 = vadd.f32 0.0, %v6864
    %v6866 = vpop.f32.mrb[0].mxu0
    %v6867 = vpop.f32.mrb[0].mxu0
    %v6868 = vadd.f32 0.0, %v6867
    %v6869 = vpop.f32.mrb[0].mxu0
    %6870 = vmatprep.mubr.bf16.mxu0 0
    %6871 = vmatmul.mubr.bf16.gmra.mrb[0].mxu0 %v6805
    %v6872 = vpop.f32.mrb[0].mxu0
    %v6873 = vadd.f32 0.0, %v6872
    %v6874 = vpop.f32.mrb[0].mxu0
    %v6875 = vpop.f32.mrb[0].mxu0
    %v6876 = vadd.f32 0.0, %v6875
    %v6877 = vpop.f32.mrb[0].mxu0
    %6878 = vmatprep.mubr.bf16.mxu0 0
    %6879 = vmatmul.mubr.bf16.gmra.mrb[0].mxu0 %v6808
    %v6880 = vpop.f32.mrb[0].mxu0
    %v6881 = vadd.f32 0.0, %v6880
    %v6882 = vpop.f32.mrb[0].mxu0
    %v6883 = vpop.f32.mrb[0].mxu0
    %v6884 = vadd.f32 0.0, %v6883
    %v6885 = vpop.f32.mrb[0].mxu0
    %6886 = vmatprep.mubr.bf16.mxu0 0
    %6887 = vmatmul.mubr.bf16.gmra.mrb[0].mxu0 %v6811
    %v6888 = vpop.f32.mrb[0].mxu0
    %v6889 = vadd.f32 0.0, %v6888
    %v6890 = vpop.f32.mrb[0].mxu0
    %v6891 = vpop.f32.mrb[0].mxu0
    %v6892 = vadd.f32 0.0, %v6891
    %v6893 = vpop.f32.mrb[0].mxu0
    %6894 = vmatprep.mubr.bf16.mxu0 0
    %6895 = vmatmul.mubr.bf16.gmra.mrb[0].mxu0 %v6814
    %v6896 = vpop.f32.mrb[0].mxu0
    %v6897 = vadd.f32 0.0, %v6896
    %v6898 = vpop.f32.mrb[0].mxu0
    %v6899 = vpop.f32.mrb[0].mxu0
    %v6900 = vadd.f32 0.0, %v6899
    %v6901 = vpop.f32.mrb[0].mxu0
    %6902 = vmatprep.mubr.bf16.mxu0 0
    %6903 = vmatmul.mubr.bf16.gmra.mrb[0].mxu0 %v6817
    %v6904 = vpop.f32.mrb[0].mxu0
    %v6905 = vadd.f32 0.0, %v6904
    %v6906 = vpop.f32.mrb[0].mxu0
    %v6907 = vpop.f32.mrb[0].mxu0
    %v6908 = vadd.f32 0.0, %v6907
    %v6909 = vpop.f32.mrb[0].mxu0
    %6910 = vmatprep.mubr.bf16.mxu0 0
    %6911 = vmatmul.mubr.bf16.gmra.mrb[0].mxu0 %v6820
    %v6912 = vpop.f32.mrb[0].mxu0
    %v6913 = vadd.f32 0.0, %v6912
    %v6914 = vpop.f32.mrb[0].mxu0
    %v6915 = vpop.f32.mrb[0].mxu0
    %v6916 = vadd.f32 0.0, %v6915
    %v6917 = vpop.f32.mrb[0].mxu0
    %6918 = vdwg.mxu0
    %v6919 = vadd.f32 %v5827, %v6857
    %v6920 = vadd.f32 %v5828, %v6860
    %v6921 = vadd.f32 %v5829, %v6865
    %v6922 = vadd.f32 %v5830, %v6868
    %v6923 = vadd.f32 %v5831, %v6873
    %v6924 = vadd.f32 %v5832, %v6876
    %v6925 = vadd.f32 %v5833, %v6881
    %v6926 = vadd.f32 %v5834, %v6884
    %v6927 = vadd.f32 %v5835, %v6889
    %v6928 = vadd.f32 %v5836, %v6892
    %v6929 = vadd.f32 %v5837, %v6897
    %v6930 = vadd.f32 %v5838, %v6900
    %v6931 = vadd.f32 %v5839, %v6905
    %v6932 = vadd.f32 %v5840, %v6908
    %v6933 = vadd.f32 %v5841, %v6913
    %v6934 = vadd.f32 %v5842, %v6916
    %s6935 = scalar_lea.vmem [#allocation7], 4
    %v6936 = vld [vmem:[%s6935] sm:$0x1]
    %v6938 = vlaneseq
    %v6939 = vshrl.u32 %v6938, 7
    %v6940 = vsub.s32 0, %v6939
    %v6941 = vrot.slane %v6936, %v6940
    %6942 = vrot.lane.b32.xlu0 %v6941, 64
    %v6943 = vpop.permute.xlu0 %6942
    %v6945 = vadd.f32 %v6857, %v6943
    %v6946 = vadd.f32 %v6860, %v6943
    %v6947 = vadd.f32 %v6865, %v6943
    %v6948 = vadd.f32 %v6868, %v6943
    %v6949 = vadd.f32 %v6873, %v6943
    %v6950 = vadd.f32 %v6876, %v6943
    %v6951 = vadd.f32 %v6881, %v6943
    %v6952 = vadd.f32 %v6884, %v6943
    %v6953 = vadd.f32 %v6889, %v6943
    %v6954 = vadd.f32 %v6892, %v6943
    %v6955 = vadd.f32 %v6897, %v6943
    %v6956 = vadd.f32 %v6900, %v6943
    %v6957 = vadd.f32 %v6905, %v6943
    %v6958 = vadd.f32 %v6908, %v6943
    %v6959 = vadd.f32 %v6913, %v6943
    %v6960 = vadd.f32 %v6916, %v6943
    %v6961 = vadd.f32 %v6945, %v5869
    %v6962 = vadd.f32 %v6946, %v5870
    %v6963 = vadd.f32 %v6947, %v5871
    %v6964 = vadd.f32 %v6948, %v5872
    %v6965 = vadd.f32 %v6949, %v5873
    %v6966 = vadd.f32 %v6950, %v5874
    %v6967 = vadd.f32 %v6951, %v5875
    %v6968 = vadd.f32 %v6952, %v5876
    %v6969 = vadd.f32 %v6953, %v5877
    %v6970 = vadd.f32 %v6954, %v5878
    %v6971 = vadd.f32 %v6955, %v5879
    %v6972 = vadd.f32 %v6956, %v5880
    %v6973 = vadd.f32 %v6957, %v5881
    %v6974 = vadd.f32 %v6958, %v5882
    %v6975 = vadd.f32 %v6959, %v5883
    %v6976 = vadd.f32 %v6960, %v5884
    %s6977 = scalar_lea.vmem %s4, 240
    %v6978 = vld [vmem:[%s6977] sm:$0xf]
    %v6979 = vld [vmem:[%s6977 + $0x4] sm:$0xf]
    %v6980 = vld [vmem:[%s6977 + $0x8] sm:$0xf]
    %v6981 = vld [vmem:[%s6977 + $0xc] sm:$0xf]
    %s6982 = scalar_lea.vmem %s4, 256
    %v6983 = vld [vmem:[%s6982] sm:$0xf]
    %v6984 = vld [vmem:[%s6982 + $0x4] sm:$0xf]
    %v6985 = vld [vmem:[%s6982 + $0x8] sm:$0xf]
    %v6986 = vld [vmem:[%s6982 + $0xc] sm:$0xf]
    %s6987 = scalar_lea.vmem %s4, 272
    %v6988 = vld [vmem:[%s6987] sm:$0xf]
    %v6989 = vld [vmem:[%s6987 + $0x4] sm:$0xf]
    %v6990 = vld [vmem:[%s6987 + $0x8] sm:$0xf]
    %v6991 = vld [vmem:[%s6987 + $0xc] sm:$0xf]
    %s6992 = scalar_lea.vmem [#allocation4], 5
    %v6993 = vld [vmem:[%s6992] sm:$0x1]
    %v6995 = vrot.slane %v6976, 6
    %v7012 = vrot.slane %v6961, 6
    %v7013 = vrot.slane %v6962, 6
    %v7014 = vsel %vm2244, %v7012, %v7013
    %v7015 = vrot.slane %v6963, 6
    %v7016 = vsel %vm2244, %v7013, %v7015
    %v7017 = vrot.slane %v6964, 6
    %v7018 = vsel %vm2244, %v7015, %v7017
    %v7019 = vrot.slane %v6965, 6
    %v7020 = vsel %vm2244, %v7017, %v7019
    %v7021 = vrot.slane %v6966, 6
    %v7022 = vsel %vm2244, %v7019, %v7021
    %v7023 = vrot.slane %v6967, 6
    %v7024 = vsel %vm2244, %v7021, %v7023
    %v7025 = vrot.slane %v6968, 6
    %v7026 = vsel %vm2244, %v7023, %v7025
    %v7027 = vrot.slane %v6969, 6
    %v7028 = vsel %vm2244, %v7025, %v7027
    %v7029 = vrot.slane %v6970, 6
    %v7030 = vsel %vm2244, %v7027, %v7029
    %v7031 = vrot.slane %v6971, 6
    %v7032 = vsel %vm2244, %v7029, %v7031
    %v7033 = vrot.slane %v6972, 6
    %v7034 = vsel %vm2244, %v7031, %v7033
    %v7035 = vrot.slane %v6973, 6
    %v7036 = vsel %vm2244, %v7033, %v7035
    %v7037 = vrot.slane %v6974, 6
    %v7038 = vsel %vm2244, %v7035, %v7037
    %v7039 = vrot.slane %v6975, 6
    %v7040 = vsel %vm2244, %v7037, %v7039
    %v7041 = vsel %vm2244, %v7039, %v6995
    %v7058 = vsel %vm2244, %v6995, %v7012
    %v7059 = vsel %vm2356, %v7058, 0.0
    %v7060 = vsel %vm2357, %v7014, 0.0
    %v7061 = vsel %vm2358, %v7016, 0.0
    %v7062 = vsel %vm2359, %v7018, 0.0
    %v7063 = vsel %vm2360, %v7020, 0.0
    %v7064 = vsel %vm2361, %v7022, 0.0
    %v7065 = vsel %vm2362, %v7024, 0.0
    %v7066 = vsel %vm2363, %v7026, 0.0
    %v7067 = vsel %vm2364, %v7028, 0.0
    %v7068 = vsel %vm2365, %v7030, 0.0
    %v7069 = vsel %vm2366, %v7032, 0.0
    %v7070 = vsel %vm2367, %v7034, 0.0
    %v7071 = vsel %vm2368, %v7036, 0.0
    %v7072 = vsel %vm2369, %v7038, 0.0
    %v7073 = vsel %vm2370, %v7040, 0.0
    %v7074 = vsel %vm2371, %v7041, 0.0
    %v7075 = vpack.c.bf16 %v7060, %v7059
    %v7076 = vpack.c.bf16 %v7062, %v7061
    %v7077 = vpack.c.bf16 %v7064, %v7063
    %v7078 = vpack.c.bf16 %v7066, %v7065
    %v7079 = vpack.c.bf16 %v7068, %v7067
    %v7080 = vpack.c.bf16 %v7070, %v7069
    %v7081 = vpack.c.bf16 %v7072, %v7071
    %v7082 = vpack.c.bf16 %v7074, %v7073
    %v7083 = vpack.c.bf16 %v6962, %v6961
    %v7084 = vpack.c.bf16 %v6964, %v6963
    %v7085 = vpack.c.bf16 %v6966, %v6965
    %v7086 = vpack.c.bf16 %v6968, %v6967
    %v7087 = vpack.c.bf16 %v6970, %v6969
    %v7088 = vpack.c.bf16 %v6972, %v6971
    %v7089 = vpack.c.bf16 %v6974, %v6973
    %v7090 = vpack.c.bf16 %v6976, %v6975
    %7099 = vrot.lane.b32.xlu0 %v7083, 64
    %v7100 = vpop.permute.xlu0 %7099
    %7101 = vrot.lane.b32.xlu0 %v7084, 64
    %v7102 = vpop.permute.xlu0 %7101
    %7103 = vrot.lane.b32.xlu0 %v7085, 64
    %v7104 = vpop.permute.xlu0 %7103
    %7105 = vrot.lane.b32.xlu0 %v7086, 64
    %v7106 = vpop.permute.xlu0 %7105
    %7107 = vrot.lane.b32.xlu0 %v7087, 64
    %v7108 = vpop.permute.xlu0 %7107
    %7109 = vrot.lane.b32.xlu0 %v7088, 64
    %v7110 = vpop.permute.xlu0 %7109
    %7111 = vrot.lane.b32.xlu0 %v7089, 64
    %v7112 = vpop.permute.xlu0 %7111
    %7113 = vrot.lane.b32.xlu0 %v7090, 64
    %v7114 = vpop.permute.xlu0 %7113
    %v7119 = vunpack.c.l.b16 %v6983
    %v7120 = vunpack.c.l.b16 %v6984
    %v7121 = vunpack.c.l.b16 %v6985
    %v7122 = vunpack.c.l.b16 %v6986
    %v7123 = vpack.c.b16 %v7120, %v7119
    %v7124 = vpack.c.b16 %v7122, %v7121
    %v7128 = vsel %vm1252, %v7100, 0
    %v7131 = vsel %vm1252, %v7102, 0
    %v7134 = vsel %vm1252, %v7104, 0
    %v7137 = vsel %vm1252, %v7106, 0
    %v7140 = vsel %vm1252, %v7108, 0
    %v7143 = vsel %vm1252, %v7110, 0
    %v7146 = vsel %vm1252, %v7112, 0
    %v7149 = vsel %vm1252, %v7114, 0
    %7151 = vmatprep.subr.bf16.mxu0 0
    %7152 = vmatpush1.bf16.msra.mxu0 %v7123
    %7153 = vmatprep.subr.bf16.mxu0 0
    %7154 = vmatpush1.bf16.msra.mxu0 %v7124
    %7155 = vmatprep.subr.bf16.mxu0 0
    %7156 = vmatpush1.bf16.msra.mxu0 0
    %7157 = vmatprep.subr.bf16.mxu0 0
    %7158 = vmatpush1.bf16.msra.mxu0 0
    %7159 = vmatprep.subr.bf16.mxu0 0
    %7160 = vmatpush1.bf16.msra.mxu0 0
    %7161 = vmatprep.subr.bf16.mxu0 0
    %7162 = vmatpush1.bf16.msra.mxu0 0
    %7163 = vmatprep.subr.bf16.mxu0 0
    %7164 = vmatpush1.bf16.msra.mxu0 0
    %7165 = vmatprep.subr.bf16.mxu0 0
    %7166 = vmatpush1.bf16.msra.mxu0 0
    %7167 = vmatprep.subr.bf16.mxu0 0
    %7168 = vmatpush1.bf16.msra.mxu0 0
    %7169 = vmatprep.subr.bf16.mxu0 0
    %7170 = vmatpush1.bf16.msra.mxu0 0
    %7171 = vmatprep.subr.bf16.mxu0 0
    %7172 = vmatpush1.bf16.msra.mxu0 0
    %7173 = vmatprep.subr.bf16.mxu0 0
    %7174 = vmatpush1.bf16.msra.mxu0 0
    %7175 = vmatprep.subr.bf16.mxu0 0
    %7176 = vmatpush1.bf16.msra.mxu0 0
    %7177 = vmatprep.subr.bf16.mxu0 0
    %7178 = vmatpush1.bf16.msra.mxu0 0
    %7179 = vmatprep.subr.bf16.mxu0 0
    %7180 = vmatpush1.bf16.msra.mxu0 0
    %7181 = vmatprep.subr.bf16.mxu0 0
    %7182 = vmatpush1.bf16.msra.mxu0 0
    %7183 = vmatprep.mubr.bf16.mxu0 0
    %7184 = vmatmul.mubr.bf16.gmra.mrb[0].mxu0 %v7128
    %v7185 = vpop.f32.mrb[0].mxu0
    %v7186 = vadd.f32 0.0, %v7185
    %v7187 = vpop.f32.mrb[0].mxu0
    %v7188 = vpop.f32.mrb[0].mxu0
    %v7189 = vadd.f32 0.0, %v7188
    %v7190 = vpop.f32.mrb[0].mxu0
    %7191 = vmatprep.mubr.bf16.mxu0 0
    %7192 = vmatmul.mubr.bf16.gmra.mrb[0].mxu0 %v7131
    %v7193 = vpop.f32.mrb[0].mxu0
    %v7194 = vadd.f32 0.0, %v7193
    %v7195 = vpop.f32.mrb[0].mxu0
    %v7196 = vpop.f32.mrb[0].mxu0
    %v7197 = vadd.f32 0.0, %v7196
    %v7198 = vpop.f32.mrb[0].mxu0
    %7199 = vmatprep.mubr.bf16.mxu0 0
    %7200 = vmatmul.mubr.bf16.gmra.mrb[0].mxu0 %v7134
    %v7201 = vpop.f32.mrb[0].mxu0
    %v7202 = vadd.f32 0.0, %v7201
    %v7203 = vpop.f32.mrb[0].mxu0
    %v7204 = vpop.f32.mrb[0].mxu0
    %v7205 = vadd.f32 0.0, %v7204
    %v7206 = vpop.f32.mrb[0].mxu0
    %7207 = vmatprep.mubr.bf16.mxu0 0
    %7208 = vmatmul.mubr.bf16.gmra.mrb[0].mxu0 %v7137
    %v7209 = vpop.f32.mrb[0].mxu0
    %v7210 = vadd.f32 0.0, %v7209
    %v7211 = vpop.f32.mrb[0].mxu0
    %v7212 = vpop.f32.mrb[0].mxu0
    %v7213 = vadd.f32 0.0, %v7212
    %v7214 = vpop.f32.mrb[0].mxu0
    %7215 = vmatprep.mubr.bf16.mxu0 0
    %7216 = vmatmul.mubr.bf16.gmra.mrb[0].mxu0 %v7140
    %v7217 = vpop.f32.mrb[0].mxu0
    %v7218 = vadd.f32 0.0, %v7217
    %v7219 = vpop.f32.mrb[0].mxu0
    %v7220 = vpop.f32.mrb[0].mxu0
    %v7221 = vadd.f32 0.0, %v7220
    %v7222 = vpop.f32.mrb[0].mxu0
    %7223 = vmatprep.mubr.bf16.mxu0 0
    %7224 = vmatmul.mubr.bf16.gmra.mrb[0].mxu0 %v7143
    %v7225 = vpop.f32.mrb[0].mxu0
    %v7226 = vadd.f32 0.0, %v7225
    %v7227 = vpop.f32.mrb[0].mxu0
    %v7228 = vpop.f32.mrb[0].mxu0
    %v7229 = vadd.f32 0.0, %v7228
    %v7230 = vpop.f32.mrb[0].mxu0
    %7231 = vmatprep.mubr.bf16.mxu0 0
    %7232 = vmatmul.mubr.bf16.gmra.mrb[0].mxu0 %v7146
    %v7233 = vpop.f32.mrb[0].mxu0
    %v7234 = vadd.f32 0.0, %v7233
    %v7235 = vpop.f32.mrb[0].mxu0
    %v7236 = vpop.f32.mrb[0].mxu0
    %v7237 = vadd.f32 0.0, %v7236
    %v7238 = vpop.f32.mrb[0].mxu0
    %7239 = vmatprep.mubr.bf16.mxu0 0
    %7240 = vmatmul.mubr.bf16.gmra.mrb[0].mxu0 %v7149
    %v7241 = vpop.f32.mrb[0].mxu0
    %v7242 = vadd.f32 0.0, %v7241
    %v7243 = vpop.f32.mrb[0].mxu0
    %v7244 = vpop.f32.mrb[0].mxu0
    %v7245 = vadd.f32 0.0, %v7244
    %v7246 = vpop.f32.mrb[0].mxu0
    %7247 = vdwg.mxu0
    %7256 = vrot.lane.b32.xlu0 %v7075, 64
    %v7257 = vpop.permute.xlu0 %7256
    %7258 = vrot.lane.b32.xlu0 %v7076, 64
    %v7259 = vpop.permute.xlu0 %7258
    %7260 = vrot.lane.b32.xlu0 %v7077, 64
    %v7261 = vpop.permute.xlu0 %7260
    %7262 = vrot.lane.b32.xlu0 %v7078, 64
    %v7263 = vpop.permute.xlu0 %7262
    %7264 = vrot.lane.b32.xlu0 %v7079, 64
    %v7265 = vpop.permute.xlu0 %7264
    %7266 = vrot.lane.b32.xlu0 %v7080, 64
    %v7267 = vpop.permute.xlu0 %7266
    %7268 = vrot.lane.b32.xlu0 %v7081, 64
    %v7269 = vpop.permute.xlu0 %7268
    %7270 = vrot.lane.b32.xlu0 %v7082, 64
    %v7271 = vpop.permute.xlu0 %7270
    %v7276 = vunpack.c.l.b16 %v6978
    %v7277 = vunpack.c.l.b16 %v6979
    %v7278 = vunpack.c.l.b16 %v6980
    %v7279 = vunpack.c.l.b16 %v6981
    %v7280 = vpack.c.b16 %v7277, %v7276
    %v7281 = vpack.c.b16 %v7279, %v7278
    %v7285 = vsel %vm1252, %v7257, 0
    %v7288 = vsel %vm1252, %v7259, 0
    %v7291 = vsel %vm1252, %v7261, 0
    %v7294 = vsel %vm1252, %v7263, 0
    %v7297 = vsel %vm1252, %v7265, 0
    %v7300 = vsel %vm1252, %v7267, 0
    %v7303 = vsel %vm1252, %v7269, 0
    %v7306 = vsel %vm1252, %v7271, 0
    %7308 = vmatprep.subr.bf16.mxu0 0
    %7309 = vmatpush1.bf16.msra.mxu0 %v7280
    %7310 = vmatprep.subr.bf16.mxu0 0
    %7311 = vmatpush1.bf16.msra.mxu0 %v7281
    %7312 = vmatprep.subr.bf16.mxu0 0
    %7313 = vmatpush1.bf16.msra.mxu0 0
    %7314 = vmatprep.subr.bf16.mxu0 0
    %7315 = vmatpush1.bf16.msra.mxu0 0
    %7316 = vmatprep.subr.bf16.mxu0 0
    %7317 = vmatpush1.bf16.msra.mxu0 0
    %7318 = vmatprep.subr.bf16.mxu0 0
    %7319 = vmatpush1.bf16.msra.mxu0 0
    %7320 = vmatprep.subr.bf16.mxu0 0
    %7321 = vmatpush1.bf16.msra.mxu0 0
    %7322 = vmatprep.subr.bf16.mxu0 0
    %7323 = vmatpush1.bf16.msra.mxu0 0
    %7324 = vmatprep.subr.bf16.mxu0 0
    %7325 = vmatpush1.bf16.msra.mxu0 0
    %7326 = vmatprep.subr.bf16.mxu0 0
    %7327 = vmatpush1.bf16.msra.mxu0 0
    %7328 = vmatprep.subr.bf16.mxu0 0
    %7329 = vmatpush1.bf16.msra.mxu0 0
    %7330 = vmatprep.subr.bf16.mxu0 0
    %7331 = vmatpush1.bf16.msra.mxu0 0
    %7332 = vmatprep.subr.bf16.mxu0 0
    %7333 = vmatpush1.bf16.msra.mxu0 0
    %7334 = vmatprep.subr.bf16.mxu0 0
    %7335 = vmatpush1.bf16.msra.mxu0 0
    %7336 = vmatprep.subr.bf16.mxu0 0
    %7337 = vmatpush1.bf16.msra.mxu0 0
    %7338 = vmatprep.subr.bf16.mxu0 0
    %7339 = vmatpush1.bf16.msra.mxu0 0
    %7340 = vmatprep.mubr.bf16.mxu0 0
    %7341 = vmatmul.mubr.bf16.gmra.mrb[0].mxu0 %v7285
    %v7342 = vpop.f32.mrb[0].mxu0
    %v7343 = vadd.f32 %v7186, %v7342
    %v7344 = vpop.f32.mrb[0].mxu0
    %v7345 = vpop.f32.mrb[0].mxu0
    %v7346 = vadd.f32 %v7189, %v7345
    %v7347 = vpop.f32.mrb[0].mxu0
    %7348 = vmatprep.mubr.bf16.mxu0 0
    %7349 = vmatmul.mubr.bf16.gmra.mrb[0].mxu0 %v7288
    %v7350 = vpop.f32.mrb[0].mxu0
    %v7351 = vadd.f32 %v7194, %v7350
    %v7352 = vpop.f32.mrb[0].mxu0
    %v7353 = vpop.f32.mrb[0].mxu0
    %v7354 = vadd.f32 %v7197, %v7353
    %v7355 = vpop.f32.mrb[0].mxu0
    %7356 = vmatprep.mubr.bf16.mxu0 0
    %7357 = vmatmul.mubr.bf16.gmra.mrb[0].mxu0 %v7291
    %v7358 = vpop.f32.mrb[0].mxu0
    %v7359 = vadd.f32 %v7202, %v7358
    %v7360 = vpop.f32.mrb[0].mxu0
    %v7361 = vpop.f32.mrb[0].mxu0
    %v7362 = vadd.f32 %v7205, %v7361
    %v7363 = vpop.f32.mrb[0].mxu0
    %7364 = vmatprep.mubr.bf16.mxu0 0
    %7365 = vmatmul.mubr.bf16.gmra.mrb[0].mxu0 %v7294
    %v7366 = vpop.f32.mrb[0].mxu0
    %v7367 = vadd.f32 %v7210, %v7366
    %v7368 = vpop.f32.mrb[0].mxu0
    %v7369 = vpop.f32.mrb[0].mxu0
    %v7370 = vadd.f32 %v7213, %v7369
    %v7371 = vpop.f32.mrb[0].mxu0
    %7372 = vmatprep.mubr.bf16.mxu0 0
    %7373 = vmatmul.mubr.bf16.gmra.mrb[0].mxu0 %v7297
    %v7374 = vpop.f32.mrb[0].mxu0
    %v7375 = vadd.f32 %v7218, %v7374
    %v7376 = vpop.f32.mrb[0].mxu0
    %v7377 = vpop.f32.mrb[0].mxu0
    %v7378 = vadd.f32 %v7221, %v7377
    %v7379 = vpop.f32.mrb[0].mxu0
    %7380 = vmatprep.mubr.bf16.mxu0 0
    %7381 = vmatmul.mubr.bf16.gmra.mrb[0].mxu0 %v7300
    %v7382 = vpop.f32.mrb[0].mxu0
    %v7383 = vadd.f32 %v7226, %v7382
    %v7384 = vpop.f32.mrb[0].mxu0
    %v7385 = vpop.f32.mrb[0].mxu0
    %v7386 = vadd.f32 %v7229, %v7385
    %v7387 = vpop.f32.mrb[0].mxu0
    %7388 = vmatprep.mubr.bf16.mxu0 0
    %7389 = vmatmul.mubr.bf16.gmra.mrb[0].mxu0 %v7303
    %v7390 = vpop.f32.mrb[0].mxu0
    %v7391 = vadd.f32 %v7234, %v7390
    %v7392 = vpop.f32.mrb[0].mxu0
    %v7393 = vpop.f32.mrb[0].mxu0
    %v7394 = vadd.f32 %v7237, %v7393
    %v7395 = vpop.f32.mrb[0].mxu0
    %7396 = vmatprep.mubr.bf16.mxu0 0
    %7397 = vmatmul.mubr.bf16.gmra.mrb[0].mxu0 %v7306
    %v7398 = vpop.f32.mrb[0].mxu0
    %v7399 = vadd.f32 %v7242, %v7398
    %v7400 = vpop.f32.mrb[0].mxu0
    %v7401 = vpop.f32.mrb[0].mxu0
    %v7402 = vadd.f32 %v7245, %v7401
    %v7403 = vpop.f32.mrb[0].mxu0
    %7404 = vdwg.mxu0
    %v7405 = vrot.slane %v6961, 2
    %v7406 = vrot.slane %v6962, 2
    %v7407 = vsel %vm2734, %v7405, %v7406
    %v7408 = vrot.slane %v6963, 2
    %v7409 = vsel %vm2734, %v7406, %v7408
    %v7410 = vrot.slane %v6964, 2
    %v7411 = vsel %vm2734, %v7408, %v7410
    %v7412 = vrot.slane %v6965, 2
    %v7413 = vsel %vm2734, %v7410, %v7412
    %v7414 = vrot.slane %v6966, 2
    %v7415 = vsel %vm2734, %v7412, %v7414
    %v7416 = vrot.slane %v6967, 2
    %v7417 = vsel %vm2734, %v7414, %v7416
    %v7418 = vrot.slane %v6968, 2
    %v7419 = vsel %vm2734, %v7416, %v7418
    %v7420 = vrot.slane %v6969, 2
    %v7421 = vsel %vm2734, %v7418, %v7420
    %v7422 = vrot.slane %v6970, 2
    %v7423 = vsel %vm2734, %v7420, %v7422
    %v7424 = vrot.slane %v6971, 2
    %v7425 = vsel %vm2734, %v7422, %v7424
    %v7426 = vrot.slane %v6972, 2
    %v7427 = vsel %vm2734, %v7424, %v7426
    %v7428 = vrot.slane %v6973, 2
    %v7429 = vsel %vm2734, %v7426, %v7428
    %v7430 = vrot.slane %v6974, 2
    %v7431 = vsel %vm2734, %v7428, %v7430
    %v7432 = vrot.slane %v6975, 2
    %v7433 = vsel %vm2734, %v7430, %v7432
    %v7434 = vrot.slane %v6976, 2
    %v7435 = vsel %vm2734, %v7432, %v7434
    %v7453 = vsel %vm2734, %v7434, %v7405
    %v7454 = vsel %vm2848, %v7407, 0.0
    %v7455 = vsel %vm2849, %v7409, 0.0
    %v7456 = vsel %vm2850, %v7411, 0.0
    %v7457 = vsel %vm2851, %v7413, 0.0
    %v7458 = vsel %vm2852, %v7415, 0.0
    %v7459 = vsel %vm2853, %v7417, 0.0
    %v7460 = vsel %vm2854, %v7419, 0.0
    %v7461 = vsel %vm2855, %v7421, 0.0
    %v7462 = vsel %vm2856, %v7423, 0.0
    %v7463 = vsel %vm2857, %v7425, 0.0
    %v7464 = vsel %vm2858, %v7427, 0.0
    %v7465 = vsel %vm2859, %v7429, 0.0
    %v7466 = vsel %vm2860, %v7431, 0.0
    %v7467 = vsel %vm2861, %v7433, 0.0
    %v7468 = vsel %vm2862, %v7435, 0.0
    %v7469 = vsel %vm2863, %v7453, 0.0
    %v7470 = vpack.c.bf16 %v7455, %v7454
    %v7471 = vpack.c.bf16 %v7457, %v7456
    %v7472 = vpack.c.bf16 %v7459, %v7458
    %v7473 = vpack.c.bf16 %v7461, %v7460
    %v7474 = vpack.c.bf16 %v7463, %v7462
    %v7475 = vpack.c.bf16 %v7465, %v7464
    %v7476 = vpack.c.bf16 %v7467, %v7466
    %v7477 = vpack.c.bf16 %v7469, %v7468
    %7486 = vrot.lane.b32.xlu0 %v7470, 64
    %v7487 = vpop.permute.xlu0 %7486
    %7488 = vrot.lane.b32.xlu0 %v7471, 64
    %v7489 = vpop.permute.xlu0 %7488
    %7490 = vrot.lane.b32.xlu0 %v7472, 64
    %v7491 = vpop.permute.xlu0 %7490
    %7492 = vrot.lane.b32.xlu0 %v7473, 64
    %v7493 = vpop.permute.xlu0 %7492
    %7494 = vrot.lane.b32.xlu0 %v7474, 64
    %v7495 = vpop.permute.xlu0 %7494
    %7496 = vrot.lane.b32.xlu0 %v7475, 64
    %v7497 = vpop.permute.xlu0 %7496
    %7498 = vrot.lane.b32.xlu0 %v7476, 64
    %v7499 = vpop.permute.xlu0 %7498
    %7500 = vrot.lane.b32.xlu0 %v7477, 64
    %v7501 = vpop.permute.xlu0 %7500
    %v7506 = vunpack.c.l.b16 %v6988
    %v7507 = vunpack.c.l.b16 %v6989
    %v7508 = vunpack.c.l.b16 %v6990
    %v7509 = vunpack.c.l.b16 %v6991
    %v7510 = vpack.c.b16 %v7507, %v7506
    %v7511 = vpack.c.b16 %v7509, %v7508
    %v7515 = vsel %vm1252, %v7487, 0
    %v7518 = vsel %vm1252, %v7489, 0
    %v7521 = vsel %vm1252, %v7491, 0
    %v7524 = vsel %vm1252, %v7493, 0
    %v7527 = vsel %vm1252, %v7495, 0
    %v7530 = vsel %vm1252, %v7497, 0
    %v7533 = vsel %vm1252, %v7499, 0
    %v7536 = vsel %vm1252, %v7501, 0
    %7538 = vmatprep.subr.bf16.mxu0 0
    %7539 = vmatpush1.bf16.msra.mxu0 %v7510
    %7540 = vmatprep.subr.bf16.mxu0 0
    %7541 = vmatpush1.bf16.msra.mxu0 %v7511
    %7542 = vmatprep.subr.bf16.mxu0 0
    %7543 = vmatpush1.bf16.msra.mxu0 0
    %7544 = vmatprep.subr.bf16.mxu0 0
    %7545 = vmatpush1.bf16.msra.mxu0 0
    %7546 = vmatprep.subr.bf16.mxu0 0
    %7547 = vmatpush1.bf16.msra.mxu0 0
    %7548 = vmatprep.subr.bf16.mxu0 0
    %7549 = vmatpush1.bf16.msra.mxu0 0
    %7550 = vmatprep.subr.bf16.mxu0 0
    %7551 = vmatpush1.bf16.msra.mxu0 0
    %7552 = vmatprep.subr.bf16.mxu0 0
    %7553 = vmatpush1.bf16.msra.mxu0 0
    %7554 = vmatprep.subr.bf16.mxu0 0
    %7555 = vmatpush1.bf16.msra.mxu0 0
    %7556 = vmatprep.subr.bf16.mxu0 0
    %7557 = vmatpush1.bf16.msra.mxu0 0
    %7558 = vmatprep.subr.bf16.mxu0 0
    %7559 = vmatpush1.bf16.msra.mxu0 0
    %7560 = vmatprep.subr.bf16.mxu0 0
    %7561 = vmatpush1.bf16.msra.mxu0 0
    %7562 = vmatprep.subr.bf16.mxu0 0
    %7563 = vmatpush1.bf16.msra.mxu0 0
    %7564 = vmatprep.subr.bf16.mxu0 0
    %7565 = vmatpush1.bf16.msra.mxu0 0
    %7566 = vmatprep.subr.bf16.mxu0 0
    %7567 = vmatpush1.bf16.msra.mxu0 0
    %7568 = vmatprep.subr.bf16.mxu0 0
    %7569 = vmatpush1.bf16.msra.mxu0 0
    %7570 = vmatprep.mubr.bf16.mxu0 0
    %7571 = vmatmul.mubr.bf16.gmra.mrb[0].mxu0 %v7515
    %v7572 = vpop.f32.mrb[0].mxu0
    %v7573 = vadd.f32 0.0, %v7572
    %v7574 = vpop.f32.mrb[0].mxu0
    %v7575 = vpop.f32.mrb[0].mxu0
    %v7576 = vadd.f32 0.0, %v7575
    %v7577 = vpop.f32.mrb[0].mxu0
    %7578 = vmatprep.mubr.bf16.mxu0 0
    %7579 = vmatmul.mubr.bf16.gmra.mrb[0].mxu0 %v7518
    %v7580 = vpop.f32.mrb[0].mxu0
    %v7581 = vadd.f32 0.0, %v7580
    %v7582 = vpop.f32.mrb[0].mxu0
    %v7583 = vpop.f32.mrb[0].mxu0
    %v7584 = vadd.f32 0.0, %v7583
    %v7585 = vpop.f32.mrb[0].mxu0
    %7586 = vmatprep.mubr.bf16.mxu0 0
    %7587 = vmatmul.mubr.bf16.gmra.mrb[0].mxu0 %v7521
    %v7588 = vpop.f32.mrb[0].mxu0
    %v7589 = vadd.f32 0.0, %v7588
    %v7590 = vpop.f32.mrb[0].mxu0
    %v7591 = vpop.f32.mrb[0].mxu0
    %v7592 = vadd.f32 0.0, %v7591
    %v7593 = vpop.f32.mrb[0].mxu0
    %7594 = vmatprep.mubr.bf16.mxu0 0
    %7595 = vmatmul.mubr.bf16.gmra.mrb[0].mxu0 %v7524
    %v7596 = vpop.f32.mrb[0].mxu0
    %v7597 = vadd.f32 0.0, %v7596
    %v7598 = vpop.f32.mrb[0].mxu0
    %v7599 = vpop.f32.mrb[0].mxu0
    %v7600 = vadd.f32 0.0, %v7599
    %v7601 = vpop.f32.mrb[0].mxu0
    %7602 = vmatprep.mubr.bf16.mxu0 0
    %7603 = vmatmul.mubr.bf16.gmra.mrb[0].mxu0 %v7527
    %v7604 = vpop.f32.mrb[0].mxu0
    %v7605 = vadd.f32 0.0, %v7604
    %v7606 = vpop.f32.mrb[0].mxu0
    %v7607 = vpop.f32.mrb[0].mxu0
    %v7608 = vadd.f32 0.0, %v7607
    %v7609 = vpop.f32.mrb[0].mxu0
    %7610 = vmatprep.mubr.bf16.mxu0 0
    %7611 = vmatmul.mubr.bf16.gmra.mrb[0].mxu0 %v7530
    %v7612 = vpop.f32.mrb[0].mxu0
    %v7613 = vadd.f32 0.0, %v7612
    %v7614 = vpop.f32.mrb[0].mxu0
    %v7615 = vpop.f32.mrb[0].mxu0
    %v7616 = vadd.f32 0.0, %v7615
    %v7617 = vpop.f32.mrb[0].mxu0
    %7618 = vmatprep.mubr.bf16.mxu0 0
    %7619 = vmatmul.mubr.bf16.gmra.mrb[0].mxu0 %v7533
    %v7620 = vpop.f32.mrb[0].mxu0
    %v7621 = vadd.f32 0.0, %v7620
    %v7622 = vpop.f32.mrb[0].mxu0
    %v7623 = vpop.f32.mrb[0].mxu0
    %v7624 = vadd.f32 0.0, %v7623
    %v7625 = vpop.f32.mrb[0].mxu0
    %7626 = vmatprep.mubr.bf16.mxu0 0
    %7627 = vmatmul.mubr.bf16.gmra.mrb[0].mxu0 %v7536
    %v7628 = vpop.f32.mrb[0].mxu0
    %v7629 = vadd.f32 0.0, %v7628
    %v7630 = vpop.f32.mrb[0].mxu0
    %v7631 = vpop.f32.mrb[0].mxu0
    %v7632 = vadd.f32 0.0, %v7631
    %v7633 = vpop.f32.mrb[0].mxu0
    %7634 = vdwg.mxu0
    %v7635 = vadd.f32 %v7343, %v7573
    %v7636 = vadd.f32 %v7346, %v7576
    %v7637 = vadd.f32 %v7351, %v7581
    %v7638 = vadd.f32 %v7354, %v7584
    %v7639 = vadd.f32 %v7359, %v7589
    %v7640 = vadd.f32 %v7362, %v7592
    %v7641 = vadd.f32 %v7367, %v7597
    %v7642 = vadd.f32 %v7370, %v7600
    %v7643 = vadd.f32 %v7375, %v7605
    %v7644 = vadd.f32 %v7378, %v7608
    %v7645 = vadd.f32 %v7383, %v7613
    %v7646 = vadd.f32 %v7386, %v7616
    %v7647 = vadd.f32 %v7391, %v7621
    %v7648 = vadd.f32 %v7394, %v7624
    %v7649 = vadd.f32 %v7399, %v7629
    %v7650 = vadd.f32 %v7402, %v7632
    %v7652 = vlaneseq
    %v7653 = vshrl.u32 %v7652, 7
    %v7654 = vsub.s32 0, %v7653
    %v7655 = vrot.slane %v6993, %v7654
    %v7657 = vadd.f32 %v7635, %v7655
    %v7658 = vadd.f32 %v7636, %v7655
    %v7659 = vadd.f32 %v7637, %v7655
    %v7660 = vadd.f32 %v7638, %v7655
    %v7661 = vadd.f32 %v7639, %v7655
    %v7662 = vadd.f32 %v7640, %v7655
    %v7663 = vadd.f32 %v7641, %v7655
    %v7664 = vadd.f32 %v7642, %v7655
    %v7665 = vadd.f32 %v7643, %v7655
    %v7666 = vadd.f32 %v7644, %v7655
    %v7667 = vadd.f32 %v7645, %v7655
    %v7668 = vadd.f32 %v7646, %v7655
    %v7669 = vadd.f32 %v7647, %v7655
    %v7670 = vadd.f32 %v7648, %v7655
    %v7671 = vadd.f32 %v7649, %v7655
    %v7672 = vadd.f32 %v7650, %v7655
    %v7673 = vtanh.pop %v7657
    %v7674 = vtanh.pop %v7658
    %v7675 = vtanh.pop %v7659
    %v7676 = vtanh.pop %v7660
    %v7677 = vtanh.pop %v7661
    %v7678 = vtanh.pop %v7662
    %v7679 = vtanh.pop %v7663
    %v7680 = vtanh.pop %v7664
    %v7681 = vtanh.pop %v7665
    %v7682 = vtanh.pop %v7666
    %v7683 = vtanh.pop %v7667
    %v7684 = vtanh.pop %v7668
    %v7685 = vtanh.pop %v7669
    %v7686 = vtanh.pop %v7670
    %v7687 = vtanh.pop %v7671
    %v7688 = vtanh.pop %v7672
    %v7689 = vxor.u32 %v7657, 2147483648
    %v7690 = vxor.u32 %v7658, 2147483648
    %v7691 = vxor.u32 %v7659, 2147483648
    %v7692 = vxor.u32 %v7660, 2147483648
    %v7693 = vxor.u32 %v7661, 2147483648
    %v7694 = vxor.u32 %v7662, 2147483648
    %v7695 = vxor.u32 %v7663, 2147483648
    %v7696 = vxor.u32 %v7664, 2147483648
    %v7697 = vxor.u32 %v7665, 2147483648
    %v7698 = vxor.u32 %v7666, 2147483648
    %v7699 = vxor.u32 %v7667, 2147483648
    %v7700 = vxor.u32 %v7668, 2147483648
    %v7701 = vxor.u32 %v7669, 2147483648
    %v7702 = vxor.u32 %v7670, 2147483648
    %v7703 = vxor.u32 %v7671, 2147483648
    %v7704 = vxor.u32 %v7672, 2147483648
    %v7705 = vmul.f32 %v7689, 1.442695
    %v7706 = vpow.pop %v7705
    %v7707 = vmul.f32 %v7690, 1.442695
    %v7708 = vpow.pop %v7707
    %v7709 = vmul.f32 %v7691, 1.442695
    %v7710 = vpow.pop %v7709
    %v7711 = vmul.f32 %v7692, 1.442695
    %v7712 = vpow.pop %v7711
    %v7713 = vmul.f32 %v7693, 1.442695
    %v7714 = vpow.pop %v7713
    %v7715 = vmul.f32 %v7694, 1.442695
    %v7716 = vpow.pop %v7715
    %v7717 = vmul.f32 %v7695, 1.442695
    %v7718 = vpow.pop %v7717
    %v7719 = vmul.f32 %v7696, 1.442695
    %v7720 = vpow.pop %v7719
    %v7721 = vmul.f32 %v7697, 1.442695
    %v7722 = vpow.pop %v7721
    %v7723 = vmul.f32 %v7698, 1.442695
    %v7724 = vpow.pop %v7723
    %v7725 = vmul.f32 %v7699, 1.442695
    %v7726 = vpow.pop %v7725
    %v7727 = vmul.f32 %v7700, 1.442695
    %v7728 = vpow.pop %v7727
    %v7729 = vmul.f32 %v7701, 1.442695
    %v7730 = vpow.pop %v7729
    %v7731 = vmul.f32 %v7702, 1.442695
    %v7732 = vpow.pop %v7731
    %v7733 = vmul.f32 %v7703, 1.442695
    %v7734 = vpow.pop %v7733
    %v7735 = vmul.f32 %v7704, 1.442695
    %v7736 = vpow.pop %v7735
    %v7737 = vadd.f32 %v7706, 1.0
    %v7738 = vadd.f32 %v7708, 1.0
    %v7739 = vadd.f32 %v7710, 1.0
    %v7740 = vadd.f32 %v7712, 1.0
    %v7741 = vadd.f32 %v7714, 1.0
    %v7742 = vadd.f32 %v7716, 1.0
    %v7743 = vadd.f32 %v7718, 1.0
    %v7744 = vadd.f32 %v7720, 1.0
    %v7745 = vadd.f32 %v7722, 1.0
    %v7746 = vadd.f32 %v7724, 1.0
    %v7747 = vadd.f32 %v7726, 1.0
    %v7748 = vadd.f32 %v7728, 1.0
    %v7749 = vadd.f32 %v7730, 1.0
    %v7750 = vadd.f32 %v7732, 1.0
    %v7751 = vadd.f32 %v7734, 1.0
    %v7752 = vadd.f32 %v7736, 1.0
    %v7753 = vrcp.pop %v7737
    %v7754 = vmul.f32 1.0, %v7753
    %v7755 = vrcp.pop %v7738
    %v7756 = vmul.f32 1.0, %v7755
    %v7757 = vrcp.pop %v7739
    %v7758 = vmul.f32 1.0, %v7757
    %v7759 = vrcp.pop %v7740
    %v7760 = vmul.f32 1.0, %v7759
    %v7761 = vrcp.pop %v7741
    %v7762 = vmul.f32 1.0, %v7761
    %v7763 = vrcp.pop %v7742
    %v7764 = vmul.f32 1.0, %v7763
    %v7765 = vrcp.pop %v7743
    %v7766 = vmul.f32 1.0, %v7765
    %v7767 = vrcp.pop %v7744
    %v7768 = vmul.f32 1.0, %v7767
    %v7769 = vrcp.pop %v7745
    %v7770 = vmul.f32 1.0, %v7769
    %v7771 = vrcp.pop %v7746
    %v7772 = vmul.f32 1.0, %v7771
    %v7773 = vrcp.pop %v7747
    %v7774 = vmul.f32 1.0, %v7773
    %v7775 = vrcp.pop %v7748
    %v7776 = vmul.f32 1.0, %v7775
    %v7777 = vrcp.pop %v7749
    %v7778 = vmul.f32 1.0, %v7777
    %v7779 = vrcp.pop %v7750
    %v7780 = vmul.f32 1.0, %v7779
    %v7781 = vrcp.pop %v7751
    %v7782 = vmul.f32 1.0, %v7781
    %v7783 = vrcp.pop %v7752
    %v7784 = vmul.f32 1.0, %v7783
    %7801 = vrot.lane.b32.xlu0 %v7754, 96
    %v7802 = vpop.permute.xlu0 %7801
    %7803 = vrot.lane.b32.xlu0 %v7756, 96
    %v7804 = vpop.permute.xlu0 %7803
    %7805 = vrot.lane.b32.xlu0 %v7758, 96
    %v7806 = vpop.permute.xlu0 %7805
    %7807 = vrot.lane.b32.xlu0 %v7760, 96
    %v7808 = vpop.permute.xlu0 %7807
    %7809 = vrot.lane.b32.xlu0 %v7762, 96
    %v7810 = vpop.permute.xlu0 %7809
    %7811 = vrot.lane.b32.xlu0 %v7764, 96
    %v7812 = vpop.permute.xlu0 %7811
    %7813 = vrot.lane.b32.xlu0 %v7766, 96
    %v7814 = vpop.permute.xlu0 %7813
    %7815 = vrot.lane.b32.xlu0 %v7768, 96
    %v7816 = vpop.permute.xlu0 %7815
    %7817 = vrot.lane.b32.xlu0 %v7770, 96
    %v7818 = vpop.permute.xlu0 %7817
    %7819 = vrot.lane.b32.xlu0 %v7772, 96
    %v7820 = vpop.permute.xlu0 %7819
    %7821 = vrot.lane.b32.xlu0 %v7774, 96
    %v7822 = vpop.permute.xlu0 %7821
    %7823 = vrot.lane.b32.xlu0 %v7776, 96
    %v7824 = vpop.permute.xlu0 %7823
    %7825 = vrot.lane.b32.xlu0 %v7778, 96
    %v7826 = vpop.permute.xlu0 %7825
    %7827 = vrot.lane.b32.xlu0 %v7780, 96
    %v7828 = vpop.permute.xlu0 %7827
    %7829 = vrot.lane.b32.xlu0 %v7782, 96
    %v7830 = vpop.permute.xlu0 %7829
    %7831 = vrot.lane.b32.xlu0 %v7784, 96
    %v7832 = vpop.permute.xlu0 %7831
    %v7849 = vmul.f32 %v7673, %v7802
    %v7850 = vmul.f32 %v7674, %v7804
    %v7851 = vmul.f32 %v7675, %v7806
    %v7852 = vmul.f32 %v7676, %v7808
    %v7853 = vmul.f32 %v7677, %v7810
    %v7854 = vmul.f32 %v7678, %v7812
    %v7855 = vmul.f32 %v7679, %v7814
    %v7856 = vmul.f32 %v7680, %v7816
    %v7857 = vmul.f32 %v7681, %v7818
    %v7858 = vmul.f32 %v7682, %v7820
    %v7859 = vmul.f32 %v7683, %v7822
    %v7860 = vmul.f32 %v7684, %v7824
    %v7861 = vmul.f32 %v7685, %v7826
    %v7862 = vmul.f32 %v7686, %v7828
    %v7863 = vmul.f32 %v7687, %v7830
    %v7864 = vmul.f32 %v7688, %v7832
    %v7865 = vpack.c.bf16 %v7850, %v7849
    %v7866 = vpack.c.bf16 %v7852, %v7851
    %v7867 = vpack.c.bf16 %v7854, %v7853
    %v7868 = vpack.c.bf16 %v7856, %v7855
    %v7869 = vpack.c.bf16 %v7858, %v7857
    %v7870 = vpack.c.bf16 %v7860, %v7859
    %v7871 = vpack.c.bf16 %v7862, %v7861
    %v7872 = vpack.c.bf16 %v7864, %v7863
    %s7873 = scalar_lea.vmem [#allocation6], 80
    %v7874 = vld [vmem:[%s7873] sm:$0xf]
    %v7875 = vld [vmem:[%s7873 + $0x4] sm:$0xf]
    %v7876 = vld [vmem:[%s7873 + $0x8] sm:$0xf]
    %v7877 = vld [vmem:[%s7873 + $0xc] sm:$0xf]
    %v7882 = vunpack.c.l.b16 %v7874
    %v7883 = vunpack.c.l.b16 %v7875
    %v7884 = vunpack.c.l.b16 %v7876
    %v7885 = vunpack.c.l.b16 %v7877
    %v7886 = vpack.c.b16 %v7883, %v7882
    %v7887 = vpack.c.b16 %v7885, %v7884
    %v7891 = vsel %vm1252, %v7865, 0
    %v7894 = vsel %vm1252, %v7866, 0
    %v7897 = vsel %vm1252, %v7867, 0
    %v7900 = vsel %vm1252, %v7868, 0
    %v7903 = vsel %vm1252, %v7869, 0
    %v7906 = vsel %vm1252, %v7870, 0
    %v7909 = vsel %vm1252, %v7871, 0
    %v7912 = vsel %vm1252, %v7872, 0
    %7914 = vmatprep.subr.bf16.mxu0 0
    %7915 = vmatpush1.bf16.msra.mxu0 %v7886
    %7916 = vmatprep.subr.bf16.mxu0 0
    %7917 = vmatpush1.bf16.msra.mxu0 %v7887
    %7918 = vmatprep.subr.bf16.mxu0 0
    %7919 = vmatpush1.bf16.msra.mxu0 0
    %7920 = vmatprep.subr.bf16.mxu0 0
    %7921 = vmatpush1.bf16.msra.mxu0 0
    %7922 = vmatprep.subr.bf16.mxu0 0
    %7923 = vmatpush1.bf16.msra.mxu0 0
    %7924 = vmatprep.subr.bf16.mxu0 0
    %7925 = vmatpush1.bf16.msra.mxu0 0
    %7926 = vmatprep.subr.bf16.mxu0 0
    %7927 = vmatpush1.bf16.msra.mxu0 0
    %7928 = vmatprep.subr.bf16.mxu0 0
    %7929 = vmatpush1.bf16.msra.mxu0 0
    %7930 = vmatprep.subr.bf16.mxu0 0
    %7931 = vmatpush1.bf16.msra.mxu0 0
    %7932 = vmatprep.subr.bf16.mxu0 0
    %7933 = vmatpush1.bf16.msra.mxu0 0
    %7934 = vmatprep.subr.bf16.mxu0 0
    %7935 = vmatpush1.bf16.msra.mxu0 0
    %7936 = vmatprep.subr.bf16.mxu0 0
    %7937 = vmatpush1.bf16.msra.mxu0 0
    %7938 = vmatprep.subr.bf16.mxu0 0
    %7939 = vmatpush1.bf16.msra.mxu0 0
    %7940 = vmatprep.subr.bf16.mxu0 0
    %7941 = vmatpush1.bf16.msra.mxu0 0
    %7942 = vmatprep.subr.bf16.mxu0 0
    %7943 = vmatpush1.bf16.msra.mxu0 0
    %7944 = vmatprep.subr.bf16.mxu0 0
    %7945 = vmatpush1.bf16.msra.mxu0 0
    %7946 = vmatprep.mubr.bf16.mxu0 0
    %7947 = vmatmul.mubr.bf16.gmra.mrb[0].mxu0 %v7891
    %v7948 = vpop.f32.mrb[0].mxu0
    %v7949 = vadd.f32 0.0, %v7948
    %v7950 = vpop.f32.mrb[0].mxu0
    %v7951 = vpop.f32.mrb[0].mxu0
    %v7952 = vadd.f32 0.0, %v7951
    %v7953 = vpop.f32.mrb[0].mxu0
    %7954 = vmatprep.mubr.bf16.mxu0 0
    %7955 = vmatmul.mubr.bf16.gmra.mrb[0].mxu0 %v7894
    %v7956 = vpop.f32.mrb[0].mxu0
    %v7957 = vadd.f32 0.0, %v7956
    %v7958 = vpop.f32.mrb[0].mxu0
    %v7959 = vpop.f32.mrb[0].mxu0
    %v7960 = vadd.f32 0.0, %v7959
    %v7961 = vpop.f32.mrb[0].mxu0
    %7962 = vmatprep.mubr.bf16.mxu0 0
    %7963 = vmatmul.mubr.bf16.gmra.mrb[0].mxu0 %v7897
    %v7964 = vpop.f32.mrb[0].mxu0
    %v7965 = vadd.f32 0.0, %v7964
    %v7966 = vpop.f32.mrb[0].mxu0
    %v7967 = vpop.f32.mrb[0].mxu0
    %v7968 = vadd.f32 0.0, %v7967
    %v7969 = vpop.f32.mrb[0].mxu0
    %7970 = vmatprep.mubr.bf16.mxu0 0
    %7971 = vmatmul.mubr.bf16.gmra.mrb[0].mxu0 %v7900
    %v7972 = vpop.f32.mrb[0].mxu0
    %v7973 = vadd.f32 0.0, %v7972
    %v7974 = vpop.f32.mrb[0].mxu0
    %v7975 = vpop.f32.mrb[0].mxu0
    %v7976 = vadd.f32 0.0, %v7975
    %v7977 = vpop.f32.mrb[0].mxu0
    %7978 = vmatprep.mubr.bf16.mxu0 0
    %7979 = vmatmul.mubr.bf16.gmra.mrb[0].mxu0 %v7903
    %v7980 = vpop.f32.mrb[0].mxu0
    %v7981 = vadd.f32 0.0, %v7980
    %v7982 = vpop.f32.mrb[0].mxu0
    %v7983 = vpop.f32.mrb[0].mxu0
    %v7984 = vadd.f32 0.0, %v7983
    %v7985 = vpop.f32.mrb[0].mxu0
    %7986 = vmatprep.mubr.bf16.mxu0 0
    %7987 = vmatmul.mubr.bf16.gmra.mrb[0].mxu0 %v7906
    %v7988 = vpop.f32.mrb[0].mxu0
    %v7989 = vadd.f32 0.0, %v7988
    %v7990 = vpop.f32.mrb[0].mxu0
    %v7991 = vpop.f32.mrb[0].mxu0
    %v7992 = vadd.f32 0.0, %v7991
    %v7993 = vpop.f32.mrb[0].mxu0
    %7994 = vmatprep.mubr.bf16.mxu0 0
    %7995 = vmatmul.mubr.bf16.gmra.mrb[0].mxu0 %v7909
    %v7996 = vpop.f32.mrb[0].mxu0
    %v7997 = vadd.f32 0.0, %v7996
    %v7998 = vpop.f32.mrb[0].mxu0
    %v7999 = vpop.f32.mrb[0].mxu0
    %v8000 = vadd.f32 0.0, %v7999
    %v8001 = vpop.f32.mrb[0].mxu0
    %8002 = vmatprep.mubr.bf16.mxu0 0
    %8003 = vmatmul.mubr.bf16.gmra.mrb[0].mxu0 %v7912
    %v8004 = vpop.f32.mrb[0].mxu0
    %v8005 = vadd.f32 0.0, %v8004
    %v8006 = vpop.f32.mrb[0].mxu0
    %v8007 = vpop.f32.mrb[0].mxu0
    %v8008 = vadd.f32 0.0, %v8007
    %v8009 = vpop.f32.mrb[0].mxu0
    %8010 = vdwg.mxu0
    %v8011 = vadd.f32 %v6919, %v7949
    %v8012 = vadd.f32 %v6920, %v7952
    %v8013 = vadd.f32 %v6921, %v7957
    %v8014 = vadd.f32 %v6922, %v7960
    %v8015 = vadd.f32 %v6923, %v7965
    %v8016 = vadd.f32 %v6924, %v7968
    %v8017 = vadd.f32 %v6925, %v7973
    %v8018 = vadd.f32 %v6926, %v7976
    %v8019 = vadd.f32 %v6927, %v7981
    %v8020 = vadd.f32 %v6928, %v7984
    %v8021 = vadd.f32 %v6929, %v7989
    %v8022 = vadd.f32 %v6930, %v7992
    %v8023 = vadd.f32 %v6931, %v7997
    %v8024 = vadd.f32 %v6932, %v8000
    %v8025 = vadd.f32 %v6933, %v8005
    %v8026 = vadd.f32 %v6934, %v8008
    %s8027 = scalar_lea.vmem [#allocation7], 5
    %v8028 = vld [vmem:[%s8027] sm:$0x1]
    %v8030 = vlaneseq
    %v8031 = vshrl.u32 %v8030, 7
    %v8032 = vsub.s32 0, %v8031
    %v8033 = vrot.slane %v8028, %v8032
    %8034 = vrot.lane.b32.xlu0 %v8033, 64
    %v8035 = vpop.permute.xlu0 %8034
    %v8037 = vadd.f32 %v7949, %v8035
    %v8038 = vadd.f32 %v7952, %v8035
    %v8039 = vadd.f32 %v7957, %v8035
    %v8040 = vadd.f32 %v7960, %v8035
    %v8041 = vadd.f32 %v7965, %v8035
    %v8042 = vadd.f32 %v7968, %v8035
    %v8043 = vadd.f32 %v7973, %v8035
    %v8044 = vadd.f32 %v7976, %v8035
    %v8045 = vadd.f32 %v7981, %v8035
    %v8046 = vadd.f32 %v7984, %v8035
    %v8047 = vadd.f32 %v7989, %v8035
    %v8048 = vadd.f32 %v7992, %v8035
    %v8049 = vadd.f32 %v7997, %v8035
    %v8050 = vadd.f32 %v8000, %v8035
    %v8051 = vadd.f32 %v8005, %v8035
    %v8052 = vadd.f32 %v8008, %v8035
    %v8053 = vadd.f32 %v8037, %v6961
    %v8054 = vadd.f32 %v8038, %v6962
    %v8055 = vadd.f32 %v8039, %v6963
    %v8056 = vadd.f32 %v8040, %v6964
    %v8057 = vadd.f32 %v8041, %v6965
    %v8058 = vadd.f32 %v8042, %v6966
    %v8059 = vadd.f32 %v8043, %v6967
    %v8060 = vadd.f32 %v8044, %v6968
    %v8061 = vadd.f32 %v8045, %v6969
    %v8062 = vadd.f32 %v8046, %v6970
    %v8063 = vadd.f32 %v8047, %v6971
    %v8064 = vadd.f32 %v8048, %v6972
    %v8065 = vadd.f32 %v8049, %v6973
    %v8066 = vadd.f32 %v8050, %v6974
    %v8067 = vadd.f32 %v8051, %v6975
    %v8068 = vadd.f32 %v8052, %v6976
    %s8069 = scalar_lea.vmem %s4, 288
    %v8070 = vld [vmem:[%s8069] sm:$0xf]
    %v8071 = vld [vmem:[%s8069 + $0x4] sm:$0xf]
    %v8072 = vld [vmem:[%s8069 + $0x8] sm:$0xf]
    %v8073 = vld [vmem:[%s8069 + $0xc] sm:$0xf]
    %s8074 = scalar_lea.vmem %s4, 304
    %v8075 = vld [vmem:[%s8074] sm:$0xf]
    %v8076 = vld [vmem:[%s8074 + $0x4] sm:$0xf]
    %v8077 = vld [vmem:[%s8074 + $0x8] sm:$0xf]
    %v8078 = vld [vmem:[%s8074 + $0xc] sm:$0xf]
    %s8079 = scalar_lea.vmem %s4, 320
    %v8080 = vld [vmem:[%s8079] sm:$0xf]
    %v8081 = vld [vmem:[%s8079 + $0x4] sm:$0xf]
    %v8082 = vld [vmem:[%s8079 + $0x8] sm:$0xf]
    %v8083 = vld [vmem:[%s8079 + $0xc] sm:$0xf]
    %s8084 = scalar_lea.vmem [#allocation4], 6
    %v8085 = vld [vmem:[%s8084] sm:$0x1]
    %v8087 = vrot.slane %v8068, 4
    %v8104 = vrot.slane %v8053, 4
    %v8105 = vrot.slane %v8054, 4
    %v8106 = vsel %vm3530, %v8104, %v8105
    %v8107 = vrot.slane %v8055, 4
    %v8108 = vsel %vm3530, %v8105, %v8107
    %v8109 = vrot.slane %v8056, 4
    %v8110 = vsel %vm3530, %v8107, %v8109
    %v8111 = vrot.slane %v8057, 4
    %v8112 = vsel %vm3530, %v8109, %v8111
    %v8113 = vrot.slane %v8058, 4
    %v8114 = vsel %vm3530, %v8111, %v8113
    %v8115 = vrot.slane %v8059, 4
    %v8116 = vsel %vm3530, %v8113, %v8115
    %v8117 = vrot.slane %v8060, 4
    %v8118 = vsel %vm3530, %v8115, %v8117
    %v8119 = vrot.slane %v8061, 4
    %v8120 = vsel %vm3530, %v8117, %v8119
    %v8121 = vrot.slane %v8062, 4
    %v8122 = vsel %vm3530, %v8119, %v8121
    %v8123 = vrot.slane %v8063, 4
    %v8124 = vsel %vm3530, %v8121, %v8123
    %v8125 = vrot.slane %v8064, 4
    %v8126 = vsel %vm3530, %v8123, %v8125
    %v8127 = vrot.slane %v8065, 4
    %v8128 = vsel %vm3530, %v8125, %v8127
    %v8129 = vrot.slane %v8066, 4
    %v8130 = vsel %vm3530, %v8127, %v8129
    %v8131 = vrot.slane %v8067, 4
    %v8132 = vsel %vm3530, %v8129, %v8131
    %v8133 = vsel %vm3530, %v8131, %v8087
    %v8150 = vsel %vm3530, %v8087, %v8104
    %v8151 = vsel %vm3642, %v8150, 0.0
    %v8152 = vsel %vm3643, %v8106, 0.0
    %v8153 = vsel %vm3644, %v8108, 0.0
    %v8154 = vsel %vm3645, %v8110, 0.0
    %v8155 = vsel %vm3646, %v8112, 0.0
    %v8156 = vsel %vm3647, %v8114, 0.0
    %v8157 = vsel %vm3648, %v8116, 0.0
    %v8158 = vsel %vm3649, %v8118, 0.0
    %v8159 = vsel %vm3650, %v8120, 0.0
    %v8160 = vsel %vm3651, %v8122, 0.0
    %v8161 = vsel %vm3652, %v8124, 0.0
    %v8162 = vsel %vm3653, %v8126, 0.0
    %v8163 = vsel %vm3654, %v8128, 0.0
    %v8164 = vsel %vm3655, %v8130, 0.0
    %v8165 = vsel %vm3656, %v8132, 0.0
    %v8166 = vsel %vm3657, %v8133, 0.0
    %v8167 = vpack.c.bf16 %v8152, %v8151
    %v8168 = vpack.c.bf16 %v8154, %v8153
    %v8169 = vpack.c.bf16 %v8156, %v8155
    %v8170 = vpack.c.bf16 %v8158, %v8157
    %v8171 = vpack.c.bf16 %v8160, %v8159
    %v8172 = vpack.c.bf16 %v8162, %v8161
    %v8173 = vpack.c.bf16 %v8164, %v8163
    %v8174 = vpack.c.bf16 %v8166, %v8165
    %v8175 = vpack.c.bf16 %v8054, %v8053
    %v8176 = vpack.c.bf16 %v8056, %v8055
    %v8177 = vpack.c.bf16 %v8058, %v8057
    %v8178 = vpack.c.bf16 %v8060, %v8059
    %v8179 = vpack.c.bf16 %v8062, %v8061
    %v8180 = vpack.c.bf16 %v8064, %v8063
    %v8181 = vpack.c.bf16 %v8066, %v8065
    %v8182 = vpack.c.bf16 %v8068, %v8067
    %8191 = vrot.lane.b32.xlu0 %v8175, 64
    %v8192 = vpop.permute.xlu0 %8191
    %8193 = vrot.lane.b32.xlu0 %v8176, 64
    %v8194 = vpop.permute.xlu0 %8193
    %8195 = vrot.lane.b32.xlu0 %v8177, 64
    %v8196 = vpop.permute.xlu0 %8195
    %8197 = vrot.lane.b32.xlu0 %v8178, 64
    %v8198 = vpop.permute.xlu0 %8197
    %8199 = vrot.lane.b32.xlu0 %v8179, 64
    %v8200 = vpop.permute.xlu0 %8199
    %8201 = vrot.lane.b32.xlu0 %v8180, 64
    %v8202 = vpop.permute.xlu0 %8201
    %8203 = vrot.lane.b32.xlu0 %v8181, 64
    %v8204 = vpop.permute.xlu0 %8203
    %8205 = vrot.lane.b32.xlu0 %v8182, 64
    %v8206 = vpop.permute.xlu0 %8205
    %v8211 = vunpack.c.l.b16 %v8075
    %v8212 = vunpack.c.l.b16 %v8076
    %v8213 = vunpack.c.l.b16 %v8077
    %v8214 = vunpack.c.l.b16 %v8078
    %v8215 = vpack.c.b16 %v8212, %v8211
    %v8216 = vpack.c.b16 %v8214, %v8213
    %v8220 = vsel %vm1252, %v8192, 0
    %v8223 = vsel %vm1252, %v8194, 0
    %v8226 = vsel %vm1252, %v8196, 0
    %v8229 = vsel %vm1252, %v8198, 0
    %v8232 = vsel %vm1252, %v8200, 0
    %v8235 = vsel %vm1252, %v8202, 0
    %v8238 = vsel %vm1252, %v8204, 0
    %v8241 = vsel %vm1252, %v8206, 0
    %8243 = vmatprep.subr.bf16.mxu0 0
    %8244 = vmatpush1.bf16.msra.mxu0 %v8215
    %8245 = vmatprep.subr.bf16.mxu0 0
    %8246 = vmatpush1.bf16.msra.mxu0 %v8216
    %8247 = vmatprep.subr.bf16.mxu0 0
    %8248 = vmatpush1.bf16.msra.mxu0 0
    %8249 = vmatprep.subr.bf16.mxu0 0
    %8250 = vmatpush1.bf16.msra.mxu0 0
    %8251 = vmatprep.subr.bf16.mxu0 0
    %8252 = vmatpush1.bf16.msra.mxu0 0
    %8253 = vmatprep.subr.bf16.mxu0 0
    %8254 = vmatpush1.bf16.msra.mxu0 0
    %8255 = vmatprep.subr.bf16.mxu0 0
    %8256 = vmatpush1.bf16.msra.mxu0 0
    %8257 = vmatprep.subr.bf16.mxu0 0
    %8258 = vmatpush1.bf16.msra.mxu0 0
    %8259 = vmatprep.subr.bf16.mxu0 0
    %8260 = vmatpush1.bf16.msra.mxu0 0
    %8261 = vmatprep.subr.bf16.mxu0 0
    %8262 = vmatpush1.bf16.msra.mxu0 0
    %8263 = vmatprep.subr.bf16.mxu0 0
    %8264 = vmatpush1.bf16.msra.mxu0 0
    %8265 = vmatprep.subr.bf16.mxu0 0
    %8266 = vmatpush1.bf16.msra.mxu0 0
    %8267 = vmatprep.subr.bf16.mxu0 0
    %8268 = vmatpush1.bf16.msra.mxu0 0
    %8269 = vmatprep.subr.bf16.mxu0 0
    %8270 = vmatpush1.bf16.msra.mxu0 0
    %8271 = vmatprep.subr.bf16.mxu0 0
    %8272 = vmatpush1.bf16.msra.mxu0 0
    %8273 = vmatprep.subr.bf16.mxu0 0
    %8274 = vmatpush1.bf16.msra.mxu0 0
    %8275 = vmatprep.mubr.bf16.mxu0 0
    %8276 = vmatmul.mubr.bf16.gmra.mrb[0].mxu0 %v8220
    %v8277 = vpop.f32.mrb[0].mxu0
    %v8278 = vadd.f32 0.0, %v8277
    %v8279 = vpop.f32.mrb[0].mxu0
    %v8280 = vpop.f32.mrb[0].mxu0
    %v8281 = vadd.f32 0.0, %v8280
    %v8282 = vpop.f32.mrb[0].mxu0
    %8283 = vmatprep.mubr.bf16.mxu0 0
    %8284 = vmatmul.mubr.bf16.gmra.mrb[0].mxu0 %v8223
    %v8285 = vpop.f32.mrb[0].mxu0
    %v8286 = vadd.f32 0.0, %v8285
    %v8287 = vpop.f32.mrb[0].mxu0
    %v8288 = vpop.f32.mrb[0].mxu0
    %v8289 = vadd.f32 0.0, %v8288
    %v8290 = vpop.f32.mrb[0].mxu0
    %8291 = vmatprep.mubr.bf16.mxu0 0
    %8292 = vmatmul.mubr.bf16.gmra.mrb[0].mxu0 %v8226
    %v8293 = vpop.f32.mrb[0].mxu0
    %v8294 = vadd.f32 0.0, %v8293
    %v8295 = vpop.f32.mrb[0].mxu0
    %v8296 = vpop.f32.mrb[0].mxu0
    %v8297 = vadd.f32 0.0, %v8296
    %v8298 = vpop.f32.mrb[0].mxu0
    %8299 = vmatprep.mubr.bf16.mxu0 0
    %8300 = vmatmul.mubr.bf16.gmra.mrb[0].mxu0 %v8229
    %v8301 = vpop.f32.mrb[0].mxu0
    %v8302 = vadd.f32 0.0, %v8301
    %v8303 = vpop.f32.mrb[0].mxu0
    %v8304 = vpop.f32.mrb[0].mxu0
    %v8305 = vadd.f32 0.0, %v8304
    %v8306 = vpop.f32.mrb[0].mxu0
    %8307 = vmatprep.mubr.bf16.mxu0 0
    %8308 = vmatmul.mubr.bf16.gmra.mrb[0].mxu0 %v8232
    %v8309 = vpop.f32.mrb[0].mxu0
    %v8310 = vadd.f32 0.0, %v8309
    %v8311 = vpop.f32.mrb[0].mxu0
    %v8312 = vpop.f32.mrb[0].mxu0
    %v8313 = vadd.f32 0.0, %v8312
    %v8314 = vpop.f32.mrb[0].mxu0
    %8315 = vmatprep.mubr.bf16.mxu0 0
    %8316 = vmatmul.mubr.bf16.gmra.mrb[0].mxu0 %v8235
    %v8317 = vpop.f32.mrb[0].mxu0
    %v8318 = vadd.f32 0.0, %v8317
    %v8319 = vpop.f32.mrb[0].mxu0
    %v8320 = vpop.f32.mrb[0].mxu0
    %v8321 = vadd.f32 0.0, %v8320
    %v8322 = vpop.f32.mrb[0].mxu0
    %8323 = vmatprep.mubr.bf16.mxu0 0
    %8324 = vmatmul.mubr.bf16.gmra.mrb[0].mxu0 %v8238
    %v8325 = vpop.f32.mrb[0].mxu0
    %v8326 = vadd.f32 0.0, %v8325
    %v8327 = vpop.f32.mrb[0].mxu0
    %v8328 = vpop.f32.mrb[0].mxu0
    %v8329 = vadd.f32 0.0, %v8328
    %v8330 = vpop.f32.mrb[0].mxu0
    %8331 = vmatprep.mubr.bf16.mxu0 0
    %8332 = vmatmul.mubr.bf16.gmra.mrb[0].mxu0 %v8241
    %v8333 = vpop.f32.mrb[0].mxu0
    %v8334 = vadd.f32 0.0, %v8333
    %v8335 = vpop.f32.mrb[0].mxu0
    %v8336 = vpop.f32.mrb[0].mxu0
    %v8337 = vadd.f32 0.0, %v8336
    %v8338 = vpop.f32.mrb[0].mxu0
    %8339 = vdwg.mxu0
    %8348 = vrot.lane.b32.xlu0 %v8167, 64
    %v8349 = vpop.permute.xlu0 %8348
    %8350 = vrot.lane.b32.xlu0 %v8168, 64
    %v8351 = vpop.permute.xlu0 %8350
    %8352 = vrot.lane.b32.xlu0 %v8169, 64
    %v8353 = vpop.permute.xlu0 %8352
    %8354 = vrot.lane.b32.xlu0 %v8170, 64
    %v8355 = vpop.permute.xlu0 %8354
    %8356 = vrot.lane.b32.xlu0 %v8171, 64
    %v8357 = vpop.permute.xlu0 %8356
    %8358 = vrot.lane.b32.xlu0 %v8172, 64
    %v8359 = vpop.permute.xlu0 %8358
    %8360 = vrot.lane.b32.xlu0 %v8173, 64
    %v8361 = vpop.permute.xlu0 %8360
    %8362 = vrot.lane.b32.xlu0 %v8174, 64
    %v8363 = vpop.permute.xlu0 %8362
    %v8368 = vunpack.c.l.b16 %v8070
    %v8369 = vunpack.c.l.b16 %v8071
    %v8370 = vunpack.c.l.b16 %v8072
    %v8371 = vunpack.c.l.b16 %v8073
    %v8372 = vpack.c.b16 %v8369, %v8368
    %v8373 = vpack.c.b16 %v8371, %v8370
    %v8377 = vsel %vm1252, %v8349, 0
    %v8380 = vsel %vm1252, %v8351, 0
    %v8383 = vsel %vm1252, %v8353, 0
    %v8386 = vsel %vm1252, %v8355, 0
    %v8389 = vsel %vm1252, %v8357, 0
    %v8392 = vsel %vm1252, %v8359, 0
    %v8395 = vsel %vm1252, %v8361, 0
    %v8398 = vsel %vm1252, %v8363, 0
    %8400 = vmatprep.subr.bf16.mxu0 0
    %8401 = vmatpush1.bf16.msra.mxu0 %v8372
    %8402 = vmatprep.subr.bf16.mxu0 0
    %8403 = vmatpush1.bf16.msra.mxu0 %v8373
    %8404 = vmatprep.subr.bf16.mxu0 0
    %8405 = vmatpush1.bf16.msra.mxu0 0
    %8406 = vmatprep.subr.bf16.mxu0 0
    %8407 = vmatpush1.bf16.msra.mxu0 0
    %8408 = vmatprep.subr.bf16.mxu0 0
    %8409 = vmatpush1.bf16.msra.mxu0 0
    %8410 = vmatprep.subr.bf16.mxu0 0
    %8411 = vmatpush1.bf16.msra.mxu0 0
    %8412 = vmatprep.subr.bf16.mxu0 0
    %8413 = vmatpush1.bf16.msra.mxu0 0
    %8414 = vmatprep.subr.bf16.mxu0 0
    %8415 = vmatpush1.bf16.msra.mxu0 0
    %8416 = vmatprep.subr.bf16.mxu0 0
    %8417 = vmatpush1.bf16.msra.mxu0 0
    %8418 = vmatprep.subr.bf16.mxu0 0
    %8419 = vmatpush1.bf16.msra.mxu0 0
    %8420 = vmatprep.subr.bf16.mxu0 0
    %8421 = vmatpush1.bf16.msra.mxu0 0
    %8422 = vmatprep.subr.bf16.mxu0 0
    %8423 = vmatpush1.bf16.msra.mxu0 0
    %8424 = vmatprep.subr.bf16.mxu0 0
    %8425 = vmatpush1.bf16.msra.mxu0 0
    %8426 = vmatprep.subr.bf16.mxu0 0
    %8427 = vmatpush1.bf16.msra.mxu0 0
    %8428 = vmatprep.subr.bf16.mxu0 0
    %8429 = vmatpush1.bf16.msra.mxu0 0
    %8430 = vmatprep.subr.bf16.mxu0 0
    %8431 = vmatpush1.bf16.msra.mxu0 0
    %8432 = vmatprep.mubr.bf16.mxu0 0
    %8433 = vmatmul.mubr.bf16.gmra.mrb[0].mxu0 %v8377
    %v8434 = vpop.f32.mrb[0].mxu0
    %v8435 = vadd.f32 %v8278, %v8434
    %v8436 = vpop.f32.mrb[0].mxu0
    %v8437 = vpop.f32.mrb[0].mxu0
    %v8438 = vadd.f32 %v8281, %v8437
    %v8439 = vpop.f32.mrb[0].mxu0
    %8440 = vmatprep.mubr.bf16.mxu0 0
    %8441 = vmatmul.mubr.bf16.gmra.mrb[0].mxu0 %v8380
    %v8442 = vpop.f32.mrb[0].mxu0
    %v8443 = vadd.f32 %v8286, %v8442
    %v8444 = vpop.f32.mrb[0].mxu0
    %v8445 = vpop.f32.mrb[0].mxu0
    %v8446 = vadd.f32 %v8289, %v8445
    %v8447 = vpop.f32.mrb[0].mxu0
    %8448 = vmatprep.mubr.bf16.mxu0 0
    %8449 = vmatmul.mubr.bf16.gmra.mrb[0].mxu0 %v8383
    %v8450 = vpop.f32.mrb[0].mxu0
    %v8451 = vadd.f32 %v8294, %v8450
    %v8452 = vpop.f32.mrb[0].mxu0
    %v8453 = vpop.f32.mrb[0].mxu0
    %v8454 = vadd.f32 %v8297, %v8453
    %v8455 = vpop.f32.mrb[0].mxu0
    %8456 = vmatprep.mubr.bf16.mxu0 0
    %8457 = vmatmul.mubr.bf16.gmra.mrb[0].mxu0 %v8386
    %v8458 = vpop.f32.mrb[0].mxu0
    %v8459 = vadd.f32 %v8302, %v8458
    %v8460 = vpop.f32.mrb[0].mxu0
    %v8461 = vpop.f32.mrb[0].mxu0
    %v8462 = vadd.f32 %v8305, %v8461
    %v8463 = vpop.f32.mrb[0].mxu0
    %8464 = vmatprep.mubr.bf16.mxu0 0
    %8465 = vmatmul.mubr.bf16.gmra.mrb[0].mxu0 %v8389
    %v8466 = vpop.f32.mrb[0].mxu0
    %v8467 = vadd.f32 %v8310, %v8466
    %v8468 = vpop.f32.mrb[0].mxu0
    %v8469 = vpop.f32.mrb[0].mxu0
    %v8470 = vadd.f32 %v8313, %v8469
    %v8471 = vpop.f32.mrb[0].mxu0
    %8472 = vmatprep.mubr.bf16.mxu0 0
    %8473 = vmatmul.mubr.bf16.gmra.mrb[0].mxu0 %v8392
    %v8474 = vpop.f32.mrb[0].mxu0
    %v8475 = vadd.f32 %v8318, %v8474
    %v8476 = vpop.f32.mrb[0].mxu0
    %v8477 = vpop.f32.mrb[0].mxu0
    %v8478 = vadd.f32 %v8321, %v8477
    %v8479 = vpop.f32.mrb[0].mxu0
    %8480 = vmatprep.mubr.bf16.mxu0 0
    %8481 = vmatmul.mubr.bf16.gmra.mrb[0].mxu0 %v8395
    %v8482 = vpop.f32.mrb[0].mxu0
    %v8483 = vadd.f32 %v8326, %v8482
    %v8484 = vpop.f32.mrb[0].mxu0
    %v8485 = vpop.f32.mrb[0].mxu0
    %v8486 = vadd.f32 %v8329, %v8485
    %v8487 = vpop.f32.mrb[0].mxu0
    %8488 = vmatprep.mubr.bf16.mxu0 0
    %8489 = vmatmul.mubr.bf16.gmra.mrb[0].mxu0 %v8398
    %v8490 = vpop.f32.mrb[0].mxu0
    %v8491 = vadd.f32 %v8334, %v8490
    %v8492 = vpop.f32.mrb[0].mxu0
    %v8493 = vpop.f32.mrb[0].mxu0
    %v8494 = vadd.f32 %v8337, %v8493
    %v8495 = vpop.f32.mrb[0].mxu0
    %8496 = vdwg.mxu0
    %v8497 = vsel %vm4084, %v8106, 0.0
    %v8498 = vsel %vm4085, %v8108, 0.0
    %v8499 = vsel %vm4086, %v8110, 0.0
    %v8500 = vsel %vm4087, %v8112, 0.0
    %v8501 = vsel %vm4088, %v8114, 0.0
    %v8502 = vsel %vm4089, %v8116, 0.0
    %v8503 = vsel %vm4090, %v8118, 0.0
    %v8504 = vsel %vm4091, %v8120, 0.0
    %v8505 = vsel %vm4092, %v8122, 0.0
    %v8506 = vsel %vm4093, %v8124, 0.0
    %v8507 = vsel %vm4094, %v8126, 0.0
    %v8508 = vsel %vm4095, %v8128, 0.0
    %v8509 = vsel %vm4096, %v8130, 0.0
    %v8510 = vsel %vm4097, %v8132, 0.0
    %v8511 = vsel %vm4098, %v8133, 0.0
    %v8512 = vsel %vm4099, %v8150, 0.0
    %v8513 = vpack.c.bf16 %v8498, %v8497
    %v8514 = vpack.c.bf16 %v8500, %v8499
    %v8515 = vpack.c.bf16 %v8502, %v8501
    %v8516 = vpack.c.bf16 %v8504, %v8503
    %v8517 = vpack.c.bf16 %v8506, %v8505
    %v8518 = vpack.c.bf16 %v8508, %v8507
    %v8519 = vpack.c.bf16 %v8510, %v8509
    %v8520 = vpack.c.bf16 %v8512, %v8511
    %8529 = vrot.lane.b32.xlu0 %v8513, 64
    %v8530 = vpop.permute.xlu0 %8529
    %8531 = vrot.lane.b32.xlu0 %v8514, 64
    %v8532 = vpop.permute.xlu0 %8531
    %8533 = vrot.lane.b32.xlu0 %v8515, 64
    %v8534 = vpop.permute.xlu0 %8533
    %8535 = vrot.lane.b32.xlu0 %v8516, 64
    %v8536 = vpop.permute.xlu0 %8535
    %8537 = vrot.lane.b32.xlu0 %v8517, 64
    %v8538 = vpop.permute.xlu0 %8537
    %8539 = vrot.lane.b32.xlu0 %v8518, 64
    %v8540 = vpop.permute.xlu0 %8539
    %8541 = vrot.lane.b32.xlu0 %v8519, 64
    %v8542 = vpop.permute.xlu0 %8541
    %8543 = vrot.lane.b32.xlu0 %v8520, 64
    %v8544 = vpop.permute.xlu0 %8543
    %v8549 = vunpack.c.l.b16 %v8080
    %v8550 = vunpack.c.l.b16 %v8081
    %v8551 = vunpack.c.l.b16 %v8082
    %v8552 = vunpack.c.l.b16 %v8083
    %v8553 = vpack.c.b16 %v8550, %v8549
    %v8554 = vpack.c.b16 %v8552, %v8551
    %v8558 = vsel %vm1252, %v8530, 0
    %v8561 = vsel %vm1252, %v8532, 0
    %v8564 = vsel %vm1252, %v8534, 0
    %v8567 = vsel %vm1252, %v8536, 0
    %v8570 = vsel %vm1252, %v8538, 0
    %v8573 = vsel %vm1252, %v8540, 0
    %v8576 = vsel %vm1252, %v8542, 0
    %v8579 = vsel %vm1252, %v8544, 0
    %8581 = vmatprep.subr.bf16.mxu0 0
    %8582 = vmatpush1.bf16.msra.mxu0 %v8553
    %8583 = vmatprep.subr.bf16.mxu0 0
    %8584 = vmatpush1.bf16.msra.mxu0 %v8554
    %8585 = vmatprep.subr.bf16.mxu0 0
    %8586 = vmatpush1.bf16.msra.mxu0 0
    %8587 = vmatprep.subr.bf16.mxu0 0
    %8588 = vmatpush1.bf16.msra.mxu0 0
    %8589 = vmatprep.subr.bf16.mxu0 0
    %8590 = vmatpush1.bf16.msra.mxu0 0
    %8591 = vmatprep.subr.bf16.mxu0 0
    %8592 = vmatpush1.bf16.msra.mxu0 0
    %8593 = vmatprep.subr.bf16.mxu0 0
    %8594 = vmatpush1.bf16.msra.mxu0 0
    %8595 = vmatprep.subr.bf16.mxu0 0
    %8596 = vmatpush1.bf16.msra.mxu0 0
    %8597 = vmatprep.subr.bf16.mxu0 0
    %8598 = vmatpush1.bf16.msra.mxu0 0
    %8599 = vmatprep.subr.bf16.mxu0 0
    %8600 = vmatpush1.bf16.msra.mxu0 0
    %8601 = vmatprep.subr.bf16.mxu0 0
    %8602 = vmatpush1.bf16.msra.mxu0 0
    %8603 = vmatprep.subr.bf16.mxu0 0
    %8604 = vmatpush1.bf16.msra.mxu0 0
    %8605 = vmatprep.subr.bf16.mxu0 0
    %8606 = vmatpush1.bf16.msra.mxu0 0
    %8607 = vmatprep.subr.bf16.mxu0 0
    %8608 = vmatpush1.bf16.msra.mxu0 0
    %8609 = vmatprep.subr.bf16.mxu0 0
    %8610 = vmatpush1.bf16.msra.mxu0 0
    %8611 = vmatprep.subr.bf16.mxu0 0
    %8612 = vmatpush1.bf16.msra.mxu0 0
    %8613 = vmatprep.mubr.bf16.mxu0 0
    %8614 = vmatmul.mubr.bf16.gmra.mrb[0].mxu0 %v8558
    %v8615 = vpop.f32.mrb[0].mxu0
    %v8616 = vadd.f32 0.0, %v8615
    %v8617 = vpop.f32.mrb[0].mxu0
    %v8618 = vpop.f32.mrb[0].mxu0
    %v8619 = vadd.f32 0.0, %v8618
    %v8620 = vpop.f32.mrb[0].mxu0
    %8621 = vmatprep.mubr.bf16.mxu0 0
    %8622 = vmatmul.mubr.bf16.gmra.mrb[0].mxu0 %v8561
    %v8623 = vpop.f32.mrb[0].mxu0
    %v8624 = vadd.f32 0.0, %v8623
    %v8625 = vpop.f32.mrb[0].mxu0
    %v8626 = vpop.f32.mrb[0].mxu0
    %v8627 = vadd.f32 0.0, %v8626
    %v8628 = vpop.f32.mrb[0].mxu0
    %8629 = vmatprep.mubr.bf16.mxu0 0
    %8630 = vmatmul.mubr.bf16.gmra.mrb[0].mxu0 %v8564
    %v8631 = vpop.f32.mrb[0].mxu0
    %v8632 = vadd.f32 0.0, %v8631
    %v8633 = vpop.f32.mrb[0].mxu0
    %v8634 = vpop.f32.mrb[0].mxu0
    %v8635 = vadd.f32 0.0, %v8634
    %v8636 = vpop.f32.mrb[0].mxu0
    %8637 = vmatprep.mubr.bf16.mxu0 0
    %8638 = vmatmul.mubr.bf16.gmra.mrb[0].mxu0 %v8567
    %v8639 = vpop.f32.mrb[0].mxu0
    %v8640 = vadd.f32 0.0, %v8639
    %v8641 = vpop.f32.mrb[0].mxu0
    %v8642 = vpop.f32.mrb[0].mxu0
    %v8643 = vadd.f32 0.0, %v8642
    %v8644 = vpop.f32.mrb[0].mxu0
    %8645 = vmatprep.mubr.bf16.mxu0 0
    %8646 = vmatmul.mubr.bf16.gmra.mrb[0].mxu0 %v8570
    %v8647 = vpop.f32.mrb[0].mxu0
    %v8648 = vadd.f32 0.0, %v8647
    %v8649 = vpop.f32.mrb[0].mxu0
    %v8650 = vpop.f32.mrb[0].mxu0
    %v8651 = vadd.f32 0.0, %v8650
    %v8652 = vpop.f32.mrb[0].mxu0
    %8653 = vmatprep.mubr.bf16.mxu0 0
    %8654 = vmatmul.mubr.bf16.gmra.mrb[0].mxu0 %v8573
    %v8655 = vpop.f32.mrb[0].mxu0
    %v8656 = vadd.f32 0.0, %v8655
    %v8657 = vpop.f32.mrb[0].mxu0
    %v8658 = vpop.f32.mrb[0].mxu0
    %v8659 = vadd.f32 0.0, %v8658
    %v8660 = vpop.f32.mrb[0].mxu0
    %8661 = vmatprep.mubr.bf16.mxu0 0
    %8662 = vmatmul.mubr.bf16.gmra.mrb[0].mxu0 %v8576
    %v8663 = vpop.f32.mrb[0].mxu0
    %v8664 = vadd.f32 0.0, %v8663
    %v8665 = vpop.f32.mrb[0].mxu0
    %v8666 = vpop.f32.mrb[0].mxu0
    %v8667 = vadd.f32 0.0, %v8666
    %v8668 = vpop.f32.mrb[0].mxu0
    %8669 = vmatprep.mubr.bf16.mxu0 0
    %8670 = vmatmul.mubr.bf16.gmra.mrb[0].mxu0 %v8579
    %v8671 = vpop.f32.mrb[0].mxu0
    %v8672 = vadd.f32 0.0, %v8671
    %v8673 = vpop.f32.mrb[0].mxu0
    %v8674 = vpop.f32.mrb[0].mxu0
    %v8675 = vadd.f32 0.0, %v8674
    %v8676 = vpop.f32.mrb[0].mxu0
    %8677 = vdwg.mxu0
    %v8678 = vadd.f32 %v8435, %v8616
    %v8679 = vadd.f32 %v8438, %v8619
    %v8680 = vadd.f32 %v8443, %v8624
    %v8681 = vadd.f32 %v8446, %v8627
    %v8682 = vadd.f32 %v8451, %v8632
    %v8683 = vadd.f32 %v8454, %v8635
    %v8684 = vadd.f32 %v8459, %v8640
    %v8685 = vadd.f32 %v8462, %v8643
    %v8686 = vadd.f32 %v8467, %v8648
    %v8687 = vadd.f32 %v8470, %v8651
    %v8688 = vadd.f32 %v8475, %v8656
    %v8689 = vadd.f32 %v8478, %v8659
    %v8690 = vadd.f32 %v8483, %v8664
    %v8691 = vadd.f32 %v8486, %v8667
    %v8692 = vadd.f32 %v8491, %v8672
    %v8693 = vadd.f32 %v8494, %v8675
    %v8695 = vlaneseq
    %v8696 = vshrl.u32 %v8695, 7
    %v8697 = vsub.s32 0, %v8696
    %v8698 = vrot.slane %v8085, %v8697
    %v8700 = vadd.f32 %v8678, %v8698
    %v8701 = vadd.f32 %v8679, %v8698
    %v8702 = vadd.f32 %v8680, %v8698
    %v8703 = vadd.f32 %v8681, %v8698
    %v8704 = vadd.f32 %v8682, %v8698
    %v8705 = vadd.f32 %v8683, %v8698
    %v8706 = vadd.f32 %v8684, %v8698
    %v8707 = vadd.f32 %v8685, %v8698
    %v8708 = vadd.f32 %v8686, %v8698
    %v8709 = vadd.f32 %v8687, %v8698
    %v8710 = vadd.f32 %v8688, %v8698
    %v8711 = vadd.f32 %v8689, %v8698
    %v8712 = vadd.f32 %v8690, %v8698
    %v8713 = vadd.f32 %v8691, %v8698
    %v8714 = vadd.f32 %v8692, %v8698
    %v8715 = vadd.f32 %v8693, %v8698
    %v8716 = vtanh.pop %v8700
    %v8717 = vtanh.pop %v8701
    %v8718 = vtanh.pop %v8702
    %v8719 = vtanh.pop %v8703
    %v8720 = vtanh.pop %v8704
    %v8721 = vtanh.pop %v8705
    %v8722 = vtanh.pop %v8706
    %v8723 = vtanh.pop %v8707
    %v8724 = vtanh.pop %v8708
    %v8725 = vtanh.pop %v8709
    %v8726 = vtanh.pop %v8710
    %v8727 = vtanh.pop %v8711
    %v8728 = vtanh.pop %v8712
    %v8729 = vtanh.pop %v8713
    %v8730 = vtanh.pop %v8714
    %v8731 = vtanh.pop %v8715
    %v8732 = vxor.u32 %v8700, 2147483648
    %v8733 = vxor.u32 %v8701, 2147483648
    %v8734 = vxor.u32 %v8702, 2147483648
    %v8735 = vxor.u32 %v8703, 2147483648
    %v8736 = vxor.u32 %v8704, 2147483648
    %v8737 = vxor.u32 %v8705, 2147483648
    %v8738 = vxor.u32 %v8706, 2147483648
    %v8739 = vxor.u32 %v8707, 2147483648
    %v8740 = vxor.u32 %v8708, 2147483648
    %v8741 = vxor.u32 %v8709, 2147483648
    %v8742 = vxor.u32 %v8710, 2147483648
    %v8743 = vxor.u32 %v8711, 2147483648
    %v8744 = vxor.u32 %v8712, 2147483648
    %v8745 = vxor.u32 %v8713, 2147483648
    %v8746 = vxor.u32 %v8714, 2147483648
    %v8747 = vxor.u32 %v8715, 2147483648
    %v8748 = vmul.f32 %v8732, 1.442695
    %v8749 = vpow.pop %v8748
    %v8750 = vmul.f32 %v8733, 1.442695
    %v8751 = vpow.pop %v8750
    %v8752 = vmul.f32 %v8734, 1.442695
    %v8753 = vpow.pop %v8752
    %v8754 = vmul.f32 %v8735, 1.442695
    %v8755 = vpow.pop %v8754
    %v8756 = vmul.f32 %v8736, 1.442695
    %v8757 = vpow.pop %v8756
    %v8758 = vmul.f32 %v8737, 1.442695
    %v8759 = vpow.pop %v8758
    %v8760 = vmul.f32 %v8738, 1.442695
    %v8761 = vpow.pop %v8760
    %v8762 = vmul.f32 %v8739, 1.442695
    %v8763 = vpow.pop %v8762
    %v8764 = vmul.f32 %v8740, 1.442695
    %v8765 = vpow.pop %v8764
    %v8766 = vmul.f32 %v8741, 1.442695
    %v8767 = vpow.pop %v8766
    %v8768 = vmul.f32 %v8742, 1.442695
    %v8769 = vpow.pop %v8768
    %v8770 = vmul.f32 %v8743, 1.442695
    %v8771 = vpow.pop %v8770
    %v8772 = vmul.f32 %v8744, 1.442695
    %v8773 = vpow.pop %v8772
    %v8774 = vmul.f32 %v8745, 1.442695
    %v8775 = vpow.pop %v8774
    %v8776 = vmul.f32 %v8746, 1.442695
    %v8777 = vpow.pop %v8776
    %v8778 = vmul.f32 %v8747, 1.442695
    %v8779 = vpow.pop %v8778
    %v8780 = vadd.f32 %v8749, 1.0
    %v8781 = vadd.f32 %v8751, 1.0
    %v8782 = vadd.f32 %v8753, 1.0
    %v8783 = vadd.f32 %v8755, 1.0
    %v8784 = vadd.f32 %v8757, 1.0
    %v8785 = vadd.f32 %v8759, 1.0
    %v8786 = vadd.f32 %v8761, 1.0
    %v8787 = vadd.f32 %v8763, 1.0
    %v8788 = vadd.f32 %v8765, 1.0
    %v8789 = vadd.f32 %v8767, 1.0
    %v8790 = vadd.f32 %v8769, 1.0
    %v8791 = vadd.f32 %v8771, 1.0
    %v8792 = vadd.f32 %v8773, 1.0
    %v8793 = vadd.f32 %v8775, 1.0
    %v8794 = vadd.f32 %v8777, 1.0
    %v8795 = vadd.f32 %v8779, 1.0
    %v8796 = vrcp.pop %v8780
    %v8797 = vmul.f32 1.0, %v8796
    %v8798 = vrcp.pop %v8781
    %v8799 = vmul.f32 1.0, %v8798
    %v8800 = vrcp.pop %v8782
    %v8801 = vmul.f32 1.0, %v8800
    %v8802 = vrcp.pop %v8783
    %v8803 = vmul.f32 1.0, %v8802
    %v8804 = vrcp.pop %v8784
    %v8805 = vmul.f32 1.0, %v8804
    %v8806 = vrcp.pop %v8785
    %v8807 = vmul.f32 1.0, %v8806
    %v8808 = vrcp.pop %v8786
    %v8809 = vmul.f32 1.0, %v8808
    %v8810 = vrcp.pop %v8787
    %v8811 = vmul.f32 1.0, %v8810
    %v8812 = vrcp.pop %v8788
    %v8813 = vmul.f32 1.0, %v8812
    %v8814 = vrcp.pop %v8789
    %v8815 = vmul.f32 1.0, %v8814
    %v8816 = vrcp.pop %v8790
    %v8817 = vmul.f32 1.0, %v8816
    %v8818 = vrcp.pop %v8791
    %v8819 = vmul.f32 1.0, %v8818
    %v8820 = vrcp.pop %v8792
    %v8821 = vmul.f32 1.0, %v8820
    %v8822 = vrcp.pop %v8793
    %v8823 = vmul.f32 1.0, %v8822
    %v8824 = vrcp.pop %v8794
    %v8825 = vmul.f32 1.0, %v8824
    %v8826 = vrcp.pop %v8795
    %v8827 = vmul.f32 1.0, %v8826
    %8844 = vrot.lane.b32.xlu0 %v8797, 96
    %v8845 = vpop.permute.xlu0 %8844
    %8846 = vrot.lane.b32.xlu0 %v8799, 96
    %v8847 = vpop.permute.xlu0 %8846
    %8848 = vrot.lane.b32.xlu0 %v8801, 96
    %v8849 = vpop.permute.xlu0 %8848
    %8850 = vrot.lane.b32.xlu0 %v8803, 96
    %v8851 = vpop.permute.xlu0 %8850
    %8852 = vrot.lane.b32.xlu0 %v8805, 96
    %v8853 = vpop.permute.xlu0 %8852
    %8854 = vrot.lane.b32.xlu0 %v8807, 96
    %v8855 = vpop.permute.xlu0 %8854
    %8856 = vrot.lane.b32.xlu0 %v8809, 96
    %v8857 = vpop.permute.xlu0 %8856
    %8858 = vrot.lane.b32.xlu0 %v8811, 96
    %v8859 = vpop.permute.xlu0 %8858
    %8860 = vrot.lane.b32.xlu0 %v8813, 96
    %v8861 = vpop.permute.xlu0 %8860
    %8862 = vrot.lane.b32.xlu0 %v8815, 96
    %v8863 = vpop.permute.xlu0 %8862
    %8864 = vrot.lane.b32.xlu0 %v8817, 96
    %v8865 = vpop.permute.xlu0 %8864
    %8866 = vrot.lane.b32.xlu0 %v8819, 96
    %v8867 = vpop.permute.xlu0 %8866
    %8868 = vrot.lane.b32.xlu0 %v8821, 96
    %v8869 = vpop.permute.xlu0 %8868
    %8870 = vrot.lane.b32.xlu0 %v8823, 96
    %v8871 = vpop.permute.xlu0 %8870
    %8872 = vrot.lane.b32.xlu0 %v8825, 96
    %v8873 = vpop.permute.xlu0 %8872
    %8874 = vrot.lane.b32.xlu0 %v8827, 96
    %v8875 = vpop.permute.xlu0 %8874
    %v8892 = vmul.f32 %v8716, %v8845
    %v8893 = vmul.f32 %v8717, %v8847
    %v8894 = vmul.f32 %v8718, %v8849
    %v8895 = vmul.f32 %v8719, %v8851
    %v8896 = vmul.f32 %v8720, %v8853
    %v8897 = vmul.f32 %v8721, %v8855
    %v8898 = vmul.f32 %v8722, %v8857
    %v8899 = vmul.f32 %v8723, %v8859
    %v8900 = vmul.f32 %v8724, %v8861
    %v8901 = vmul.f32 %v8725, %v8863
    %v8902 = vmul.f32 %v8726, %v8865
    %v8903 = vmul.f32 %v8727, %v8867
    %v8904 = vmul.f32 %v8728, %v8869
    %v8905 = vmul.f32 %v8729, %v8871
    %v8906 = vmul.f32 %v8730, %v8873
    %v8907 = vmul.f32 %v8731, %v8875
    %v8908 = vpack.c.bf16 %v8893, %v8892
    %v8909 = vpack.c.bf16 %v8895, %v8894
    %v8910 = vpack.c.bf16 %v8897, %v8896
    %v8911 = vpack.c.bf16 %v8899, %v8898
    %v8912 = vpack.c.bf16 %v8901, %v8900
    %v8913 = vpack.c.bf16 %v8903, %v8902
    %v8914 = vpack.c.bf16 %v8905, %v8904
    %v8915 = vpack.c.bf16 %v8907, %v8906
    %s8916 = scalar_lea.vmem [#allocation6], 96
    %v8917 = vld [vmem:[%s8916] sm:$0xf]
    %v8918 = vld [vmem:[%s8916 + $0x4] sm:$0xf]
    %v8919 = vld [vmem:[%s8916 + $0x8] sm:$0xf]
    %v8920 = vld [vmem:[%s8916 + $0xc] sm:$0xf]
    %v8925 = vunpack.c.l.b16 %v8917
    %v8926 = vunpack.c.l.b16 %v8918
    %v8927 = vunpack.c.l.b16 %v8919
    %v8928 = vunpack.c.l.b16 %v8920
    %v8929 = vpack.c.b16 %v8926, %v8925
    %v8930 = vpack.c.b16 %v8928, %v8927
    %v8934 = vsel %vm1252, %v8908, 0
    %v8937 = vsel %vm1252, %v8909, 0
    %v8940 = vsel %vm1252, %v8910, 0
    %v8943 = vsel %vm1252, %v8911, 0
    %v8946 = vsel %vm1252, %v8912, 0
    %v8949 = vsel %vm1252, %v8913, 0
    %v8952 = vsel %vm1252, %v8914, 0
    %v8955 = vsel %vm1252, %v8915, 0
    %8957 = vmatprep.subr.bf16.mxu0 0
    %8958 = vmatpush1.bf16.msra.mxu0 %v8929
    %8959 = vmatprep.subr.bf16.mxu0 0
    %8960 = vmatpush1.bf16.msra.mxu0 %v8930
    %8961 = vmatprep.subr.bf16.mxu0 0
    %8962 = vmatpush1.bf16.msra.mxu0 0
    %8963 = vmatprep.subr.bf16.mxu0 0
    %8964 = vmatpush1.bf16.msra.mxu0 0
    %8965 = vmatprep.subr.bf16.mxu0 0
    %8966 = vmatpush1.bf16.msra.mxu0 0
    %8967 = vmatprep.subr.bf16.mxu0 0
    %8968 = vmatpush1.bf16.msra.mxu0 0
    %8969 = vmatprep.subr.bf16.mxu0 0
    %8970 = vmatpush1.bf16.msra.mxu0 0
    %8971 = vmatprep.subr.bf16.mxu0 0
    %8972 = vmatpush1.bf16.msra.mxu0 0
    %8973 = vmatprep.subr.bf16.mxu0 0
    %8974 = vmatpush1.bf16.msra.mxu0 0
    %8975 = vmatprep.subr.bf16.mxu0 0
    %8976 = vmatpush1.bf16.msra.mxu0 0
    %8977 = vmatprep.subr.bf16.mxu0 0
    %8978 = vmatpush1.bf16.msra.mxu0 0
    %8979 = vmatprep.subr.bf16.mxu0 0
    %8980 = vmatpush1.bf16.msra.mxu0 0
    %8981 = vmatprep.subr.bf16.mxu0 0
    %8982 = vmatpush1.bf16.msra.mxu0 0
    %8983 = vmatprep.subr.bf16.mxu0 0
    %8984 = vmatpush1.bf16.msra.mxu0 0
    %8985 = vmatprep.subr.bf16.mxu0 0
    %8986 = vmatpush1.bf16.msra.mxu0 0
    %8987 = vmatprep.subr.bf16.mxu0 0
    %8988 = vmatpush1.bf16.msra.mxu0 0
    %8989 = vmatprep.mubr.bf16.mxu0 0
    %8990 = vmatmul.mubr.bf16.gmra.mrb[0].mxu0 %v8934
    %v8991 = vpop.f32.mrb[0].mxu0
    %v8992 = vadd.f32 0.0, %v8991
    %v8993 = vpop.f32.mrb[0].mxu0
    %v8994 = vpop.f32.mrb[0].mxu0
    %v8995 = vadd.f32 0.0, %v8994
    %v8996 = vpop.f32.mrb[0].mxu0
    %8997 = vmatprep.mubr.bf16.mxu0 0
    %8998 = vmatmul.mubr.bf16.gmra.mrb[0].mxu0 %v8937
    %v8999 = vpop.f32.mrb[0].mxu0
    %v9000 = vadd.f32 0.0, %v8999
    %v9001 = vpop.f32.mrb[0].mxu0
    %v9002 = vpop.f32.mrb[0].mxu0
    %v9003 = vadd.f32 0.0, %v9002
    %v9004 = vpop.f32.mrb[0].mxu0
    %9005 = vmatprep.mubr.bf16.mxu0 0
    %9006 = vmatmul.mubr.bf16.gmra.mrb[0].mxu0 %v8940
    %v9007 = vpop.f32.mrb[0].mxu0
    %v9008 = vadd.f32 0.0, %v9007
    %v9009 = vpop.f32.mrb[0].mxu0
    %v9010 = vpop.f32.mrb[0].mxu0
    %v9011 = vadd.f32 0.0, %v9010
    %v9012 = vpop.f32.mrb[0].mxu0
    %9013 = vmatprep.mubr.bf16.mxu0 0
    %9014 = vmatmul.mubr.bf16.gmra.mrb[0].mxu0 %v8943
    %v9015 = vpop.f32.mrb[0].mxu0
    %v9016 = vadd.f32 0.0, %v9015
    %v9017 = vpop.f32.mrb[0].mxu0
    %v9018 = vpop.f32.mrb[0].mxu0
    %v9019 = vadd.f32 0.0, %v9018
    %v9020 = vpop.f32.mrb[0].mxu0
    %9021 = vmatprep.mubr.bf16.mxu0 0
    %9022 = vmatmul.mubr.bf16.gmra.mrb[0].mxu0 %v8946
    %v9023 = vpop.f32.mrb[0].mxu0
    %v9024 = vadd.f32 0.0, %v9023
    %v9025 = vpop.f32.mrb[0].mxu0
    %v9026 = vpop.f32.mrb[0].mxu0
    %v9027 = vadd.f32 0.0, %v9026
    %v9028 = vpop.f32.mrb[0].mxu0
    %9029 = vmatprep.mubr.bf16.mxu0 0
    %9030 = vmatmul.mubr.bf16.gmra.mrb[0].mxu0 %v8949
    %v9031 = vpop.f32.mrb[0].mxu0
    %v9032 = vadd.f32 0.0, %v9031
    %v9033 = vpop.f32.mrb[0].mxu0
    %v9034 = vpop.f32.mrb[0].mxu0
    %v9035 = vadd.f32 0.0, %v9034
    %v9036 = vpop.f32.mrb[0].mxu0
    %9037 = vmatprep.mubr.bf16.mxu0 0
    %9038 = vmatmul.mubr.bf16.gmra.mrb[0].mxu0 %v8952
    %v9039 = vpop.f32.mrb[0].mxu0
    %v9040 = vadd.f32 0.0, %v9039
    %v9041 = vpop.f32.mrb[0].mxu0
    %v9042 = vpop.f32.mrb[0].mxu0
    %v9043 = vadd.f32 0.0, %v9042
    %v9044 = vpop.f32.mrb[0].mxu0
    %9045 = vmatprep.mubr.bf16.mxu0 0
    %9046 = vmatmul.mubr.bf16.gmra.mrb[0].mxu0 %v8955
    %v9047 = vpop.f32.mrb[0].mxu0
    %v9048 = vadd.f32 0.0, %v9047
    %v9049 = vpop.f32.mrb[0].mxu0
    %v9050 = vpop.f32.mrb[0].mxu0
    %v9051 = vadd.f32 0.0, %v9050
    %v9052 = vpop.f32.mrb[0].mxu0
    %9053 = vdwg.mxu0
    %v9054 = vadd.f32 %v8011, %v8992
    %v9055 = vadd.f32 %v8012, %v8995
    %v9056 = vadd.f32 %v8013, %v9000
    %v9057 = vadd.f32 %v8014, %v9003
    %v9058 = vadd.f32 %v8015, %v9008
    %v9059 = vadd.f32 %v8016, %v9011
    %v9060 = vadd.f32 %v8017, %v9016
    %v9061 = vadd.f32 %v8018, %v9019
    %v9062 = vadd.f32 %v8019, %v9024
    %v9063 = vadd.f32 %v8020, %v9027
    %v9064 = vadd.f32 %v8021, %v9032
    %v9065 = vadd.f32 %v8022, %v9035
    %v9066 = vadd.f32 %v8023, %v9040
    %v9067 = vadd.f32 %v8024, %v9043
    %v9068 = vadd.f32 %v8025, %v9048
    %v9069 = vadd.f32 %v8026, %v9051
    %s9070 = scalar_lea.vmem [#allocation7], 6
    %v9071 = vld [vmem:[%s9070] sm:$0x1]
    %v9073 = vlaneseq
    %v9074 = vshrl.u32 %v9073, 7
    %v9075 = vsub.s32 0, %v9074
    %v9076 = vrot.slane %v9071, %v9075
    %9077 = vrot.lane.b32.xlu0 %v9076, 64
    %v9078 = vpop.permute.xlu0 %9077
    %v9080 = vadd.f32 %v8992, %v9078
    %v9081 = vadd.f32 %v8995, %v9078
    %v9082 = vadd.f32 %v9000, %v9078
    %v9083 = vadd.f32 %v9003, %v9078
    %v9084 = vadd.f32 %v9008, %v9078
    %v9085 = vadd.f32 %v9011, %v9078
    %v9086 = vadd.f32 %v9016, %v9078
    %v9087 = vadd.f32 %v9019, %v9078
    %v9088 = vadd.f32 %v9024, %v9078
    %v9089 = vadd.f32 %v9027, %v9078
    %v9090 = vadd.f32 %v9032, %v9078
    %v9091 = vadd.f32 %v9035, %v9078
    %v9092 = vadd.f32 %v9040, %v9078
    %v9093 = vadd.f32 %v9043, %v9078
    %v9094 = vadd.f32 %v9048, %v9078
    %v9095 = vadd.f32 %v9051, %v9078
    %v9096 = vadd.f32 %v9080, %v8053
    %v9097 = vadd.f32 %v9081, %v8054
    %v9098 = vadd.f32 %v9082, %v8055
    %v9099 = vadd.f32 %v9083, %v8056
    %v9100 = vadd.f32 %v9084, %v8057
    %v9101 = vadd.f32 %v9085, %v8058
    %v9102 = vadd.f32 %v9086, %v8059
    %v9103 = vadd.f32 %v9087, %v8060
    %v9104 = vadd.f32 %v9088, %v8061
    %v9105 = vadd.f32 %v9089, %v8062
    %v9106 = vadd.f32 %v9090, %v8063
    %v9107 = vadd.f32 %v9091, %v8064
    %v9108 = vadd.f32 %v9092, %v8065
    %v9109 = vadd.f32 %v9093, %v8066
    %v9110 = vadd.f32 %v9094, %v8067
    %v9111 = vadd.f32 %v9095, %v8068
    %s9112 = scalar_lea.vmem %s4, 336
    %v9113 = vld [vmem:[%s9112] sm:$0xf]
    %v9114 = vld [vmem:[%s9112 + $0x4] sm:$0xf]
    %v9115 = vld [vmem:[%s9112 + $0x8] sm:$0xf]
    %v9116 = vld [vmem:[%s9112 + $0xc] sm:$0xf]
    %s9117 = scalar_lea.vmem %s4, 352
    %v9118 = vld [vmem:[%s9117] sm:$0xf]
    %v9119 = vld [vmem:[%s9117 + $0x4] sm:$0xf]
    %v9120 = vld [vmem:[%s9117 + $0x8] sm:$0xf]
    %v9121 = vld [vmem:[%s9117 + $0xc] sm:$0xf]
    %s9122 = scalar_lea.vmem %s4, 368
    %v9123 = vld [vmem:[%s9122] sm:$0xf]
    %v9124 = vld [vmem:[%s9122 + $0x4] sm:$0xf]
    %v9125 = vld [vmem:[%s9122 + $0x8] sm:$0xf]
    %v9126 = vld [vmem:[%s9122 + $0xc] sm:$0xf]
    %s9127 = scalar_lea.vmem [#allocation4], 7
    %v9128 = vld [vmem:[%s9127] sm:$0x1]
    %v9129 = vsel %vm4812, %v9111, 0.0
    %v9130 = vsel %vm4813, %v9096, 0.0
    %v9131 = vsel %vm4814, %v9097, 0.0
    %v9132 = vsel %vm4815, %v9098, 0.0
    %v9133 = vsel %vm4816, %v9099, 0.0
    %v9134 = vsel %vm4817, %v9100, 0.0
    %v9135 = vsel %vm4818, %v9101, 0.0
    %v9136 = vsel %vm4819, %v9102, 0.0
    %v9137 = vsel %vm4820, %v9103, 0.0
    %v9138 = vsel %vm4821, %v9104, 0.0
    %v9139 = vsel %vm4822, %v9105, 0.0
    %v9140 = vsel %vm4823, %v9106, 0.0
    %v9141 = vsel %vm4824, %v9107, 0.0
    %v9142 = vsel %vm4825, %v9108, 0.0
    %v9143 = vsel %vm4826, %v9109, 0.0
    %v9144 = vsel %vm4827, %v9110, 0.0
    %v9145 = vpack.c.bf16 %v9130, %v9129
    %v9146 = vpack.c.bf16 %v9132, %v9131
    %v9147 = vpack.c.bf16 %v9134, %v9133
    %v9148 = vpack.c.bf16 %v9136, %v9135
    %v9149 = vpack.c.bf16 %v9138, %v9137
    %v9150 = vpack.c.bf16 %v9140, %v9139
    %v9151 = vpack.c.bf16 %v9142, %v9141
    %v9152 = vpack.c.bf16 %v9144, %v9143
    %v9153 = vpack.c.bf16 %v9097, %v9096
    %v9154 = vpack.c.bf16 %v9099, %v9098
    %v9155 = vpack.c.bf16 %v9101, %v9100
    %v9156 = vpack.c.bf16 %v9103, %v9102
    %v9157 = vpack.c.bf16 %v9105, %v9104
    %v9158 = vpack.c.bf16 %v9107, %v9106
    %v9159 = vpack.c.bf16 %v9109, %v9108
    %v9160 = vpack.c.bf16 %v9111, %v9110
    %9169 = vrot.lane.b32.xlu0 %v9153, 64
    %v9170 = vpop.permute.xlu0 %9169
    %9171 = vrot.lane.b32.xlu0 %v9154, 64
    %v9172 = vpop.permute.xlu0 %9171
    %9173 = vrot.lane.b32.xlu0 %v9155, 64
    %v9174 = vpop.permute.xlu0 %9173
    %9175 = vrot.lane.b32.xlu0 %v9156, 64
    %v9176 = vpop.permute.xlu0 %9175
    %9177 = vrot.lane.b32.xlu0 %v9157, 64
    %v9178 = vpop.permute.xlu0 %9177
    %9179 = vrot.lane.b32.xlu0 %v9158, 64
    %v9180 = vpop.permute.xlu0 %9179
    %9181 = vrot.lane.b32.xlu0 %v9159, 64
    %v9182 = vpop.permute.xlu0 %9181
    %9183 = vrot.lane.b32.xlu0 %v9160, 64
    %v9184 = vpop.permute.xlu0 %9183
    %v9189 = vunpack.c.l.b16 %v9118
    %v9190 = vunpack.c.l.b16 %v9119
    %v9191 = vunpack.c.l.b16 %v9120
    %v9192 = vunpack.c.l.b16 %v9121
    %v9193 = vpack.c.b16 %v9190, %v9189
    %v9194 = vpack.c.b16 %v9192, %v9191
    %v9198 = vsel %vm1252, %v9170, 0
    %v9201 = vsel %vm1252, %v9172, 0
    %v9204 = vsel %vm1252, %v9174, 0
    %v9207 = vsel %vm1252, %v9176, 0
    %v9210 = vsel %vm1252, %v9178, 0
    %v9213 = vsel %vm1252, %v9180, 0
    %v9216 = vsel %vm1252, %v9182, 0
    %v9219 = vsel %vm1252, %v9184, 0
    %9221 = vmatprep.subr.bf16.mxu0 0
    %9222 = vmatpush1.bf16.msra.mxu0 %v9193
    %9223 = vmatprep.subr.bf16.mxu0 0
    %9224 = vmatpush1.bf16.msra.mxu0 %v9194
    %9225 = vmatprep.subr.bf16.mxu0 0
    %9226 = vmatpush1.bf16.msra.mxu0 0
    %9227 = vmatprep.subr.bf16.mxu0 0
    %9228 = vmatpush1.bf16.msra.mxu0 0
    %9229 = vmatprep.subr.bf16.mxu0 0
    %9230 = vmatpush1.bf16.msra.mxu0 0
    %9231 = vmatprep.subr.bf16.mxu0 0
    %9232 = vmatpush1.bf16.msra.mxu0 0
    %9233 = vmatprep.subr.bf16.mxu0 0
    %9234 = vmatpush1.bf16.msra.mxu0 0
    %9235 = vmatprep.subr.bf16.mxu0 0
    %9236 = vmatpush1.bf16.msra.mxu0 0
    %9237 = vmatprep.subr.bf16.mxu0 0
    %9238 = vmatpush1.bf16.msra.mxu0 0
    %9239 = vmatprep.subr.bf16.mxu0 0
    %9240 = vmatpush1.bf16.msra.mxu0 0
    %9241 = vmatprep.subr.bf16.mxu0 0
    %9242 = vmatpush1.bf16.msra.mxu0 0
    %9243 = vmatprep.subr.bf16.mxu0 0
    %9244 = vmatpush1.bf16.msra.mxu0 0
    %9245 = vmatprep.subr.bf16.mxu0 0
    %9246 = vmatpush1.bf16.msra.mxu0 0
    %9247 = vmatprep.subr.bf16.mxu0 0
    %9248 = vmatpush1.bf16.msra.mxu0 0
    %9249 = vmatprep.subr.bf16.mxu0 0
    %9250 = vmatpush1.bf16.msra.mxu0 0
    %9251 = vmatprep.subr.bf16.mxu0 0
    %9252 = vmatpush1.bf16.msra.mxu0 0
    %9253 = vmatprep.mubr.bf16.mxu0 0
    %9254 = vmatmul.mubr.bf16.gmra.mrb[0].mxu0 %v9198
    %v9255 = vpop.f32.mrb[0].mxu0
    %v9256 = vadd.f32 0.0, %v9255
    %v9257 = vpop.f32.mrb[0].mxu0
    %v9258 = vpop.f32.mrb[0].mxu0
    %v9259 = vadd.f32 0.0, %v9258
    %v9260 = vpop.f32.mrb[0].mxu0
    %9261 = vmatprep.mubr.bf16.mxu0 0
    %9262 = vmatmul.mubr.bf16.gmra.mrb[0].mxu0 %v9201
    %v9263 = vpop.f32.mrb[0].mxu0
    %v9264 = vadd.f32 0.0, %v9263
    %v9265 = vpop.f32.mrb[0].mxu0
    %v9266 = vpop.f32.mrb[0].mxu0
    %v9267 = vadd.f32 0.0, %v9266
    %v9268 = vpop.f32.mrb[0].mxu0
    %9269 = vmatprep.mubr.bf16.mxu0 0
    %9270 = vmatmul.mubr.bf16.gmra.mrb[0].mxu0 %v9204
    %v9271 = vpop.f32.mrb[0].mxu0
    %v9272 = vadd.f32 0.0, %v9271
    %v9273 = vpop.f32.mrb[0].mxu0
    %v9274 = vpop.f32.mrb[0].mxu0
    %v9275 = vadd.f32 0.0, %v9274
    %v9276 = vpop.f32.mrb[0].mxu0
    %9277 = vmatprep.mubr.bf16.mxu0 0
    %9278 = vmatmul.mubr.bf16.gmra.mrb[0].mxu0 %v9207
    %v9279 = vpop.f32.mrb[0].mxu0
    %v9280 = vadd.f32 0.0, %v9279
    %v9281 = vpop.f32.mrb[0].mxu0
    %v9282 = vpop.f32.mrb[0].mxu0
    %v9283 = vadd.f32 0.0, %v9282
    %v9284 = vpop.f32.mrb[0].mxu0
    %9285 = vmatprep.mubr.bf16.mxu0 0
    %9286 = vmatmul.mubr.bf16.gmra.mrb[0].mxu0 %v9210
    %v9287 = vpop.f32.mrb[0].mxu0
    %v9288 = vadd.f32 0.0, %v9287
    %v9289 = vpop.f32.mrb[0].mxu0
    %v9290 = vpop.f32.mrb[0].mxu0
    %v9291 = vadd.f32 0.0, %v9290
    %v9292 = vpop.f32.mrb[0].mxu0
    %9293 = vmatprep.mubr.bf16.mxu0 0
    %9294 = vmatmul.mubr.bf16.gmra.mrb[0].mxu0 %v9213
    %v9295 = vpop.f32.mrb[0].mxu0
    %v9296 = vadd.f32 0.0, %v9295
    %v9297 = vpop.f32.mrb[0].mxu0
    %v9298 = vpop.f32.mrb[0].mxu0
    %v9299 = vadd.f32 0.0, %v9298
    %v9300 = vpop.f32.mrb[0].mxu0
    %9301 = vmatprep.mubr.bf16.mxu0 0
    %9302 = vmatmul.mubr.bf16.gmra.mrb[0].mxu0 %v9216
    %v9303 = vpop.f32.mrb[0].mxu0
    %v9304 = vadd.f32 0.0, %v9303
    %v9305 = vpop.f32.mrb[0].mxu0
    %v9306 = vpop.f32.mrb[0].mxu0
    %v9307 = vadd.f32 0.0, %v9306
    %v9308 = vpop.f32.mrb[0].mxu0
    %9309 = vmatprep.mubr.bf16.mxu0 0
    %9310 = vmatmul.mubr.bf16.gmra.mrb[0].mxu0 %v9219
    %v9311 = vpop.f32.mrb[0].mxu0
    %v9312 = vadd.f32 0.0, %v9311
    %v9313 = vpop.f32.mrb[0].mxu0
    %v9314 = vpop.f32.mrb[0].mxu0
    %v9315 = vadd.f32 0.0, %v9314
    %v9316 = vpop.f32.mrb[0].mxu0
    %9317 = vdwg.mxu0
    %9326 = vrot.lane.b32.xlu0 %v9145, 64
    %v9327 = vpop.permute.xlu0 %9326
    %9328 = vrot.lane.b32.xlu0 %v9146, 64
    %v9329 = vpop.permute.xlu0 %9328
    %9330 = vrot.lane.b32.xlu0 %v9147, 64
    %v9331 = vpop.permute.xlu0 %9330
    %9332 = vrot.lane.b32.xlu0 %v9148, 64
    %v9333 = vpop.permute.xlu0 %9332
    %9334 = vrot.lane.b32.xlu0 %v9149, 64
    %v9335 = vpop.permute.xlu0 %9334
    %9336 = vrot.lane.b32.xlu0 %v9150, 64
    %v9337 = vpop.permute.xlu0 %9336
    %9338 = vrot.lane.b32.xlu0 %v9151, 64
    %v9339 = vpop.permute.xlu0 %9338
    %9340 = vrot.lane.b32.xlu0 %v9152, 64
    %v9341 = vpop.permute.xlu0 %9340
    %v9346 = vunpack.c.l.b16 %v9113
    %v9347 = vunpack.c.l.b16 %v9114
    %v9348 = vunpack.c.l.b16 %v9115
    %v9349 = vunpack.c.l.b16 %v9116
    %v9350 = vpack.c.b16 %v9347, %v9346
    %v9351 = vpack.c.b16 %v9349, %v9348
    %v9355 = vsel %vm1252, %v9327, 0
    %v9358 = vsel %vm1252, %v9329, 0
    %v9361 = vsel %vm1252, %v9331, 0
    %v9364 = vsel %vm1252, %v9333, 0
    %v9367 = vsel %vm1252, %v9335, 0
    %v9370 = vsel %vm1252, %v9337, 0
    %v9373 = vsel %vm1252, %v9339, 0
    %v9376 = vsel %vm1252, %v9341, 0
    %9378 = vmatprep.subr.bf16.mxu0 0
    %9379 = vmatpush1.bf16.msra.mxu0 %v9350
    %9380 = vmatprep.subr.bf16.mxu0 0
    %9381 = vmatpush1.bf16.msra.mxu0 %v9351
    %9382 = vmatprep.subr.bf16.mxu0 0
    %9383 = vmatpush1.bf16.msra.mxu0 0
    %9384 = vmatprep.subr.bf16.mxu0 0
    %9385 = vmatpush1.bf16.msra.mxu0 0
    %9386 = vmatprep.subr.bf16.mxu0 0
    %9387 = vmatpush1.bf16.msra.mxu0 0
    %9388 = vmatprep.subr.bf16.mxu0 0
    %9389 = vmatpush1.bf16.msra.mxu0 0
    %9390 = vmatprep.subr.bf16.mxu0 0
    %9391 = vmatpush1.bf16.msra.mxu0 0
    %9392 = vmatprep.subr.bf16.mxu0 0
    %9393 = vmatpush1.bf16.msra.mxu0 0
    %9394 = vmatprep.subr.bf16.mxu0 0
    %9395 = vmatpush1.bf16.msra.mxu0 0
    %9396 = vmatprep.subr.bf16.mxu0 0
    %9397 = vmatpush1.bf16.msra.mxu0 0
    %9398 = vmatprep.subr.bf16.mxu0 0
    %9399 = vmatpush1.bf16.msra.mxu0 0
    %9400 = vmatprep.subr.bf16.mxu0 0
    %9401 = vmatpush1.bf16.msra.mxu0 0
    %9402 = vmatprep.subr.bf16.mxu0 0
    %9403 = vmatpush1.bf16.msra.mxu0 0
    %9404 = vmatprep.subr.bf16.mxu0 0
    %9405 = vmatpush1.bf16.msra.mxu0 0
    %9406 = vmatprep.subr.bf16.mxu0 0
    %9407 = vmatpush1.bf16.msra.mxu0 0
    %9408 = vmatprep.subr.bf16.mxu0 0
    %9409 = vmatpush1.bf16.msra.mxu0 0
    %9410 = vmatprep.mubr.bf16.mxu0 0
    %9411 = vmatmul.mubr.bf16.gmra.mrb[0].mxu0 %v9355
    %v9412 = vpop.f32.mrb[0].mxu0
    %v9413 = vadd.f32 %v9256, %v9412
    %v9414 = vpop.f32.mrb[0].mxu0
    %v9415 = vpop.f32.mrb[0].mxu0
    %v9416 = vadd.f32 %v9259, %v9415
    %v9417 = vpop.f32.mrb[0].mxu0
    %9418 = vmatprep.mubr.bf16.mxu0 0
    %9419 = vmatmul.mubr.bf16.gmra.mrb[0].mxu0 %v9358
    %v9420 = vpop.f32.mrb[0].mxu0
    %v9421 = vadd.f32 %v9264, %v9420
    %v9422 = vpop.f32.mrb[0].mxu0
    %v9423 = vpop.f32.mrb[0].mxu0
    %v9424 = vadd.f32 %v9267, %v9423
    %v9425 = vpop.f32.mrb[0].mxu0
    %9426 = vmatprep.mubr.bf16.mxu0 0
    %9427 = vmatmul.mubr.bf16.gmra.mrb[0].mxu0 %v9361
    %v9428 = vpop.f32.mrb[0].mxu0
    %v9429 = vadd.f32 %v9272, %v9428
    %v9430 = vpop.f32.mrb[0].mxu0
    %v9431 = vpop.f32.mrb[0].mxu0
    %v9432 = vadd.f32 %v9275, %v9431
    %v9433 = vpop.f32.mrb[0].mxu0
    %9434 = vmatprep.mubr.bf16.mxu0 0
    %9435 = vmatmul.mubr.bf16.gmra.mrb[0].mxu0 %v9364
    %v9436 = vpop.f32.mrb[0].mxu0
    %v9437 = vadd.f32 %v9280, %v9436
    %v9438 = vpop.f32.mrb[0].mxu0
    %v9439 = vpop.f32.mrb[0].mxu0
    %v9440 = vadd.f32 %v9283, %v9439
    %v9441 = vpop.f32.mrb[0].mxu0
    %9442 = vmatprep.mubr.bf16.mxu0 0
    %9443 = vmatmul.mubr.bf16.gmra.mrb[0].mxu0 %v9367
    %v9444 = vpop.f32.mrb[0].mxu0
    %v9445 = vadd.f32 %v9288, %v9444
    %v9446 = vpop.f32.mrb[0].mxu0
    %v9447 = vpop.f32.mrb[0].mxu0
    %v9448 = vadd.f32 %v9291, %v9447
    %v9449 = vpop.f32.mrb[0].mxu0
    %9450 = vmatprep.mubr.bf16.mxu0 0
    %9451 = vmatmul.mubr.bf16.gmra.mrb[0].mxu0 %v9370
    %v9452 = vpop.f32.mrb[0].mxu0
    %v9453 = vadd.f32 %v9296, %v9452
    %v9454 = vpop.f32.mrb[0].mxu0
    %v9455 = vpop.f32.mrb[0].mxu0
    %v9456 = vadd.f32 %v9299, %v9455
    %v9457 = vpop.f32.mrb[0].mxu0
    %9458 = vmatprep.mubr.bf16.mxu0 0
    %9459 = vmatmul.mubr.bf16.gmra.mrb[0].mxu0 %v9373
    %v9460 = vpop.f32.mrb[0].mxu0
    %v9461 = vadd.f32 %v9304, %v9460
    %v9462 = vpop.f32.mrb[0].mxu0
    %v9463 = vpop.f32.mrb[0].mxu0
    %v9464 = vadd.f32 %v9307, %v9463
    %v9465 = vpop.f32.mrb[0].mxu0
    %9466 = vmatprep.mubr.bf16.mxu0 0
    %9467 = vmatmul.mubr.bf16.gmra.mrb[0].mxu0 %v9376
    %v9468 = vpop.f32.mrb[0].mxu0
    %v9469 = vadd.f32 %v9312, %v9468
    %v9470 = vpop.f32.mrb[0].mxu0
    %v9471 = vpop.f32.mrb[0].mxu0
    %v9472 = vadd.f32 %v9315, %v9471
    %v9473 = vpop.f32.mrb[0].mxu0
    %9474 = vdwg.mxu0
    %v9475 = vsel %vm5254, %v9097, 0.0
    %v9476 = vsel %vm5255, %v9098, 0.0
    %v9477 = vsel %vm5256, %v9099, 0.0
    %v9478 = vsel %vm5257, %v9100, 0.0
    %v9479 = vsel %vm5258, %v9101, 0.0
    %v9480 = vsel %vm5259, %v9102, 0.0
    %v9481 = vsel %vm5260, %v9103, 0.0
    %v9482 = vsel %vm5261, %v9104, 0.0
    %v9483 = vsel %vm5262, %v9105, 0.0
    %v9484 = vsel %vm5263, %v9106, 0.0
    %v9485 = vsel %vm5264, %v9107, 0.0
    %v9486 = vsel %vm5265, %v9108, 0.0
    %v9487 = vsel %vm5266, %v9109, 0.0
    %v9488 = vsel %vm5267, %v9110, 0.0
    %v9489 = vsel %vm5268, %v9111, 0.0
    %v9490 = vsel %vm5269, %v9096, 0.0
    %v9491 = vpack.c.bf16 %v9476, %v9475
    %v9492 = vpack.c.bf16 %v9478, %v9477
    %v9493 = vpack.c.bf16 %v9480, %v9479
    %v9494 = vpack.c.bf16 %v9482, %v9481
    %v9495 = vpack.c.bf16 %v9484, %v9483
    %v9496 = vpack.c.bf16 %v9486, %v9485
    %v9497 = vpack.c.bf16 %v9488, %v9487
    %v9498 = vpack.c.bf16 %v9490, %v9489
    %9507 = vrot.lane.b32.xlu0 %v9491, 64
    %v9508 = vpop.permute.xlu0 %9507
    %9509 = vrot.lane.b32.xlu0 %v9492, 64
    %v9510 = vpop.permute.xlu0 %9509
    %9511 = vrot.lane.b32.xlu0 %v9493, 64
    %v9512 = vpop.permute.xlu0 %9511
    %9513 = vrot.lane.b32.xlu0 %v9494, 64
    %v9514 = vpop.permute.xlu0 %9513
    %9515 = vrot.lane.b32.xlu0 %v9495, 64
    %v9516 = vpop.permute.xlu0 %9515
    %9517 = vrot.lane.b32.xlu0 %v9496, 64
    %v9518 = vpop.permute.xlu0 %9517
    %9519 = vrot.lane.b32.xlu0 %v9497, 64
    %v9520 = vpop.permute.xlu0 %9519
    %9521 = vrot.lane.b32.xlu0 %v9498, 64
    %v9522 = vpop.permute.xlu0 %9521
    %v9527 = vunpack.c.l.b16 %v9123
    %v9528 = vunpack.c.l.b16 %v9124
    %v9529 = vunpack.c.l.b16 %v9125
    %v9530 = vunpack.c.l.b16 %v9126
    %v9531 = vpack.c.b16 %v9528, %v9527
    %v9532 = vpack.c.b16 %v9530, %v9529
    %v9536 = vsel %vm1252, %v9508, 0
    %v9539 = vsel %vm1252, %v9510, 0
    %v9542 = vsel %vm1252, %v9512, 0
    %v9545 = vsel %vm1252, %v9514, 0
    %v9548 = vsel %vm1252, %v9516, 0
    %v9551 = vsel %vm1252, %v9518, 0
    %v9554 = vsel %vm1252, %v9520, 0
    %v9557 = vsel %vm1252, %v9522, 0
    %9559 = vmatprep.subr.bf16.mxu0 0
    %9560 = vmatpush1.bf16.msra.mxu0 %v9531
    %9561 = vmatprep.subr.bf16.mxu0 0
    %9562 = vmatpush1.bf16.msra.mxu0 %v9532
    %9563 = vmatprep.subr.bf16.mxu0 0
    %9564 = vmatpush1.bf16.msra.mxu0 0
    %9565 = vmatprep.subr.bf16.mxu0 0
    %9566 = vmatpush1.bf16.msra.mxu0 0
    %9567 = vmatprep.subr.bf16.mxu0 0
    %9568 = vmatpush1.bf16.msra.mxu0 0
    %9569 = vmatprep.subr.bf16.mxu0 0
    %9570 = vmatpush1.bf16.msra.mxu0 0
    %9571 = vmatprep.subr.bf16.mxu0 0
    %9572 = vmatpush1.bf16.msra.mxu0 0
    %9573 = vmatprep.subr.bf16.mxu0 0
    %9574 = vmatpush1.bf16.msra.mxu0 0
    %9575 = vmatprep.subr.bf16.mxu0 0
    %9576 = vmatpush1.bf16.msra.mxu0 0
    %9577 = vmatprep.subr.bf16.mxu0 0
    %9578 = vmatpush1.bf16.msra.mxu0 0
    %9579 = vmatprep.subr.bf16.mxu0 0
    %9580 = vmatpush1.bf16.msra.mxu0 0
    %9581 = vmatprep.subr.bf16.mxu0 0
    %9582 = vmatpush1.bf16.msra.mxu0 0
    %9583 = vmatprep.subr.bf16.mxu0 0
    %9584 = vmatpush1.bf16.msra.mxu0 0
    %9585 = vmatprep.subr.bf16.mxu0 0
    %9586 = vmatpush1.bf16.msra.mxu0 0
    %9587 = vmatprep.subr.bf16.mxu0 0
    %9588 = vmatpush1.bf16.msra.mxu0 0
    %9589 = vmatprep.subr.bf16.mxu0 0
    %9590 = vmatpush1.bf16.msra.mxu0 0
    %9591 = vmatprep.mubr.bf16.mxu0 0
    %9592 = vmatmul.mubr.bf16.gmra.mrb[0].mxu0 %v9536
    %v9593 = vpop.f32.mrb[0].mxu0
    %v9594 = vadd.f32 0.0, %v9593
    %v9595 = vpop.f32.mrb[0].mxu0
    %v9596 = vpop.f32.mrb[0].mxu0
    %v9597 = vadd.f32 0.0, %v9596
    %v9598 = vpop.f32.mrb[0].mxu0
    %9599 = vmatprep.mubr.bf16.mxu0 0
    %9600 = vmatmul.mubr.bf16.gmra.mrb[0].mxu0 %v9539
    %v9601 = vpop.f32.mrb[0].mxu0
    %v9602 = vadd.f32 0.0, %v9601
    %v9603 = vpop.f32.mrb[0].mxu0
    %v9604 = vpop.f32.mrb[0].mxu0
    %v9605 = vadd.f32 0.0, %v9604
    %v9606 = vpop.f32.mrb[0].mxu0
    %9607 = vmatprep.mubr.bf16.mxu0 0
    %9608 = vmatmul.mubr.bf16.gmra.mrb[0].mxu0 %v9542
    %v9609 = vpop.f32.mrb[0].mxu0
    %v9610 = vadd.f32 0.0, %v9609
    %v9611 = vpop.f32.mrb[0].mxu0
    %v9612 = vpop.f32.mrb[0].mxu0
    %v9613 = vadd.f32 0.0, %v9612
    %v9614 = vpop.f32.mrb[0].mxu0
    %9615 = vmatprep.mubr.bf16.mxu0 0
    %9616 = vmatmul.mubr.bf16.gmra.mrb[0].mxu0 %v9545
    %v9617 = vpop.f32.mrb[0].mxu0
    %v9618 = vadd.f32 0.0, %v9617
    %v9619 = vpop.f32.mrb[0].mxu0
    %v9620 = vpop.f32.mrb[0].mxu0
    %v9621 = vadd.f32 0.0, %v9620
    %v9622 = vpop.f32.mrb[0].mxu0
    %9623 = vmatprep.mubr.bf16.mxu0 0
    %9624 = vmatmul.mubr.bf16.gmra.mrb[0].mxu0 %v9548
    %v9625 = vpop.f32.mrb[0].mxu0
    %v9626 = vadd.f32 0.0, %v9625
    %v9627 = vpop.f32.mrb[0].mxu0
    %v9628 = vpop.f32.mrb[0].mxu0
    %v9629 = vadd.f32 0.0, %v9628
    %v9630 = vpop.f32.mrb[0].mxu0
    %9631 = vmatprep.mubr.bf16.mxu0 0
    %9632 = vmatmul.mubr.bf16.gmra.mrb[0].mxu0 %v9551
    %v9633 = vpop.f32.mrb[0].mxu0
    %v9634 = vadd.f32 0.0, %v9633
    %v9635 = vpop.f32.mrb[0].mxu0
    %v9636 = vpop.f32.mrb[0].mxu0
    %v9637 = vadd.f32 0.0, %v9636
    %v9638 = vpop.f32.mrb[0].mxu0
    %9639 = vmatprep.mubr.bf16.mxu0 0
    %9640 = vmatmul.mubr.bf16.gmra.mrb[0].mxu0 %v9554
    %v9641 = vpop.f32.mrb[0].mxu0
    %v9642 = vadd.f32 0.0, %v9641
    %v9643 = vpop.f32.mrb[0].mxu0
    %v9644 = vpop.f32.mrb[0].mxu0
    %v9645 = vadd.f32 0.0, %v9644
    %v9646 = vpop.f32.mrb[0].mxu0
    %9647 = vmatprep.mubr.bf16.mxu0 0
    %9648 = vmatmul.mubr.bf16.gmra.mrb[0].mxu0 %v9557
    %v9649 = vpop.f32.mrb[0].mxu0
    %v9650 = vadd.f32 0.0, %v9649
    %v9651 = vpop.f32.mrb[0].mxu0
    %v9652 = vpop.f32.mrb[0].mxu0
    %v9653 = vadd.f32 0.0, %v9652
    %v9654 = vpop.f32.mrb[0].mxu0
    %9655 = vdwg.mxu0
    %v9656 = vadd.f32 %v9413, %v9594
    %v9657 = vadd.f32 %v9416, %v9597
    %v9658 = vadd.f32 %v9421, %v9602
    %v9659 = vadd.f32 %v9424, %v9605
    %v9660 = vadd.f32 %v9429, %v9610
    %v9661 = vadd.f32 %v9432, %v9613
    %v9662 = vadd.f32 %v9437, %v9618
    %v9663 = vadd.f32 %v9440, %v9621
    %v9664 = vadd.f32 %v9445, %v9626
    %v9665 = vadd.f32 %v9448, %v9629
    %v9666 = vadd.f32 %v9453, %v9634
    %v9667 = vadd.f32 %v9456, %v9637
    %v9668 = vadd.f32 %v9461, %v9642
    %v9669 = vadd.f32 %v9464, %v9645
    %v9670 = vadd.f32 %v9469, %v9650
    %v9671 = vadd.f32 %v9472, %v9653
    %v9673 = vlaneseq
    %v9674 = vshrl.u32 %v9673, 7
    %v9675 = vsub.s32 0, %v9674
    %v9676 = vrot.slane %v9128, %v9675
    %v9678 = vadd.f32 %v9656, %v9676
    %v9679 = vadd.f32 %v9657, %v9676
    %v9680 = vadd.f32 %v9658, %v9676
    %v9681 = vadd.f32 %v9659, %v9676
    %v9682 = vadd.f32 %v9660, %v9676
    %v9683 = vadd.f32 %v9661, %v9676
    %v9684 = vadd.f32 %v9662, %v9676
    %v9685 = vadd.f32 %v9663, %v9676
    %v9686 = vadd.f32 %v9664, %v9676
    %v9687 = vadd.f32 %v9665, %v9676
    %v9688 = vadd.f32 %v9666, %v9676
    %v9689 = vadd.f32 %v9667, %v9676
    %v9690 = vadd.f32 %v9668, %v9676
    %v9691 = vadd.f32 %v9669, %v9676
    %v9692 = vadd.f32 %v9670, %v9676
    %v9693 = vadd.f32 %v9671, %v9676
    %v9694 = vtanh.pop %v9678
    %v9695 = vtanh.pop %v9679
    %v9696 = vtanh.pop %v9680
    %v9697 = vtanh.pop %v9681
    %v9698 = vtanh.pop %v9682
    %v9699 = vtanh.pop %v9683
    %v9700 = vtanh.pop %v9684
    %v9701 = vtanh.pop %v9685
    %v9702 = vtanh.pop %v9686
    %v9703 = vtanh.pop %v9687
    %v9704 = vtanh.pop %v9688
    %v9705 = vtanh.pop %v9689
    %v9706 = vtanh.pop %v9690
    %v9707 = vtanh.pop %v9691
    %v9708 = vtanh.pop %v9692
    %v9709 = vtanh.pop %v9693
    %v9710 = vxor.u32 %v9678, 2147483648
    %v9711 = vxor.u32 %v9679, 2147483648
    %v9712 = vxor.u32 %v9680, 2147483648
    %v9713 = vxor.u32 %v9681, 2147483648
    %v9714 = vxor.u32 %v9682, 2147483648
    %v9715 = vxor.u32 %v9683, 2147483648
    %v9716 = vxor.u32 %v9684, 2147483648
    %v9717 = vxor.u32 %v9685, 2147483648
    %v9718 = vxor.u32 %v9686, 2147483648
    %v9719 = vxor.u32 %v9687, 2147483648
    %v9720 = vxor.u32 %v9688, 2147483648
    %v9721 = vxor.u32 %v9689, 2147483648
    %v9722 = vxor.u32 %v9690, 2147483648
    %v9723 = vxor.u32 %v9691, 2147483648
    %v9724 = vxor.u32 %v9692, 2147483648
    %v9725 = vxor.u32 %v9693, 2147483648
    %v9726 = vmul.f32 %v9710, 1.442695
    %v9727 = vpow.pop %v9726
    %v9728 = vmul.f32 %v9711, 1.442695
    %v9729 = vpow.pop %v9728
    %v9730 = vmul.f32 %v9712, 1.442695
    %v9731 = vpow.pop %v9730
    %v9732 = vmul.f32 %v9713, 1.442695
    %v9733 = vpow.pop %v9732
    %v9734 = vmul.f32 %v9714, 1.442695
    %v9735 = vpow.pop %v9734
    %v9736 = vmul.f32 %v9715, 1.442695
    %v9737 = vpow.pop %v9736
    %v9738 = vmul.f32 %v9716, 1.442695
    %v9739 = vpow.pop %v9738
    %v9740 = vmul.f32 %v9717, 1.442695
    %v9741 = vpow.pop %v9740
    %v9742 = vmul.f32 %v9718, 1.442695
    %v9743 = vpow.pop %v9742
    %v9744 = vmul.f32 %v9719, 1.442695
    %v9745 = vpow.pop %v9744
    %v9746 = vmul.f32 %v9720, 1.442695
    %v9747 = vpow.pop %v9746
    %v9748 = vmul.f32 %v9721, 1.442695
    %v9749 = vpow.pop %v9748
    %v9750 = vmul.f32 %v9722, 1.442695
    %v9751 = vpow.pop %v9750
    %v9752 = vmul.f32 %v9723, 1.442695
    %v9753 = vpow.pop %v9752
    %v9754 = vmul.f32 %v9724, 1.442695
    %v9755 = vpow.pop %v9754
    %v9756 = vmul.f32 %v9725, 1.442695
    %v9757 = vpow.pop %v9756
    %v9758 = vadd.f32 %v9727, 1.0
    %v9759 = vadd.f32 %v9729, 1.0
    %v9760 = vadd.f32 %v9731, 1.0
    %v9761 = vadd.f32 %v9733, 1.0
    %v9762 = vadd.f32 %v9735, 1.0
    %v9763 = vadd.f32 %v9737, 1.0
    %v9764 = vadd.f32 %v9739, 1.0
    %v9765 = vadd.f32 %v9741, 1.0
    %v9766 = vadd.f32 %v9743, 1.0
    %v9767 = vadd.f32 %v9745, 1.0
    %v9768 = vadd.f32 %v9747, 1.0
    %v9769 = vadd.f32 %v9749, 1.0
    %v9770 = vadd.f32 %v9751, 1.0
    %v9771 = vadd.f32 %v9753, 1.0
    %v9772 = vadd.f32 %v9755, 1.0
    %v9773 = vadd.f32 %v9757, 1.0
    %v9774 = vrcp.pop %v9758
    %v9775 = vmul.f32 1.0, %v9774
    %v9776 = vrcp.pop %v9759
    %v9777 = vmul.f32 1.0, %v9776
    %v9778 = vrcp.pop %v9760
    %v9779 = vmul.f32 1.0, %v9778
    %v9780 = vrcp.pop %v9761
    %v9781 = vmul.f32 1.0, %v9780
    %v9782 = vrcp.pop %v9762
    %v9783 = vmul.f32 1.0, %v9782
    %v9784 = vrcp.pop %v9763
    %v9785 = vmul.f32 1.0, %v9784
    %v9786 = vrcp.pop %v9764
    %v9787 = vmul.f32 1.0, %v9786
    %v9788 = vrcp.pop %v9765
    %v9789 = vmul.f32 1.0, %v9788
    %v9790 = vrcp.pop %v9766
    %v9791 = vmul.f32 1.0, %v9790
    %v9792 = vrcp.pop %v9767
    %v9793 = vmul.f32 1.0, %v9792
    %v9794 = vrcp.pop %v9768
    %v9795 = vmul.f32 1.0, %v9794
    %v9796 = vrcp.pop %v9769
    %v9797 = vmul.f32 1.0, %v9796
    %v9798 = vrcp.pop %v9770
    %v9799 = vmul.f32 1.0, %v9798
    %v9800 = vrcp.pop %v9771
    %v9801 = vmul.f32 1.0, %v9800
    %v9802 = vrcp.pop %v9772
    %v9803 = vmul.f32 1.0, %v9802
    %v9804 = vrcp.pop %v9773
    %v9805 = vmul.f32 1.0, %v9804
    %9822 = vrot.lane.b32.xlu0 %v9775, 96
    %v9823 = vpop.permute.xlu0 %9822
    %9824 = vrot.lane.b32.xlu0 %v9777, 96
    %v9825 = vpop.permute.xlu0 %9824
    %9826 = vrot.lane.b32.xlu0 %v9779, 96
    %v9827 = vpop.permute.xlu0 %9826
    %9828 = vrot.lane.b32.xlu0 %v9781, 96
    %v9829 = vpop.permute.xlu0 %9828
    %9830 = vrot.lane.b32.xlu0 %v9783, 96
    %v9831 = vpop.permute.xlu0 %9830
    %9832 = vrot.lane.b32.xlu0 %v9785, 96
    %v9833 = vpop.permute.xlu0 %9832
    %9834 = vrot.lane.b32.xlu0 %v9787, 96
    %v9835 = vpop.permute.xlu0 %9834
    %9836 = vrot.lane.b32.xlu0 %v9789, 96
    %v9837 = vpop.permute.xlu0 %9836
    %9838 = vrot.lane.b32.xlu0 %v9791, 96
    %v9839 = vpop.permute.xlu0 %9838
    %9840 = vrot.lane.b32.xlu0 %v9793, 96
    %v9841 = vpop.permute.xlu0 %9840
    %9842 = vrot.lane.b32.xlu0 %v9795, 96
    %v9843 = vpop.permute.xlu0 %9842
    %9844 = vrot.lane.b32.xlu0 %v9797, 96
    %v9845 = vpop.permute.xlu0 %9844
    %9846 = vrot.lane.b32.xlu0 %v9799, 96
    %v9847 = vpop.permute.xlu0 %9846
    %9848 = vrot.lane.b32.xlu0 %v9801, 96
    %v9849 = vpop.permute.xlu0 %9848
    %9850 = vrot.lane.b32.xlu0 %v9803, 96
    %v9851 = vpop.permute.xlu0 %9850
    %9852 = vrot.lane.b32.xlu0 %v9805, 96
    %v9853 = vpop.permute.xlu0 %9852
    %v9870 = vmul.f32 %v9694, %v9823
    %v9871 = vmul.f32 %v9695, %v9825
    %v9872 = vmul.f32 %v9696, %v9827
    %v9873 = vmul.f32 %v9697, %v9829
    %v9874 = vmul.f32 %v9698, %v9831
    %v9875 = vmul.f32 %v9699, %v9833
    %v9876 = vmul.f32 %v9700, %v9835
    %v9877 = vmul.f32 %v9701, %v9837
    %v9878 = vmul.f32 %v9702, %v9839
    %v9879 = vmul.f32 %v9703, %v9841
    %v9880 = vmul.f32 %v9704, %v9843
    %v9881 = vmul.f32 %v9705, %v9845
    %v9882 = vmul.f32 %v9706, %v9847
    %v9883 = vmul.f32 %v9707, %v9849
    %v9884 = vmul.f32 %v9708, %v9851
    %v9885 = vmul.f32 %v9709, %v9853
    %v9886 = vpack.c.bf16 %v9871, %v9870
    %v9887 = vpack.c.bf16 %v9873, %v9872
    %v9888 = vpack.c.bf16 %v9875, %v9874
    %v9889 = vpack.c.bf16 %v9877, %v9876
    %v9890 = vpack.c.bf16 %v9879, %v9878
    %v9891 = vpack.c.bf16 %v9881, %v9880
    %v9892 = vpack.c.bf16 %v9883, %v9882
    %v9893 = vpack.c.bf16 %v9885, %v9884
    %s9894 = scalar_lea.vmem [#allocation6], 112
    %v9895 = vld [vmem:[%s9894] sm:$0xf]
    %v9896 = vld [vmem:[%s9894 + $0x4] sm:$0xf]
    %v9897 = vld [vmem:[%s9894 + $0x8] sm:$0xf]
    %v9898 = vld [vmem:[%s9894 + $0xc] sm:$0xf]
    %v9903 = vunpack.c.l.b16 %v9895
    %v9904 = vunpack.c.l.b16 %v9896
    %v9905 = vunpack.c.l.b16 %v9897
    %v9906 = vunpack.c.l.b16 %v9898
    %v9907 = vpack.c.b16 %v9904, %v9903
    %v9908 = vpack.c.b16 %v9906, %v9905
    %v9912 = vsel %vm1252, %v9886, 0
    %v9915 = vsel %vm1252, %v9887, 0
    %v9918 = vsel %vm1252, %v9888, 0
    %v9921 = vsel %vm1252, %v9889, 0
    %v9924 = vsel %vm1252, %v9890, 0
    %v9927 = vsel %vm1252, %v9891, 0
    %v9930 = vsel %vm1252, %v9892, 0
    %v9933 = vsel %vm1252, %v9893, 0
    %9935 = vmatprep.subr.bf16.mxu0 0
    %9936 = vmatpush1.bf16.msra.mxu0 %v9907
    %9937 = vmatprep.subr.bf16.mxu0 0
    %9938 = vmatpush1.bf16.msra.mxu0 %v9908
    %9939 = vmatprep.subr.bf16.mxu0 0
    %9940 = vmatpush1.bf16.msra.mxu0 0
    %9941 = vmatprep.subr.bf16.mxu0 0
    %9942 = vmatpush1.bf16.msra.mxu0 0
    %9943 = vmatprep.subr.bf16.mxu0 0
    %9944 = vmatpush1.bf16.msra.mxu0 0
    %9945 = vmatprep.subr.bf16.mxu0 0
    %9946 = vmatpush1.bf16.msra.mxu0 0
    %9947 = vmatprep.subr.bf16.mxu0 0
    %9948 = vmatpush1.bf16.msra.mxu0 0
    %9949 = vmatprep.subr.bf16.mxu0 0
    %9950 = vmatpush1.bf16.msra.mxu0 0
    %9951 = vmatprep.subr.bf16.mxu0 0
    %9952 = vmatpush1.bf16.msra.mxu0 0
    %9953 = vmatprep.subr.bf16.mxu0 0
    %9954 = vmatpush1.bf16.msra.mxu0 0
    %9955 = vmatprep.subr.bf16.mxu0 0
    %9956 = vmatpush1.bf16.msra.mxu0 0
    %9957 = vmatprep.subr.bf16.mxu0 0
    %9958 = vmatpush1.bf16.msra.mxu0 0
    %9959 = vmatprep.subr.bf16.mxu0 0
    %9960 = vmatpush1.bf16.msra.mxu0 0
    %9961 = vmatprep.subr.bf16.mxu0 0
    %9962 = vmatpush1.bf16.msra.mxu0 0
    %9963 = vmatprep.subr.bf16.mxu0 0
    %9964 = vmatpush1.bf16.msra.mxu0 0
    %9965 = vmatprep.subr.bf16.mxu0 0
    %9966 = vmatpush1.bf16.msra.mxu0 0
    %9967 = vmatprep.mubr.bf16.mxu0 0
    %9968 = vmatmul.mubr.bf16.gmra.mrb[0].mxu0 %v9912
    %v9969 = vpop.f32.mrb[0].mxu0
    %v9970 = vadd.f32 0.0, %v9969
    %v9971 = vpop.f32.mrb[0].mxu0
    %v9972 = vpop.f32.mrb[0].mxu0
    %v9973 = vadd.f32 0.0, %v9972
    %v9974 = vpop.f32.mrb[0].mxu0
    %9975 = vmatprep.mubr.bf16.mxu0 0
    %9976 = vmatmul.mubr.bf16.gmra.mrb[0].mxu0 %v9915
    %v9977 = vpop.f32.mrb[0].mxu0
    %v9978 = vadd.f32 0.0, %v9977
    %v9979 = vpop.f32.mrb[0].mxu0
    %v9980 = vpop.f32.mrb[0].mxu0
    %v9981 = vadd.f32 0.0, %v9980
    %v9982 = vpop.f32.mrb[0].mxu0
    %9983 = vmatprep.mubr.bf16.mxu0 0
    %9984 = vmatmul.mubr.bf16.gmra.mrb[0].mxu0 %v9918
    %v9985 = vpop.f32.mrb[0].mxu0
    %v9986 = vadd.f32 0.0, %v9985
    %v9987 = vpop.f32.mrb[0].mxu0
    %v9988 = vpop.f32.mrb[0].mxu0
    %v9989 = vadd.f32 0.0, %v9988
    %v9990 = vpop.f32.mrb[0].mxu0
    %9991 = vmatprep.mubr.bf16.mxu0 0
    %9992 = vmatmul.mubr.bf16.gmra.mrb[0].mxu0 %v9921
    %v9993 = vpop.f32.mrb[0].mxu0
    %v9994 = vadd.f32 0.0, %v9993
    %v9995 = vpop.f32.mrb[0].mxu0
    %v9996 = vpop.f32.mrb[0].mxu0
    %v9997 = vadd.f32 0.0, %v9996
    %v9998 = vpop.f32.mrb[0].mxu0
    %9999 = vmatprep.mubr.bf16.mxu0 0
    %10000 = vmatmul.mubr.bf16.gmra.mrb[0].mxu0 %v9924
    %v10001 = vpop.f32.mrb[0].mxu0
    %v10002 = vadd.f32 0.0, %v10001
    %v10003 = vpop.f32.mrb[0].mxu0
    %v10004 = vpop.f32.mrb[0].mxu0
    %v10005 = vadd.f32 0.0, %v10004
    %v10006 = vpop.f32.mrb[0].mxu0
    %10007 = vmatprep.mubr.bf16.mxu0 0
    %10008 = vmatmul.mubr.bf16.gmra.mrb[0].mxu0 %v9927
    %v10009 = vpop.f32.mrb[0].mxu0
    %v10010 = vadd.f32 0.0, %v10009
    %v10011 = vpop.f32.mrb[0].mxu0
    %v10012 = vpop.f32.mrb[0].mxu0
    %v10013 = vadd.f32 0.0, %v10012
    %v10014 = vpop.f32.mrb[0].mxu0
    %10015 = vmatprep.mubr.bf16.mxu0 0
    %10016 = vmatmul.mubr.bf16.gmra.mrb[0].mxu0 %v9930
    %v10017 = vpop.f32.mrb[0].mxu0
    %v10018 = vadd.f32 0.0, %v10017
    %v10019 = vpop.f32.mrb[0].mxu0
    %v10020 = vpop.f32.mrb[0].mxu0
    %v10021 = vadd.f32 0.0, %v10020
    %v10022 = vpop.f32.mrb[0].mxu0
    %10023 = vmatprep.mubr.bf16.mxu0 0
    %10024 = vmatmul.mubr.bf16.gmra.mrb[0].mxu0 %v9933
    %v10025 = vpop.f32.mrb[0].mxu0
    %v10026 = vadd.f32 0.0, %v10025
    %v10027 = vpop.f32.mrb[0].mxu0
    %v10028 = vpop.f32.mrb[0].mxu0
    %v10029 = vadd.f32 0.0, %v10028
    %v10030 = vpop.f32.mrb[0].mxu0
    %10031 = vdwg.mxu0
    %v10032 = vadd.f32 %v9054, %v9970
    %v10033 = vadd.f32 %v9055, %v9973
    %v10034 = vadd.f32 %v9056, %v9978
    %v10035 = vadd.f32 %v9057, %v9981
    %v10036 = vadd.f32 %v9058, %v9986
    %v10037 = vadd.f32 %v9059, %v9989
    %v10038 = vadd.f32 %v9060, %v9994
    %v10039 = vadd.f32 %v9061, %v9997
    %v10040 = vadd.f32 %v9062, %v10002
    %v10041 = vadd.f32 %v9063, %v10005
    %v10042 = vadd.f32 %v9064, %v10010
    %v10043 = vadd.f32 %v9065, %v10013
    %v10044 = vadd.f32 %v9066, %v10018
    %v10045 = vadd.f32 %v9067, %v10021
    %v10046 = vadd.f32 %v9068, %v10026
    %v10047 = vadd.f32 %v9069, %v10029
    %v10048 = vld [vmem:[%s8] sm:$0x1]
    %v10050 = vlaneseq
    %v10051 = vshrl.u32 %v10050, 7
    %v10052 = vsub.s32 0, %v10051
    %v10053 = vrot.slane %v10048, %v10052
    %v10055 = vadd.f32 %v10032, %v10053
    %v10056 = vadd.f32 %v10033, %v10053
    %v10057 = vadd.f32 %v10034, %v10053
    %v10058 = vadd.f32 %v10035, %v10053
    %v10059 = vadd.f32 %v10036, %v10053
    %v10060 = vadd.f32 %v10037, %v10053
    %v10061 = vadd.f32 %v10038, %v10053
    %v10062 = vadd.f32 %v10039, %v10053
    %v10063 = vadd.f32 %v10040, %v10053
    %v10064 = vadd.f32 %v10041, %v10053
    %v10065 = vadd.f32 %v10042, %v10053
    %v10066 = vadd.f32 %v10043, %v10053
    %v10067 = vadd.f32 %v10044, %v10053
    %v10068 = vadd.f32 %v10045, %v10053
    %v10069 = vadd.f32 %v10046, %v10053
    %v10070 = vadd.f32 %v10047, %v10053
    %v10071 = vld [vmem:[#allocation9] sm:$0xf]
    %v10072 = vld [vmem:[#allocation9 + $0x4] sm:$0xf]
    %v10073 = vld [vmem:[#allocation9 + $0x8] sm:$0xf]
    %v10074 = vld [vmem:[#allocation9 + $0xc] sm:$0xf]
    %v10075 = vld [vmem:[#allocation9 + $0x10] sm:$0xf]
    %v10076 = vld [vmem:[#allocation9 + $0x14] sm:$0xf]
    %v10077 = vld [vmem:[#allocation9 + $0x18] sm:$0xf]
    %v10078 = vld [vmem:[#allocation9 + $0x1c] sm:$0xf]
    %s10079 = scalar_lea.vmem [#allocation9], 32
    %v10080 = vld [vmem:[%s10079] sm:$0xf]
    %v10081 = vld [vmem:[%s10079 + $0x4] sm:$0xf]
    %v10082 = vld [vmem:[%s10079 + $0x8] sm:$0xf]
    %v10083 = vld [vmem:[%s10079 + $0xc] sm:$0xf]
    %v10084 = vld [vmem:[%s10079 + $0x10] sm:$0xf]
    %v10085 = vld [vmem:[%s10079 + $0x14] sm:$0xf]
    %v10086 = vld [vmem:[%s10079 + $0x18] sm:$0xf]
    %v10087 = vld [vmem:[%s10079 + $0x1c] sm:$0xf]
    %s10088 = scalar_lea.vmem [#allocation9], 64
    %v10089 = vld [vmem:[%s10088] sm:$0xf]
    %v10090 = vld [vmem:[%s10088 + $0x4] sm:$0xf]
    %v10091 = vld [vmem:[%s10088 + $0x8] sm:$0xf]
    %v10092 = vld [vmem:[%s10088 + $0xc] sm:$0xf]
    %v10093 = vld [vmem:[%s10088 + $0x10] sm:$0xf]
    %v10094 = vld [vmem:[%s10088 + $0x14] sm:$0xf]
    %v10095 = vld [vmem:[%s10088 + $0x18] sm:$0xf]
    %v10096 = vld [vmem:[%s10088 + $0x1c] sm:$0xf]
    %v10097 = vld [vmem:[%s10] sm:$0x1]
    %v10099 = vrot.slane %v10070, 7
    %v10116 = vrot.slane %v10055, 7
    %v10117 = vrot.slane %v10056, 7
    %v10118 = vsel %vm186, %v10116, %v10117
    %v10119 = vrot.slane %v10057, 7
    %v10120 = vsel %vm186, %v10117, %v10119
    %v10121 = vrot.slane %v10058, 7
    %v10122 = vsel %vm186, %v10119, %v10121
    %v10123 = vrot.slane %v10059, 7
    %v10124 = vsel %vm186, %v10121, %v10123
    %v10125 = vrot.slane %v10060, 7
    %v10126 = vsel %vm186, %v10123, %v10125
    %v10127 = vrot.slane %v10061, 7
    %v10128 = vsel %vm186, %v10125, %v10127
    %v10129 = vrot.slane %v10062, 7
    %v10130 = vsel %vm186, %v10127, %v10129
    %v10131 = vrot.slane %v10063, 7
    %v10132 = vsel %vm186, %v10129, %v10131
    %v10133 = vrot.slane %v10064, 7
    %v10134 = vsel %vm186, %v10131, %v10133
    %v10135 = vrot.slane %v10065, 7
    %v10136 = vsel %vm186, %v10133, %v10135
    %v10137 = vrot.slane %v10066, 7
    %v10138 = vsel %vm186, %v10135, %v10137
    %v10139 = vrot.slane %v10067, 7
    %v10140 = vsel %vm186, %v10137, %v10139
    %v10141 = vrot.slane %v10068, 7
    %v10142 = vsel %vm186, %v10139, %v10141
    %v10143 = vrot.slane %v10069, 7
    %v10144 = vsel %vm186, %v10141, %v10143
    %v10145 = vsel %vm186, %v10143, %v10099
    %v10162 = vsel %vm186, %v10099, %v10116
    %v10163 = vsel %vm298, %v10162, 0.0
    %v10164 = vsel %vm299, %v10118, 0.0
    %v10165 = vsel %vm300, %v10120, 0.0
    %v10166 = vsel %vm301, %v10122, 0.0
    %v10167 = vsel %vm302, %v10124, 0.0
    %v10168 = vsel %vm303, %v10126, 0.0
    %v10169 = vsel %vm304, %v10128, 0.0
    %v10170 = vsel %vm305, %v10130, 0.0
    %v10171 = vsel %vm306, %v10132, 0.0
    %v10172 = vsel %vm307, %v10134, 0.0
    %v10173 = vsel %vm308, %v10136, 0.0
    %v10174 = vsel %vm309, %v10138, 0.0
    %v10175 = vsel %vm310, %v10140, 0.0
    %v10176 = vsel %vm311, %v10142, 0.0
    %v10177 = vsel %vm312, %v10144, 0.0
    %v10178 = vsel %vm313, %v10145, 0.0
    %v10179 = vpack.c.bf16 %v10164, %v10163
    %v10180 = vpack.c.bf16 %v10166, %v10165
    %v10181 = vpack.c.bf16 %v10168, %v10167
    %v10182 = vpack.c.bf16 %v10170, %v10169
    %v10183 = vpack.c.bf16 %v10172, %v10171
    %v10184 = vpack.c.bf16 %v10174, %v10173
    %v10185 = vpack.c.bf16 %v10176, %v10175
    %v10186 = vpack.c.bf16 %v10178, %v10177
    %v10187 = vpack.c.bf16 %v10056, %v10055
    %v10188 = vpack.c.bf16 %v10058, %v10057
    %v10189 = vpack.c.bf16 %v10060, %v10059
    %v10190 = vpack.c.bf16 %v10062, %v10061
    %v10191 = vpack.c.bf16 %v10064, %v10063
    %v10192 = vpack.c.bf16 %v10066, %v10065
    %v10193 = vpack.c.bf16 %v10068, %v10067
    %v10194 = vpack.c.bf16 %v10070, %v10069
    %v10203 = vunpack.c.l.b16 %v10080
    %v10204 = vunpack.c.l.b16 %v10081
    %v10205 = vunpack.c.l.b16 %v10082
    %v10206 = vunpack.c.l.b16 %v10083
    %v10207 = vunpack.c.l.b16 %v10084
    %v10208 = vunpack.c.l.b16 %v10085
    %v10209 = vunpack.c.l.b16 %v10086
    %v10210 = vunpack.c.l.b16 %v10087
    %v10211 = vpack.c.b16 %v10204, %v10203
    %v10212 = vpack.c.b16 %v10206, %v10205
    %v10213 = vpack.c.b16 %v10208, %v10207
    %v10214 = vpack.c.b16 %v10210, %v10209
    %vm10219 = vcmask 523264
    %v10221 = vsel %vm10219, %v10187, 0
    %v10224 = vsel %vm10219, %v10188, 0
    %v10227 = vsel %vm10219, %v10189, 0
    %v10230 = vsel %vm10219, %v10190, 0
    %v10233 = vsel %vm10219, %v10191, 0
    %v10236 = vsel %vm10219, %v10192, 0
    %v10239 = vsel %vm10219, %v10193, 0
    %v10242 = vsel %vm10219, %v10194, 0
    %10244 = vmatprep.subr.bf16.mxu0 0
    %10245 = vmatpush1.bf16.msra.mxu0 %v10211
    %10246 = vmatprep.subr.bf16.mxu0 0
    %10247 = vmatpush1.bf16.msra.mxu0 %v10212
    %10248 = vmatprep.subr.bf16.mxu0 0
    %10249 = vmatpush1.bf16.msra.mxu0 %v10213
    %10250 = vmatprep.subr.bf16.mxu0 0
    %10251 = vmatpush1.bf16.msra.mxu0 %v10214
    %10252 = vmatprep.subr.bf16.mxu0 0
    %10253 = vmatpush1.bf16.msra.mxu0 0
    %10254 = vmatprep.subr.bf16.mxu0 0
    %10255 = vmatpush1.bf16.msra.mxu0 0
    %10256 = vmatprep.subr.bf16.mxu0 0
    %10257 = vmatpush1.bf16.msra.mxu0 0
    %10258 = vmatprep.subr.bf16.mxu0 0
    %10259 = vmatpush1.bf16.msra.mxu0 0
    %10260 = vmatprep.subr.bf16.mxu0 0
    %10261 = vmatpush1.bf16.msra.mxu0 0
    %10262 = vmatprep.subr.bf16.mxu0 0
    %10263 = vmatpush1.bf16.msra.mxu0 0
    %10264 = vmatprep.subr.bf16.mxu0 0
    %10265 = vmatpush1.bf16.msra.mxu0 0
    %10266 = vmatprep.subr.bf16.mxu0 0
    %10267 = vmatpush1.bf16.msra.mxu0 0
    %10268 = vmatprep.subr.bf16.mxu0 0
    %10269 = vmatpush1.bf16.msra.mxu0 0
    %10270 = vmatprep.subr.bf16.mxu0 0
    %10271 = vmatpush1.bf16.msra.mxu0 0
    %10272 = vmatprep.subr.bf16.mxu0 0
    %10273 = vmatpush1.bf16.msra.mxu0 0
    %10274 = vmatprep.subr.bf16.mxu0 0
    %10275 = vmatpush1.bf16.msra.mxu0 0
    %10276 = vmatprep.mubr.bf16.mxu0 0
    %10277 = vmatmul.mubr.bf16.gmra.mrb[0].mxu0 %v10221
    %v10278 = vpop.f32.mrb[0].mxu0
    %v10279 = vadd.f32 0.0, %v10278
    %v10280 = vpop.f32.mrb[0].mxu0
    %v10281 = vpop.f32.mrb[0].mxu0
    %v10282 = vadd.f32 0.0, %v10281
    %v10283 = vpop.f32.mrb[0].mxu0
    %10284 = vmatprep.mubr.bf16.mxu0 0
    %10285 = vmatmul.mubr.bf16.gmra.mrb[0].mxu0 %v10224
    %v10286 = vpop.f32.mrb[0].mxu0
    %v10287 = vadd.f32 0.0, %v10286
    %v10288 = vpop.f32.mrb[0].mxu0
    %v10289 = vpop.f32.mrb[0].mxu0
    %v10290 = vadd.f32 0.0, %v10289
    %v10291 = vpop.f32.mrb[0].mxu0
    %10292 = vmatprep.mubr.bf16.mxu0 0
    %10293 = vmatmul.mubr.bf16.gmra.mrb[0].mxu0 %v10227
    %v10294 = vpop.f32.mrb[0].mxu0
    %v10295 = vadd.f32 0.0, %v10294
    %v10296 = vpop.f32.mrb[0].mxu0
    %v10297 = vpop.f32.mrb[0].mxu0
    %v10298 = vadd.f32 0.0, %v10297
    %v10299 = vpop.f32.mrb[0].mxu0
    %10300 = vmatprep.mubr.bf16.mxu0 0
    %10301 = vmatmul.mubr.bf16.gmra.mrb[0].mxu0 %v10230
    %v10302 = vpop.f32.mrb[0].mxu0
    %v10303 = vadd.f32 0.0, %v10302
    %v10304 = vpop.f32.mrb[0].mxu0
    %v10305 = vpop.f32.mrb[0].mxu0
    %v10306 = vadd.f32 0.0, %v10305
    %v10307 = vpop.f32.mrb[0].mxu0
    %10308 = vmatprep.mubr.bf16.mxu0 0
    %10309 = vmatmul.mubr.bf16.gmra.mrb[0].mxu0 %v10233
    %v10310 = vpop.f32.mrb[0].mxu0
    %v10311 = vadd.f32 0.0, %v10310
    %v10312 = vpop.f32.mrb[0].mxu0
    %v10313 = vpop.f32.mrb[0].mxu0
    %v10314 = vadd.f32 0.0, %v10313
    %v10315 = vpop.f32.mrb[0].mxu0
    %10316 = vmatprep.mubr.bf16.mxu0 0
    %10317 = vmatmul.mubr.bf16.gmra.mrb[0].mxu0 %v10236
    %v10318 = vpop.f32.mrb[0].mxu0
    %v10319 = vadd.f32 0.0, %v10318
    %v10320 = vpop.f32.mrb[0].mxu0
    %v10321 = vpop.f32.mrb[0].mxu0
    %v10322 = vadd.f32 0.0, %v10321
    %v10323 = vpop.f32.mrb[0].mxu0
    %10324 = vmatprep.mubr.bf16.mxu0 0
    %10325 = vmatmul.mubr.bf16.gmra.mrb[0].mxu0 %v10239
    %v10326 = vpop.f32.mrb[0].mxu0
    %v10327 = vadd.f32 0.0, %v10326
    %v10328 = vpop.f32.mrb[0].mxu0
    %v10329 = vpop.f32.mrb[0].mxu0
    %v10330 = vadd.f32 0.0, %v10329
    %v10331 = vpop.f32.mrb[0].mxu0
    %10332 = vmatprep.mubr.bf16.mxu0 0
    %10333 = vmatmul.mubr.bf16.gmra.mrb[0].mxu0 %v10242
    %v10334 = vpop.f32.mrb[0].mxu0
    %v10335 = vadd.f32 0.0, %v10334
    %v10336 = vpop.f32.mrb[0].mxu0
    %v10337 = vpop.f32.mrb[0].mxu0
    %v10338 = vadd.f32 0.0, %v10337
    %v10339 = vpop.f32.mrb[0].mxu0
    %10340 = vdwg.mxu0
    %v10349 = vunpack.c.l.b16 %v10071
    %v10350 = vunpack.c.l.b16 %v10072
    %v10351 = vunpack.c.l.b16 %v10073
    %v10352 = vunpack.c.l.b16 %v10074
    %v10353 = vunpack.c.l.b16 %v10075
    %v10354 = vunpack.c.l.b16 %v10076
    %v10355 = vunpack.c.l.b16 %v10077
    %v10356 = vunpack.c.l.b16 %v10078
    %v10357 = vpack.c.b16 %v10350, %v10349
    %v10358 = vpack.c.b16 %v10352, %v10351
    %v10359 = vpack.c.b16 %v10354, %v10353
    %v10360 = vpack.c.b16 %v10356, %v10355
    %v10366 = vsel %vm10219, %v10179, 0
    %v10369 = vsel %vm10219, %v10180, 0
    %v10372 = vsel %vm10219, %v10181, 0
    %v10375 = vsel %vm10219, %v10182, 0
    %v10378 = vsel %vm10219, %v10183, 0
    %v10381 = vsel %vm10219, %v10184, 0
    %v10384 = vsel %vm10219, %v10185, 0
    %v10387 = vsel %vm10219, %v10186, 0
    %10389 = vmatprep.subr.bf16.mxu0 0
    %10390 = vmatpush1.bf16.msra.mxu0 %v10357
    %10391 = vmatprep.subr.bf16.mxu0 0
    %10392 = vmatpush1.bf16.msra.mxu0 %v10358
    %10393 = vmatprep.subr.bf16.mxu0 0
    %10394 = vmatpush1.bf16.msra.mxu0 %v10359
    %10395 = vmatprep.subr.bf16.mxu0 0
    %10396 = vmatpush1.bf16.msra.mxu0 %v10360
    %10397 = vmatprep.subr.bf16.mxu0 0
    %10398 = vmatpush1.bf16.msra.mxu0 0
    %10399 = vmatprep.subr.bf16.mxu0 0
    %10400 = vmatpush1.bf16.msra.mxu0 0
    %10401 = vmatprep.subr.bf16.mxu0 0
    %10402 = vmatpush1.bf16.msra.mxu0 0
    %10403 = vmatprep.subr.bf16.mxu0 0
    %10404 = vmatpush1.bf16.msra.mxu0 0
    %10405 = vmatprep.subr.bf16.mxu0 0
    %10406 = vmatpush1.bf16.msra.mxu0 0
    %10407 = vmatprep.subr.bf16.mxu0 0
    %10408 = vmatpush1.bf16.msra.mxu0 0
    %10409 = vmatprep.subr.bf16.mxu0 0
    %10410 = vmatpush1.bf16.msra.mxu0 0
    %10411 = vmatprep.subr.bf16.mxu0 0
    %10412 = vmatpush1.bf16.msra.mxu0 0
    %10413 = vmatprep.subr.bf16.mxu0 0
    %10414 = vmatpush1.bf16.msra.mxu0 0
    %10415 = vmatprep.subr.bf16.mxu0 0
    %10416 = vmatpush1.bf16.msra.mxu0 0
    %10417 = vmatprep.subr.bf16.mxu0 0
    %10418 = vmatpush1.bf16.msra.mxu0 0
    %10419 = vmatprep.subr.bf16.mxu0 0
    %10420 = vmatpush1.bf16.msra.mxu0 0
    %10421 = vmatprep.mubr.bf16.mxu0 0
    %10422 = vmatmul.mubr.bf16.gmra.mrb[0].mxu0 %v10366
    %v10423 = vpop.f32.mrb[0].mxu0
    %v10424 = vadd.f32 %v10279, %v10423
    %v10425 = vpop.f32.mrb[0].mxu0
    %v10426 = vpop.f32.mrb[0].mxu0
    %v10427 = vadd.f32 %v10282, %v10426
    %v10428 = vpop.f32.mrb[0].mxu0
    %10429 = vmatprep.mubr.bf16.mxu0 0
    %10430 = vmatmul.mubr.bf16.gmra.mrb[0].mxu0 %v10369
    %v10431 = vpop.f32.mrb[0].mxu0
    %v10432 = vadd.f32 %v10287, %v10431
    %v10433 = vpop.f32.mrb[0].mxu0
    %v10434 = vpop.f32.mrb[0].mxu0
    %v10435 = vadd.f32 %v10290, %v10434
    %v10436 = vpop.f32.mrb[0].mxu0
    %10437 = vmatprep.mubr.bf16.mxu0 0
    %10438 = vmatmul.mubr.bf16.gmra.mrb[0].mxu0 %v10372
    %v10439 = vpop.f32.mrb[0].mxu0
    %v10440 = vadd.f32 %v10295, %v10439
    %v10441 = vpop.f32.mrb[0].mxu0
    %v10442 = vpop.f32.mrb[0].mxu0
    %v10443 = vadd.f32 %v10298, %v10442
    %v10444 = vpop.f32.mrb[0].mxu0
    %10445 = vmatprep.mubr.bf16.mxu0 0
    %10446 = vmatmul.mubr.bf16.gmra.mrb[0].mxu0 %v10375
    %v10447 = vpop.f32.mrb[0].mxu0
    %v10448 = vadd.f32 %v10303, %v10447
    %v10449 = vpop.f32.mrb[0].mxu0
    %v10450 = vpop.f32.mrb[0].mxu0
    %v10451 = vadd.f32 %v10306, %v10450
    %v10452 = vpop.f32.mrb[0].mxu0
    %10453 = vmatprep.mubr.bf16.mxu0 0
    %10454 = vmatmul.mubr.bf16.gmra.mrb[0].mxu0 %v10378
    %v10455 = vpop.f32.mrb[0].mxu0
    %v10456 = vadd.f32 %v10311, %v10455
    %v10457 = vpop.f32.mrb[0].mxu0
    %v10458 = vpop.f32.mrb[0].mxu0
    %v10459 = vadd.f32 %v10314, %v10458
    %v10460 = vpop.f32.mrb[0].mxu0
    %10461 = vmatprep.mubr.bf16.mxu0 0
    %10462 = vmatmul.mubr.bf16.gmra.mrb[0].mxu0 %v10381
    %v10463 = vpop.f32.mrb[0].mxu0
    %v10464 = vadd.f32 %v10319, %v10463
    %v10465 = vpop.f32.mrb[0].mxu0
    %v10466 = vpop.f32.mrb[0].mxu0
    %v10467 = vadd.f32 %v10322, %v10466
    %v10468 = vpop.f32.mrb[0].mxu0
    %10469 = vmatprep.mubr.bf16.mxu0 0
    %10470 = vmatmul.mubr.bf16.gmra.mrb[0].mxu0 %v10384
    %v10471 = vpop.f32.mrb[0].mxu0
    %v10472 = vadd.f32 %v10327, %v10471
    %v10473 = vpop.f32.mrb[0].mxu0
    %v10474 = vpop.f32.mrb[0].mxu0
    %v10475 = vadd.f32 %v10330, %v10474
    %v10476 = vpop.f32.mrb[0].mxu0
    %10477 = vmatprep.mubr.bf16.mxu0 0
    %10478 = vmatmul.mubr.bf16.gmra.mrb[0].mxu0 %v10387
    %v10479 = vpop.f32.mrb[0].mxu0
    %v10480 = vadd.f32 %v10335, %v10479
    %v10481 = vpop.f32.mrb[0].mxu0
    %v10482 = vpop.f32.mrb[0].mxu0
    %v10483 = vadd.f32 %v10338, %v10482
    %v10484 = vpop.f32.mrb[0].mxu0
    %10485 = vdwg.mxu0
    %v10486 = vrot.slane %v10055, 1
    %v10487 = vrot.slane %v10056, 1
    %v10488 = vsel %vm617, %v10486, %v10487
    %v10489 = vrot.slane %v10057, 1
    %v10490 = vsel %vm617, %v10487, %v10489
    %v10491 = vrot.slane %v10058, 1
    %v10492 = vsel %vm617, %v10489, %v10491
    %v10493 = vrot.slane %v10059, 1
    %v10494 = vsel %vm617, %v10491, %v10493
    %v10495 = vrot.slane %v10060, 1
    %v10496 = vsel %vm617, %v10493, %v10495
    %v10497 = vrot.slane %v10061, 1
    %v10498 = vsel %vm617, %v10495, %v10497
    %v10499 = vrot.slane %v10062, 1
    %v10500 = vsel %vm617, %v10497, %v10499
    %v10501 = vrot.slane %v10063, 1
    %v10502 = vsel %vm617, %v10499, %v10501
    %v10503 = vrot.slane %v10064, 1
    %v10504 = vsel %vm617, %v10501, %v10503
    %v10505 = vrot.slane %v10065, 1
    %v10506 = vsel %vm617, %v10503, %v10505
    %v10507 = vrot.slane %v10066, 1
    %v10508 = vsel %vm617, %v10505, %v10507
    %v10509 = vrot.slane %v10067, 1
    %v10510 = vsel %vm617, %v10507, %v10509
    %v10511 = vrot.slane %v10068, 1
    %v10512 = vsel %vm617, %v10509, %v10511
    %v10513 = vrot.slane %v10069, 1
    %v10514 = vsel %vm617, %v10511, %v10513
    %v10515 = vrot.slane %v10070, 1
    %v10516 = vsel %vm617, %v10513, %v10515
    %v10534 = vsel %vm617, %v10515, %v10486
    %v10535 = vsel %vm731, %v10488, 0.0
    %v10536 = vsel %vm732, %v10490, 0.0
    %v10537 = vsel %vm733, %v10492, 0.0
    %v10538 = vsel %vm734, %v10494, 0.0
    %v10539 = vsel %vm735, %v10496, 0.0
    %v10540 = vsel %vm736, %v10498, 0.0
    %v10541 = vsel %vm737, %v10500, 0.0
    %v10542 = vsel %vm738, %v10502, 0.0
    %v10543 = vsel %vm739, %v10504, 0.0
    %v10544 = vsel %vm740, %v10506, 0.0
    %v10545 = vsel %vm741, %v10508, 0.0
    %v10546 = vsel %vm742, %v10510, 0.0
    %v10547 = vsel %vm743, %v10512, 0.0
    %v10548 = vsel %vm744, %v10514, 0.0
    %v10549 = vsel %vm745, %v10516, 0.0
    %v10550 = vsel %vm746, %v10534, 0.0
    %v10551 = vpack.c.bf16 %v10536, %v10535
    %v10552 = vpack.c.bf16 %v10538, %v10537
    %v10553 = vpack.c.bf16 %v10540, %v10539
    %v10554 = vpack.c.bf16 %v10542, %v10541
    %v10555 = vpack.c.bf16 %v10544, %v10543
    %v10556 = vpack.c.bf16 %v10546, %v10545
    %v10557 = vpack.c.bf16 %v10548, %v10547
    %v10558 = vpack.c.bf16 %v10550, %v10549
    %v10567 = vunpack.c.l.b16 %v10089
    %v10568 = vunpack.c.l.b16 %v10090
    %v10569 = vunpack.c.l.b16 %v10091
    %v10570 = vunpack.c.l.b16 %v10092
    %v10571 = vunpack.c.l.b16 %v10093
    %v10572 = vunpack.c.l.b16 %v10094
    %v10573 = vunpack.c.l.b16 %v10095
    %v10574 = vunpack.c.l.b16 %v10096
    %v10575 = vpack.c.b16 %v10568, %v10567
    %v10576 = vpack.c.b16 %v10570, %v10569
    %v10577 = vpack.c.b16 %v10572, %v10571
    %v10578 = vpack.c.b16 %v10574, %v10573
    %v10584 = vsel %vm10219, %v10551, 0
    %v10587 = vsel %vm10219, %v10552, 0
    %v10590 = vsel %vm10219, %v10553, 0
    %v10593 = vsel %vm10219, %v10554, 0
    %v10596 = vsel %vm10219, %v10555, 0
    %v10599 = vsel %vm10219, %v10556, 0
    %v10602 = vsel %vm10219, %v10557, 0
    %v10605 = vsel %vm10219, %v10558, 0
    %10607 = vmatprep.subr.bf16.mxu0 0
    %10608 = vmatpush1.bf16.msra.mxu0 %v10575
    %10609 = vmatprep.subr.bf16.mxu0 0
    %10610 = vmatpush1.bf16.msra.mxu0 %v10576
    %10611 = vmatprep.subr.bf16.mxu0 0
    %10612 = vmatpush1.bf16.msra.mxu0 %v10577
    %10613 = vmatprep.subr.bf16.mxu0 0
    %10614 = vmatpush1.bf16.msra.mxu0 %v10578
    %10615 = vmatprep.subr.bf16.mxu0 0
    %10616 = vmatpush1.bf16.msra.mxu0 0
    %10617 = vmatprep.subr.bf16.mxu0 0
    %10618 = vmatpush1.bf16.msra.mxu0 0
    %10619 = vmatprep.subr.bf16.mxu0 0
    %10620 = vmatpush1.bf16.msra.mxu0 0
    %10621 = vmatprep.subr.bf16.mxu0 0
    %10622 = vmatpush1.bf16.msra.mxu0 0
    %10623 = vmatprep.subr.bf16.mxu0 0
    %10624 = vmatpush1.bf16.msra.mxu0 0
    %10625 = vmatprep.subr.bf16.mxu0 0
    %10626 = vmatpush1.bf16.msra.mxu0 0
    %10627 = vmatprep.subr.bf16.mxu0 0
    %10628 = vmatpush1.bf16.msra.mxu0 0
    %10629 = vmatprep.subr.bf16.mxu0 0
    %10630 = vmatpush1.bf16.msra.mxu0 0
    %10631 = vmatprep.subr.bf16.mxu0 0
    %10632 = vmatpush1.bf16.msra.mxu0 0
    %10633 = vmatprep.subr.bf16.mxu0 0
    %10634 = vmatpush1.bf16.msra.mxu0 0
    %10635 = vmatprep.subr.bf16.mxu0 0
    %10636 = vmatpush1.bf16.msra.mxu0 0
    %10637 = vmatprep.subr.bf16.mxu0 0
    %10638 = vmatpush1.bf16.msra.mxu0 0
    %10639 = vmatprep.mubr.bf16.mxu0 0
    %10640 = vmatmul.mubr.bf16.gmra.mrb[0].mxu0 %v10584
    %v10641 = vpop.f32.mrb[0].mxu0
    %v10642 = vadd.f32 0.0, %v10641
    %v10643 = vpop.f32.mrb[0].mxu0
    %v10644 = vpop.f32.mrb[0].mxu0
    %v10645 = vadd.f32 0.0, %v10644
    %v10646 = vpop.f32.mrb[0].mxu0
    %10647 = vmatprep.mubr.bf16.mxu0 0
    %10648 = vmatmul.mubr.bf16.gmra.mrb[0].mxu0 %v10587
    %v10649 = vpop.f32.mrb[0].mxu0
    %v10650 = vadd.f32 0.0, %v10649
    %v10651 = vpop.f32.mrb[0].mxu0
    %v10652 = vpop.f32.mrb[0].mxu0
    %v10653 = vadd.f32 0.0, %v10652
    %v10654 = vpop.f32.mrb[0].mxu0
    %10655 = vmatprep.mubr.bf16.mxu0 0
    %10656 = vmatmul.mubr.bf16.gmra.mrb[0].mxu0 %v10590
    %v10657 = vpop.f32.mrb[0].mxu0
    %v10658 = vadd.f32 0.0, %v10657
    %v10659 = vpop.f32.mrb[0].mxu0
    %v10660 = vpop.f32.mrb[0].mxu0
    %v10661 = vadd.f32 0.0, %v10660
    %v10662 = vpop.f32.mrb[0].mxu0
    %10663 = vmatprep.mubr.bf16.mxu0 0
    %10664 = vmatmul.mubr.bf16.gmra.mrb[0].mxu0 %v10593
    %v10665 = vpop.f32.mrb[0].mxu0
    %v10666 = vadd.f32 0.0, %v10665
    %v10667 = vpop.f32.mrb[0].mxu0
    %v10668 = vpop.f32.mrb[0].mxu0
    %v10669 = vadd.f32 0.0, %v10668
    %v10670 = vpop.f32.mrb[0].mxu0
    %10671 = vmatprep.mubr.bf16.mxu0 0
    %10672 = vmatmul.mubr.bf16.gmra.mrb[0].mxu0 %v10596
    %v10673 = vpop.f32.mrb[0].mxu0
    %v10674 = vadd.f32 0.0, %v10673
    %v10675 = vpop.f32.mrb[0].mxu0
    %v10676 = vpop.f32.mrb[0].mxu0
    %v10677 = vadd.f32 0.0, %v10676
    %v10678 = vpop.f32.mrb[0].mxu0
    %10679 = vmatprep.mubr.bf16.mxu0 0
    %10680 = vmatmul.mubr.bf16.gmra.mrb[0].mxu0 %v10599
    %v10681 = vpop.f32.mrb[0].mxu0
    %v10682 = vadd.f32 0.0, %v10681
    %v10683 = vpop.f32.mrb[0].mxu0
    %v10684 = vpop.f32.mrb[0].mxu0
    %v10685 = vadd.f32 0.0, %v10684
    %v10686 = vpop.f32.mrb[0].mxu0
    %10687 = vmatprep.mubr.bf16.mxu0 0
    %10688 = vmatmul.mubr.bf16.gmra.mrb[0].mxu0 %v10602
    %v10689 = vpop.f32.mrb[0].mxu0
    %v10690 = vadd.f32 0.0, %v10689
    %v10691 = vpop.f32.mrb[0].mxu0
    %v10692 = vpop.f32.mrb[0].mxu0
    %v10693 = vadd.f32 0.0, %v10692
    %v10694 = vpop.f32.mrb[0].mxu0
    %10695 = vmatprep.mubr.bf16.mxu0 0
    %10696 = vmatmul.mubr.bf16.gmra.mrb[0].mxu0 %v10605
    %v10697 = vpop.f32.mrb[0].mxu0
    %v10698 = vadd.f32 0.0, %v10697
    %v10699 = vpop.f32.mrb[0].mxu0
    %v10700 = vpop.f32.mrb[0].mxu0
    %v10701 = vadd.f32 0.0, %v10700
    %v10702 = vpop.f32.mrb[0].mxu0
    %10703 = vdwg.mxu0
    %v10704 = vadd.f32 %v10424, %v10642
    %v10705 = vadd.f32 %v10427, %v10645
    %v10706 = vadd.f32 %v10432, %v10650
    %v10707 = vadd.f32 %v10435, %v10653
    %v10708 = vadd.f32 %v10440, %v10658
    %v10709 = vadd.f32 %v10443, %v10661
    %v10710 = vadd.f32 %v10448, %v10666
    %v10711 = vadd.f32 %v10451, %v10669
    %v10712 = vadd.f32 %v10456, %v10674
    %v10713 = vadd.f32 %v10459, %v10677
    %v10714 = vadd.f32 %v10464, %v10682
    %v10715 = vadd.f32 %v10467, %v10685
    %v10716 = vadd.f32 %v10472, %v10690
    %v10717 = vadd.f32 %v10475, %v10693
    %v10718 = vadd.f32 %v10480, %v10698
    %v10719 = vadd.f32 %v10483, %v10701
    %v10721 = vlaneseq
    %v10722 = vshrl.u32 %v10721, 7
    %v10723 = vsub.s32 0, %v10722
    %v10724 = vrot.slane %v10097, %v10723
    %v10726 = vadd.f32 %v10704, %v10724
    %v10727 = vadd.f32 %v10705, %v10724
    %v10728 = vadd.f32 %v10706, %v10724
    %v10729 = vadd.f32 %v10707, %v10724
    %v10730 = vadd.f32 %v10708, %v10724
    %v10731 = vadd.f32 %v10709, %v10724
    %v10732 = vadd.f32 %v10710, %v10724
    %v10733 = vadd.f32 %v10711, %v10724
    %v10734 = vadd.f32 %v10712, %v10724
    %v10735 = vadd.f32 %v10713, %v10724
    %v10736 = vadd.f32 %v10714, %v10724
    %v10737 = vadd.f32 %v10715, %v10724
    %v10738 = vadd.f32 %v10716, %v10724
    %v10739 = vadd.f32 %v10717, %v10724
    %v10740 = vadd.f32 %v10718, %v10724
    %v10741 = vadd.f32 %v10719, %v10724
    %v10742 = vmax.f32 %v10726, 0.0
    %v10743 = vmax.f32 %v10727, 0.0
    %v10744 = vmax.f32 %v10728, 0.0
    %v10745 = vmax.f32 %v10729, 0.0
    %v10746 = vmax.f32 %v10730, 0.0
    %v10747 = vmax.f32 %v10731, 0.0
    %v10748 = vmax.f32 %v10732, 0.0
    %v10749 = vmax.f32 %v10733, 0.0
    %v10750 = vmax.f32 %v10734, 0.0
    %v10751 = vmax.f32 %v10735, 0.0
    %v10752 = vmax.f32 %v10736, 0.0
    %v10753 = vmax.f32 %v10737, 0.0
    %v10754 = vmax.f32 %v10738, 0.0
    %v10755 = vmax.f32 %v10739, 0.0
    %v10756 = vmax.f32 %v10740, 0.0
    %v10757 = vmax.f32 %v10741, 0.0
    %v10758 = vld [vmem:[%s11] sm:$0xf]
    %v10759 = vld [vmem:[%s11 + $0x4] sm:$0xf]
    %v10760 = vld [vmem:[%s11 + $0x8] sm:$0xf]
    %v10761 = vld [vmem:[%s11 + $0xc] sm:$0xf]
    %v10762 = vld [vmem:[%s11 + $0x10] sm:$0xf]
    %v10763 = vld [vmem:[%s11 + $0x14] sm:$0xf]
    %v10764 = vld [vmem:[%s11 + $0x18] sm:$0xf]
    %v10765 = vld [vmem:[%s11 + $0x1c] sm:$0xf]
    %s10766 = scalar_lea.vmem %s11, 32
    %v10767 = vld [vmem:[%s10766] sm:$0xf]
    %v10768 = vld [vmem:[%s10766 + $0x4] sm:$0xf]
    %v10769 = vld [vmem:[%s10766 + $0x8] sm:$0xf]
    %v10770 = vld [vmem:[%s10766 + $0xc] sm:$0xf]
    %v10771 = vld [vmem:[%s10766 + $0x10] sm:$0xf]
    %v10772 = vld [vmem:[%s10766 + $0x14] sm:$0xf]
    %v10773 = vld [vmem:[%s10766 + $0x18] sm:$0xf]
    %v10774 = vld [vmem:[%s10766 + $0x1c] sm:$0xf]
    %s10775 = scalar_lea.vmem %s11, 64
    %v10776 = vld [vmem:[%s10775] sm:$0xf]
    %v10777 = vld [vmem:[%s10775 + $0x4] sm:$0xf]
    %v10778 = vld [vmem:[%s10775 + $0x8] sm:$0xf]
    %v10779 = vld [vmem:[%s10775 + $0xc] sm:$0xf]
    %v10780 = vld [vmem:[%s10775 + $0x10] sm:$0xf]
    %v10781 = vld [vmem:[%s10775 + $0x14] sm:$0xf]
    %v10782 = vld [vmem:[%s10775 + $0x18] sm:$0xf]
    %v10783 = vld [vmem:[%s10775 + $0x1c] sm:$0xf]
    %v10784 = vld [vmem:[%s12] sm:$0x1]
    %v10786 = vrot.slane %v10757, 7
    %v10803 = vrot.slane %v10742, 7
    %v10804 = vrot.slane %v10743, 7
    %v10805 = vsel %vm186, %v10803, %v10804
    %v10806 = vrot.slane %v10744, 7
    %v10807 = vsel %vm186, %v10804, %v10806
    %v10808 = vrot.slane %v10745, 7
    %v10809 = vsel %vm186, %v10806, %v10808
    %v10810 = vrot.slane %v10746, 7
    %v10811 = vsel %vm186, %v10808, %v10810
    %v10812 = vrot.slane %v10747, 7
    %v10813 = vsel %vm186, %v10810, %v10812
    %v10814 = vrot.slane %v10748, 7
    %v10815 = vsel %vm186, %v10812, %v10814
    %v10816 = vrot.slane %v10749, 7
    %v10817 = vsel %vm186, %v10814, %v10816
    %v10818 = vrot.slane %v10750, 7
    %v10819 = vsel %vm186, %v10816, %v10818
    %v10820 = vrot.slane %v10751, 7
    %v10821 = vsel %vm186, %v10818, %v10820
    %v10822 = vrot.slane %v10752, 7
    %v10823 = vsel %vm186, %v10820, %v10822
    %v10824 = vrot.slane %v10753, 7
    %v10825 = vsel %vm186, %v10822, %v10824
    %v10826 = vrot.slane %v10754, 7
    %v10827 = vsel %vm186, %v10824, %v10826
    %v10828 = vrot.slane %v10755, 7
    %v10829 = vsel %vm186, %v10826, %v10828
    %v10830 = vrot.slane %v10756, 7
    %v10831 = vsel %vm186, %v10828, %v10830
    %v10832 = vsel %vm186, %v10830, %v10786
    %v10849 = vsel %vm186, %v10786, %v10803
    %v10850 = vsel %vm298, %v10849, 0.0
    %v10851 = vsel %vm299, %v10805, 0.0
    %v10852 = vsel %vm300, %v10807, 0.0
    %v10853 = vsel %vm301, %v10809, 0.0
    %v10854 = vsel %vm302, %v10811, 0.0
    %v10855 = vsel %vm303, %v10813, 0.0
    %v10856 = vsel %vm304, %v10815, 0.0
    %v10857 = vsel %vm305, %v10817, 0.0
    %v10858 = vsel %vm306, %v10819, 0.0
    %v10859 = vsel %vm307, %v10821, 0.0
    %v10860 = vsel %vm308, %v10823, 0.0
    %v10861 = vsel %vm309, %v10825, 0.0
    %v10862 = vsel %vm310, %v10827, 0.0
    %v10863 = vsel %vm311, %v10829, 0.0
    %v10864 = vsel %vm312, %v10831, 0.0
    %v10865 = vsel %vm313, %v10832, 0.0
    %v10866 = vpack.c.bf16 %v10851, %v10850
    %v10867 = vpack.c.bf16 %v10853, %v10852
    %v10868 = vpack.c.bf16 %v10855, %v10854
    %v10869 = vpack.c.bf16 %v10857, %v10856
    %v10870 = vpack.c.bf16 %v10859, %v10858
    %v10871 = vpack.c.bf16 %v10861, %v10860
    %v10872 = vpack.c.bf16 %v10863, %v10862
    %v10873 = vpack.c.bf16 %v10865, %v10864
    %v10874 = vpack.c.bf16 %v10743, %v10742
    %v10875 = vpack.c.bf16 %v10745, %v10744
    %v10876 = vpack.c.bf16 %v10747, %v10746
    %v10877 = vpack.c.bf16 %v10749, %v10748
    %v10878 = vpack.c.bf16 %v10751, %v10750
    %v10879 = vpack.c.bf16 %v10753, %v10752
    %v10880 = vpack.c.bf16 %v10755, %v10754
    %v10881 = vpack.c.bf16 %v10757, %v10756
    %v10890 = vunpack.c.l.b16 %v10767
    %v10891 = vunpack.c.l.b16 %v10768
    %v10892 = vunpack.c.l.b16 %v10769
    %v10893 = vunpack.c.l.b16 %v10770
    %v10894 = vunpack.c.l.b16 %v10771
    %v10895 = vunpack.c.l.b16 %v10772
    %v10896 = vunpack.c.l.b16 %v10773
    %v10897 = vunpack.c.l.b16 %v10774
    %v10898 = vpack.c.b16 %v10891, %v10890
    %v10899 = vpack.c.b16 %v10893, %v10892
    %v10900 = vpack.c.b16 %v10895, %v10894
    %v10901 = vpack.c.b16 %v10897, %v10896
    %v10907 = vsel %vm10219, %v10874, 0
    %v10910 = vsel %vm10219, %v10875, 0
    %v10913 = vsel %vm10219, %v10876, 0
    %v10916 = vsel %vm10219, %v10877, 0
    %v10919 = vsel %vm10219, %v10878, 0
    %v10922 = vsel %vm10219, %v10879, 0
    %v10925 = vsel %vm10219, %v10880, 0
    %v10928 = vsel %vm10219, %v10881, 0
    %10930 = vmatprep.subr.bf16.mxu0 0
    %10931 = vmatpush1.bf16.msra.mxu0 %v10898
    %10932 = vmatprep.subr.bf16.mxu0 0
    %10933 = vmatpush1.bf16.msra.mxu0 %v10899
    %10934 = vmatprep.subr.bf16.mxu0 0
    %10935 = vmatpush1.bf16.msra.mxu0 %v10900
    %10936 = vmatprep.subr.bf16.mxu0 0
    %10937 = vmatpush1.bf16.msra.mxu0 %v10901
    %10938 = vmatprep.subr.bf16.mxu0 0
    %10939 = vmatpush1.bf16.msra.mxu0 0
    %10940 = vmatprep.subr.bf16.mxu0 0
    %10941 = vmatpush1.bf16.msra.mxu0 0
    %10942 = vmatprep.subr.bf16.mxu0 0
    %10943 = vmatpush1.bf16.msra.mxu0 0
    %10944 = vmatprep.subr.bf16.mxu0 0
    %10945 = vmatpush1.bf16.msra.mxu0 0
    %10946 = vmatprep.subr.bf16.mxu0 0
    %10947 = vmatpush1.bf16.msra.mxu0 0
    %10948 = vmatprep.subr.bf16.mxu0 0
    %10949 = vmatpush1.bf16.msra.mxu0 0
    %10950 = vmatprep.subr.bf16.mxu0 0
    %10951 = vmatpush1.bf16.msra.mxu0 0
    %10952 = vmatprep.subr.bf16.mxu0 0
    %10953 = vmatpush1.bf16.msra.mxu0 0
    %10954 = vmatprep.subr.bf16.mxu0 0
    %10955 = vmatpush1.bf16.msra.mxu0 0
    %10956 = vmatprep.subr.bf16.mxu0 0
    %10957 = vmatpush1.bf16.msra.mxu0 0
    %10958 = vmatprep.subr.bf16.mxu0 0
    %10959 = vmatpush1.bf16.msra.mxu0 0
    %10960 = vmatprep.subr.bf16.mxu0 0
    %10961 = vmatpush1.bf16.msra.mxu0 0
    %10962 = vmatprep.mubr.bf16.mxu0 0
    %10963 = vmatmul.mubr.bf16.gmra.mrb[0].mxu0 %v10907
    %v10964 = vpop.f32.mrb[0].mxu0
    %v10965 = vadd.f32 0.0, %v10964
    %v10966 = vpop.f32.mrb[0].mxu0
    %v10967 = vpop.f32.mrb[0].mxu0
    %v10968 = vadd.f32 0.0, %v10967
    %v10969 = vpop.f32.mrb[0].mxu0
    %10970 = vmatprep.mubr.bf16.mxu0 0
    %10971 = vmatmul.mubr.bf16.gmra.mrb[0].mxu0 %v10910
    %v10972 = vpop.f32.mrb[0].mxu0
    %v10973 = vadd.f32 0.0, %v10972
    %v10974 = vpop.f32.mrb[0].mxu0
    %v10975 = vpop.f32.mrb[0].mxu0
    %v10976 = vadd.f32 0.0, %v10975
    %v10977 = vpop.f32.mrb[0].mxu0
    %10978 = vmatprep.mubr.bf16.mxu0 0
    %10979 = vmatmul.mubr.bf16.gmra.mrb[0].mxu0 %v10913
    %v10980 = vpop.f32.mrb[0].mxu0
    %v10981 = vadd.f32 0.0, %v10980
    %v10982 = vpop.f32.mrb[0].mxu0
    %v10983 = vpop.f32.mrb[0].mxu0
    %v10984 = vadd.f32 0.0, %v10983
    %v10985 = vpop.f32.mrb[0].mxu0
    %10986 = vmatprep.mubr.bf16.mxu0 0
    %10987 = vmatmul.mubr.bf16.gmra.mrb[0].mxu0 %v10916
    %v10988 = vpop.f32.mrb[0].mxu0
    %v10989 = vadd.f32 0.0, %v10988
    %v10990 = vpop.f32.mrb[0].mxu0
    %v10991 = vpop.f32.mrb[0].mxu0
    %v10992 = vadd.f32 0.0, %v10991
    %v10993 = vpop.f32.mrb[0].mxu0
    %10994 = vmatprep.mubr.bf16.mxu0 0
    %10995 = vmatmul.mubr.bf16.gmra.mrb[0].mxu0 %v10919
    %v10996 = vpop.f32.mrb[0].mxu0
    %v10997 = vadd.f32 0.0, %v10996
    %v10998 = vpop.f32.mrb[0].mxu0
    %v10999 = vpop.f32.mrb[0].mxu0
    %v11000 = vadd.f32 0.0, %v10999
    %v11001 = vpop.f32.mrb[0].mxu0
    %11002 = vmatprep.mubr.bf16.mxu0 0
    %11003 = vmatmul.mubr.bf16.gmra.mrb[0].mxu0 %v10922
    %v11004 = vpop.f32.mrb[0].mxu0
    %v11005 = vadd.f32 0.0, %v11004
    %v11006 = vpop.f32.mrb[0].mxu0
    %v11007 = vpop.f32.mrb[0].mxu0
    %v11008 = vadd.f32 0.0, %v11007
    %v11009 = vpop.f32.mrb[0].mxu0
    %11010 = vmatprep.mubr.bf16.mxu0 0
    %11011 = vmatmul.mubr.bf16.gmra.mrb[0].mxu0 %v10925
    %v11012 = vpop.f32.mrb[0].mxu0
    %v11013 = vadd.f32 0.0, %v11012
    %v11014 = vpop.f32.mrb[0].mxu0
    %v11015 = vpop.f32.mrb[0].mxu0
    %v11016 = vadd.f32 0.0, %v11015
    %v11017 = vpop.f32.mrb[0].mxu0
    %11018 = vmatprep.mubr.bf16.mxu0 0
    %11019 = vmatmul.mubr.bf16.gmra.mrb[0].mxu0 %v10928
    %v11020 = vpop.f32.mrb[0].mxu0
    %v11021 = vadd.f32 0.0, %v11020
    %v11022 = vpop.f32.mrb[0].mxu0
    %v11023 = vpop.f32.mrb[0].mxu0
    %v11024 = vadd.f32 0.0, %v11023
    %v11025 = vpop.f32.mrb[0].mxu0
    %11026 = vdwg.mxu0
    %v11035 = vunpack.c.l.b16 %v10758
    %v11036 = vunpack.c.l.b16 %v10759
    %v11037 = vunpack.c.l.b16 %v10760
    %v11038 = vunpack.c.l.b16 %v10761
    %v11039 = vunpack.c.l.b16 %v10762
    %v11040 = vunpack.c.l.b16 %v10763
    %v11041 = vunpack.c.l.b16 %v10764
    %v11042 = vunpack.c.l.b16 %v10765
    %v11043 = vpack.c.b16 %v11036, %v11035
    %v11044 = vpack.c.b16 %v11038, %v11037
    %v11045 = vpack.c.b16 %v11040, %v11039
    %v11046 = vpack.c.b16 %v11042, %v11041
    %v11052 = vsel %vm10219, %v10866, 0
    %v11055 = vsel %vm10219, %v10867, 0
    %v11058 = vsel %vm10219, %v10868, 0
    %v11061 = vsel %vm10219, %v10869, 0
    %v11064 = vsel %vm10219, %v10870, 0
    %v11067 = vsel %vm10219, %v10871, 0
    %v11070 = vsel %vm10219, %v10872, 0
    %v11073 = vsel %vm10219, %v10873, 0
    %11075 = vmatprep.subr.bf16.mxu0 0
    %11076 = vmatpush1.bf16.msra.mxu0 %v11043
    %11077 = vmatprep.subr.bf16.mxu0 0
    %11078 = vmatpush1.bf16.msra.mxu0 %v11044
    %11079 = vmatprep.subr.bf16.mxu0 0
    %11080 = vmatpush1.bf16.msra.mxu0 %v11045
    %11081 = vmatprep.subr.bf16.mxu0 0
    %11082 = vmatpush1.bf16.msra.mxu0 %v11046
    %11083 = vmatprep.subr.bf16.mxu0 0
    %11084 = vmatpush1.bf16.msra.mxu0 0
    %11085 = vmatprep.subr.bf16.mxu0 0
    %11086 = vmatpush1.bf16.msra.mxu0 0
    %11087 = vmatprep.subr.bf16.mxu0 0
    %11088 = vmatpush1.bf16.msra.mxu0 0
    %11089 = vmatprep.subr.bf16.mxu0 0
    %11090 = vmatpush1.bf16.msra.mxu0 0
    %11091 = vmatprep.subr.bf16.mxu0 0
    %11092 = vmatpush1.bf16.msra.mxu0 0
    %11093 = vmatprep.subr.bf16.mxu0 0
    %11094 = vmatpush1.bf16.msra.mxu0 0
    %11095 = vmatprep.subr.bf16.mxu0 0
    %11096 = vmatpush1.bf16.msra.mxu0 0
    %11097 = vmatprep.subr.bf16.mxu0 0
    %11098 = vmatpush1.bf16.msra.mxu0 0
    %11099 = vmatprep.subr.bf16.mxu0 0
    %11100 = vmatpush1.bf16.msra.mxu0 0
    %11101 = vmatprep.subr.bf16.mxu0 0
    %11102 = vmatpush1.bf16.msra.mxu0 0
    %11103 = vmatprep.subr.bf16.mxu0 0
    %11104 = vmatpush1.bf16.msra.mxu0 0
    %11105 = vmatprep.subr.bf16.mxu0 0
    %11106 = vmatpush1.bf16.msra.mxu0 0
    %11107 = vmatprep.mubr.bf16.mxu0 0
    %11108 = vmatmul.mubr.bf16.gmra.mrb[0].mxu0 %v11052
    %v11109 = vpop.f32.mrb[0].mxu0
    %v11110 = vadd.f32 %v10965, %v11109
    %v11111 = vpop.f32.mrb[0].mxu0
    %v11112 = vpop.f32.mrb[0].mxu0
    %v11113 = vadd.f32 %v10968, %v11112
    %v11114 = vpop.f32.mrb[0].mxu0
    %11115 = vmatprep.mubr.bf16.mxu0 0
    %11116 = vmatmul.mubr.bf16.gmra.mrb[0].mxu0 %v11055
    %v11117 = vpop.f32.mrb[0].mxu0
    %v11118 = vadd.f32 %v10973, %v11117
    %v11119 = vpop.f32.mrb[0].mxu0
    %v11120 = vpop.f32.mrb[0].mxu0
    %v11121 = vadd.f32 %v10976, %v11120
    %v11122 = vpop.f32.mrb[0].mxu0
    %11123 = vmatprep.mubr.bf16.mxu0 0
    %11124 = vmatmul.mubr.bf16.gmra.mrb[0].mxu0 %v11058
    %v11125 = vpop.f32.mrb[0].mxu0
    %v11126 = vadd.f32 %v10981, %v11125
    %v11127 = vpop.f32.mrb[0].mxu0
    %v11128 = vpop.f32.mrb[0].mxu0
    %v11129 = vadd.f32 %v10984, %v11128
    %v11130 = vpop.f32.mrb[0].mxu0
    %11131 = vmatprep.mubr.bf16.mxu0 0
    %11132 = vmatmul.mubr.bf16.gmra.mrb[0].mxu0 %v11061
    %v11133 = vpop.f32.mrb[0].mxu0
    %v11134 = vadd.f32 %v10989, %v11133
    %v11135 = vpop.f32.mrb[0].mxu0
    %v11136 = vpop.f32.mrb[0].mxu0
    %v11137 = vadd.f32 %v10992, %v11136
    %v11138 = vpop.f32.mrb[0].mxu0
    %11139 = vmatprep.mubr.bf16.mxu0 0
    %11140 = vmatmul.mubr.bf16.gmra.mrb[0].mxu0 %v11064
    %v11141 = vpop.f32.mrb[0].mxu0
    %v11142 = vadd.f32 %v10997, %v11141
    %v11143 = vpop.f32.mrb[0].mxu0
    %v11144 = vpop.f32.mrb[0].mxu0
    %v11145 = vadd.f32 %v11000, %v11144
    %v11146 = vpop.f32.mrb[0].mxu0
    %11147 = vmatprep.mubr.bf16.mxu0 0
    %11148 = vmatmul.mubr.bf16.gmra.mrb[0].mxu0 %v11067
    %v11149 = vpop.f32.mrb[0].mxu0
    %v11150 = vadd.f32 %v11005, %v11149
    %v11151 = vpop.f32.mrb[0].mxu0
    %v11152 = vpop.f32.mrb[0].mxu0
    %v11153 = vadd.f32 %v11008, %v11152
    %v11154 = vpop.f32.mrb[0].mxu0
    %11155 = vmatprep.mubr.bf16.mxu0 0
    %11156 = vmatmul.mubr.bf16.gmra.mrb[0].mxu0 %v11070
    %v11157 = vpop.f32.mrb[0].mxu0
    %v11158 = vadd.f32 %v11013, %v11157
    %v11159 = vpop.f32.mrb[0].mxu0
    %v11160 = vpop.f32.mrb[0].mxu0
    %v11161 = vadd.f32 %v11016, %v11160
    %v11162 = vpop.f32.mrb[0].mxu0
    %11163 = vmatprep.mubr.bf16.mxu0 0
    %11164 = vmatmul.mubr.bf16.gmra.mrb[0].mxu0 %v11073
    %v11165 = vpop.f32.mrb[0].mxu0
    %v11166 = vadd.f32 %v11021, %v11165
    %v11167 = vpop.f32.mrb[0].mxu0
    %v11168 = vpop.f32.mrb[0].mxu0
    %v11169 = vadd.f32 %v11024, %v11168
    %v11170 = vpop.f32.mrb[0].mxu0
    %11171 = vdwg.mxu0
    %v11172 = vrot.slane %v10742, 1
    %v11173 = vrot.slane %v10743, 1
    %v11174 = vsel %vm617, %v11172, %v11173
    %v11175 = vrot.slane %v10744, 1
    %v11176 = vsel %vm617, %v11173, %v11175
    %v11177 = vrot.slane %v10745, 1
    %v11178 = vsel %vm617, %v11175, %v11177
    %v11179 = vrot.slane %v10746, 1
    %v11180 = vsel %vm617, %v11177, %v11179
    %v11181 = vrot.slane %v10747, 1
    %v11182 = vsel %vm617, %v11179, %v11181
    %v11183 = vrot.slane %v10748, 1
    %v11184 = vsel %vm617, %v11181, %v11183
    %v11185 = vrot.slane %v10749, 1
    %v11186 = vsel %vm617, %v11183, %v11185
    %v11187 = vrot.slane %v10750, 1
    %v11188 = vsel %vm617, %v11185, %v11187
    %v11189 = vrot.slane %v10751, 1
    %v11190 = vsel %vm617, %v11187, %v11189
    %v11191 = vrot.slane %v10752, 1
    %v11192 = vsel %vm617, %v11189, %v11191
    %v11193 = vrot.slane %v10753, 1
    %v11194 = vsel %vm617, %v11191, %v11193
    %v11195 = vrot.slane %v10754, 1
    %v11196 = vsel %vm617, %v11193, %v11195
    %v11197 = vrot.slane %v10755, 1
    %v11198 = vsel %vm617, %v11195, %v11197
    %v11199 = vrot.slane %v10756, 1
    %v11200 = vsel %vm617, %v11197, %v11199
    %v11201 = vrot.slane %v10757, 1
    %v11202 = vsel %vm617, %v11199, %v11201
    %v11220 = vsel %vm617, %v11201, %v11172
    %v11221 = vsel %vm731, %v11174, 0.0
    %v11222 = vsel %vm732, %v11176, 0.0
    %v11223 = vsel %vm733, %v11178, 0.0
    %v11224 = vsel %vm734, %v11180, 0.0
    %v11225 = vsel %vm735, %v11182, 0.0
    %v11226 = vsel %vm736, %v11184, 0.0
    %v11227 = vsel %vm737, %v11186, 0.0
    %v11228 = vsel %vm738, %v11188, 0.0
    %v11229 = vsel %vm739, %v11190, 0.0
    %v11230 = vsel %vm740, %v11192, 0.0
    %v11231 = vsel %vm741, %v11194, 0.0
    %v11232 = vsel %vm742, %v11196, 0.0
    %v11233 = vsel %vm743, %v11198, 0.0
    %v11234 = vsel %vm744, %v11200, 0.0
    %v11235 = vsel %vm745, %v11202, 0.0
    %v11236 = vsel %vm746, %v11220, 0.0
    %v11237 = vpack.c.bf16 %v11222, %v11221
    %v11238 = vpack.c.bf16 %v11224, %v11223
    %v11239 = vpack.c.bf16 %v11226, %v11225
    %v11240 = vpack.c.bf16 %v11228, %v11227
    %v11241 = vpack.c.bf16 %v11230, %v11229
    %v11242 = vpack.c.bf16 %v11232, %v11231
    %v11243 = vpack.c.bf16 %v11234, %v11233
    %v11244 = vpack.c.bf16 %v11236, %v11235
    %v11253 = vunpack.c.l.b16 %v10776
    %v11254 = vunpack.c.l.b16 %v10777
    %v11255 = vunpack.c.l.b16 %v10778
    %v11256 = vunpack.c.l.b16 %v10779
    %v11257 = vunpack.c.l.b16 %v10780
    %v11258 = vunpack.c.l.b16 %v10781
    %v11259 = vunpack.c.l.b16 %v10782
    %v11260 = vunpack.c.l.b16 %v10783
    %v11261 = vpack.c.b16 %v11254, %v11253
    %v11262 = vpack.c.b16 %v11256, %v11255
    %v11263 = vpack.c.b16 %v11258, %v11257
    %v11264 = vpack.c.b16 %v11260, %v11259
    %v11270 = vsel %vm10219, %v11237, 0
    %v11273 = vsel %vm10219, %v11238, 0
    %v11276 = vsel %vm10219, %v11239, 0
    %v11279 = vsel %vm10219, %v11240, 0
    %v11282 = vsel %vm10219, %v11241, 0
    %v11285 = vsel %vm10219, %v11242, 0
    %v11288 = vsel %vm10219, %v11243, 0
    %v11291 = vsel %vm10219, %v11244, 0
    %11293 = vmatprep.subr.bf16.mxu0 0
    %11294 = vmatpush1.bf16.msra.mxu0 %v11261
    %11295 = vmatprep.subr.bf16.mxu0 0
    %11296 = vmatpush1.bf16.msra.mxu0 %v11262
    %11297 = vmatprep.subr.bf16.mxu0 0
    %11298 = vmatpush1.bf16.msra.mxu0 %v11263
    %11299 = vmatprep.subr.bf16.mxu0 0
    %11300 = vmatpush1.bf16.msra.mxu0 %v11264
    %11301 = vmatprep.subr.bf16.mxu0 0
    %11302 = vmatpush1.bf16.msra.mxu0 0
    %11303 = vmatprep.subr.bf16.mxu0 0
    %11304 = vmatpush1.bf16.msra.mxu0 0
    %11305 = vmatprep.subr.bf16.mxu0 0
    %11306 = vmatpush1.bf16.msra.mxu0 0
    %11307 = vmatprep.subr.bf16.mxu0 0
    %11308 = vmatpush1.bf16.msra.mxu0 0
    %11309 = vmatprep.subr.bf16.mxu0 0
    %11310 = vmatpush1.bf16.msra.mxu0 0
    %11311 = vmatprep.subr.bf16.mxu0 0
    %11312 = vmatpush1.bf16.msra.mxu0 0
    %11313 = vmatprep.subr.bf16.mxu0 0
    %11314 = vmatpush1.bf16.msra.mxu0 0
    %11315 = vmatprep.subr.bf16.mxu0 0
    %11316 = vmatpush1.bf16.msra.mxu0 0
    %11317 = vmatprep.subr.bf16.mxu0 0
    %11318 = vmatpush1.bf16.msra.mxu0 0
    %11319 = vmatprep.subr.bf16.mxu0 0
    %11320 = vmatpush1.bf16.msra.mxu0 0
    %11321 = vmatprep.subr.bf16.mxu0 0
    %11322 = vmatpush1.bf16.msra.mxu0 0
    %11323 = vmatprep.subr.bf16.mxu0 0
    %11324 = vmatpush1.bf16.msra.mxu0 0
    %11325 = vmatprep.mubr.bf16.mxu0 0
    %11326 = vmatmul.mubr.bf16.gmra.mrb[0].mxu0 %v11270
    %v11327 = vpop.f32.mrb[0].mxu0
    %v11328 = vadd.f32 0.0, %v11327
    %v11329 = vpop.f32.mrb[0].mxu0
    %v11330 = vpop.f32.mrb[0].mxu0
    %v11331 = vadd.f32 0.0, %v11330
    %v11332 = vpop.f32.mrb[0].mxu0
    %11333 = vmatprep.mubr.bf16.mxu0 0
    %11334 = vmatmul.mubr.bf16.gmra.mrb[0].mxu0 %v11273
    %v11335 = vpop.f32.mrb[0].mxu0
    %v11336 = vadd.f32 0.0, %v11335
    %v11337 = vpop.f32.mrb[0].mxu0
    %v11338 = vpop.f32.mrb[0].mxu0
    %v11339 = vadd.f32 0.0, %v11338
    %v11340 = vpop.f32.mrb[0].mxu0
    %11341 = vmatprep.mubr.bf16.mxu0 0
    %11342 = vmatmul.mubr.bf16.gmra.mrb[0].mxu0 %v11276
    %v11343 = vpop.f32.mrb[0].mxu0
    %v11344 = vadd.f32 0.0, %v11343
    %v11345 = vpop.f32.mrb[0].mxu0
    %v11346 = vpop.f32.mrb[0].mxu0
    %v11347 = vadd.f32 0.0, %v11346
    %v11348 = vpop.f32.mrb[0].mxu0
    %11349 = vmatprep.mubr.bf16.mxu0 0
    %11350 = vmatmul.mubr.bf16.gmra.mrb[0].mxu0 %v11279
    %v11351 = vpop.f32.mrb[0].mxu0
    %v11352 = vadd.f32 0.0, %v11351
    %v11353 = vpop.f32.mrb[0].mxu0
    %v11354 = vpop.f32.mrb[0].mxu0
    %v11355 = vadd.f32 0.0, %v11354
    %v11356 = vpop.f32.mrb[0].mxu0
    %11357 = vmatprep.mubr.bf16.mxu0 0
    %11358 = vmatmul.mubr.bf16.gmra.mrb[0].mxu0 %v11282
    %v11359 = vpop.f32.mrb[0].mxu0
    %v11360 = vadd.f32 0.0, %v11359
    %v11361 = vpop.f32.mrb[0].mxu0
    %v11362 = vpop.f32.mrb[0].mxu0
    %v11363 = vadd.f32 0.0, %v11362
    %v11364 = vpop.f32.mrb[0].mxu0
    %11365 = vmatprep.mubr.bf16.mxu0 0
    %11366 = vmatmul.mubr.bf16.gmra.mrb[0].mxu0 %v11285
    %v11367 = vpop.f32.mrb[0].mxu0
    %v11368 = vadd.f32 0.0, %v11367
    %v11369 = vpop.f32.mrb[0].mxu0
    %v11370 = vpop.f32.mrb[0].mxu0
    %v11371 = vadd.f32 0.0, %v11370
    %v11372 = vpop.f32.mrb[0].mxu0
    %11373 = vmatprep.mubr.bf16.mxu0 0
    %11374 = vmatmul.mubr.bf16.gmra.mrb[0].mxu0 %v11288
    %v11375 = vpop.f32.mrb[0].mxu0
    %v11376 = vadd.f32 0.0, %v11375
    %v11377 = vpop.f32.mrb[0].mxu0
    %v11378 = vpop.f32.mrb[0].mxu0
    %v11379 = vadd.f32 0.0, %v11378
    %v11380 = vpop.f32.mrb[0].mxu0
    %11381 = vmatprep.mubr.bf16.mxu0 0
    %11382 = vmatmul.mubr.bf16.gmra.mrb[0].mxu0 %v11291
    %v11383 = vpop.f32.mrb[0].mxu0
    %v11384 = vadd.f32 0.0, %v11383
    %v11385 = vpop.f32.mrb[0].mxu0
    %v11386 = vpop.f32.mrb[0].mxu0
    %v11387 = vadd.f32 0.0, %v11386
    %v11388 = vpop.f32.mrb[0].mxu0
    %11389 = vdwg.mxu0
    %v11390 = vadd.f32 %v11110, %v11328
    %v11391 = vadd.f32 %v11113, %v11331
    %v11392 = vadd.f32 %v11118, %v11336
    %v11393 = vadd.f32 %v11121, %v11339
    %v11394 = vadd.f32 %v11126, %v11344
    %v11395 = vadd.f32 %v11129, %v11347
    %v11396 = vadd.f32 %v11134, %v11352
    %v11397 = vadd.f32 %v11137, %v11355
    %v11398 = vadd.f32 %v11142, %v11360
    %v11399 = vadd.f32 %v11145, %v11363
    %v11400 = vadd.f32 %v11150, %v11368
    %v11401 = vadd.f32 %v11153, %v11371
    %v11402 = vadd.f32 %v11158, %v11376
    %v11403 = vadd.f32 %v11161, %v11379
    %v11404 = vadd.f32 %v11166, %v11384
    %v11405 = vadd.f32 %v11169, %v11387
    %v11407 = vlaneseq
    %v11408 = vshrl.u32 %v11407, 7
    %v11409 = vsub.s32 0, %v11408
    %v11410 = vrot.slane %v10784, %v11409
    %v11412 = vadd.f32 %v11390, %v11410
    %v11413 = vadd.f32 %v11391, %v11410
    %v11414 = vadd.f32 %v11392, %v11410
    %v11415 = vadd.f32 %v11393, %v11410
    %v11416 = vadd.f32 %v11394, %v11410
    %v11417 = vadd.f32 %v11395, %v11410
    %v11418 = vadd.f32 %v11396, %v11410
    %v11419 = vadd.f32 %v11397, %v11410
    %v11420 = vadd.f32 %v11398, %v11410
    %v11421 = vadd.f32 %v11399, %v11410
    %v11422 = vadd.f32 %v11400, %v11410
    %v11423 = vadd.f32 %v11401, %v11410
    %v11424 = vadd.f32 %v11402, %v11410
    %v11425 = vadd.f32 %v11403, %v11410
    %v11426 = vadd.f32 %v11404, %v11410
    %v11427 = vadd.f32 %v11405, %v11410
    %vm11428 = vcmask 97280
    %11429 = vst.msk [vmem:[%s13] sm:$0xff] %vm11428, %v11412
    %11430 = vst.msk [vmem:[%s13 + $0x8] sm:$0xff] %vm11428, %v11413
    %11431 = vst.msk [vmem:[%s13 + $0x10] sm:$0xff] %vm11428, %v11414
    %11432 = vst.msk [vmem:[%s13 + $0x18] sm:$0xff] %vm11428, %v11415
    %11433 = vst.msk [vmem:[%s13 + $0x20] sm:$0xff] %vm11428, %v11416
    %11434 = vst.msk [vmem:[%s13 + $0x28] sm:$0xff] %vm11428, %v11417
    %11435 = vst.msk [vmem:[%s13 + $0x30] sm:$0xff] %vm11428, %v11418
    %11436 = vst.msk [vmem:[%s13 + $0x38] sm:$0xff] %vm11428, %v11419
    %11437 = vst.msk [vmem:[%s13 + $0x40] sm:$0xff] %vm11428, %v11420
    %11438 = vst.msk [vmem:[%s13 + $0x48] sm:$0xff] %vm11428, %v11421
    %11439 = vst.msk [vmem:[%s13 + $0x50] sm:$0xff] %vm11428, %v11422
    %11440 = vst.msk [vmem:[%s13 + $0x58] sm:$0xff] %vm11428, %v11423
    %11441 = vst.msk [vmem:[%s13 + $0x60] sm:$0xff] %vm11428, %v11424
    %11442 = vst.msk [vmem:[%s13 + $0x68] sm:$0xff] %vm11428, %v11425
    %11443 = vst.msk [vmem:[%s13 + $0x70] sm:$0xff] %vm11428, %v11426
    %11444 = vst.msk [vmem:[%s13 + $0x78] sm:$0xff] %vm11428, %v11427
    // Predicated region
    $region74: #{tpu_custom_call.1} parent=1 // pred_check
      _
    $region75: #{tpu_custom_call.1} parent=1 // pred_check_branch
      %11446 = sbr.rel (0) target = $region77
    $region76: #{tpu_custom_call.1} parent=1 // pred_region
      _
    $region77: #{tpu_custom_call.1} parent=1 // pred_fallthru
      _
    // Predicated region
    $region78: #{tpu_custom_call.1} parent=1 // pred_check
      _
    $region79: #{tpu_custom_call.1} parent=1 // pred_check_branch
      %11448 = sbr.rel (0) target = $region81
    $region80: #{tpu_custom_call.1} parent=1 // pred_region
      _
    $region81: #{tpu_custom_call.1} parent=1 // pred_fallthru
      _
    %11449 = vsyncpa [#allocation3], 1
    %11450 = vsyncpa [#allocation5], 1
    %11451 = vsyncpa [#allocation8], 1

</llo_original>
